<compile_context>
chip_gen: v7x
topology: tpu7x:2x2x1
jax: 0.10.0
libtpu: 0.0.40
codegen_flags: <defaults>
</compile_context>

<pallas_src>
import functools

import jax
import jax.numpy as jnp
from jax.experimental import pallas as pl
from jax.experimental.pallas import tpu as pltpu

# f32 everywhere: bf16 x bf16 -> f32 dots are unsupported on the interpret /
# CPU fallback path ("DotThunk"); MXU handles f32 operands fine.
MXU_DTYPE = jnp.float32
EPS = 1e-5


# ----------------------------------------------------------------------------
# Kernel 1: kv 1x1 conv + keys AdaIN + values AdaIN (fused, grid over batch)
# ----------------------------------------------------------------------------
def _kv_adain_kernel(x_ref, s_ref, wk_ref, wv_ref,
                     kgw_ref, kgb_ref, kbw_ref, kbb_ref,
                     vgw_ref, vgb_ref, vbw_ref, vbb_ref,
                     keys_out, vals_out, *, eps):
    x = x_ref[...].astype(MXU_DTYPE)                 # (C, N)
    s = s_ref[...]                                   # (1, L)

    def project_adain(w_ref, gw_ref, gb_ref, bw_ref, bb_ref, o_ref):
        y = jnp.dot(w_ref[...], x, preferred_element_type=jnp.float32)
        mu = jnp.mean(y, axis=-1, keepdims=True)
        var = jnp.mean(jnp.square(y - mu), axis=-1, keepdims=True)
        gamma = 1.0 + jnp.sum(gw_ref[...] * s, axis=-1, keepdims=True) + gb_ref[...]
        beta = jnp.sum(bw_ref[...] * s, axis=-1, keepdims=True) + bb_ref[...]
        o_ref[...] = gamma * (y - mu) * jax.lax.rsqrt(var + eps) + beta

    project_adain(wk_ref, kgw_ref, kgb_ref, kbw_ref, kbb_ref, keys_out)
    project_adain(wv_ref, vgw_ref, vgb_ref, vbw_ref, vbb_ref, vals_out)


def fused_kv_adain(x, style_row, p, *, heads, feat):
    B, C, N = x.shape
    L = style_row.shape[-1]
    H3, HF = heads * 3, heads * feat
    wk = p['kv_w'][:H3].astype(MXU_DTYPE)
    wv = p['kv_w'][H3:].astype(MXU_DTYPE)
    kbn, vbn = p['keys_bn'], p['values_bn']

    def full_spec(a):
        return pl.BlockSpec(a.shape, lambda b: (0,) * a.ndim)

    args = [x, style_row, wk, wv,
            kbn['wg'].T, kbn['bg'].reshape(H3, 1),
            kbn['wb'].T, kbn['bb'].reshape(H3, 1),
            vbn['wg'].T, vbn['bg'].reshape(HF, 1),
            vbn['wb'].T, vbn['bb'].reshape(HF, 1)]
    in_specs = ([pl.BlockSpec((None, C, N), lambda b: (b, 0, 0)),
                 pl.BlockSpec((None, 1, L), lambda b: (b, 0, 0))]
                + [full_spec(a) for a in args[2:]])

    keys_res, values = pl.pallas_call(
        functools.partial(_kv_adain_kernel, eps=EPS),
        out_shape=(jax.ShapeDtypeStruct((B, H3, N), jnp.float32),
                   jax.ShapeDtypeStruct((B, HF, N), jnp.float32)),
        grid=(B,),
        in_specs=in_specs,
        out_specs=(pl.BlockSpec((None, H3, N), lambda b: (b, 0, 0)),
                   pl.BlockSpec((None, HF, N), lambda b: (b, 0, 0))),
        compiler_params=pltpu.CompilerParams(
            dimension_semantics=("parallel",)),
    )(*args)
    return keys_res, values


# ----------------------------------------------------------------------------
# Kernel 2: (optional 1x1 conv) + AdaIN (+ ReLU) (+ residual add)
# ----------------------------------------------------------------------------
def _make_adain_kernel(has_conv, has_res, relu, eps):
    def kernel(*refs):
        it = iter(refs)
        x_ref = next(it)
        w_ref = next(it) if has_conv else None
        s_ref = next(it)
        gw_ref, gb_ref, bw_ref, bb_ref = next(it), next(it), next(it), next(it)
        res_ref = next(it) if has_res else None
        o_ref = next(it)

        if has_conv:
            y = jnp.dot(w_ref[...], x_ref[...].astype(MXU_DTYPE),
                        preferred_element_type=jnp.float32)
        else:
            y = x_ref[...]
        s = s_ref[...]                                            # (1, L)
        mu = jnp.mean(y, axis=-1, keepdims=True)
        var = jnp.mean(jnp.square(y - mu), axis=-1, keepdims=True)
        gamma = 1.0 + jnp.sum(gw_ref[...] * s, axis=-1, keepdims=True) + gb_ref[...]
        beta = jnp.sum(bw_ref[...] * s, axis=-1, keepdims=True) + bb_ref[...]
        out = gamma * (y - mu) * jax.lax.rsqrt(var + eps) + beta
        if relu:
            out = jnp.maximum(out, 0.0)
        if has_res:
            out = out + res_ref[...]
        o_ref[...] = out
    return kernel


def fused_adain(x, style_row, bn, *, w=None, residual=None, relu=False):
    """x: (B, Cin, N). Optional 1x1 conv (w: (C, Cin)), instance-norm over N,
    style-conditioned affine, optional ReLU, optional residual add."""
    B, Cin, N = x.shape
    L = style_row.shape[-1]
    C = w.shape[0] if w is not None else Cin

    args = [x]
    in_specs = [pl.BlockSpec((None, Cin, N), lambda b: (b, 0, 0))]
    if w is not None:
        args.append(w.astype(MXU_DTYPE))
        in_specs.append(pl.BlockSpec((C, Cin), lambda b: (0, 0)))
    args.append(style_row)
    in_specs.append(pl.BlockSpec((None, 1, L), lambda b: (b, 0, 0)))
    for a in (bn['wg'].T, bn['bg'].reshape(C, 1),
              bn['wb'].T, bn['bb'].reshape(C, 1)):
        args.append(a)
        in_specs.append(pl.BlockSpec(a.shape, lambda b: (0, 0)))
    if residual is not None:
        args.append(residual)
        in_specs.append(pl.BlockSpec((None, C, N), lambda b: (b, 0, 0)))

    kern = _make_adain_kernel(w is not None, residual is not None, relu, EPS)
    return pl.pallas_call(
        kern,
        out_shape=jax.ShapeDtypeStruct((B, C, N), jnp.float32),
        grid=(B,),
        in_specs=in_specs,
        out_specs=pl.BlockSpec((None, C, N), lambda b: (b, 0, 0)),
        compiler_params=pltpu.CompilerParams(
            dimension_semantics=("parallel",)),
    )(*args)


# ----------------------------------------------------------------------------
# Kernel 3: splat + grouped 3x3 conv + slice (fused, grid over batch)
# ----------------------------------------------------------------------------
def _splat_conv_slice_kernel(vals_ref, loc_ref, flt_ref, w2_ref, bias_ref,
                             msk_ref, out_ref, occ_ref, imcol_ref,
                             *, heads, feat, size):
    H, F, S = heads, feat, size
    G = S * S
    N = vals_ref.shape[-1]
    grow = jax.lax.broadcasted_iota(jnp.int32, (G, N), 0)   # cell id per row
    masks = msk_ref[...]                                     # (G, 9) tap validity
    total = 0.0
    for h in range(H):
        loc = loc_ref[h]                                     # (2, N)
        ly, lx = loc[0:1, :], loc[1:2, :]
        base = flt_ref[h:h + 1, :]                           # (1, N) int32
        # transposed bilinear matrix  Mt[g, n] = sum_c w_c[n] * (idx_c[n] == g)
        mt = jnp.zeros((G, N), jnp.float32)
        for cy in (0, 1):
            wy = ly if cy else (1.0 - ly)
            for cx in (0, 1):
                wx = lx if cx else (1.0 - lx)
                idx = base + (cy * S + cx)
                mt = mt + jnp.where(grow == idx, wy * wx, 0.0)
        # splat on the MXU:  zT[g, f] = sum_n Mt[g, n] * v[f, n]
        zT = jnp.dot(mt.astype(MXU_DTYPE), vals_ref[h].T.astype(MXU_DTYPE),
                     preferred_element_type=jnp.float32)      # (G, F)
        total = total + jnp.sum((jnp.abs(zT) > 1e-9).astype(jnp.float32))
        # im2col of the (implicitly zero-padded) 3x3 neighbourhood, in VMEM
        for t in range(9):
            dy, dx = t // 3, t % 3
            k = (dy - 1) * S + (dx - 1)
            tap = zT if k == 0 else pltpu.roll(zT, shift=(-k) % G, axis=0)
            imcol_ref[:, t * F:(t + 1) * F] = tap * masks[:, t:t + 1]
        # grouped 3x3 conv = ONE matmul with K = 9*F
        convT = jnp.dot(imcol_ref[...].astype(MXU_DTYPE), w2_ref[h],
                        preferred_element_type=jnp.float32) + bias_ref[h]
        # slice (bilinear gather) back to the points, also on the MXU
        out_ref[h] = jnp.dot(convT.T.astype(MXU_DTYPE), mt.astype(MXU_DTYPE),
                             preferred_element_type=jnp.float32)   # (F, N)
    occ_ref[...] = jnp.zeros((1, 1), jnp.float32) + total


def fused_splat_conv_slice(values, local, flat, conv_w, conv_b,
                           *, heads, feat, size):
    """values: (B, H*F, N); local: (B, H, 2, N); flat: (B, H, N) int32.
    Returns sliced (B, H*F, N) and per-batch occupancy counts (B,)."""
    B, _, N = values.shape
    H, F, S = heads, feat, size
    G = S * S
    vals4 = values.reshape(B, H, F, N)
    # (H, Fo, Fi, 3, 3) -> (H, 9*Fi, Fo) matching the im2col column order
    w2t = conv_w.transpose(0, 3, 4, 2, 1).reshape(H, 9 * F, F).astype(MXU_DTYPE)
    bias = conv_b.reshape(H, 1, F)
    # static boundary-validity masks for the 9 taps, shape (G, 9)
    g = jnp.arange(G, dtype=jnp.int32)
    gy, gx = g // S, g % S
    cols = []
    for dy in range(3):
        for dx in range(3):
            yy, xx = gy + dy - 1, gx + dx - 1
            cols.append(((yy >= 0) & (yy < S) & (xx >= 0) & (xx < S)
                         ).astype(jnp.float32))
    masks = jnp.stack(cols, axis=1)

    kern = functools.partial(_splat_conv_slice_kernel,
                             heads=H, feat=F, size=S)
    sliced, occ = pl.pallas_call(
        kern,
        out_shape=(jax.ShapeDtypeStruct((B, H, F, N), jnp.float32),
                   jax.ShapeDtypeStruct((B, 1, 1), jnp.float32)),
        grid=(B,),
        in_specs=[
            pl.BlockSpec((None, H, F, N), lambda b: (b, 0, 0, 0)),
            pl.BlockSpec((None, H, 2, N), lambda b: (b, 0, 0, 0)),
            pl.BlockSpec((None, H, N), lambda b: (b, 0, 0)),
            pl.BlockSpec((H, 9 * F, F), lambda b: (0, 0, 0)),
            pl.BlockSpec((H, 1, F), lambda b: (0, 0, 0)),
            pl.BlockSpec((G, 9), lambda b: (0, 0)),
        ],
        out_specs=(pl.BlockSpec((None, H, F, N), lambda b: (b, 0, 0, 0)),
                   pl.BlockSpec((None, 1, 1), lambda b: (b, 0, 0))),
        scratch_shapes=[pltpu.VMEM((G, 9 * F), jnp.float32)],
        compiler_params=pltpu.CompilerParams(
            dimension_semantics=("parallel",)),
    )(vals4, local, flat, w2t, bias, masks)
    return sliced.reshape(B, H * F, N), occ.reshape(B)


# ----------------------------------------------------------------------------
# JAX glue (tiny per-point coordinate math; no scatter/gather here)
# ----------------------------------------------------------------------------
def diff_positions(lattice, heads, dim, S):
    # TODO(synk): DifferentiablePositions source unavailable; modeled as
    # mapping tanh-lattice coords in (-1,1) onto an S^dim grid, returning
    # fractional local coords and the flattened lower-corner index.
    B, _, N = lattice.shape
    pos = (lattice.reshape(B, heads, dim, N) + 1.0) * 0.5 * (S - 1)
    base = jnp.clip(jnp.floor(pos), 0.0, S - 2).astype(jnp.int32)
    local = pos - base.astype(jnp.float32)
    flat = base[:, :, 0, :]
    for d in range(1, dim):
        flat = flat * S + base[:, :, d, :]
    return local, flat                       # (B, H, dim, N), (B, H, N)


# ----------------------------------------------------------------------------
# Forward passes
# ----------------------------------------------------------------------------
def multihead_adain_forward(x, style_row, orig_pcd, p, *, heads, F, S, dim):
    B, _, N = x.shape
    # fused: kv 1x1 conv + keys_bn AdaIN + values_bn AdaIN
    keys_res, values = fused_kv_adain(x, style_row, p, heads=heads, feat=F)
    keys_in = orig_pcd[:, None] + p['scale'] * keys_res.reshape(B, heads, 3, N)
    # TODO(synk): PlaneTransformer source unavailable; modeled as a learned
    # per-head linear projection 3 -> tensor_dim of the shifted coordinates.
    keys = jnp.einsum('hij,bhjn->bhin', p['proj'], keys_in)     # (B,H,dim,N)
    keys = keys.reshape(B, heads * dim, N)
    lattice = jnp.tanh(keys)
    # TODO(synk): Splat / Slice sources unavailable; modeled as bilinear
    # scatter-add / gather (implemented as one-hot matmuls inside the kernel).
    local, flat = diff_positions(lattice, heads, dim, S)
    sliced, occ_b = fused_splat_conv_slice(values, local, flat,
                                           p['conv_w'], p['conv_b'],
                                           heads=heads, feat=F, size=S)
    # fused: per-level AdaIN + ReLU (style matmuls inside the kernel)
    result = fused_adain(sliced, style_row, p['after_bn'], relu=True)
    occ = jnp.sum(occ_b) / (B * F * heads)
    stats = (occ, jnp.mean(keys), jnp.var(keys, ddof=1), keys)
    return result, stats


def multihead_union_adain_forward(x, style, orig_pcd, params):
    # shortcut is identity because model_dim_out == model_dim (PyTorch default)
    style_row = style.reshape(style.shape[0], 1, style.shape[1])
    results, stats = [], []
    for p, cfg in zip(params['attentions'], params['attn_cfgs']):
        r, s = multihead_adain_forward(x, style_row, orig_pcd, p, **cfg)
        results.append(r)
        stats.append(s)
    cat = jnp.concatenate(results, axis=1)
    # fused: union 1x1 conv + AdaIN + ReLU + residual add
    out = fused_adain(cat, style_row, params['after_bn'],
                      w=params['after_w'], residual=x, relu=True)
    return out, stats


# ----------------------------------------------------------------------------
# Deterministic parameter init (synthetic weights; no checkpoint loading)
# ----------------------------------------------------------------------------
def init_adain_params(key, n_latent, C):
    # TODO(synk): AdaIn1dUpd source unavailable; modeled as InstanceNorm1d
    # (no learned affine) modulated by style-conditioned (1+gamma, beta).
    k1, k2 = jax.random.split(key)
    return dict(
        wg=0.05 * jax.random.normal(k1, (n_latent, C), jnp.float32),
        bg=jnp.zeros((C,), jnp.float32),
        wb=0.05 * jax.random.normal(k2, (n_latent, C), jnp.float32),
        bb=jnp.zeros((C,), jnp.float32),
    )


def init_params(key, model_dim, features_dims, tensor_sizes, tensor_dims,
                heads, n_latent):
    attn_params, attn_cfgs = [], []
    keys = jax.random.split(key, len(features_dims) + 2)
    for i, (F, S, dim, H) in enumerate(zip(features_dims, tensor_sizes,
                                           tensor_dims, heads)):
        assert dim == 2  # TODO(synk): 3-D (VolTransformer/Conv3d) path not implemented
        ks = jax.random.split(keys[i], 6)
        base = jnp.concatenate([jnp.eye(dim), jnp.zeros((dim, 3 - dim))], 1)
        attn_params.append(dict(
            kv_w=0.1 * jax.random.normal(ks[0], (H * (F + 3), model_dim),
                                         jnp.float32),
            keys_bn=init_adain_params(ks[1], n_latent, H * 3),
            values_bn=init_adain_params(ks[2], n_latent, H * F),
            scale=jnp.float32(0.0),     # matches torch.tensor(0) init
            proj=jnp.tile(base[None], (H, 1, 1))
                 + 0.1 * jax.random.normal(ks[3], (H, dim, 3), jnp.float32),
            conv_w=0.1 * jax.random.normal(ks[4], (H, F, F, 3, 3), jnp.float32),
            conv_b=jnp.zeros((H, F), jnp.float32),
            after_bn=init_adain_params(ks[5], n_latent, H * F),
        ))
        attn_cfgs.append(dict(heads=H, F=F, S=S, dim=dim))
    sum_hf = sum(h * f for h, f in zip(heads, features_dims))
    return dict(
        attentions=attn_params,
        attn_cfgs=attn_cfgs,
        after_w=0.1 * jax.random.normal(keys[-2], (model_dim, sum_hf),
                                        jnp.float32),
        after_bn=init_adain_params(keys[-1], n_latent, model_dim),
    )


# ----------------------------------------------------------------------------
if __name__ == "__main__":
    B, model_dim, N, n_latent = 2, 8, 16, 16
    features_dims = (4, 2)
    tensor_sizes = (8, 8)
    tensor_dims = (2, 2)
    heads = (2, 2)

    params = init_params(jax.random.PRNGKey(42), model_dim, features_dims,
                         tensor_sizes, tensor_dims, heads, n_latent)

    kx, ks, kp = jax.random.split(jax.random.PRNGKey(0), 3)
    x = jax.random.normal(kx, (B, model_dim, N), jnp.float32)
    style = jax.random.normal(ks, (B, n_latent), jnp.float32)
    orig_pcd = jax.random.uniform(kp, (B, 3, N), jnp.float32, -1.0, 1.0)

    run = jax.jit(lambda a, b, c: multihead_union_adain_forward(a, b, c, params))
    out, stats = run(x, style, orig_pcd)
    jax.block_until_ready(out)
    assert out.shape == (B, model_dim, N)
    print("KERNEL_OK")
</pallas_src>

<mosaic_0001>
module attributes {stable_mosaic.version = 11 : i64} {
  func.func @_kv_adain_kernel(%arg0: i32, %arg1: memref<1x8x16xf32, #tpu.memory_space<vmem>>, %arg2: memref<1x1x16xf32, #tpu.memory_space<vmem>>, %arg3: memref<6x8xf32, #tpu.memory_space<vmem>>, %arg4: memref<8x8xf32, #tpu.memory_space<vmem>>, %arg5: memref<6x16xf32, #tpu.memory_space<vmem>>, %arg6: memref<6x1xf32, #tpu.memory_space<vmem>>, %arg7: memref<6x16xf32, #tpu.memory_space<vmem>>, %arg8: memref<6x1xf32, #tpu.memory_space<vmem>>, %arg9: memref<8x16xf32, #tpu.memory_space<vmem>>, %arg10: memref<8x1xf32, #tpu.memory_space<vmem>>, %arg11: memref<8x16xf32, #tpu.memory_space<vmem>>, %arg12: memref<8x1xf32, #tpu.memory_space<vmem>>, %arg13: memref<1x6x16xf32, #tpu.memory_space<vmem>>, %arg14: memref<1x8x16xf32, #tpu.memory_space<vmem>>) attributes {dimension_semantics = [#tpu.dimension_semantics<parallel>], iteration_bounds = array<i64: 2>, scalar_prefetch = 0 : i64, scratch_operands = 0 : i64, tpu.core_type = #tpu.core_type<tc>, window_params = [{transform_indices = @transform_0, window_bounds = array<i64: 1, 8, 16>}, {transform_indices = @transform_1, window_bounds = array<i64: 1, 1, 16>}, {pipeline_mode = #tpu.pipeline_mode<synchronous>, transform_indices = @transform_2, window_bounds = array<i64: 6, 8>}, {pipeline_mode = #tpu.pipeline_mode<synchronous>, transform_indices = @transform_3, window_bounds = array<i64: 8, 8>}, {pipeline_mode = #tpu.pipeline_mode<synchronous>, transform_indices = @transform_4, window_bounds = array<i64: 6, 16>}, {pipeline_mode = #tpu.pipeline_mode<synchronous>, transform_indices = @transform_5, window_bounds = array<i64: 6, 1>}, {pipeline_mode = #tpu.pipeline_mode<synchronous>, transform_indices = @transform_6, window_bounds = array<i64: 6, 16>}, {pipeline_mode = #tpu.pipeline_mode<synchronous>, transform_indices = @transform_7, window_bounds = array<i64: 6, 1>}, {pipeline_mode = #tpu.pipeline_mode<synchronous>, transform_indices = @transform_8, window_bounds = array<i64: 8, 16>}, {pipeline_mode = #tpu.pipeline_mode<synchronous>, transform_indices = @transform_9, window_bounds = array<i64: 8, 1>}, {pipeline_mode = #tpu.pipeline_mode<synchronous>, transform_indices = @transform_10, window_bounds = array<i64: 8, 16>}, {pipeline_mode = #tpu.pipeline_mode<synchronous>, transform_indices = @transform_11, window_bounds = array<i64: 8, 1>}, {transform_indices = @transform_12, window_bounds = array<i64: 1, 6, 16>}, {transform_indices = @transform_13, window_bounds = array<i64: 1, 8, 16>}]} {
    %c0 = arith.constant 0 : index
    %c0_0 = arith.constant 0 : index
    %c0_1 = arith.constant 0 : index
    %0 = vector.load %arg1[%c0, %c0_0, %c0_1] : memref<1x8x16xf32, #tpu.memory_space<vmem>>, vector<1x8x16xf32>
    %1 = vector.shape_cast %0 : vector<1x8x16xf32> to vector<8x16xf32>
    %c0_2 = arith.constant 0 : index
    %c0_3 = arith.constant 0 : index
    %c0_4 = arith.constant 0 : index
    %2 = vector.load %arg2[%c0_2, %c0_3, %c0_4] : memref<1x1x16xf32, #tpu.memory_space<vmem>>, vector<1x1x16xf32>
    %3 = vector.shape_cast %2 : vector<1x1x16xf32> to vector<1x16xf32>
    %c0_5 = arith.constant 0 : index
    %c0_6 = arith.constant 0 : index
    %4 = vector.load %arg3[%c0_5, %c0_6] : memref<6x8xf32, #tpu.memory_space<vmem>>, vector<6x8xf32>
    %cst = arith.constant dense<0.000000e+00> : vector<6x16xf32>
    %5 = tpu.matmul %4, %1, %cst {dimension_numbers = #tpu.dot_dimension_numbers<[1], [0], [0], [1], [0, 0, 1, 1], [], []>} : vector<6x8xf32>, vector<8x16xf32>, vector<6x16xf32> -> vector<6x16xf32>
    %cst_7 = arith.constant dense<0.000000e+00> : vector<6xf32>
    %6 = vector.multi_reduction <add>, %5, %cst_7 [1] : vector<6x16xf32> to vector<6xf32>
    %7 = vector.shape_cast %6 : vector<6xf32> to vector<6x1xf32>
    %cst_8 = arith.constant 1.600000e+01 : f32
    %8 = vector.broadcast %cst_8 : f32 to vector<6x1xf32>
    %9 = arith.divf %7, %8 : vector<6x1xf32>
    %10 = vector.broadcast %9 : vector<6x1xf32> to vector<6x16xf32>
    %11 = arith.subf %5, %10 : vector<6x16xf32>
    %12 = arith.mulf %11, %11 : vector<6x16xf32>
    %cst_9 = arith.constant dense<0.000000e+00> : vector<6xf32>
    %13 = vector.multi_reduction <add>, %12, %cst_9 [1] : vector<6x16xf32> to vector<6xf32>
    %14 = vector.shape_cast %13 : vector<6xf32> to vector<6x1xf32>
    %cst_10 = arith.constant 1.600000e+01 : f32
    %15 = vector.broadcast %cst_10 : f32 to vector<6x1xf32>
    %16 = arith.divf %14, %15 : vector<6x1xf32>
    %c0_11 = arith.constant 0 : index
    %c0_12 = arith.constant 0 : index
    %17 = vector.load %arg5[%c0_11, %c0_12] : memref<6x16xf32, #tpu.memory_space<vmem>>, vector<6x16xf32>
    %18 = vector.broadcast %3 : vector<1x16xf32> to vector<6x16xf32>
    %19 = arith.mulf %17, %18 : vector<6x16xf32>
    %cst_13 = arith.constant dense<0.000000e+00> : vector<6xf32>
    %20 = vector.multi_reduction <add>, %19, %cst_13 [1] : vector<6x16xf32> to vector<6xf32>
    %21 = vector.shape_cast %20 : vector<6xf32> to vector<6x1xf32>
    %cst_14 = arith.constant 1.000000e+00 : f32
    %22 = vector.broadcast %cst_14 : f32 to vector<6x1xf32>
    %23 = arith.addf %22, %21 : vector<6x1xf32>
    %c0_15 = arith.constant 0 : index
    %c0_16 = arith.constant 0 : index
    %24 = vector.load %arg6[%c0_15, %c0_16] : memref<6x1xf32, #tpu.memory_space<vmem>>, vector<6x1xf32>
    %25 = arith.addf %23, %24 : vector<6x1xf32>
    %c0_17 = arith.constant 0 : index
    %c0_18 = arith.constant 0 : index
    %26 = vector.load %arg7[%c0_17, %c0_18] : memref<6x16xf32, #tpu.memory_space<vmem>>, vector<6x16xf32>
    %27 = vector.broadcast %3 : vector<1x16xf32> to vector<6x16xf32>
    %28 = arith.mulf %26, %27 : vector<6x16xf32>
    %cst_19 = arith.constant dense<0.000000e+00> : vector<6xf32>
    %29 = vector.multi_reduction <add>, %28, %cst_19 [1] : vector<6x16xf32> to vector<6xf32>
    %30 = vector.shape_cast %29 : vector<6xf32> to vector<6x1xf32>
    %c0_20 = arith.constant 0 : index
    %c0_21 = arith.constant 0 : index
    %31 = vector.load %arg8[%c0_20, %c0_21] : memref<6x1xf32, #tpu.memory_space<vmem>>, vector<6x1xf32>
    %32 = arith.addf %30, %31 : vector<6x1xf32>
    %33 = vector.broadcast %9 : vector<6x1xf32> to vector<6x16xf32>
    %34 = arith.subf %5, %33 : vector<6x16xf32>
    %35 = vector.broadcast %25 : vector<6x1xf32> to vector<6x16xf32>
    %36 = arith.mulf %35, %34 : vector<6x16xf32>
    %cst_22 = arith.constant 9.99999974E-6 : f32
    %37 = vector.broadcast %cst_22 : f32 to vector<6x1xf32>
    %38 = arith.addf %16, %37 : vector<6x1xf32>
    %39 = math.rsqrt %38 : vector<6x1xf32>
    %40 = vector.broadcast %39 : vector<6x1xf32> to vector<6x16xf32>
    %41 = arith.mulf %36, %40 : vector<6x16xf32>
    %42 = vector.broadcast %32 : vector<6x1xf32> to vector<6x16xf32>
    %43 = arith.addf %41, %42 : vector<6x16xf32>
    %c0_23 = arith.constant 0 : index
    %c0_24 = arith.constant 0 : index
    %c0_25 = arith.constant 0 : index
    %44 = vector.load %arg13[%c0_23, %c0_24, %c0_25] : memref<1x6x16xf32, #tpu.memory_space<vmem>>, vector<1x6x16xf32>
    %45 = vector.shape_cast %44 : vector<1x6x16xf32> to vector<6x16xf32>
    %46 = vector.shape_cast %43 : vector<6x16xf32> to vector<1x6x16xf32>
    tpu.vector_store %arg13[%c0_23, %c0_24, %c0_25], %46 {strides = array<i32>} : memref<1x6x16xf32, #tpu.memory_space<vmem>>, vector<1x6x16xf32>,
    %c0_26 = arith.constant 0 : index
    %c0_27 = arith.constant 0 : index
    %47 = vector.load %arg4[%c0_26, %c0_27] : memref<8x8xf32, #tpu.memory_space<vmem>>, vector<8x8xf32>
    %cst_28 = arith.constant dense<0.000000e+00> : vector<8x16xf32>
    %48 = tpu.matmul %47, %1, %cst_28 {dimension_numbers = #tpu.dot_dimension_numbers<[1], [0], [0], [1], [0, 0, 1, 1], [], []>} : vector<8x8xf32>, vector<8x16xf32>, vector<8x16xf32> -> vector<8x16xf32>
    %cst_29 = arith.constant dense<0.000000e+00> : vector<8xf32>
    %49 = vector.multi_reduction <add>, %48, %cst_29 [1] : vector<8x16xf32> to vector<8xf32>
    %50 = vector.shape_cast %49 : vector<8xf32> to vector<8x1xf32>
    %cst_30 = arith.constant 1.600000e+01 : f32
    %51 = vector.broadcast %cst_30 : f32 to vector<8x1xf32>
    %52 = arith.divf %50, %51 : vector<8x1xf32>
    %53 = vector.broadcast %52 : vector<8x1xf32> to vector<8x16xf32>
    %54 = arith.subf %48, %53 : vector<8x16xf32>
    %55 = arith.mulf %54, %54 : vector<8x16xf32>
    %cst_31 = arith.constant dense<0.000000e+00> : vector<8xf32>
    %56 = vector.multi_reduction <add>, %55, %cst_31 [1] : vector<8x16xf32> to vector<8xf32>
    %57 = vector.shape_cast %56 : vector<8xf32> to vector<8x1xf32>
    %cst_32 = arith.constant 1.600000e+01 : f32
    %58 = vector.broadcast %cst_32 : f32 to vector<8x1xf32>
    %59 = arith.divf %57, %58 : vector<8x1xf32>
    %c0_33 = arith.constant 0 : index
    %c0_34 = arith.constant 0 : index
    %60 = vector.load %arg9[%c0_33, %c0_34] : memref<8x16xf32, #tpu.memory_space<vmem>>, vector<8x16xf32>
    %61 = vector.broadcast %3 : vector<1x16xf32> to vector<8x16xf32>
    %62 = arith.mulf %60, %61 : vector<8x16xf32>
    %cst_35 = arith.constant dense<0.000000e+00> : vector<8xf32>
    %63 = vector.multi_reduction <add>, %62, %cst_35 [1] : vector<8x16xf32> to vector<8xf32>
    %64 = vector.shape_cast %63 : vector<8xf32> to vector<8x1xf32>
    %cst_36 = arith.constant 1.000000e+00 : f32
    %65 = vector.broadcast %cst_36 : f32 to vector<8x1xf32>
    %66 = arith.addf %65, %64 : vector<8x1xf32>
    %c0_37 = arith.constant 0 : index
    %c0_38 = arith.constant 0 : index
    %67 = vector.load %arg10[%c0_37, %c0_38] : memref<8x1xf32, #tpu.memory_space<vmem>>, vector<8x1xf32>
    %68 = arith.addf %66, %67 : vector<8x1xf32>
    %c0_39 = arith.constant 0 : index
    %c0_40 = arith.constant 0 : index
    %69 = vector.load %arg11[%c0_39, %c0_40] : memref<8x16xf32, #tpu.memory_space<vmem>>, vector<8x16xf32>
    %70 = vector.broadcast %3 : vector<1x16xf32> to vector<8x16xf32>
    %71 = arith.mulf %69, %70 : vector<8x16xf32>
    %cst_41 = arith.constant dense<0.000000e+00> : vector<8xf32>
    %72 = vector.multi_reduction <add>, %71, %cst_41 [1] : vector<8x16xf32> to vector<8xf32>
    %73 = vector.shape_cast %72 : vector<8xf32> to vector<8x1xf32>
    %c0_42 = arith.constant 0 : index
    %c0_43 = arith.constant 0 : index
    %74 = vector.load %arg12[%c0_42, %c0_43] : memref<8x1xf32, #tpu.memory_space<vmem>>, vector<8x1xf32>
    %75 = arith.addf %73, %74 : vector<8x1xf32>
    %76 = vector.broadcast %52 : vector<8x1xf32> to vector<8x16xf32>
    %77 = arith.subf %48, %76 : vector<8x16xf32>
    %78 = vector.broadcast %68 : vector<8x1xf32> to vector<8x16xf32>
    %79 = arith.mulf %78, %77 : vector<8x16xf32>
    %cst_44 = arith.constant 9.99999974E-6 : f32
    %80 = vector.broadcast %cst_44 : f32 to vector<8x1xf32>
    %81 = arith.addf %59, %80 : vector<8x1xf32>
    %82 = math.rsqrt %81 : vector<8x1xf32>
    %83 = vector.broadcast %82 : vector<8x1xf32> to vector<8x16xf32>
    %84 = arith.mulf %79, %83 : vector<8x16xf32>
    %85 = vector.broadcast %75 : vector<8x1xf32> to vector<8x16xf32>
    %86 = arith.addf %84, %85 : vector<8x16xf32>
    %c0_45 = arith.constant 0 : index
    %c0_46 = arith.constant 0 : index
    %c0_47 = arith.constant 0 : index
    %87 = vector.load %arg14[%c0_45, %c0_46, %c0_47] : memref<1x8x16xf32, #tpu.memory_space<vmem>>, vector<1x8x16xf32>
    %88 = vector.shape_cast %87 : vector<1x8x16xf32> to vector<8x16xf32>
    %89 = vector.shape_cast %86 : vector<8x16xf32> to vector<1x8x16xf32>
    tpu.vector_store %arg14[%c0_45, %c0_46, %c0_47], %89 {strides = array<i32>} : memref<1x8x16xf32, #tpu.memory_space<vmem>>, vector<1x8x16xf32>,
    return
  }
  func.func @transform_0(%arg0: i32) -> (i32, i32, i32) {
    %c0_i32 = arith.constant 0 : i32
    %c0_i32_0 = arith.constant 0 : i32
    %c0_i32_1 = arith.constant 0 : i32
    return %arg0, %c0_i32, %c0_i32_0 : i32, i32, i32
  }
  func.func @transform_1(%arg0: i32) -> (i32, i32, i32) {
    %c0_i32 = arith.constant 0 : i32
    %c0_i32_0 = arith.constant 0 : i32
    %c0_i32_1 = arith.constant 0 : i32
    return %arg0, %c0_i32, %c0_i32_0 : i32, i32, i32
  }
  func.func @transform_2(%arg0: i32) -> (i32, i32) {
    %c0_i32 = arith.constant 0 : i32
    %c0_i32_0 = arith.constant 0 : i32
    %c0_i32_1 = arith.constant 0 : i32
    return %c0_i32, %c0_i32_0 : i32, i32
  }
  func.func @transform_3(%arg0: i32) -> (i32, i32) {
    %c0_i32 = arith.constant 0 : i32
    %c0_i32_0 = arith.constant 0 : i32
    %c0_i32_1 = arith.constant 0 : i32
    return %c0_i32, %c0_i32_0 : i32, i32
  }
  func.func @transform_4(%arg0: i32) -> (i32, i32) {
    %c0_i32 = arith.constant 0 : i32
    %c0_i32_0 = arith.constant 0 : i32
    %c0_i32_1 = arith.constant 0 : i32
    return %c0_i32, %c0_i32_0 : i32, i32
  }
  func.func @transform_5(%arg0: i32) -> (i32, i32) {
    %c0_i32 = arith.constant 0 : i32
    %c0_i32_0 = arith.constant 0 : i32
    %c0_i32_1 = arith.constant 0 : i32
    return %c0_i32, %c0_i32_0 : i32, i32
  }
  func.func @transform_6(%arg0: i32) -> (i32, i32) {
    %c0_i32 = arith.constant 0 : i32
    %c0_i32_0 = arith.constant 0 : i32
    %c0_i32_1 = arith.constant 0 : i32
    return %c0_i32, %c0_i32_0 : i32, i32
  }
  func.func @transform_7(%arg0: i32) -> (i32, i32) {
    %c0_i32 = arith.constant 0 : i32
    %c0_i32_0 = arith.constant 0 : i32
    %c0_i32_1 = arith.constant 0 : i32
    return %c0_i32, %c0_i32_0 : i32, i32
  }
  func.func @transform_8(%arg0: i32) -> (i32, i32) {
    %c0_i32 = arith.constant 0 : i32
    %c0_i32_0 = arith.constant 0 : i32
    %c0_i32_1 = arith.constant 0 : i32
    return %c0_i32, %c0_i32_0 : i32, i32
  }
  func.func @transform_9(%arg0: i32) -> (i32, i32) {
    %c0_i32 = arith.constant 0 : i32
    %c0_i32_0 = arith.constant 0 : i32
    %c0_i32_1 = arith.constant 0 : i32
    return %c0_i32, %c0_i32_0 : i32, i32
  }
  func.func @transform_10(%arg0: i32) -> (i32, i32) {
    %c0_i32 = arith.constant 0 : i32
    %c0_i32_0 = arith.constant 0 : i32
    %c0_i32_1 = arith.constant 0 : i32
    return %c0_i32, %c0_i32_0 : i32, i32
  }
  func.func @transform_11(%arg0: i32) -> (i32, i32) {
    %c0_i32 = arith.constant 0 : i32
    %c0_i32_0 = arith.constant 0 : i32
    %c0_i32_1 = arith.constant 0 : i32
    return %c0_i32, %c0_i32_0 : i32, i32
  }
  func.func @transform_12(%arg0: i32) -> (i32, i32, i32) {
    %c0_i32 = arith.constant 0 : i32
    %c0_i32_0 = arith.constant 0 : i32
    %c0_i32_1 = arith.constant 0 : i32
    return %arg0, %c0_i32, %c0_i32_0 : i32, i32, i32
  }
  func.func @transform_13(%arg0: i32) -> (i32, i32, i32) {
    %c0_i32 = arith.constant 0 : i32
    %c0_i32_0 = arith.constant 0 : i32
    %c0_i32_1 = arith.constant 0 : i32
    return %arg0, %c0_i32, %c0_i32_0 : i32, i32, i32
  }
}

module attributes {stable_mosaic.version = 11 : i64} {
  func.func @_kv_adain_kernel(%arg0: i32, %arg1: memref<1x8x16xf32, #tpu.memory_space<vmem>>, %arg2: memref<1x1x16xf32, #tpu.memory_space<vmem>>, %arg3: memref<6x8xf32, #tpu.memory_space<vmem>>, %arg4: memref<4x8xf32, #tpu.memory_space<vmem>>, %arg5: memref<6x16xf32, #tpu.memory_space<vmem>>, %arg6: memref<6x1xf32, #tpu.memory_space<vmem>>, %arg7: memref<6x16xf32, #tpu.memory_space<vmem>>, %arg8: memref<6x1xf32, #tpu.memory_space<vmem>>, %arg9: memref<4x16xf32, #tpu.memory_space<vmem>>, %arg10: memref<4x1xf32, #tpu.memory_space<vmem>>, %arg11: memref<4x16xf32, #tpu.memory_space<vmem>>, %arg12: memref<4x1xf32, #tpu.memory_space<vmem>>, %arg13: memref<1x6x16xf32, #tpu.memory_space<vmem>>, %arg14: memref<1x4x16xf32, #tpu.memory_space<vmem>>) attributes {dimension_semantics = [#tpu.dimension_semantics<parallel>], iteration_bounds = array<i64: 2>, scalar_prefetch = 0 : i64, scratch_operands = 0 : i64, tpu.core_type = #tpu.core_type<tc>, window_params = [{transform_indices = @transform_0, window_bounds = array<i64: 1, 8, 16>}, {transform_indices = @transform_1, window_bounds = array<i64: 1, 1, 16>}, {pipeline_mode = #tpu.pipeline_mode<synchronous>, transform_indices = @transform_2, window_bounds = array<i64: 6, 8>}, {pipeline_mode = #tpu.pipeline_mode<synchronous>, transform_indices = @transform_3, window_bounds = array<i64: 4, 8>}, {pipeline_mode = #tpu.pipeline_mode<synchronous>, transform_indices = @transform_4, window_bounds = array<i64: 6, 16>}, {pipeline_mode = #tpu.pipeline_mode<synchronous>, transform_indices = @transform_5, window_bounds = array<i64: 6, 1>}, {pipeline_mode = #tpu.pipeline_mode<synchronous>, transform_indices = @transform_6, window_bounds = array<i64: 6, 16>}, {pipeline_mode = #tpu.pipeline_mode<synchronous>, transform_indices = @transform_7, window_bounds = array<i64: 6, 1>}, {pipeline_mode = #tpu.pipeline_mode<synchronous>, transform_indices = @transform_8, window_bounds = array<i64: 4, 16>}, {pipeline_mode = #tpu.pipeline_mode<synchronous>, transform_indices = @transform_9, window_bounds = array<i64: 4, 1>}, {pipeline_mode = #tpu.pipeline_mode<synchronous>, transform_indices = @transform_10, window_bounds = array<i64: 4, 16>}, {pipeline_mode = #tpu.pipeline_mode<synchronous>, transform_indices = @transform_11, window_bounds = array<i64: 4, 1>}, {transform_indices = @transform_12, window_bounds = array<i64: 1, 6, 16>}, {transform_indices = @transform_13, window_bounds = array<i64: 1, 4, 16>}]} {
    %c0 = arith.constant 0 : index
    %c0_0 = arith.constant 0 : index
    %c0_1 = arith.constant 0 : index
    %0 = vector.load %arg1[%c0, %c0_0, %c0_1] : memref<1x8x16xf32, #tpu.memory_space<vmem>>, vector<1x8x16xf32>
    %1 = vector.shape_cast %0 : vector<1x8x16xf32> to vector<8x16xf32>
    %c0_2 = arith.constant 0 : index
    %c0_3 = arith.constant 0 : index
    %c0_4 = arith.constant 0 : index
    %2 = vector.load %arg2[%c0_2, %c0_3, %c0_4] : memref<1x1x16xf32, #tpu.memory_space<vmem>>, vector<1x1x16xf32>
    %3 = vector.shape_cast %2 : vector<1x1x16xf32> to vector<1x16xf32>
    %c0_5 = arith.constant 0 : index
    %c0_6 = arith.constant 0 : index
    %4 = vector.load %arg3[%c0_5, %c0_6] : memref<6x8xf32, #tpu.memory_space<vmem>>, vector<6x8xf32>
    %cst = arith.constant dense<0.000000e+00> : vector<6x16xf32>
    %5 = tpu.matmul %4, %1, %cst {dimension_numbers = #tpu.dot_dimension_numbers<[1], [0], [0], [1], [0, 0, 1, 1], [], []>} : vector<6x8xf32>, vector<8x16xf32>, vector<6x16xf32> -> vector<6x16xf32>
    %cst_7 = arith.constant dense<0.000000e+00> : vector<6xf32>
    %6 = vector.multi_reduction <add>, %5, %cst_7 [1] : vector<6x16xf32> to vector<6xf32>
    %7 = vector.shape_cast %6 : vector<6xf32> to vector<6x1xf32>
    %cst_8 = arith.constant 1.600000e+01 : f32
    %8 = vector.broadcast %cst_8 : f32 to vector<6x1xf32>
    %9 = arith.divf %7, %8 : vector<6x1xf32>
    %10 = vector.broadcast %9 : vector<6x1xf32> to vector<6x16xf32>
    %11 = arith.subf %5, %10 : vector<6x16xf32>
    %12 = arith.mulf %11, %11 : vector<6x16xf32>
    %cst_9 = arith.constant dense<0.000000e+00> : vector<6xf32>
    %13 = vector.multi_reduction <add>, %12, %cst_9 [1] : vector<6x16xf32> to vector<6xf32>
    %14 = vector.shape_cast %13 : vector<6xf32> to vector<6x1xf32>
    %cst_10 = arith.constant 1.600000e+01 : f32
    %15 = vector.broadcast %cst_10 : f32 to vector<6x1xf32>
    %16 = arith.divf %14, %15 : vector<6x1xf32>
    %c0_11 = arith.constant 0 : index
    %c0_12 = arith.constant 0 : index
    %17 = vector.load %arg5[%c0_11, %c0_12] : memref<6x16xf32, #tpu.memory_space<vmem>>, vector<6x16xf32>
    %18 = vector.broadcast %3 : vector<1x16xf32> to vector<6x16xf32>
    %19 = arith.mulf %17, %18 : vector<6x16xf32>
    %cst_13 = arith.constant dense<0.000000e+00> : vector<6xf32>
    %20 = vector.multi_reduction <add>, %19, %cst_13 [1] : vector<6x16xf32> to vector<6xf32>
    %21 = vector.shape_cast %20 : vector<6xf32> to vector<6x1xf32>
    %cst_14 = arith.constant 1.000000e+00 : f32
    %22 = vector.broadcast %cst_14 : f32 to vector<6x1xf32>
    %23 = arith.addf %22, %21 : vector<6x1xf32>
    %c0_15 = arith.constant 0 : index
    %c0_16 = arith.constant 0 : index
    %24 = vector.load %arg6[%c0_15, %c0_16] : memref<6x1xf32, #tpu.memory_space<vmem>>, vector<6x1xf32>
    %25 = arith.addf %23, %24 : vector<6x1xf32>
    %c0_17 = arith.constant 0 : index
    %c0_18 = arith.constant 0 : index
    %26 = vector.load %arg7[%c0_17, %c0_18] : memref<6x16xf32, #tpu.memory_space<vmem>>, vector<6x16xf32>
    %27 = vector.broadcast %3 : vector<1x16xf32> to vector<6x16xf32>
    %28 = arith.mulf %26, %27 : vector<6x16xf32>
    %cst_19 = arith.constant dense<0.000000e+00> : vector<6xf32>
    %29 = vector.multi_reduction <add>, %28, %cst_19 [1] : vector<6x16xf32> to vector<6xf32>
    %30 = vector.shape_cast %29 : vector<6xf32> to vector<6x1xf32>
    %c0_20 = arith.constant 0 : index
    %c0_21 = arith.constant 0 : index
    %31 = vector.load %arg8[%c0_20, %c0_21] : memref<6x1xf32, #tpu.memory_space<vmem>>, vector<6x1xf32>
    %32 = arith.addf %30, %31 : vector<6x1xf32>
    %33 = vector.broadcast %9 : vector<6x1xf32> to vector<6x16xf32>
    %34 = arith.subf %5, %33 : vector<6x16xf32>
    %35 = vector.broadcast %25 : vector<6x1xf32> to vector<6x16xf32>
    %36 = arith.mulf %35, %34 : vector<6x16xf32>
    %cst_22 = arith.constant 9.99999974E-6 : f32
    %37 = vector.broadcast %cst_22 : f32 to vector<6x1xf32>
    %38 = arith.addf %16, %37 : vector<6x1xf32>
    %39 = math.rsqrt %38 : vector<6x1xf32>
    %40 = vector.broadcast %39 : vector<6x1xf32> to vector<6x16xf32>
    %41 = arith.mulf %36, %40 : vector<6x16xf32>
    %42 = vector.broadcast %32 : vector<6x1xf32> to vector<6x16xf32>
    %43 = arith.addf %41, %42 : vector<6x16xf32>
    %c0_23 = arith.constant 0 : index
    %c0_24 = arith.constant 0 : index
    %c0_25 = arith.constant 0 : index
    %44 = vector.load %arg13[%c0_23, %c0_24, %c0_25] : memref<1x6x16xf32, #tpu.memory_space<vmem>>, vector<1x6x16xf32>
    %45 = vector.shape_cast %44 : vector<1x6x16xf32> to vector<6x16xf32>
    %46 = vector.shape_cast %43 : vector<6x16xf32> to vector<1x6x16xf32>
    tpu.vector_store %arg13[%c0_23, %c0_24, %c0_25], %46 {strides = array<i32>} : memref<1x6x16xf32, #tpu.memory_space<vmem>>, vector<1x6x16xf32>,
    %c0_26 = arith.constant 0 : index
    %c0_27 = arith.constant 0 : index
    %47 = vector.load %arg4[%c0_26, %c0_27] : memref<4x8xf32, #tpu.memory_space<vmem>>, vector<4x8xf32>
    %cst_28 = arith.constant dense<0.000000e+00> : vector<4x16xf32>
    %48 = tpu.matmul %47, %1, %cst_28 {dimension_numbers = #tpu.dot_dimension_numbers<[1], [0], [0], [1], [0, 0, 1, 1], [], []>} : vector<4x8xf32>, vector<8x16xf32>, vector<4x16xf32> -> vector<4x16xf32>
    %cst_29 = arith.constant dense<0.000000e+00> : vector<4xf32>
    %49 = vector.multi_reduction <add>, %48, %cst_29 [1] : vector<4x16xf32> to vector<4xf32>
    %50 = vector.shape_cast %49 : vector<4xf32> to vector<4x1xf32>
    %cst_30 = arith.constant 1.600000e+01 : f32
    %51 = vector.broadcast %cst_30 : f32 to vector<4x1xf32>
    %52 = arith.divf %50, %51 : vector<4x1xf32>
    %53 = vector.broadcast %52 : vector<4x1xf32> to vector<4x16xf32>
    %54 = arith.subf %48, %53 : vector<4x16xf32>
    %55 = arith.mulf %54, %54 : vector<4x16xf32>
    %cst_31 = arith.constant dense<0.000000e+00> : vector<4xf32>
    %56 = vector.multi_reduction <add>, %55, %cst_31 [1] : vector<4x16xf32> to vector<4xf32>
    %57 = vector.shape_cast %56 : vector<4xf32> to vector<4x1xf32>
    %cst_32 = arith.constant 1.600000e+01 : f32
    %58 = vector.broadcast %cst_32 : f32 to vector<4x1xf32>
    %59 = arith.divf %57, %58 : vector<4x1xf32>
    %c0_33 = arith.constant 0 : index
    %c0_34 = arith.constant 0 : index
    %60 = vector.load %arg9[%c0_33, %c0_34] : memref<4x16xf32, #tpu.memory_space<vmem>>, vector<4x16xf32>
    %61 = vector.broadcast %3 : vector<1x16xf32> to vector<4x16xf32>
    %62 = arith.mulf %60, %61 : vector<4x16xf32>
    %cst_35 = arith.constant dense<0.000000e+00> : vector<4xf32>
    %63 = vector.multi_reduction <add>, %62, %cst_35 [1] : vector<4x16xf32> to vector<4xf32>
    %64 = vector.shape_cast %63 : vector<4xf32> to vector<4x1xf32>
    %cst_36 = arith.constant 1.000000e+00 : f32
    %65 = vector.broadcast %cst_36 : f32 to vector<4x1xf32>
    %66 = arith.addf %65, %64 : vector<4x1xf32>
    %c0_37 = arith.constant 0 : index
    %c0_38 = arith.constant 0 : index
    %67 = vector.load %arg10[%c0_37, %c0_38] : memref<4x1xf32, #tpu.memory_space<vmem>>, vector<4x1xf32>
    %68 = arith.addf %66, %67 : vector<4x1xf32>
    %c0_39 = arith.constant 0 : index
    %c0_40 = arith.constant 0 : index
    %69 = vector.load %arg11[%c0_39, %c0_40] : memref<4x16xf32, #tpu.memory_space<vmem>>, vector<4x16xf32>
    %70 = vector.broadcast %3 : vector<1x16xf32> to vector<4x16xf32>
    %71 = arith.mulf %69, %70 : vector<4x16xf32>
    %cst_41 = arith.constant dense<0.000000e+00> : vector<4xf32>
    %72 = vector.multi_reduction <add>, %71, %cst_41 [1] : vector<4x16xf32> to vector<4xf32>
    %73 = vector.shape_cast %72 : vector<4xf32> to vector<4x1xf32>
    %c0_42 = arith.constant 0 : index
    %c0_43 = arith.constant 0 : index
    %74 = vector.load %arg12[%c0_42, %c0_43] : memref<4x1xf32, #tpu.memory_space<vmem>>, vector<4x1xf32>
    %75 = arith.addf %73, %74 : vector<4x1xf32>
    %76 = vector.broadcast %52 : vector<4x1xf32> to vector<4x16xf32>
    %77 = arith.subf %48, %76 : vector<4x16xf32>
    %78 = vector.broadcast %68 : vector<4x1xf32> to vector<4x16xf32>
    %79 = arith.mulf %78, %77 : vector<4x16xf32>
    %cst_44 = arith.constant 9.99999974E-6 : f32
    %80 = vector.broadcast %cst_44 : f32 to vector<4x1xf32>
    %81 = arith.addf %59, %80 : vector<4x1xf32>
    %82 = math.rsqrt %81 : vector<4x1xf32>
    %83 = vector.broadcast %82 : vector<4x1xf32> to vector<4x16xf32>
    %84 = arith.mulf %79, %83 : vector<4x16xf32>
    %85 = vector.broadcast %75 : vector<4x1xf32> to vector<4x16xf32>
    %86 = arith.addf %84, %85 : vector<4x16xf32>
    %c0_45 = arith.constant 0 : index
    %c0_46 = arith.constant 0 : index
    %c0_47 = arith.constant 0 : index
    %87 = vector.load %arg14[%c0_45, %c0_46, %c0_47] : memref<1x4x16xf32, #tpu.memory_space<vmem>>, vector<1x4x16xf32>
    %88 = vector.shape_cast %87 : vector<1x4x16xf32> to vector<4x16xf32>
    %89 = vector.shape_cast %86 : vector<4x16xf32> to vector<1x4x16xf32>
    tpu.vector_store %arg14[%c0_45, %c0_46, %c0_47], %89 {strides = array<i32>} : memref<1x4x16xf32, #tpu.memory_space<vmem>>, vector<1x4x16xf32>,
    return
  }
  func.func @transform_0(%arg0: i32) -> (i32, i32, i32) {
    %c0_i32 = arith.constant 0 : i32
    %c0_i32_0 = arith.constant 0 : i32
    %c0_i32_1 = arith.constant 0 : i32
    return %arg0, %c0_i32, %c0_i32_0 : i32, i32, i32
  }
  func.func @transform_1(%arg0: i32) -> (i32, i32, i32) {
    %c0_i32 = arith.constant 0 : i32
    %c0_i32_0 = arith.constant 0 : i32
    %c0_i32_1 = arith.constant 0 : i32
    return %arg0, %c0_i32, %c0_i32_0 : i32, i32, i32
  }
  func.func @transform_2(%arg0: i32) -> (i32, i32) {
    %c0_i32 = arith.constant 0 : i32
    %c0_i32_0 = arith.constant 0 : i32
    %c0_i32_1 = arith.constant 0 : i32
    return %c0_i32, %c0_i32_0 : i32, i32
  }
  func.func @transform_3(%arg0: i32) -> (i32, i32) {
    %c0_i32 = arith.constant 0 : i32
    %c0_i32_0 = arith.constant 0 : i32
    %c0_i32_1 = arith.constant 0 : i32
    return %c0_i32, %c0_i32_0 : i32, i32
  }
  func.func @transform_4(%arg0: i32) -> (i32, i32) {
    %c0_i32 = arith.constant 0 : i32
    %c0_i32_0 = arith.constant 0 : i32
    %c0_i32_1 = arith.constant 0 : i32
    return %c0_i32, %c0_i32_0 : i32, i32
  }
  func.func @transform_5(%arg0: i32) -> (i32, i32) {
    %c0_i32 = arith.constant 0 : i32
    %c0_i32_0 = arith.constant 0 : i32
    %c0_i32_1 = arith.constant 0 : i32
    return %c0_i32, %c0_i32_0 : i32, i32
  }
  func.func @transform_6(%arg0: i32) -> (i32, i32) {
    %c0_i32 = arith.constant 0 : i32
    %c0_i32_0 = arith.constant 0 : i32
    %c0_i32_1 = arith.constant 0 : i32
    return %c0_i32, %c0_i32_0 : i32, i32
  }
  func.func @transform_7(%arg0: i32) -> (i32, i32) {
    %c0_i32 = arith.constant 0 : i32
    %c0_i32_0 = arith.constant 0 : i32
    %c0_i32_1 = arith.constant 0 : i32
    return %c0_i32, %c0_i32_0 : i32, i32
  }
  func.func @transform_8(%arg0: i32) -> (i32, i32) {
    %c0_i32 = arith.constant 0 : i32
    %c0_i32_0 = arith.constant 0 : i32
    %c0_i32_1 = arith.constant 0 : i32
    return %c0_i32, %c0_i32_0 : i32, i32
  }
  func.func @transform_9(%arg0: i32) -> (i32, i32) {
    %c0_i32 = arith.constant 0 : i32
    %c0_i32_0 = arith.constant 0 : i32
    %c0_i32_1 = arith.constant 0 : i32
    return %c0_i32, %c0_i32_0 : i32, i32
  }
  func.func @transform_10(%arg0: i32) -> (i32, i32) {
    %c0_i32 = arith.constant 0 : i32
    %c0_i32_0 = arith.constant 0 : i32
    %c0_i32_1 = arith.constant 0 : i32
    return %c0_i32, %c0_i32_0 : i32, i32
  }
  func.func @transform_11(%arg0: i32) -> (i32, i32) {
    %c0_i32 = arith.constant 0 : i32
    %c0_i32_0 = arith.constant 0 : i32
    %c0_i32_1 = arith.constant 0 : i32
    return %c0_i32, %c0_i32_0 : i32, i32
  }
  func.func @transform_12(%arg0: i32) -> (i32, i32, i32) {
    %c0_i32 = arith.constant 0 : i32
    %c0_i32_0 = arith.constant 0 : i32
    %c0_i32_1 = arith.constant 0 : i32
    return %arg0, %c0_i32, %c0_i32_0 : i32, i32, i32
  }
  func.func @transform_13(%arg0: i32) -> (i32, i32, i32) {
    %c0_i32 = arith.constant 0 : i32
    %c0_i32_0 = arith.constant 0 : i32
    %c0_i32_1 = arith.constant 0 : i32
    return %arg0, %c0_i32, %c0_i32_0 : i32, i32, i32
  }
}

module attributes {stable_mosaic.version = 11 : i64} {
  func.func @kernel(%arg0: i32, %arg1: memref<1x8x16xf32, #tpu.memory_space<vmem>>, %arg2: memref<1x1x16xf32, #tpu.memory_space<vmem>>, %arg3: memref<8x16xf32, #tpu.memory_space<vmem>>, %arg4: memref<8x1xf32, #tpu.memory_space<vmem>>, %arg5: memref<8x16xf32, #tpu.memory_space<vmem>>, %arg6: memref<8x1xf32, #tpu.memory_space<vmem>>, %arg7: memref<1x8x16xf32, #tpu.memory_space<vmem>>) attributes {dimension_semantics = [#tpu.dimension_semantics<parallel>], iteration_bounds = array<i64: 2>, scalar_prefetch = 0 : i64, scratch_operands = 0 : i64, tpu.core_type = #tpu.core_type<tc>, window_params = [{transform_indices = @transform_0, window_bounds = array<i64: 1, 8, 16>}, {transform_indices = @transform_1, window_bounds = array<i64: 1, 1, 16>}, {pipeline_mode = #tpu.pipeline_mode<synchronous>, transform_indices = @transform_2, window_bounds = array<i64: 8, 16>}, {pipeline_mode = #tpu.pipeline_mode<synchronous>, transform_indices = @transform_3, window_bounds = array<i64: 8, 1>}, {pipeline_mode = #tpu.pipeline_mode<synchronous>, transform_indices = @transform_4, window_bounds = array<i64: 8, 16>}, {pipeline_mode = #tpu.pipeline_mode<synchronous>, transform_indices = @transform_5, window_bounds = array<i64: 8, 1>}, {transform_indices = @transform_6, window_bounds = array<i64: 1, 8, 16>}]} {
    %c0 = arith.constant 0 : index
    %c0_0 = arith.constant 0 : index
    %c0_1 = arith.constant 0 : index
    %0 = vector.load %arg1[%c0, %c0_0, %c0_1] : memref<1x8x16xf32, #tpu.memory_space<vmem>>, vector<1x8x16xf32>
    %1 = vector.shape_cast %0 : vector<1x8x16xf32> to vector<8x16xf32>
    %c0_2 = arith.constant 0 : index
    %c0_3 = arith.constant 0 : index
    %c0_4 = arith.constant 0 : index
    %2 = vector.load %arg2[%c0_2, %c0_3, %c0_4] : memref<1x1x16xf32, #tpu.memory_space<vmem>>, vector<1x1x16xf32>
    %3 = vector.shape_cast %2 : vector<1x1x16xf32> to vector<1x16xf32>
    %cst = arith.constant dense<0.000000e+00> : vector<8xf32>
    %4 = vector.multi_reduction <add>, %1, %cst [1] : vector<8x16xf32> to vector<8xf32>
    %5 = vector.shape_cast %4 : vector<8xf32> to vector<8x1xf32>
    %cst_5 = arith.constant 1.600000e+01 : f32
    %6 = vector.broadcast %cst_5 : f32 to vector<8x1xf32>
    %7 = arith.divf %5, %6 : vector<8x1xf32>
    %8 = vector.broadcast %7 : vector<8x1xf32> to vector<8x16xf32>
    %9 = arith.subf %1, %8 : vector<8x16xf32>
    %10 = arith.mulf %9, %9 : vector<8x16xf32>
    %cst_6 = arith.constant dense<0.000000e+00> : vector<8xf32>
    %11 = vector.multi_reduction <add>, %10, %cst_6 [1] : vector<8x16xf32> to vector<8xf32>
    %12 = vector.shape_cast %11 : vector<8xf32> to vector<8x1xf32>
    %cst_7 = arith.constant 1.600000e+01 : f32
    %13 = vector.broadcast %cst_7 : f32 to vector<8x1xf32>
    %14 = arith.divf %12, %13 : vector<8x1xf32>
    %c0_8 = arith.constant 0 : index
    %c0_9 = arith.constant 0 : index
    %15 = vector.load %arg3[%c0_8, %c0_9] : memref<8x16xf32, #tpu.memory_space<vmem>>, vector<8x16xf32>
    %16 = vector.broadcast %3 : vector<1x16xf32> to vector<8x16xf32>
    %17 = arith.mulf %15, %16 : vector<8x16xf32>
    %cst_10 = arith.constant dense<0.000000e+00> : vector<8xf32>
    %18 = vector.multi_reduction <add>, %17, %cst_10 [1] : vector<8x16xf32> to vector<8xf32>
    %19 = vector.shape_cast %18 : vector<8xf32> to vector<8x1xf32>
    %cst_11 = arith.constant 1.000000e+00 : f32
    %20 = vector.broadcast %cst_11 : f32 to vector<8x1xf32>
    %21 = arith.addf %20, %19 : vector<8x1xf32>
    %c0_12 = arith.constant 0 : index
    %c0_13 = arith.constant 0 : index
    %22 = vector.load %arg4[%c0_12, %c0_13] : memref<8x1xf32, #tpu.memory_space<vmem>>, vector<8x1xf32>
    %23 = arith.addf %21, %22 : vector<8x1xf32>
    %c0_14 = arith.constant 0 : index
    %c0_15 = arith.constant 0 : index
    %24 = vector.load %arg5[%c0_14, %c0_15] : memref<8x16xf32, #tpu.memory_space<vmem>>, vector<8x16xf32>
    %25 = vector.broadcast %3 : vector<1x16xf32> to vector<8x16xf32>
    %26 = arith.mulf %24, %25 : vector<8x16xf32>
    %cst_16 = arith.constant dense<0.000000e+00> : vector<8xf32>
    %27 = vector.multi_reduction <add>, %26, %cst_16 [1] : vector<8x16xf32> to vector<8xf32>
    %28 = vector.shape_cast %27 : vector<8xf32> to vector<8x1xf32>
    %c0_17 = arith.constant 0 : index
    %c0_18 = arith.constant 0 : index
    %29 = vector.load %arg6[%c0_17, %c0_18] : memref<8x1xf32, #tpu.memory_space<vmem>>, vector<8x1xf32>
    %30 = arith.addf %28, %29 : vector<8x1xf32>
    %31 = vector.broadcast %7 : vector<8x1xf32> to vector<8x16xf32>
    %32 = arith.subf %1, %31 : vector<8x16xf32>
    %33 = vector.broadcast %23 : vector<8x1xf32> to vector<8x16xf32>
    %34 = arith.mulf %33, %32 : vector<8x16xf32>
    %cst_19 = arith.constant 9.99999974E-6 : f32
    %35 = vector.broadcast %cst_19 : f32 to vector<8x1xf32>
    %36 = arith.addf %14, %35 : vector<8x1xf32>
    %37 = math.rsqrt %36 : vector<8x1xf32>
    %38 = vector.broadcast %37 : vector<8x1xf32> to vector<8x16xf32>
    %39 = arith.mulf %34, %38 : vector<8x16xf32>
    %40 = vector.broadcast %30 : vector<8x1xf32> to vector<8x16xf32>
    %41 = arith.addf %39, %40 : vector<8x16xf32>
    %cst_20 = arith.constant 0.000000e+00 : f32
    %42 = vector.broadcast %cst_20 : f32 to vector<8x16xf32>
    %43 = arith.maximumf %41, %42 : vector<8x16xf32>
    %c0_21 = arith.constant 0 : index
    %c0_22 = arith.constant 0 : index
    %c0_23 = arith.constant 0 : index
    %44 = vector.load %arg7[%c0_21, %c0_22, %c0_23] : memref<1x8x16xf32, #tpu.memory_space<vmem>>, vector<1x8x16xf32>
    %45 = vector.shape_cast %44 : vector<1x8x16xf32> to vector<8x16xf32>
    %46 = vector.shape_cast %43 : vector<8x16xf32> to vector<1x8x16xf32>
    tpu.vector_store %arg7[%c0_21, %c0_22, %c0_23], %46 {strides = array<i32>} : memref<1x8x16xf32, #tpu.memory_space<vmem>>, vector<1x8x16xf32>,
    return
  }
  func.func @transform_0(%arg0: i32) -> (i32, i32, i32) {
    %c0_i32 = arith.constant 0 : i32
    %c0_i32_0 = arith.constant 0 : i32
    %c0_i32_1 = arith.constant 0 : i32
    return %arg0, %c0_i32, %c0_i32_0 : i32, i32, i32
  }
  func.func @transform_1(%arg0: i32) -> (i32, i32, i32) {
    %c0_i32 = arith.constant 0 : i32
    %c0_i32_0 = arith.constant 0 : i32
    %c0_i32_1 = arith.constant 0 : i32
    return %arg0, %c0_i32, %c0_i32_0 : i32, i32, i32
  }
  func.func @transform_2(%arg0: i32) -> (i32, i32) {
    %c0_i32 = arith.constant 0 : i32
    %c0_i32_0 = arith.constant 0 : i32
    %c0_i32_1 = arith.constant 0 : i32
    return %c0_i32, %c0_i32_0 : i32, i32
  }
  func.func @transform_3(%arg0: i32) -> (i32, i32) {
    %c0_i32 = arith.constant 0 : i32
    %c0_i32_0 = arith.constant 0 : i32
    %c0_i32_1 = arith.constant 0 : i32
    return %c0_i32, %c0_i32_0 : i32, i32
  }
  func.func @transform_4(%arg0: i32) -> (i32, i32) {
    %c0_i32 = arith.constant 0 : i32
    %c0_i32_0 = arith.constant 0 : i32
    %c0_i32_1 = arith.constant 0 : i32
    return %c0_i32, %c0_i32_0 : i32, i32
  }
  func.func @transform_5(%arg0: i32) -> (i32, i32) {
    %c0_i32 = arith.constant 0 : i32
    %c0_i32_0 = arith.constant 0 : i32
    %c0_i32_1 = arith.constant 0 : i32
    return %c0_i32, %c0_i32_0 : i32, i32
  }
  func.func @transform_6(%arg0: i32) -> (i32, i32, i32) {
    %c0_i32 = arith.constant 0 : i32
    %c0_i32_0 = arith.constant 0 : i32
    %c0_i32_1 = arith.constant 0 : i32
    return %arg0, %c0_i32, %c0_i32_0 : i32, i32, i32
  }
}

module attributes {stable_mosaic.version = 11 : i64} {
  func.func @_splat_conv_slice_kernel(%arg0: i32, %arg1: memref<1x2x4x16xf32, #tpu.memory_space<vmem>>, %arg2: memref<1x2x2x16xf32, #tpu.memory_space<vmem>>, %arg3: memref<1x2x16xi32, #tpu.memory_space<vmem>>, %arg4: memref<2x36x4xf32, #tpu.memory_space<vmem>>, %arg5: memref<2x1x4xf32, #tpu.memory_space<vmem>>, %arg6: memref<64x9xf32, #tpu.memory_space<vmem>>, %arg7: memref<1x2x4x16xf32, #tpu.memory_space<vmem>>, %arg8: memref<1x1x1xf32, #tpu.memory_space<vmem>>, %arg9: memref<64x36xf32, #tpu.memory_space<vmem>>) attributes {dimension_semantics = [#tpu.dimension_semantics<parallel>], iteration_bounds = array<i64: 2>, scalar_prefetch = 0 : i64, scratch_operands = 1 : i64, tpu.core_type = #tpu.core_type<tc>, window_params = [{transform_indices = @transform_0, window_bounds = array<i64: 1, 2, 4, 16>}, {transform_indices = @transform_1, window_bounds = array<i64: 1, 2, 2, 16>}, {transform_indices = @transform_2, window_bounds = array<i64: 1, 2, 16>}, {pipeline_mode = #tpu.pipeline_mode<synchronous>, transform_indices = @transform_3, window_bounds = array<i64: 2, 36, 4>}, {pipeline_mode = #tpu.pipeline_mode<synchronous>, transform_indices = @transform_4, window_bounds = array<i64: 2, 1, 4>}, {pipeline_mode = #tpu.pipeline_mode<synchronous>, transform_indices = @transform_5, window_bounds = array<i64: 64, 9>}, {transform_indices = @transform_6, window_bounds = array<i64: 1, 2, 4, 16>}, {transform_indices = @transform_7, window_bounds = array<i64: 1, 1, 1>}]} {
    %0 = tpu.iota {dimensions = array<i32: 0>} : vector<64x16xi32>
    %c0 = arith.constant 0 : index
    %c0_0 = arith.constant 0 : index
    %1 = vector.load %arg6[%c0, %c0_0] : memref<64x9xf32, #tpu.memory_space<vmem>>, vector<64x9xf32>
    %c0_1 = arith.constant 0 : index
    %c0_2 = arith.constant 0 : index
    %c0_3 = arith.constant 0 : index
    %c0_4 = arith.constant 0 : index
    %2 = vector.load %arg2[%c0_1, %c0_2, %c0_3, %c0_4] : memref<1x2x2x16xf32, #tpu.memory_space<vmem>>, vector<1x1x2x16xf32>
    %3 = vector.shape_cast %2 : vector<1x1x2x16xf32> to vector<2x16xf32>
    %4 = vector.extract_strided_slice %3 {offsets = [0, 0], sizes = [1, 16], strides = [1, 1]} : vector<2x16xf32> to vector<1x16xf32>
    %5 = vector.extract_strided_slice %3 {offsets = [1, 0], sizes = [1, 16], strides = [1, 1]} : vector<2x16xf32> to vector<1x16xf32>
    %c0_5 = arith.constant 0 : index
    %c0_6 = arith.constant 0 : index
    %c0_7 = arith.constant 0 : index
    %6 = vector.load %arg3[%c0_5, %c0_6, %c0_7] : memref<1x2x16xi32, #tpu.memory_space<vmem>>, vector<1x1x16xi32>
    %7 = vector.shape_cast %6 : vector<1x1x16xi32> to vector<1x16xi32>
    %cst = arith.constant 0.000000e+00 : f32
    %8 = vector.broadcast %cst : f32 to vector<64x16xf32>
    %cst_8 = arith.constant 1.000000e+00 : f32
    %9 = vector.broadcast %cst_8 : f32 to vector<1x16xf32>
    %10 = arith.subf %9, %4 : vector<1x16xf32>
    %cst_9 = arith.constant 1.000000e+00 : f32
    %11 = vector.broadcast %cst_9 : f32 to vector<1x16xf32>
    %12 = arith.subf %11, %5 : vector<1x16xf32>
    %c0_i32 = arith.constant 0 : i32
    %13 = vector.broadcast %c0_i32 : i32 to vector<1x16xi32>
    %14 = arith.addi %7, %13 : vector<1x16xi32>
    %15 = vector.broadcast %14 : vector<1x16xi32> to vector<64x16xi32>
    %16 = arith.cmpi eq, %0, %15 : vector<64x16xi32>
    %17 = arith.mulf %10, %12 : vector<1x16xf32>
    %cst_10 = arith.constant 0.000000e+00 : f32
    %18 = vector.shape_cast %17 : vector<1x16xf32> to vector<1x16xf32>
    %19 = vector.broadcast %18 : vector<1x16xf32> to vector<64x16xf32>
    %20 = vector.broadcast %cst_10 : f32 to vector<64x16xf32>
    %21 = arith.select %16, %19, %20 : vector<64x16xi1>, vector<64x16xf32>
    %22 = arith.addf %8, %21 : vector<64x16xf32>
    %c1_i32 = arith.constant 1 : i32
    %23 = vector.broadcast %c1_i32 : i32 to vector<1x16xi32>
    %24 = arith.addi %7, %23 : vector<1x16xi32>
    %25 = vector.broadcast %24 : vector<1x16xi32> to vector<64x16xi32>
    %26 = arith.cmpi eq, %0, %25 : vector<64x16xi32>
    %27 = arith.mulf %10, %5 : vector<1x16xf32>
    %cst_11 = arith.constant 0.000000e+00 : f32
    %28 = vector.shape_cast %27 : vector<1x16xf32> to vector<1x16xf32>
    %29 = vector.broadcast %28 : vector<1x16xf32> to vector<64x16xf32>
    %30 = vector.broadcast %cst_11 : f32 to vector<64x16xf32>
    %31 = arith.select %26, %29, %30 : vector<64x16xi1>, vector<64x16xf32>
    %32 = arith.addf %22, %31 : vector<64x16xf32>
    %cst_12 = arith.constant 1.000000e+00 : f32
    %33 = vector.broadcast %cst_12 : f32 to vector<1x16xf32>
    %34 = arith.subf %33, %5 : vector<1x16xf32>
    %c8_i32 = arith.constant 8 : i32
    %35 = vector.broadcast %c8_i32 : i32 to vector<1x16xi32>
    %36 = arith.addi %7, %35 : vector<1x16xi32>
    %37 = vector.broadcast %36 : vector<1x16xi32> to vector<64x16xi32>
    %38 = arith.cmpi eq, %0, %37 : vector<64x16xi32>
    %39 = arith.mulf %4, %34 : vector<1x16xf32>
    %cst_13 = arith.constant 0.000000e+00 : f32
    %40 = vector.shape_cast %39 : vector<1x16xf32> to vector<1x16xf32>
    %41 = vector.broadcast %40 : vector<1x16xf32> to vector<64x16xf32>
    %42 = vector.broadcast %cst_13 : f32 to vector<64x16xf32>
    %43 = arith.select %38, %41, %42 : vector<64x16xi1>, vector<64x16xf32>
    %44 = arith.addf %32, %43 : vector<64x16xf32>
    %c9_i32 = arith.constant 9 : i32
    %45 = vector.broadcast %c9_i32 : i32 to vector<1x16xi32>
    %46 = arith.addi %7, %45 : vector<1x16xi32>
    %47 = vector.broadcast %46 : vector<1x16xi32> to vector<64x16xi32>
    %48 = arith.cmpi eq, %0, %47 : vector<64x16xi32>
    %49 = arith.mulf %4, %5 : vector<1x16xf32>
    %cst_14 = arith.constant 0.000000e+00 : f32
    %50 = vector.shape_cast %49 : vector<1x16xf32> to vector<1x16xf32>
    %51 = vector.broadcast %50 : vector<1x16xf32> to vector<64x16xf32>
    %52 = vector.broadcast %cst_14 : f32 to vector<64x16xf32>
    %53 = arith.select %48, %51, %52 : vector<64x16xi1>, vector<64x16xf32>
    %54 = arith.addf %44, %53 : vector<64x16xf32>
    %c0_15 = arith.constant 0 : index
    %c0_16 = arith.constant 0 : index
    %c0_17 = arith.constant 0 : index
    %c0_18 = arith.constant 0 : index
    %55 = vector.load %arg1[%c0_15, %c0_16, %c0_17, %c0_18] : memref<1x2x4x16xf32, #tpu.memory_space<vmem>>, vector<1x1x4x16xf32>
    %56 = vector.shape_cast %55 : vector<1x1x4x16xf32> to vector<4x16xf32>
    %57 = tpu.transpose %56, [1, 0] : vector<4x16xf32> -> vector<16x4xf32>
    %cst_19 = arith.constant dense<0.000000e+00> : vector<64x4xf32>
    %58 = tpu.matmul %54, %57, %cst_19 {dimension_numbers = #tpu.dot_dimension_numbers<[1], [0], [0], [1], [0, 0, 1, 1], [], []>} : vector<64x16xf32>, vector<16x4xf32>, vector<64x4xf32> -> vector<64x4xf32>
    %59 = math.absf %58 : vector<64x4xf32>
    %cst_20 = arith.constant 9.99999971E-10 : f32
    %60 = vector.broadcast %cst_20 : f32 to vector<64x4xf32>
    %61 = arith.cmpf ogt, %59, %60 : vector<64x4xf32>
    %62 = arith.extui %61 : vector<64x4xi1> to vector<64x4xi32>
    %63 = arith.sitofp %62 : vector<64x4xi32> to vector<64x4xf32>
    %64 = vector.shape_cast %63 : vector<64x4xf32> to vector<1x64x4xf32>
    %cst_21 = arith.constant dense<0.000000e+00> : vector<1xf32>
    %65 = vector.multi_reduction <add>, %64, %cst_21 [1, 2] : vector<1x64x4xf32> to vector<1xf32>
    %66 = vector.shape_cast %65 : vector<1xf32> to vector<1x1x1xf32>
    %67 = vector.extract %66[0, 0, 0] : f32 from vector<1x1x1xf32>
    %cst_22 = arith.constant 0.000000e+00 : f32
    %68 = arith.addf %cst_22, %67 : f32
    %c9_i32_23 = arith.constant 9 : i32
    %69 = tpu.dynamic_rotate %58 by %c9_i32_23 dim 0 : vector<64x4xf32>, i32 -> vector<64x4xf32>
    %70 = vector.extract_strided_slice %1 {offsets = [0, 0], sizes = [64, 1], strides = [1, 1]} : vector<64x9xf32> to vector<64x1xf32>
    %71 = vector.broadcast %70 : vector<64x1xf32> to vector<64x4xf32>
    %72 = arith.mulf %69, %71 : vector<64x4xf32>
    %c0_24 = arith.constant 0 : index
    %c0_25 = arith.constant 0 : index
    %73 = vector.load %arg9[%c0_24, %c0_25] : memref<64x36xf32, #tpu.memory_space<vmem>>, vector<64x4xf32>
    tpu.vector_store %arg9[%c0_24, %c0_25], %72 {strides = array<i32>} : memref<64x36xf32, #tpu.memory_space<vmem>>, vector<64x4xf32>,
    %c8_i32_26 = arith.constant 8 : i32
    %74 = tpu.dynamic_rotate %58 by %c8_i32_26 dim 0 : vector<64x4xf32>, i32 -> vector<64x4xf32>
    %75 = vector.extract_strided_slice %1 {offsets = [0, 1], sizes = [64, 1], strides = [1, 1]} : vector<64x9xf32> to vector<64x1xf32>
    %76 = vector.broadcast %75 : vector<64x1xf32> to vector<64x4xf32>
    %77 = arith.mulf %74, %76 : vector<64x4xf32>
    %c0_27 = arith.constant 0 : index
    %c4 = arith.constant 4 : index
    %78 = vector.load %arg9[%c0_27, %c4] : memref<64x36xf32, #tpu.memory_space<vmem>>, vector<64x4xf32>
    tpu.vector_store %arg9[%c0_27, %c4], %77 {strides = array<i32>} : memref<64x36xf32, #tpu.memory_space<vmem>>, vector<64x4xf32>,
    %c7_i32 = arith.constant 7 : i32
    %79 = tpu.dynamic_rotate %58 by %c7_i32 dim 0 : vector<64x4xf32>, i32 -> vector<64x4xf32>
    %80 = vector.extract_strided_slice %1 {offsets = [0, 2], sizes = [64, 1], strides = [1, 1]} : vector<64x9xf32> to vector<64x1xf32>
    %81 = vector.broadcast %80 : vector<64x1xf32> to vector<64x4xf32>
    %82 = arith.mulf %79, %81 : vector<64x4xf32>
    %c0_28 = arith.constant 0 : index
    %c8 = arith.constant 8 : index
    %83 = vector.load %arg9[%c0_28, %c8] : memref<64x36xf32, #tpu.memory_space<vmem>>, vector<64x4xf32>
    tpu.vector_store %arg9[%c0_28, %c8], %82 {strides = array<i32>} : memref<64x36xf32, #tpu.memory_space<vmem>>, vector<64x4xf32>,
    %c1_i32_29 = arith.constant 1 : i32
    %84 = tpu.dynamic_rotate %58 by %c1_i32_29 dim 0 : vector<64x4xf32>, i32 -> vector<64x4xf32>
    %85 = vector.extract_strided_slice %1 {offsets = [0, 3], sizes = [64, 1], strides = [1, 1]} : vector<64x9xf32> to vector<64x1xf32>
    %86 = vector.broadcast %85 : vector<64x1xf32> to vector<64x4xf32>
    %87 = arith.mulf %84, %86 : vector<64x4xf32>
    %c0_30 = arith.constant 0 : index
    %c12 = arith.constant 12 : index
    %88 = vector.load %arg9[%c0_30, %c12] : memref<64x36xf32, #tpu.memory_space<vmem>>, vector<64x4xf32>
    tpu.vector_store %arg9[%c0_30, %c12], %87 {strides = array<i32>} : memref<64x36xf32, #tpu.memory_space<vmem>>, vector<64x4xf32>,
    %89 = vector.extract_strided_slice %1 {offsets = [0, 4], sizes = [64, 1], strides = [1, 1]} : vector<64x9xf32> to vector<64x1xf32>
    %90 = vector.broadcast %89 : vector<64x1xf32> to vector<64x4xf32>
    %91 = arith.mulf %58, %90 : vector<64x4xf32>
    %c0_31 = arith.constant 0 : index
    %c16 = arith.constant 16 : index
    %92 = vector.load %arg9[%c0_31, %c16] : memref<64x36xf32, #tpu.memory_space<vmem>>, vector<64x4xf32>
    tpu.vector_store %arg9[%c0_31, %c16], %91 {strides = array<i32>} : memref<64x36xf32, #tpu.memory_space<vmem>>, vector<64x4xf32>,
    %c63_i32 = arith.constant 63 : i32
    %93 = tpu.dynamic_rotate %58 by %c63_i32 dim 0 : vector<64x4xf32>, i32 -> vector<64x4xf32>
    %94 = vector.extract_strided_slice %1 {offsets = [0, 5], sizes = [64, 1], strides = [1, 1]} : vector<64x9xf32> to vector<64x1xf32>
    %95 = vector.broadcast %94 : vector<64x1xf32> to vector<64x4xf32>
    %96 = arith.mulf %93, %95 : vector<64x4xf32>
    %c0_32 = arith.constant 0 : index
    %c20 = arith.constant 20 : index
    %97 = vector.load %arg9[%c0_32, %c20] : memref<64x36xf32, #tpu.memory_space<vmem>>, vector<64x4xf32>
    tpu.vector_store %arg9[%c0_32, %c20], %96 {strides = array<i32>} : memref<64x36xf32, #tpu.memory_space<vmem>>, vector<64x4xf32>,
    %c57_i32 = arith.constant 57 : i32
    %98 = tpu.dynamic_rotate %58 by %c57_i32 dim 0 : vector<64x4xf32>, i32 -> vector<64x4xf32>
    %99 = vector.extract_strided_slice %1 {offsets = [0, 6], sizes = [64, 1], strides = [1, 1]} : vector<64x9xf32> to vector<64x1xf32>
    %100 = vector.broadcast %99 : vector<64x1xf32> to vector<64x4xf32>
    %101 = arith.mulf %98, %100 : vector<64x4xf32>
    %c0_33 = arith.constant 0 : index
    %c24 = arith.constant 24 : index
    %102 = vector.load %arg9[%c0_33, %c24] : memref<64x36xf32, #tpu.memory_space<vmem>>, vector<64x4xf32>
    tpu.vector_store %arg9[%c0_33, %c24], %101 {strides = array<i32>} : memref<64x36xf32, #tpu.memory_space<vmem>>, vector<64x4xf32>,
    %c56_i32 = arith.constant 56 : i32
    %103 = tpu.dynamic_rotate %58 by %c56_i32 dim 0 : vector<64x4xf32>, i32 -> vector<64x4xf32>
    %104 = vector.extract_strided_slice %1 {offsets = [0, 7], sizes = [64, 1], strides = [1, 1]} : vector<64x9xf32> to vector<64x1xf32>
    %105 = vector.broadcast %104 : vector<64x1xf32> to vector<64x4xf32>
    %106 = arith.mulf %103, %105 : vector<64x4xf32>
    %c0_34 = arith.constant 0 : index
    %c28 = arith.constant 28 : index
    %107 = vector.load %arg9[%c0_34, %c28] : memref<64x36xf32, #tpu.memory_space<vmem>>, vector<64x4xf32>
    tpu.vector_store %arg9[%c0_34, %c28], %106 {strides = array<i32>} : memref<64x36xf32, #tpu.memory_space<vmem>>, vector<64x4xf32>,
    %c55_i32 = arith.constant 55 : i32
    %108 = tpu.dynamic_rotate %58 by %c55_i32 dim 0 : vector<64x4xf32>, i32 -> vector<64x4xf32>
    %109 = vector.extract_strided_slice %1 {offsets = [0, 8], sizes = [64, 1], strides = [1, 1]} : vector<64x9xf32> to vector<64x1xf32>
    %110 = vector.broadcast %109 : vector<64x1xf32> to vector<64x4xf32>
    %111 = arith.mulf %108, %110 : vector<64x4xf32>
    %c0_35 = arith.constant 0 : index
    %c32 = arith.constant 32 : index
    %112 = vector.load %arg9[%c0_35, %c32] : memref<64x36xf32, #tpu.memory_space<vmem>>, vector<64x4xf32>
    tpu.vector_store %arg9[%c0_35, %c32], %111 {strides = array<i32>} : memref<64x36xf32, #tpu.memory_space<vmem>>, vector<64x4xf32>,
    %c0_36 = arith.constant 0 : index
    %c0_37 = arith.constant 0 : index
    %113 = vector.load %arg9[%c0_36, %c0_37] : memref<64x36xf32, #tpu.memory_space<vmem>>, vector<64x36xf32>
    %c0_38 = arith.constant 0 : index
    %c0_39 = arith.constant 0 : index
    %c0_40 = arith.constant 0 : index
    %114 = vector.load %arg4[%c0_38, %c0_39, %c0_40] : memref<2x36x4xf32, #tpu.memory_space<vmem>>, vector<1x36x4xf32>
    %115 = vector.shape_cast %114 : vector<1x36x4xf32> to vector<36x4xf32>
    %cst_41 = arith.constant dense<0.000000e+00> : vector<64x4xf32>
    %116 = tpu.matmul %113, %115, %cst_41 {dimension_numbers = #tpu.dot_dimension_numbers<[1], [0], [0], [1], [0, 0, 1, 1], [], []>} : vector<64x36xf32>, vector<36x4xf32>, vector<64x4xf32> -> vector<64x4xf32>
    %c0_42 = arith.constant 0 : index
    %c0_43 = arith.constant 0 : index
    %c0_44 = arith.constant 0 : index
    %117 = vector.load %arg5[%c0_42, %c0_43, %c0_44] : memref<2x1x4xf32, #tpu.memory_space<vmem>>, vector<1x1x4xf32>
    %118 = vector.shape_cast %117 : vector<1x1x4xf32> to vector<1x4xf32>
    %119 = vector.broadcast %118 : vector<1x4xf32> to vector<64x4xf32>
    %120 = arith.addf %116, %119 : vector<64x4xf32>
    %121 = tpu.transpose %120, [1, 0] : vector<64x4xf32> -> vector<4x64xf32>
    %cst_45 = arith.constant dense<0.000000e+00> : vector<4x16xf32>
    %122 = tpu.matmul %121, %54, %cst_45 {dimension_numbers = #tpu.dot_dimension_numbers<[1], [0], [0], [1], [0, 0, 1, 1], [], []>} : vector<4x64xf32>, vector<64x16xf32>, vector<4x16xf32> -> vector<4x16xf32>
    %c0_46 = arith.constant 0 : index
    %c0_47 = arith.constant 0 : index
    %c0_48 = arith.constant 0 : index
    %c0_49 = arith.constant 0 : index
    %123 = vector.load %arg7[%c0_46, %c0_47, %c0_48, %c0_49] : memref<1x2x4x16xf32, #tpu.memory_space<vmem>>, vector<1x1x4x16xf32>
    %124 = vector.shape_cast %123 : vector<1x1x4x16xf32> to vector<4x16xf32>
    %125 = vector.shape_cast %122 : vector<4x16xf32> to vector<1x1x4x16xf32>
    tpu.vector_store %arg7[%c0_46, %c0_47, %c0_48, %c0_49], %125 {strides = array<i32>} : memref<1x2x4x16xf32, #tpu.memory_space<vmem>>, vector<1x1x4x16xf32>,
    %c0_50 = arith.constant 0 : index
    %c1 = arith.constant 1 : index
    %c0_51 = arith.constant 0 : index
    %c0_52 = arith.constant 0 : index
    %126 = vector.load %arg2[%c0_50, %c1, %c0_51, %c0_52] : memref<1x2x2x16xf32, #tpu.memory_space<vmem>>, vector<1x1x2x16xf32>
    %127 = vector.shape_cast %126 : vector<1x1x2x16xf32> to vector<2x16xf32>
    %128 = vector.extract_strided_slice %127 {offsets = [0, 0], sizes = [1, 16], strides = [1, 1]} : vector<2x16xf32> to vector<1x16xf32>
    %129 = vector.extract_strided_slice %127 {offsets = [1, 0], sizes = [1, 16], strides = [1, 1]} : vector<2x16xf32> to vector<1x16xf32>
    %c0_53 = arith.constant 0 : index
    %c1_54 = arith.constant 1 : index
    %c0_55 = arith.constant 0 : index
    %130 = vector.load %arg3[%c0_53, %c1_54, %c0_55] : memref<1x2x16xi32, #tpu.memory_space<vmem>>, vector<1x1x16xi32>
    %131 = vector.shape_cast %130 : vector<1x1x16xi32> to vector<1x16xi32>
    %cst_56 = arith.constant 0.000000e+00 : f32
    %132 = vector.broadcast %cst_56 : f32 to vector<64x16xf32>
    %cst_57 = arith.constant 1.000000e+00 : f32
    %133 = vector.broadcast %cst_57 : f32 to vector<1x16xf32>
    %134 = arith.subf %133, %128 : vector<1x16xf32>
    %cst_58 = arith.constant 1.000000e+00 : f32
    %135 = vector.broadcast %cst_58 : f32 to vector<1x16xf32>
    %136 = arith.subf %135, %129 : vector<1x16xf32>
    %c0_i32_59 = arith.constant 0 : i32
    %137 = vector.broadcast %c0_i32_59 : i32 to vector<1x16xi32>
    %138 = arith.addi %131, %137 : vector<1x16xi32>
    %139 = vector.broadcast %138 : vector<1x16xi32> to vector<64x16xi32>
    %140 = arith.cmpi eq, %0, %139 : vector<64x16xi32>
    %141 = arith.mulf %134, %136 : vector<1x16xf32>
    %cst_60 = arith.constant 0.000000e+00 : f32
    %142 = vector.shape_cast %141 : vector<1x16xf32> to vector<1x16xf32>
    %143 = vector.broadcast %142 : vector<1x16xf32> to vector<64x16xf32>
    %144 = vector.broadcast %cst_60 : f32 to vector<64x16xf32>
    %145 = arith.select %140, %143, %144 : vector<64x16xi1>, vector<64x16xf32>
    %146 = arith.addf %132, %145 : vector<64x16xf32>
    %c1_i32_61 = arith.constant 1 : i32
    %147 = vector.broadcast %c1_i32_61 : i32 to vector<1x16xi32>
    %148 = arith.addi %131, %147 : vector<1x16xi32>
    %149 = vector.broadcast %148 : vector<1x16xi32> to vector<64x16xi32>
    %150 = arith.cmpi eq, %0, %149 : vector<64x16xi32>
    %151 = arith.mulf %134, %129 : vector<1x16xf32>
    %cst_62 = arith.constant 0.000000e+00 : f32
    %152 = vector.shape_cast %151 : vector<1x16xf32> to vector<1x16xf32>
    %153 = vector.broadcast %152 : vector<1x16xf32> to vector<64x16xf32>
    %154 = vector.broadcast %cst_62 : f32 to vector<64x16xf32>
    %155 = arith.select %150, %153, %154 : vector<64x16xi1>, vector<64x16xf32>
    %156 = arith.addf %146, %155 : vector<64x16xf32>
    %cst_63 = arith.constant 1.000000e+00 : f32
    %157 = vector.broadcast %cst_63 : f32 to vector<1x16xf32>
    %158 = arith.subf %157, %129 : vector<1x16xf32>
    %c8_i32_64 = arith.constant 8 : i32
    %159 = vector.broadcast %c8_i32_64 : i32 to vector<1x16xi32>
    %160 = arith.addi %131, %159 : vector<1x16xi32>
    %161 = vector.broadcast %160 : vector<1x16xi32> to vector<64x16xi32>
    %162 = arith.cmpi eq, %0, %161 : vector<64x16xi32>
    %163 = arith.mulf %128, %158 : vector<1x16xf32>
    %cst_65 = arith.constant 0.000000e+00 : f32
    %164 = vector.shape_cast %163 : vector<1x16xf32> to vector<1x16xf32>
    %165 = vector.broadcast %164 : vector<1x16xf32> to vector<64x16xf32>
    %166 = vector.broadcast %cst_65 : f32 to vector<64x16xf32>
    %167 = arith.select %162, %165, %166 : vector<64x16xi1>, vector<64x16xf32>
    %168 = arith.addf %156, %167 : vector<64x16xf32>
    %c9_i32_66 = arith.constant 9 : i32
    %169 = vector.broadcast %c9_i32_66 : i32 to vector<1x16xi32>
    %170 = arith.addi %131, %169 : vector<1x16xi32>
    %171 = vector.broadcast %170 : vector<1x16xi32> to vector<64x16xi32>
    %172 = arith.cmpi eq, %0, %171 : vector<64x16xi32>
    %173 = arith.mulf %128, %129 : vector<1x16xf32>
    %cst_67 = arith.constant 0.000000e+00 : f32
    %174 = vector.shape_cast %173 : vector<1x16xf32> to vector<1x16xf32>
    %175 = vector.broadcast %174 : vector<1x16xf32> to vector<64x16xf32>
    %176 = vector.broadcast %cst_67 : f32 to vector<64x16xf32>
    %177 = arith.select %172, %175, %176 : vector<64x16xi1>, vector<64x16xf32>
    %178 = arith.addf %168, %177 : vector<64x16xf32>
    %c0_68 = arith.constant 0 : index
    %c1_69 = arith.constant 1 : index
    %c0_70 = arith.constant 0 : index
    %c0_71 = arith.constant 0 : index
    %179 = vector.load %arg1[%c0_68, %c1_69, %c0_70, %c0_71] : memref<1x2x4x16xf32, #tpu.memory_space<vmem>>, vector<1x1x4x16xf32>
    %180 = vector.shape_cast %179 : vector<1x1x4x16xf32> to vector<4x16xf32>
    %181 = tpu.transpose %180, [1, 0] : vector<4x16xf32> -> vector<16x4xf32>
    %cst_72 = arith.constant dense<0.000000e+00> : vector<64x4xf32>
    %182 = tpu.matmul %178, %181, %cst_72 {dimension_numbers = #tpu.dot_dimension_numbers<[1], [0], [0], [1], [0, 0, 1, 1], [], []>} : vector<64x16xf32>, vector<16x4xf32>, vector<64x4xf32> -> vector<64x4xf32>
    %183 = math.absf %182 : vector<64x4xf32>
    %cst_73 = arith.constant 9.99999971E-10 : f32
    %184 = vector.broadcast %cst_73 : f32 to vector<64x4xf32>
    %185 = arith.cmpf ogt, %183, %184 : vector<64x4xf32>
    %186 = arith.extui %185 : vector<64x4xi1> to vector<64x4xi32>
    %187 = arith.sitofp %186 : vector<64x4xi32> to vector<64x4xf32>
    %188 = vector.shape_cast %187 : vector<64x4xf32> to vector<1x64x4xf32>
    %cst_74 = arith.constant dense<0.000000e+00> : vector<1xf32>
    %189 = vector.multi_reduction <add>, %188, %cst_74 [1, 2] : vector<1x64x4xf32> to vector<1xf32>
    %190 = vector.shape_cast %189 : vector<1xf32> to vector<1x1x1xf32>
    %191 = vector.extract %190[0, 0, 0] : f32 from vector<1x1x1xf32>
    %192 = arith.addf %68, %191 : f32
    %c9_i32_75 = arith.constant 9 : i32
    %193 = tpu.dynamic_rotate %182 by %c9_i32_75 dim 0 : vector<64x4xf32>, i32 -> vector<64x4xf32>
    %194 = vector.extract_strided_slice %1 {offsets = [0, 0], sizes = [64, 1], strides = [1, 1]} : vector<64x9xf32> to vector<64x1xf32>
    %195 = vector.broadcast %194 : vector<64x1xf32> to vector<64x4xf32>
    %196 = arith.mulf %193, %195 : vector<64x4xf32>
    %c0_76 = arith.constant 0 : index
    %c0_77 = arith.constant 0 : index
    %197 = vector.load %arg9[%c0_76, %c0_77] : memref<64x36xf32, #tpu.memory_space<vmem>>, vector<64x4xf32>
    tpu.vector_store %arg9[%c0_76, %c0_77], %196 {strides = array<i32>} : memref<64x36xf32, #tpu.memory_space<vmem>>, vector<64x4xf32>,
    %c8_i32_78 = arith.constant 8 : i32
    %198 = tpu.dynamic_rotate %182 by %c8_i32_78 dim 0 : vector<64x4xf32>, i32 -> vector<64x4xf32>
    %199 = vector.extract_strided_slice %1 {offsets = [0, 1], sizes = [64, 1], strides = [1, 1]} : vector<64x9xf32> to vector<64x1xf32>
    %200 = vector.broadcast %199 : vector<64x1xf32> to vector<64x4xf32>
    %201 = arith.mulf %198, %200 : vector<64x4xf32>
    %c0_79 = arith.constant 0 : index
    %c4_80 = arith.constant 4 : index
    %202 = vector.load %arg9[%c0_79, %c4_80] : memref<64x36xf32, #tpu.memory_space<vmem>>, vector<64x4xf32>
    tpu.vector_store %arg9[%c0_79, %c4_80], %201 {strides = array<i32>} : memref<64x36xf32, #tpu.memory_space<vmem>>, vector<64x4xf32>,
    %c7_i32_81 = arith.constant 7 : i32
    %203 = tpu.dynamic_rotate %182 by %c7_i32_81 dim 0 : vector<64x4xf32>, i32 -> vector<64x4xf32>
    %204 = vector.extract_strided_slice %1 {offsets = [0, 2], sizes = [64, 1], strides = [1, 1]} : vector<64x9xf32> to vector<64x1xf32>
    %205 = vector.broadcast %204 : vector<64x1xf32> to vector<64x4xf32>
    %206 = arith.mulf %203, %205 : vector<64x4xf32>
    %c0_82 = arith.constant 0 : index
    %c8_83 = arith.constant 8 : index
    %207 = vector.load %arg9[%c0_82, %c8_83] : memref<64x36xf32, #tpu.memory_space<vmem>>, vector<64x4xf32>
    tpu.vector_store %arg9[%c0_82, %c8_83], %206 {strides = array<i32>} : memref<64x36xf32, #tpu.memory_space<vmem>>, vector<64x4xf32>,
    %c1_i32_84 = arith.constant 1 : i32
    %208 = tpu.dynamic_rotate %182 by %c1_i32_84 dim 0 : vector<64x4xf32>, i32 -> vector<64x4xf32>
    %209 = vector.extract_strided_slice %1 {offsets = [0, 3], sizes = [64, 1], strides = [1, 1]} : vector<64x9xf32> to vector<64x1xf32>
    %210 = vector.broadcast %209 : vector<64x1xf32> to vector<64x4xf32>
    %211 = arith.mulf %208, %210 : vector<64x4xf32>
    %c0_85 = arith.constant 0 : index
    %c12_86 = arith.constant 12 : index
    %212 = vector.load %arg9[%c0_85, %c12_86] : memref<64x36xf32, #tpu.memory_space<vmem>>, vector<64x4xf32>
    tpu.vector_store %arg9[%c0_85, %c12_86], %211 {strides = array<i32>} : memref<64x36xf32, #tpu.memory_space<vmem>>, vector<64x4xf32>,
    %213 = vector.extract_strided_slice %1 {offsets = [0, 4], sizes = [64, 1], strides = [1, 1]} : vector<64x9xf32> to vector<64x1xf32>
    %214 = vector.broadcast %213 : vector<64x1xf32> to vector<64x4xf32>
    %215 = arith.mulf %182, %214 : vector<64x4xf32>
    %c0_87 = arith.constant 0 : index
    %c16_88 = arith.constant 16 : index
    %216 = vector.load %arg9[%c0_87, %c16_88] : memref<64x36xf32, #tpu.memory_space<vmem>>, vector<64x4xf32>
    tpu.vector_store %arg9[%c0_87, %c16_88], %215 {strides = array<i32>} : memref<64x36xf32, #tpu.memory_space<vmem>>, vector<64x4xf32>,
    %c63_i32_89 = arith.constant 63 : i32
    %217 = tpu.dynamic_rotate %182 by %c63_i32_89 dim 0 : vector<64x4xf32>, i32 -> vector<64x4xf32>
    %218 = vector.extract_strided_slice %1 {offsets = [0, 5], sizes = [64, 1], strides = [1, 1]} : vector<64x9xf32> to vector<64x1xf32>
    %219 = vector.broadcast %218 : vector<64x1xf32> to vector<64x4xf32>
    %220 = arith.mulf %217, %219 : vector<64x4xf32>
    %c0_90 = arith.constant 0 : index
    %c20_91 = arith.constant 20 : index
    %221 = vector.load %arg9[%c0_90, %c20_91] : memref<64x36xf32, #tpu.memory_space<vmem>>, vector<64x4xf32>
    tpu.vector_store %arg9[%c0_90, %c20_91], %220 {strides = array<i32>} : memref<64x36xf32, #tpu.memory_space<vmem>>, vector<64x4xf32>,
    %c57_i32_92 = arith.constant 57 : i32
    %222 = tpu.dynamic_rotate %182 by %c57_i32_92 dim 0 : vector<64x4xf32>, i32 -> vector<64x4xf32>
    %223 = vector.extract_strided_slice %1 {offsets = [0, 6], sizes = [64, 1], strides = [1, 1]} : vector<64x9xf32> to vector<64x1xf32>
    %224 = vector.broadcast %223 : vector<64x1xf32> to vector<64x4xf32>
    %225 = arith.mulf %222, %224 : vector<64x4xf32>
    %c0_93 = arith.constant 0 : index
    %c24_94 = arith.constant 24 : index
    %226 = vector.load %arg9[%c0_93, %c24_94] : memref<64x36xf32, #tpu.memory_space<vmem>>, vector<64x4xf32>
    tpu.vector_store %arg9[%c0_93, %c24_94], %225 {strides = array<i32>} : memref<64x36xf32, #tpu.memory_space<vmem>>, vector<64x4xf32>,
    %c56_i32_95 = arith.constant 56 : i32
    %227 = tpu.dynamic_rotate %182 by %c56_i32_95 dim 0 : vector<64x4xf32>, i32 -> vector<64x4xf32>
    %228 = vector.extract_strided_slice %1 {offsets = [0, 7], sizes = [64, 1], strides = [1, 1]} : vector<64x9xf32> to vector<64x1xf32>
    %229 = vector.broadcast %228 : vector<64x1xf32> to vector<64x4xf32>
    %230 = arith.mulf %227, %229 : vector<64x4xf32>
    %c0_96 = arith.constant 0 : index
    %c28_97 = arith.constant 28 : index
    %231 = vector.load %arg9[%c0_96, %c28_97] : memref<64x36xf32, #tpu.memory_space<vmem>>, vector<64x4xf32>
    tpu.vector_store %arg9[%c0_96, %c28_97], %230 {strides = array<i32>} : memref<64x36xf32, #tpu.memory_space<vmem>>, vector<64x4xf32>,
    %c55_i32_98 = arith.constant 55 : i32
    %232 = tpu.dynamic_rotate %182 by %c55_i32_98 dim 0 : vector<64x4xf32>, i32 -> vector<64x4xf32>
    %233 = vector.extract_strided_slice %1 {offsets = [0, 8], sizes = [64, 1], strides = [1, 1]} : vector<64x9xf32> to vector<64x1xf32>
    %234 = vector.broadcast %233 : vector<64x1xf32> to vector<64x4xf32>
    %235 = arith.mulf %232, %234 : vector<64x4xf32>
    %c0_99 = arith.constant 0 : index
    %c32_100 = arith.constant 32 : index
    %236 = vector.load %arg9[%c0_99, %c32_100] : memref<64x36xf32, #tpu.memory_space<vmem>>, vector<64x4xf32>
    tpu.vector_store %arg9[%c0_99, %c32_100], %235 {strides = array<i32>} : memref<64x36xf32, #tpu.memory_space<vmem>>, vector<64x4xf32>,
    %c0_101 = arith.constant 0 : index
    %c0_102 = arith.constant 0 : index
    %237 = vector.load %arg9[%c0_101, %c0_102] : memref<64x36xf32, #tpu.memory_space<vmem>>, vector<64x36xf32>
    %c1_103 = arith.constant 1 : index
    %c0_104 = arith.constant 0 : index
    %c0_105 = arith.constant 0 : index
    %238 = vector.load %arg4[%c1_103, %c0_104, %c0_105] : memref<2x36x4xf32, #tpu.memory_space<vmem>>, vector<1x36x4xf32>
    %239 = vector.shape_cast %238 : vector<1x36x4xf32> to vector<36x4xf32>
    %cst_106 = arith.constant dense<0.000000e+00> : vector<64x4xf32>
    %240 = tpu.matmul %237, %239, %cst_106 {dimension_numbers = #tpu.dot_dimension_numbers<[1], [0], [0], [1], [0, 0, 1, 1], [], []>} : vector<64x36xf32>, vector<36x4xf32>, vector<64x4xf32> -> vector<64x4xf32>
    %c1_107 = arith.constant 1 : index
    %c0_108 = arith.constant 0 : index
    %c0_109 = arith.constant 0 : index
    %241 = vector.load %arg5[%c1_107, %c0_108, %c0_109] : memref<2x1x4xf32, #tpu.memory_space<vmem>>, vector<1x1x4xf32>
    %242 = vector.shape_cast %241 : vector<1x1x4xf32> to vector<1x4xf32>
    %243 = vector.broadcast %242 : vector<1x4xf32> to vector<64x4xf32>
    %244 = arith.addf %240, %243 : vector<64x4xf32>
    %245 = tpu.transpose %244, [1, 0] : vector<64x4xf32> -> vector<4x64xf32>
    %cst_110 = arith.constant dense<0.000000e+00> : vector<4x16xf32>
    %246 = tpu.matmul %245, %178, %cst_110 {dimension_numbers = #tpu.dot_dimension_numbers<[1], [0], [0], [1], [0, 0, 1, 1], [], []>} : vector<4x64xf32>, vector<64x16xf32>, vector<4x16xf32> -> vector<4x16xf32>
    %c0_111 = arith.constant 0 : index
    %c1_112 = arith.constant 1 : index
    %c0_113 = arith.constant 0 : index
    %c0_114 = arith.constant 0 : index
    %247 = vector.load %arg7[%c0_111, %c1_112, %c0_113, %c0_114] : memref<1x2x4x16xf32, #tpu.memory_space<vmem>>, vector<1x1x4x16xf32>
    %248 = vector.shape_cast %247 : vector<1x1x4x16xf32> to vector<4x16xf32>
    %249 = vector.shape_cast %246 : vector<4x16xf32> to vector<1x1x4x16xf32>
    tpu.vector_store %arg7[%c0_111, %c1_112, %c0_113, %c0_114], %249 {strides = array<i32>} : memref<1x2x4x16xf32, #tpu.memory_space<vmem>>, vector<1x1x4x16xf32>,
    %cst_115 = arith.constant 0.000000e+00 : f32
    %250 = vector.broadcast %cst_115 : f32 to vector<1x1xf32>
    %251 = vector.broadcast %192 : f32 to vector<1x1xf32>
    %252 = arith.addf %250, %251 : vector<1x1xf32>
    %c0_116 = arith.constant 0 : index
    %c0_117 = arith.constant 0 : index
    %c0_118 = arith.constant 0 : index
    %253 = vector.load %arg8[%c0_116, %c0_117, %c0_118] : memref<1x1x1xf32, #tpu.memory_space<vmem>>, vector<1x1x1xf32>
    %254 = vector.shape_cast %253 : vector<1x1x1xf32> to vector<1x1xf32>
    %255 = vector.shape_cast %252 : vector<1x1xf32> to vector<1x1x1xf32>
    tpu.vector_store %arg8[%c0_116, %c0_117, %c0_118], %255 {strides = array<i32>} : memref<1x1x1xf32, #tpu.memory_space<vmem>>, vector<1x1x1xf32>,
    return
  }
  func.func @transform_0(%arg0: i32) -> (i32, i32, i32, i32) {
    %c0_i32 = arith.constant 0 : i32
    %c0_i32_0 = arith.constant 0 : i32
    %c0_i32_1 = arith.constant 0 : i32
    %c0_i32_2 = arith.constant 0 : i32
    return %arg0, %c0_i32, %c0_i32_0, %c0_i32_1 : i32, i32, i32, i32
  }
  func.func @transform_1(%arg0: i32) -> (i32, i32, i32, i32) {
    %c0_i32 = arith.constant 0 : i32
    %c0_i32_0 = arith.constant 0 : i32
    %c0_i32_1 = arith.constant 0 : i32
    %c0_i32_2 = arith.constant 0 : i32
    return %arg0, %c0_i32, %c0_i32_0, %c0_i32_1 : i32, i32, i32, i32
  }
  func.func @transform_2(%arg0: i32) -> (i32, i32, i32) {
    %c0_i32 = arith.constant 0 : i32
    %c0_i32_0 = arith.constant 0 : i32
    %c0_i32_1 = arith.constant 0 : i32
    return %arg0, %c0_i32, %c0_i32_0 : i32, i32, i32
  }
  func.func @transform_3(%arg0: i32) -> (i32, i32, i32) {
    %c0_i32 = arith.constant 0 : i32
    %c0_i32_0 = arith.constant 0 : i32
    %c0_i32_1 = arith.constant 0 : i32
    %c0_i32_2 = arith.constant 0 : i32
    return %c0_i32, %c0_i32_0, %c0_i32_1 : i32, i32, i32
  }
  func.func @transform_4(%arg0: i32) -> (i32, i32, i32) {
    %c0_i32 = arith.constant 0 : i32
    %c0_i32_0 = arith.constant 0 : i32
    %c0_i32_1 = arith.constant 0 : i32
    %c0_i32_2 = arith.constant 0 : i32
    return %c0_i32, %c0_i32_0, %c0_i32_1 : i32, i32, i32
  }
  func.func @transform_5(%arg0: i32) -> (i32, i32) {
    %c0_i32 = arith.constant 0 : i32
    %c0_i32_0 = arith.constant 0 : i32
    %c0_i32_1 = arith.constant 0 : i32
    return %c0_i32, %c0_i32_0 : i32, i32
  }
  func.func @transform_6(%arg0: i32) -> (i32, i32, i32, i32) {
    %c0_i32 = arith.constant 0 : i32
    %c0_i32_0 = arith.constant 0 : i32
    %c0_i32_1 = arith.constant 0 : i32
    %c0_i32_2 = arith.constant 0 : i32
    return %arg0, %c0_i32, %c0_i32_0, %c0_i32_1 : i32, i32, i32, i32
  }
  func.func @transform_7(%arg0: i32) -> (i32, i32, i32) {
    %c0_i32 = arith.constant 0 : i32
    %c0_i32_0 = arith.constant 0 : i32
    %c0_i32_1 = arith.constant 0 : i32
    return %arg0, %c0_i32, %c0_i32_0 : i32, i32, i32
  }
}

module attributes {stable_mosaic.version = 11 : i64} {
  func.func @kernel(%arg0: i32, %arg1: memref<1x4x16xf32, #tpu.memory_space<vmem>>, %arg2: memref<1x1x16xf32, #tpu.memory_space<vmem>>, %arg3: memref<4x16xf32, #tpu.memory_space<vmem>>, %arg4: memref<4x1xf32, #tpu.memory_space<vmem>>, %arg5: memref<4x16xf32, #tpu.memory_space<vmem>>, %arg6: memref<4x1xf32, #tpu.memory_space<vmem>>, %arg7: memref<1x4x16xf32, #tpu.memory_space<vmem>>) attributes {dimension_semantics = [#tpu.dimension_semantics<parallel>], iteration_bounds = array<i64: 2>, scalar_prefetch = 0 : i64, scratch_operands = 0 : i64, tpu.core_type = #tpu.core_type<tc>, window_params = [{transform_indices = @transform_0, window_bounds = array<i64: 1, 4, 16>}, {transform_indices = @transform_1, window_bounds = array<i64: 1, 1, 16>}, {pipeline_mode = #tpu.pipeline_mode<synchronous>, transform_indices = @transform_2, window_bounds = array<i64: 4, 16>}, {pipeline_mode = #tpu.pipeline_mode<synchronous>, transform_indices = @transform_3, window_bounds = array<i64: 4, 1>}, {pipeline_mode = #tpu.pipeline_mode<synchronous>, transform_indices = @transform_4, window_bounds = array<i64: 4, 16>}, {pipeline_mode = #tpu.pipeline_mode<synchronous>, transform_indices = @transform_5, window_bounds = array<i64: 4, 1>}, {transform_indices = @transform_6, window_bounds = array<i64: 1, 4, 16>}]} {
    %c0 = arith.constant 0 : index
    %c0_0 = arith.constant 0 : index
    %c0_1 = arith.constant 0 : index
    %0 = vector.load %arg1[%c0, %c0_0, %c0_1] : memref<1x4x16xf32, #tpu.memory_space<vmem>>, vector<1x4x16xf32>
    %1 = vector.shape_cast %0 : vector<1x4x16xf32> to vector<4x16xf32>
    %c0_2 = arith.constant 0 : index
    %c0_3 = arith.constant 0 : index
    %c0_4 = arith.constant 0 : index
    %2 = vector.load %arg2[%c0_2, %c0_3, %c0_4] : memref<1x1x16xf32, #tpu.memory_space<vmem>>, vector<1x1x16xf32>
    %3 = vector.shape_cast %2 : vector<1x1x16xf32> to vector<1x16xf32>
    %cst = arith.constant dense<0.000000e+00> : vector<4xf32>
    %4 = vector.multi_reduction <add>, %1, %cst [1] : vector<4x16xf32> to vector<4xf32>
    %5 = vector.shape_cast %4 : vector<4xf32> to vector<4x1xf32>
    %cst_5 = arith.constant 1.600000e+01 : f32
    %6 = vector.broadcast %cst_5 : f32 to vector<4x1xf32>
    %7 = arith.divf %5, %6 : vector<4x1xf32>
    %8 = vector.broadcast %7 : vector<4x1xf32> to vector<4x16xf32>
    %9 = arith.subf %1, %8 : vector<4x16xf32>
    %10 = arith.mulf %9, %9 : vector<4x16xf32>
    %cst_6 = arith.constant dense<0.000000e+00> : vector<4xf32>
    %11 = vector.multi_reduction <add>, %10, %cst_6 [1] : vector<4x16xf32> to vector<4xf32>
    %12 = vector.shape_cast %11 : vector<4xf32> to vector<4x1xf32>
    %cst_7 = arith.constant 1.600000e+01 : f32
    %13 = vector.broadcast %cst_7 : f32 to vector<4x1xf32>
    %14 = arith.divf %12, %13 : vector<4x1xf32>
    %c0_8 = arith.constant 0 : index
    %c0_9 = arith.constant 0 : index
    %15 = vector.load %arg3[%c0_8, %c0_9] : memref<4x16xf32, #tpu.memory_space<vmem>>, vector<4x16xf32>
    %16 = vector.broadcast %3 : vector<1x16xf32> to vector<4x16xf32>
    %17 = arith.mulf %15, %16 : vector<4x16xf32>
    %cst_10 = arith.constant dense<0.000000e+00> : vector<4xf32>
    %18 = vector.multi_reduction <add>, %17, %cst_10 [1] : vector<4x16xf32> to vector<4xf32>
    %19 = vector.shape_cast %18 : vector<4xf32> to vector<4x1xf32>
    %cst_11 = arith.constant 1.000000e+00 : f32
    %20 = vector.broadcast %cst_11 : f32 to vector<4x1xf32>
    %21 = arith.addf %20, %19 : vector<4x1xf32>
    %c0_12 = arith.constant 0 : index
    %c0_13 = arith.constant 0 : index
    %22 = vector.load %arg4[%c0_12, %c0_13] : memref<4x1xf32, #tpu.memory_space<vmem>>, vector<4x1xf32>
    %23 = arith.addf %21, %22 : vector<4x1xf32>
    %c0_14 = arith.constant 0 : index
    %c0_15 = arith.constant 0 : index
    %24 = vector.load %arg5[%c0_14, %c0_15] : memref<4x16xf32, #tpu.memory_space<vmem>>, vector<4x16xf32>
    %25 = vector.broadcast %3 : vector<1x16xf32> to vector<4x16xf32>
    %26 = arith.mulf %24, %25 : vector<4x16xf32>
    %cst_16 = arith.constant dense<0.000000e+00> : vector<4xf32>
    %27 = vector.multi_reduction <add>, %26, %cst_16 [1] : vector<4x16xf32> to vector<4xf32>
    %28 = vector.shape_cast %27 : vector<4xf32> to vector<4x1xf32>
    %c0_17 = arith.constant 0 : index
    %c0_18 = arith.constant 0 : index
    %29 = vector.load %arg6[%c0_17, %c0_18] : memref<4x1xf32, #tpu.memory_space<vmem>>, vector<4x1xf32>
    %30 = arith.addf %28, %29 : vector<4x1xf32>
    %31 = vector.broadcast %7 : vector<4x1xf32> to vector<4x16xf32>
    %32 = arith.subf %1, %31 : vector<4x16xf32>
    %33 = vector.broadcast %23 : vector<4x1xf32> to vector<4x16xf32>
    %34 = arith.mulf %33, %32 : vector<4x16xf32>
    %cst_19 = arith.constant 9.99999974E-6 : f32
    %35 = vector.broadcast %cst_19 : f32 to vector<4x1xf32>
    %36 = arith.addf %14, %35 : vector<4x1xf32>
    %37 = math.rsqrt %36 : vector<4x1xf32>
    %38 = vector.broadcast %37 : vector<4x1xf32> to vector<4x16xf32>
    %39 = arith.mulf %34, %38 : vector<4x16xf32>
    %40 = vector.broadcast %30 : vector<4x1xf32> to vector<4x16xf32>
    %41 = arith.addf %39, %40 : vector<4x16xf32>
    %cst_20 = arith.constant 0.000000e+00 : f32
    %42 = vector.broadcast %cst_20 : f32 to vector<4x16xf32>
    %43 = arith.maximumf %41, %42 : vector<4x16xf32>
    %c0_21 = arith.constant 0 : index
    %c0_22 = arith.constant 0 : index
    %c0_23 = arith.constant 0 : index
    %44 = vector.load %arg7[%c0_21, %c0_22, %c0_23] : memref<1x4x16xf32, #tpu.memory_space<vmem>>, vector<1x4x16xf32>
    %45 = vector.shape_cast %44 : vector<1x4x16xf32> to vector<4x16xf32>
    %46 = vector.shape_cast %43 : vector<4x16xf32> to vector<1x4x16xf32>
    tpu.vector_store %arg7[%c0_21, %c0_22, %c0_23], %46 {strides = array<i32>} : memref<1x4x16xf32, #tpu.memory_space<vmem>>, vector<1x4x16xf32>,
    return
  }
  func.func @transform_0(%arg0: i32) -> (i32, i32, i32) {
    %c0_i32 = arith.constant 0 : i32
    %c0_i32_0 = arith.constant 0 : i32
    %c0_i32_1 = arith.constant 0 : i32
    return %arg0, %c0_i32, %c0_i32_0 : i32, i32, i32
  }
  func.func @transform_1(%arg0: i32) -> (i32, i32, i32) {
    %c0_i32 = arith.constant 0 : i32
    %c0_i32_0 = arith.constant 0 : i32
    %c0_i32_1 = arith.constant 0 : i32
    return %arg0, %c0_i32, %c0_i32_0 : i32, i32, i32
  }
  func.func @transform_2(%arg0: i32) -> (i32, i32) {
    %c0_i32 = arith.constant 0 : i32
    %c0_i32_0 = arith.constant 0 : i32
    %c0_i32_1 = arith.constant 0 : i32
    return %c0_i32, %c0_i32_0 : i32, i32
  }
  func.func @transform_3(%arg0: i32) -> (i32, i32) {
    %c0_i32 = arith.constant 0 : i32
    %c0_i32_0 = arith.constant 0 : i32
    %c0_i32_1 = arith.constant 0 : i32
    return %c0_i32, %c0_i32_0 : i32, i32
  }
  func.func @transform_4(%arg0: i32) -> (i32, i32) {
    %c0_i32 = arith.constant 0 : i32
    %c0_i32_0 = arith.constant 0 : i32
    %c0_i32_1 = arith.constant 0 : i32
    return %c0_i32, %c0_i32_0 : i32, i32
  }
  func.func @transform_5(%arg0: i32) -> (i32, i32) {
    %c0_i32 = arith.constant 0 : i32
    %c0_i32_0 = arith.constant 0 : i32
    %c0_i32_1 = arith.constant 0 : i32
    return %c0_i32, %c0_i32_0 : i32, i32
  }
  func.func @transform_6(%arg0: i32) -> (i32, i32, i32) {
    %c0_i32 = arith.constant 0 : i32
    %c0_i32_0 = arith.constant 0 : i32
    %c0_i32_1 = arith.constant 0 : i32
    return %arg0, %c0_i32, %c0_i32_0 : i32, i32, i32
  }
}

module attributes {stable_mosaic.version = 11 : i64} {
  func.func @_splat_conv_slice_kernel(%arg0: i32, %arg1: memref<1x2x2x16xf32, #tpu.memory_space<vmem>>, %arg2: memref<1x2x2x16xf32, #tpu.memory_space<vmem>>, %arg3: memref<1x2x16xi32, #tpu.memory_space<vmem>>, %arg4: memref<2x18x2xf32, #tpu.memory_space<vmem>>, %arg5: memref<2x1x2xf32, #tpu.memory_space<vmem>>, %arg6: memref<64x9xf32, #tpu.memory_space<vmem>>, %arg7: memref<1x2x2x16xf32, #tpu.memory_space<vmem>>, %arg8: memref<1x1x1xf32, #tpu.memory_space<vmem>>, %arg9: memref<64x18xf32, #tpu.memory_space<vmem>>) attributes {dimension_semantics = [#tpu.dimension_semantics<parallel>], iteration_bounds = array<i64: 2>, scalar_prefetch = 0 : i64, scratch_operands = 1 : i64, tpu.core_type = #tpu.core_type<tc>, window_params = [{transform_indices = @transform_0, window_bounds = array<i64: 1, 2, 2, 16>}, {transform_indices = @transform_1, window_bounds = array<i64: 1, 2, 2, 16>}, {transform_indices = @transform_2, window_bounds = array<i64: 1, 2, 16>}, {pipeline_mode = #tpu.pipeline_mode<synchronous>, transform_indices = @transform_3, window_bounds = array<i64: 2, 18, 2>}, {pipeline_mode = #tpu.pipeline_mode<synchronous>, transform_indices = @transform_4, window_bounds = array<i64: 2, 1, 2>}, {pipeline_mode = #tpu.pipeline_mode<synchronous>, transform_indices = @transform_5, window_bounds = array<i64: 64, 9>}, {transform_indices = @transform_6, window_bounds = array<i64: 1, 2, 2, 16>}, {transform_indices = @transform_7, window_bounds = array<i64: 1, 1, 1>}]} {
    %0 = tpu.iota {dimensions = array<i32: 0>} : vector<64x16xi32>
    %c0 = arith.constant 0 : index
    %c0_0 = arith.constant 0 : index
    %1 = vector.load %arg6[%c0, %c0_0] : memref<64x9xf32, #tpu.memory_space<vmem>>, vector<64x9xf32>
    %c0_1 = arith.constant 0 : index
    %c0_2 = arith.constant 0 : index
    %c0_3 = arith.constant 0 : index
    %c0_4 = arith.constant 0 : index
    %2 = vector.load %arg2[%c0_1, %c0_2, %c0_3, %c0_4] : memref<1x2x2x16xf32, #tpu.memory_space<vmem>>, vector<1x1x2x16xf32>
    %3 = vector.shape_cast %2 : vector<1x1x2x16xf32> to vector<2x16xf32>
    %4 = vector.extract_strided_slice %3 {offsets = [0, 0], sizes = [1, 16], strides = [1, 1]} : vector<2x16xf32> to vector<1x16xf32>
    %5 = vector.extract_strided_slice %3 {offsets = [1, 0], sizes = [1, 16], strides = [1, 1]} : vector<2x16xf32> to vector<1x16xf32>
    %c0_5 = arith.constant 0 : index
    %c0_6 = arith.constant 0 : index
    %c0_7 = arith.constant 0 : index
    %6 = vector.load %arg3[%c0_5, %c0_6, %c0_7] : memref<1x2x16xi32, #tpu.memory_space<vmem>>, vector<1x1x16xi32>
    %7 = vector.shape_cast %6 : vector<1x1x16xi32> to vector<1x16xi32>
    %cst = arith.constant 0.000000e+00 : f32
    %8 = vector.broadcast %cst : f32 to vector<64x16xf32>
    %cst_8 = arith.constant 1.000000e+00 : f32
    %9 = vector.broadcast %cst_8 : f32 to vector<1x16xf32>
    %10 = arith.subf %9, %4 : vector<1x16xf32>
    %cst_9 = arith.constant 1.000000e+00 : f32
    %11 = vector.broadcast %cst_9 : f32 to vector<1x16xf32>
    %12 = arith.subf %11, %5 : vector<1x16xf32>
    %c0_i32 = arith.constant 0 : i32
    %13 = vector.broadcast %c0_i32 : i32 to vector<1x16xi32>
    %14 = arith.addi %7, %13 : vector<1x16xi32>
    %15 = vector.broadcast %14 : vector<1x16xi32> to vector<64x16xi32>
    %16 = arith.cmpi eq, %0, %15 : vector<64x16xi32>
    %17 = arith.mulf %10, %12 : vector<1x16xf32>
    %cst_10 = arith.constant 0.000000e+00 : f32
    %18 = vector.shape_cast %17 : vector<1x16xf32> to vector<1x16xf32>
    %19 = vector.broadcast %18 : vector<1x16xf32> to vector<64x16xf32>
    %20 = vector.broadcast %cst_10 : f32 to vector<64x16xf32>
    %21 = arith.select %16, %19, %20 : vector<64x16xi1>, vector<64x16xf32>
    %22 = arith.addf %8, %21 : vector<64x16xf32>
    %c1_i32 = arith.constant 1 : i32
    %23 = vector.broadcast %c1_i32 : i32 to vector<1x16xi32>
    %24 = arith.addi %7, %23 : vector<1x16xi32>
    %25 = vector.broadcast %24 : vector<1x16xi32> to vector<64x16xi32>
    %26 = arith.cmpi eq, %0, %25 : vector<64x16xi32>
    %27 = arith.mulf %10, %5 : vector<1x16xf32>
    %cst_11 = arith.constant 0.000000e+00 : f32
    %28 = vector.shape_cast %27 : vector<1x16xf32> to vector<1x16xf32>
    %29 = vector.broadcast %28 : vector<1x16xf32> to vector<64x16xf32>
    %30 = vector.broadcast %cst_11 : f32 to vector<64x16xf32>
    %31 = arith.select %26, %29, %30 : vector<64x16xi1>, vector<64x16xf32>
    %32 = arith.addf %22, %31 : vector<64x16xf32>
    %cst_12 = arith.constant 1.000000e+00 : f32
    %33 = vector.broadcast %cst_12 : f32 to vector<1x16xf32>
    %34 = arith.subf %33, %5 : vector<1x16xf32>
    %c8_i32 = arith.constant 8 : i32
    %35 = vector.broadcast %c8_i32 : i32 to vector<1x16xi32>
    %36 = arith.addi %7, %35 : vector<1x16xi32>
    %37 = vector.broadcast %36 : vector<1x16xi32> to vector<64x16xi32>
    %38 = arith.cmpi eq, %0, %37 : vector<64x16xi32>
    %39 = arith.mulf %4, %34 : vector<1x16xf32>
    %cst_13 = arith.constant 0.000000e+00 : f32
    %40 = vector.shape_cast %39 : vector<1x16xf32> to vector<1x16xf32>
    %41 = vector.broadcast %40 : vector<1x16xf32> to vector<64x16xf32>
    %42 = vector.broadcast %cst_13 : f32 to vector<64x16xf32>
    %43 = arith.select %38, %41, %42 : vector<64x16xi1>, vector<64x16xf32>
    %44 = arith.addf %32, %43 : vector<64x16xf32>
    %c9_i32 = arith.constant 9 : i32
    %45 = vector.broadcast %c9_i32 : i32 to vector<1x16xi32>
    %46 = arith.addi %7, %45 : vector<1x16xi32>
    %47 = vector.broadcast %46 : vector<1x16xi32> to vector<64x16xi32>
    %48 = arith.cmpi eq, %0, %47 : vector<64x16xi32>
    %49 = arith.mulf %4, %5 : vector<1x16xf32>
    %cst_14 = arith.constant 0.000000e+00 : f32
    %50 = vector.shape_cast %49 : vector<1x16xf32> to vector<1x16xf32>
    %51 = vector.broadcast %50 : vector<1x16xf32> to vector<64x16xf32>
    %52 = vector.broadcast %cst_14 : f32 to vector<64x16xf32>
    %53 = arith.select %48, %51, %52 : vector<64x16xi1>, vector<64x16xf32>
    %54 = arith.addf %44, %53 : vector<64x16xf32>
    %c0_15 = arith.constant 0 : index
    %c0_16 = arith.constant 0 : index
    %c0_17 = arith.constant 0 : index
    %c0_18 = arith.constant 0 : index
    %55 = vector.load %arg1[%c0_15, %c0_16, %c0_17, %c0_18] : memref<1x2x2x16xf32, #tpu.memory_space<vmem>>, vector<1x1x2x16xf32>
    %56 = vector.shape_cast %55 : vector<1x1x2x16xf32> to vector<2x16xf32>
    %57 = tpu.transpose %56, [1, 0] : vector<2x16xf32> -> vector<16x2xf32>
    %cst_19 = arith.constant dense<0.000000e+00> : vector<64x2xf32>
    %58 = tpu.matmul %54, %57, %cst_19 {dimension_numbers = #tpu.dot_dimension_numbers<[1], [0], [0], [1], [0, 0, 1, 1], [], []>} : vector<64x16xf32>, vector<16x2xf32>, vector<64x2xf32> -> vector<64x2xf32>
    %59 = math.absf %58 : vector<64x2xf32>
    %cst_20 = arith.constant 9.99999971E-10 : f32
    %60 = vector.broadcast %cst_20 : f32 to vector<64x2xf32>
    %61 = arith.cmpf ogt, %59, %60 : vector<64x2xf32>
    %62 = arith.extui %61 : vector<64x2xi1> to vector<64x2xi32>
    %63 = arith.sitofp %62 : vector<64x2xi32> to vector<64x2xf32>
    %64 = vector.shape_cast %63 : vector<64x2xf32> to vector<1x64x2xf32>
    %cst_21 = arith.constant dense<0.000000e+00> : vector<1xf32>
    %65 = vector.multi_reduction <add>, %64, %cst_21 [1, 2] : vector<1x64x2xf32> to vector<1xf32>
    %66 = vector.shape_cast %65 : vector<1xf32> to vector<1x1x1xf32>
    %67 = vector.extract %66[0, 0, 0] : f32 from vector<1x1x1xf32>
    %cst_22 = arith.constant 0.000000e+00 : f32
    %68 = arith.addf %cst_22, %67 : f32
    %c9_i32_23 = arith.constant 9 : i32
    %69 = tpu.dynamic_rotate %58 by %c9_i32_23 dim 0 : vector<64x2xf32>, i32 -> vector<64x2xf32>
    %70 = vector.extract_strided_slice %1 {offsets = [0, 0], sizes = [64, 1], strides = [1, 1]} : vector<64x9xf32> to vector<64x1xf32>
    %71 = vector.broadcast %70 : vector<64x1xf32> to vector<64x2xf32>
    %72 = arith.mulf %69, %71 : vector<64x2xf32>
    %c0_24 = arith.constant 0 : index
    %c0_25 = arith.constant 0 : index
    %73 = vector.load %arg9[%c0_24, %c0_25] : memref<64x18xf32, #tpu.memory_space<vmem>>, vector<64x2xf32>
    tpu.vector_store %arg9[%c0_24, %c0_25], %72 {strides = array<i32>} : memref<64x18xf32, #tpu.memory_space<vmem>>, vector<64x2xf32>,
    %c8_i32_26 = arith.constant 8 : i32
    %74 = tpu.dynamic_rotate %58 by %c8_i32_26 dim 0 : vector<64x2xf32>, i32 -> vector<64x2xf32>
    %75 = vector.extract_strided_slice %1 {offsets = [0, 1], sizes = [64, 1], strides = [1, 1]} : vector<64x9xf32> to vector<64x1xf32>
    %76 = vector.broadcast %75 : vector<64x1xf32> to vector<64x2xf32>
    %77 = arith.mulf %74, %76 : vector<64x2xf32>
    %c0_27 = arith.constant 0 : index
    %c2 = arith.constant 2 : index
    %78 = vector.load %arg9[%c0_27, %c2] : memref<64x18xf32, #tpu.memory_space<vmem>>, vector<64x2xf32>
    tpu.vector_store %arg9[%c0_27, %c2], %77 {strides = array<i32>} : memref<64x18xf32, #tpu.memory_space<vmem>>, vector<64x2xf32>,
    %c7_i32 = arith.constant 7 : i32
    %79 = tpu.dynamic_rotate %58 by %c7_i32 dim 0 : vector<64x2xf32>, i32 -> vector<64x2xf32>
    %80 = vector.extract_strided_slice %1 {offsets = [0, 2], sizes = [64, 1], strides = [1, 1]} : vector<64x9xf32> to vector<64x1xf32>
    %81 = vector.broadcast %80 : vector<64x1xf32> to vector<64x2xf32>
    %82 = arith.mulf %79, %81 : vector<64x2xf32>
    %c0_28 = arith.constant 0 : index
    %c4 = arith.constant 4 : index
    %83 = vector.load %arg9[%c0_28, %c4] : memref<64x18xf32, #tpu.memory_space<vmem>>, vector<64x2xf32>
    tpu.vector_store %arg9[%c0_28, %c4], %82 {strides = array<i32>} : memref<64x18xf32, #tpu.memory_space<vmem>>, vector<64x2xf32>,
    %c1_i32_29 = arith.constant 1 : i32
    %84 = tpu.dynamic_rotate %58 by %c1_i32_29 dim 0 : vector<64x2xf32>, i32 -> vector<64x2xf32>
    %85 = vector.extract_strided_slice %1 {offsets = [0, 3], sizes = [64, 1], strides = [1, 1]} : vector<64x9xf32> to vector<64x1xf32>
    %86 = vector.broadcast %85 : vector<64x1xf32> to vector<64x2xf32>
    %87 = arith.mulf %84, %86 : vector<64x2xf32>
    %c0_30 = arith.constant 0 : index
    %c6 = arith.constant 6 : index
    %88 = vector.load %arg9[%c0_30, %c6] : memref<64x18xf32, #tpu.memory_space<vmem>>, vector<64x2xf32>
    tpu.vector_store %arg9[%c0_30, %c6], %87 {strides = array<i32>} : memref<64x18xf32, #tpu.memory_space<vmem>>, vector<64x2xf32>,
    %89 = vector.extract_strided_slice %1 {offsets = [0, 4], sizes = [64, 1], strides = [1, 1]} : vector<64x9xf32> to vector<64x1xf32>
    %90 = vector.broadcast %89 : vector<64x1xf32> to vector<64x2xf32>
    %91 = arith.mulf %58, %90 : vector<64x2xf32>
    %c0_31 = arith.constant 0 : index
    %c8 = arith.constant 8 : index
    %92 = vector.load %arg9[%c0_31, %c8] : memref<64x18xf32, #tpu.memory_space<vmem>>, vector<64x2xf32>
    tpu.vector_store %arg9[%c0_31, %c8], %91 {strides = array<i32>} : memref<64x18xf32, #tpu.memory_space<vmem>>, vector<64x2xf32>,
    %c63_i32 = arith.constant 63 : i32
    %93 = tpu.dynamic_rotate %58 by %c63_i32 dim 0 : vector<64x2xf32>, i32 -> vector<64x2xf32>
    %94 = vector.extract_strided_slice %1 {offsets = [0, 5], sizes = [64, 1], strides = [1, 1]} : vector<64x9xf32> to vector<64x1xf32>
    %95 = vector.broadcast %94 : vector<64x1xf32> to vector<64x2xf32>
    %96 = arith.mulf %93, %95 : vector<64x2xf32>
    %c0_32 = arith.constant 0 : index
    %c10 = arith.constant 10 : index
    %97 = vector.load %arg9[%c0_32, %c10] : memref<64x18xf32, #tpu.memory_space<vmem>>, vector<64x2xf32>
    tpu.vector_store %arg9[%c0_32, %c10], %96 {strides = array<i32>} : memref<64x18xf32, #tpu.memory_space<vmem>>, vector<64x2xf32>,
    %c57_i32 = arith.constant 57 : i32
    %98 = tpu.dynamic_rotate %58 by %c57_i32 dim 0 : vector<64x2xf32>, i32 -> vector<64x2xf32>
    %99 = vector.extract_strided_slice %1 {offsets = [0, 6], sizes = [64, 1], strides = [1, 1]} : vector<64x9xf32> to vector<64x1xf32>
    %100 = vector.broadcast %99 : vector<64x1xf32> to vector<64x2xf32>
    %101 = arith.mulf %98, %100 : vector<64x2xf32>
    %c0_33 = arith.constant 0 : index
    %c12 = arith.constant 12 : index
    %102 = vector.load %arg9[%c0_33, %c12] : memref<64x18xf32, #tpu.memory_space<vmem>>, vector<64x2xf32>
    tpu.vector_store %arg9[%c0_33, %c12], %101 {strides = array<i32>} : memref<64x18xf32, #tpu.memory_space<vmem>>, vector<64x2xf32>,
    %c56_i32 = arith.constant 56 : i32
    %103 = tpu.dynamic_rotate %58 by %c56_i32 dim 0 : vector<64x2xf32>, i32 -> vector<64x2xf32>
    %104 = vector.extract_strided_slice %1 {offsets = [0, 7], sizes = [64, 1], strides = [1, 1]} : vector<64x9xf32> to vector<64x1xf32>
    %105 = vector.broadcast %104 : vector<64x1xf32> to vector<64x2xf32>
    %106 = arith.mulf %103, %105 : vector<64x2xf32>
    %c0_34 = arith.constant 0 : index
    %c14 = arith.constant 14 : index
    %107 = vector.load %arg9[%c0_34, %c14] : memref<64x18xf32, #tpu.memory_space<vmem>>, vector<64x2xf32>
    tpu.vector_store %arg9[%c0_34, %c14], %106 {strides = array<i32>} : memref<64x18xf32, #tpu.memory_space<vmem>>, vector<64x2xf32>,
    %c55_i32 = arith.constant 55 : i32
    %108 = tpu.dynamic_rotate %58 by %c55_i32 dim 0 : vector<64x2xf32>, i32 -> vector<64x2xf32>
    %109 = vector.extract_strided_slice %1 {offsets = [0, 8], sizes = [64, 1], strides = [1, 1]} : vector<64x9xf32> to vector<64x1xf32>
    %110 = vector.broadcast %109 : vector<64x1xf32> to vector<64x2xf32>
    %111 = arith.mulf %108, %110 : vector<64x2xf32>
    %c0_35 = arith.constant 0 : index
    %c16 = arith.constant 16 : index
    %112 = vector.load %arg9[%c0_35, %c16] : memref<64x18xf32, #tpu.memory_space<vmem>>, vector<64x2xf32>
    tpu.vector_store %arg9[%c0_35, %c16], %111 {strides = array<i32>} : memref<64x18xf32, #tpu.memory_space<vmem>>, vector<64x2xf32>,
    %c0_36 = arith.constant 0 : index
    %c0_37 = arith.constant 0 : index
    %113 = vector.load %arg9[%c0_36, %c0_37] : memref<64x18xf32, #tpu.memory_space<vmem>>, vector<64x18xf32>
    %c0_38 = arith.constant 0 : index
    %c0_39 = arith.constant 0 : index
    %c0_40 = arith.constant 0 : index
    %114 = vector.load %arg4[%c0_38, %c0_39, %c0_40] : memref<2x18x2xf32, #tpu.memory_space<vmem>>, vector<1x18x2xf32>
    %115 = vector.shape_cast %114 : vector<1x18x2xf32> to vector<18x2xf32>
    %cst_41 = arith.constant dense<0.000000e+00> : vector<64x2xf32>
    %116 = tpu.matmul %113, %115, %cst_41 {dimension_numbers = #tpu.dot_dimension_numbers<[1], [0], [0], [1], [0, 0, 1, 1], [], []>} : vector<64x18xf32>, vector<18x2xf32>, vector<64x2xf32> -> vector<64x2xf32>
    %c0_42 = arith.constant 0 : index
    %c0_43 = arith.constant 0 : index
    %c0_44 = arith.constant 0 : index
    %117 = vector.load %arg5[%c0_42, %c0_43, %c0_44] : memref<2x1x2xf32, #tpu.memory_space<vmem>>, vector<1x1x2xf32>
    %118 = vector.shape_cast %117 : vector<1x1x2xf32> to vector<1x2xf32>
    %119 = vector.broadcast %118 : vector<1x2xf32> to vector<64x2xf32>
    %120 = arith.addf %116, %119 : vector<64x2xf32>
    %121 = tpu.transpose %120, [1, 0] : vector<64x2xf32> -> vector<2x64xf32>
    %cst_45 = arith.constant dense<0.000000e+00> : vector<2x16xf32>
    %122 = tpu.matmul %121, %54, %cst_45 {dimension_numbers = #tpu.dot_dimension_numbers<[1], [0], [0], [1], [0, 0, 1, 1], [], []>} : vector<2x64xf32>, vector<64x16xf32>, vector<2x16xf32> -> vector<2x16xf32>
    %c0_46 = arith.constant 0 : index
    %c0_47 = arith.constant 0 : index
    %c0_48 = arith.constant 0 : index
    %c0_49 = arith.constant 0 : index
    %123 = vector.load %arg7[%c0_46, %c0_47, %c0_48, %c0_49] : memref<1x2x2x16xf32, #tpu.memory_space<vmem>>, vector<1x1x2x16xf32>
    %124 = vector.shape_cast %123 : vector<1x1x2x16xf32> to vector<2x16xf32>
    %125 = vector.shape_cast %122 : vector<2x16xf32> to vector<1x1x2x16xf32>
    tpu.vector_store %arg7[%c0_46, %c0_47, %c0_48, %c0_49], %125 {strides = array<i32>} : memref<1x2x2x16xf32, #tpu.memory_space<vmem>>, vector<1x1x2x16xf32>,
    %c0_50 = arith.constant 0 : index
    %c1 = arith.constant 1 : index
    %c0_51 = arith.constant 0 : index
    %c0_52 = arith.constant 0 : index
    %126 = vector.load %arg2[%c0_50, %c1, %c0_51, %c0_52] : memref<1x2x2x16xf32, #tpu.memory_space<vmem>>, vector<1x1x2x16xf32>
    %127 = vector.shape_cast %126 : vector<1x1x2x16xf32> to vector<2x16xf32>
    %128 = vector.extract_strided_slice %127 {offsets = [0, 0], sizes = [1, 16], strides = [1, 1]} : vector<2x16xf32> to vector<1x16xf32>
    %129 = vector.extract_strided_slice %127 {offsets = [1, 0], sizes = [1, 16], strides = [1, 1]} : vector<2x16xf32> to vector<1x16xf32>
    %c0_53 = arith.constant 0 : index
    %c1_54 = arith.constant 1 : index
    %c0_55 = arith.constant 0 : index
    %130 = vector.load %arg3[%c0_53, %c1_54, %c0_55] : memref<1x2x16xi32, #tpu.memory_space<vmem>>, vector<1x1x16xi32>
    %131 = vector.shape_cast %130 : vector<1x1x16xi32> to vector<1x16xi32>
    %cst_56 = arith.constant 0.000000e+00 : f32
    %132 = vector.broadcast %cst_56 : f32 to vector<64x16xf32>
    %cst_57 = arith.constant 1.000000e+00 : f32
    %133 = vector.broadcast %cst_57 : f32 to vector<1x16xf32>
    %134 = arith.subf %133, %128 : vector<1x16xf32>
    %cst_58 = arith.constant 1.000000e+00 : f32
    %135 = vector.broadcast %cst_58 : f32 to vector<1x16xf32>
    %136 = arith.subf %135, %129 : vector<1x16xf32>
    %c0_i32_59 = arith.constant 0 : i32
    %137 = vector.broadcast %c0_i32_59 : i32 to vector<1x16xi32>
    %138 = arith.addi %131, %137 : vector<1x16xi32>
    %139 = vector.broadcast %138 : vector<1x16xi32> to vector<64x16xi32>
    %140 = arith.cmpi eq, %0, %139 : vector<64x16xi32>
    %141 = arith.mulf %134, %136 : vector<1x16xf32>
    %cst_60 = arith.constant 0.000000e+00 : f32
    %142 = vector.shape_cast %141 : vector<1x16xf32> to vector<1x16xf32>
    %143 = vector.broadcast %142 : vector<1x16xf32> to vector<64x16xf32>
    %144 = vector.broadcast %cst_60 : f32 to vector<64x16xf32>
    %145 = arith.select %140, %143, %144 : vector<64x16xi1>, vector<64x16xf32>
    %146 = arith.addf %132, %145 : vector<64x16xf32>
    %c1_i32_61 = arith.constant 1 : i32
    %147 = vector.broadcast %c1_i32_61 : i32 to vector<1x16xi32>
    %148 = arith.addi %131, %147 : vector<1x16xi32>
    %149 = vector.broadcast %148 : vector<1x16xi32> to vector<64x16xi32>
    %150 = arith.cmpi eq, %0, %149 : vector<64x16xi32>
    %151 = arith.mulf %134, %129 : vector<1x16xf32>
    %cst_62 = arith.constant 0.000000e+00 : f32
    %152 = vector.shape_cast %151 : vector<1x16xf32> to vector<1x16xf32>
    %153 = vector.broadcast %152 : vector<1x16xf32> to vector<64x16xf32>
    %154 = vector.broadcast %cst_62 : f32 to vector<64x16xf32>
    %155 = arith.select %150, %153, %154 : vector<64x16xi1>, vector<64x16xf32>
    %156 = arith.addf %146, %155 : vector<64x16xf32>
    %cst_63 = arith.constant 1.000000e+00 : f32
    %157 = vector.broadcast %cst_63 : f32 to vector<1x16xf32>
    %158 = arith.subf %157, %129 : vector<1x16xf32>
    %c8_i32_64 = arith.constant 8 : i32
    %159 = vector.broadcast %c8_i32_64 : i32 to vector<1x16xi32>
    %160 = arith.addi %131, %159 : vector<1x16xi32>
    %161 = vector.broadcast %160 : vector<1x16xi32> to vector<64x16xi32>
    %162 = arith.cmpi eq, %0, %161 : vector<64x16xi32>
    %163 = arith.mulf %128, %158 : vector<1x16xf32>
    %cst_65 = arith.constant 0.000000e+00 : f32
    %164 = vector.shape_cast %163 : vector<1x16xf32> to vector<1x16xf32>
    %165 = vector.broadcast %164 : vector<1x16xf32> to vector<64x16xf32>
    %166 = vector.broadcast %cst_65 : f32 to vector<64x16xf32>
    %167 = arith.select %162, %165, %166 : vector<64x16xi1>, vector<64x16xf32>
    %168 = arith.addf %156, %167 : vector<64x16xf32>
    %c9_i32_66 = arith.constant 9 : i32
    %169 = vector.broadcast %c9_i32_66 : i32 to vector<1x16xi32>
    %170 = arith.addi %131, %169 : vector<1x16xi32>
    %171 = vector.broadcast %170 : vector<1x16xi32> to vector<64x16xi32>
    %172 = arith.cmpi eq, %0, %171 : vector<64x16xi32>
    %173 = arith.mulf %128, %129 : vector<1x16xf32>
    %cst_67 = arith.constant 0.000000e+00 : f32
    %174 = vector.shape_cast %173 : vector<1x16xf32> to vector<1x16xf32>
    %175 = vector.broadcast %174 : vector<1x16xf32> to vector<64x16xf32>
    %176 = vector.broadcast %cst_67 : f32 to vector<64x16xf32>
    %177 = arith.select %172, %175, %176 : vector<64x16xi1>, vector<64x16xf32>
    %178 = arith.addf %168, %177 : vector<64x16xf32>
    %c0_68 = arith.constant 0 : index
    %c1_69 = arith.constant 1 : index
    %c0_70 = arith.constant 0 : index
    %c0_71 = arith.constant 0 : index
    %179 = vector.load %arg1[%c0_68, %c1_69, %c0_70, %c0_71] : memref<1x2x2x16xf32, #tpu.memory_space<vmem>>, vector<1x1x2x16xf32>
    %180 = vector.shape_cast %179 : vector<1x1x2x16xf32> to vector<2x16xf32>
    %181 = tpu.transpose %180, [1, 0] : vector<2x16xf32> -> vector<16x2xf32>
    %cst_72 = arith.constant dense<0.000000e+00> : vector<64x2xf32>
    %182 = tpu.matmul %178, %181, %cst_72 {dimension_numbers = #tpu.dot_dimension_numbers<[1], [0], [0], [1], [0, 0, 1, 1], [], []>} : vector<64x16xf32>, vector<16x2xf32>, vector<64x2xf32> -> vector<64x2xf32>
    %183 = math.absf %182 : vector<64x2xf32>
    %cst_73 = arith.constant 9.99999971E-10 : f32
    %184 = vector.broadcast %cst_73 : f32 to vector<64x2xf32>
    %185 = arith.cmpf ogt, %183, %184 : vector<64x2xf32>
    %186 = arith.extui %185 : vector<64x2xi1> to vector<64x2xi32>
    %187 = arith.sitofp %186 : vector<64x2xi32> to vector<64x2xf32>
    %188 = vector.shape_cast %187 : vector<64x2xf32> to vector<1x64x2xf32>
    %cst_74 = arith.constant dense<0.000000e+00> : vector<1xf32>
    %189 = vector.multi_reduction <add>, %188, %cst_74 [1, 2] : vector<1x64x2xf32> to vector<1xf32>
    %190 = vector.shape_cast %189 : vector<1xf32> to vector<1x1x1xf32>
    %191 = vector.extract %190[0, 0, 0] : f32 from vector<1x1x1xf32>
    %192 = arith.addf %68, %191 : f32
    %c9_i32_75 = arith.constant 9 : i32
    %193 = tpu.dynamic_rotate %182 by %c9_i32_75 dim 0 : vector<64x2xf32>, i32 -> vector<64x2xf32>
    %194 = vector.extract_strided_slice %1 {offsets = [0, 0], sizes = [64, 1], strides = [1, 1]} : vector<64x9xf32> to vector<64x1xf32>
    %195 = vector.broadcast %194 : vector<64x1xf32> to vector<64x2xf32>
    %196 = arith.mulf %193, %195 : vector<64x2xf32>
    %c0_76 = arith.constant 0 : index
    %c0_77 = arith.constant 0 : index
    %197 = vector.load %arg9[%c0_76, %c0_77] : memref<64x18xf32, #tpu.memory_space<vmem>>, vector<64x2xf32>
    tpu.vector_store %arg9[%c0_76, %c0_77], %196 {strides = array<i32>} : memref<64x18xf32, #tpu.memory_space<vmem>>, vector<64x2xf32>,
    %c8_i32_78 = arith.constant 8 : i32
    %198 = tpu.dynamic_rotate %182 by %c8_i32_78 dim 0 : vector<64x2xf32>, i32 -> vector<64x2xf32>
    %199 = vector.extract_strided_slice %1 {offsets = [0, 1], sizes = [64, 1], strides = [1, 1]} : vector<64x9xf32> to vector<64x1xf32>
    %200 = vector.broadcast %199 : vector<64x1xf32> to vector<64x2xf32>
    %201 = arith.mulf %198, %200 : vector<64x2xf32>
    %c0_79 = arith.constant 0 : index
    %c2_80 = arith.constant 2 : index
    %202 = vector.load %arg9[%c0_79, %c2_80] : memref<64x18xf32, #tpu.memory_space<vmem>>, vector<64x2xf32>
    tpu.vector_store %arg9[%c0_79, %c2_80], %201 {strides = array<i32>} : memref<64x18xf32, #tpu.memory_space<vmem>>, vector<64x2xf32>,
    %c7_i32_81 = arith.constant 7 : i32
    %203 = tpu.dynamic_rotate %182 by %c7_i32_81 dim 0 : vector<64x2xf32>, i32 -> vector<64x2xf32>
    %204 = vector.extract_strided_slice %1 {offsets = [0, 2], sizes = [64, 1], strides = [1, 1]} : vector<64x9xf32> to vector<64x1xf32>
    %205 = vector.broadcast %204 : vector<64x1xf32> to vector<64x2xf32>
    %206 = arith.mulf %203, %205 : vector<64x2xf32>
    %c0_82 = arith.constant 0 : index
    %c4_83 = arith.constant 4 : index
    %207 = vector.load %arg9[%c0_82, %c4_83] : memref<64x18xf32, #tpu.memory_space<vmem>>, vector<64x2xf32>
    tpu.vector_store %arg9[%c0_82, %c4_83], %206 {strides = array<i32>} : memref<64x18xf32, #tpu.memory_space<vmem>>, vector<64x2xf32>,
    %c1_i32_84 = arith.constant 1 : i32
    %208 = tpu.dynamic_rotate %182 by %c1_i32_84 dim 0 : vector<64x2xf32>, i32 -> vector<64x2xf32>
    %209 = vector.extract_strided_slice %1 {offsets = [0, 3], sizes = [64, 1], strides = [1, 1]} : vector<64x9xf32> to vector<64x1xf32>
    %210 = vector.broadcast %209 : vector<64x1xf32> to vector<64x2xf32>
    %211 = arith.mulf %208, %210 : vector<64x2xf32>
    %c0_85 = arith.constant 0 : index
    %c6_86 = arith.constant 6 : index
    %212 = vector.load %arg9[%c0_85, %c6_86] : memref<64x18xf32, #tpu.memory_space<vmem>>, vector<64x2xf32>
    tpu.vector_store %arg9[%c0_85, %c6_86], %211 {strides = array<i32>} : memref<64x18xf32, #tpu.memory_space<vmem>>, vector<64x2xf32>,
    %213 = vector.extract_strided_slice %1 {offsets = [0, 4], sizes = [64, 1], strides = [1, 1]} : vector<64x9xf32> to vector<64x1xf32>
    %214 = vector.broadcast %213 : vector<64x1xf32> to vector<64x2xf32>
    %215 = arith.mulf %182, %214 : vector<64x2xf32>
    %c0_87 = arith.constant 0 : index
    %c8_88 = arith.constant 8 : index
    %216 = vector.load %arg9[%c0_87, %c8_88] : memref<64x18xf32, #tpu.memory_space<vmem>>, vector<64x2xf32>
    tpu.vector_store %arg9[%c0_87, %c8_88], %215 {strides = array<i32>} : memref<64x18xf32, #tpu.memory_space<vmem>>, vector<64x2xf32>,
    %c63_i32_89 = arith.constant 63 : i32
    %217 = tpu.dynamic_rotate %182 by %c63_i32_89 dim 0 : vector<64x2xf32>, i32 -> vector<64x2xf32>
    %218 = vector.extract_strided_slice %1 {offsets = [0, 5], sizes = [64, 1], strides = [1, 1]} : vector<64x9xf32> to vector<64x1xf32>
    %219 = vector.broadcast %218 : vector<64x1xf32> to vector<64x2xf32>
    %220 = arith.mulf %217, %219 : vector<64x2xf32>
    %c0_90 = arith.constant 0 : index
    %c10_91 = arith.constant 10 : index
    %221 = vector.load %arg9[%c0_90, %c10_91] : memref<64x18xf32, #tpu.memory_space<vmem>>, vector<64x2xf32>
    tpu.vector_store %arg9[%c0_90, %c10_91], %220 {strides = array<i32>} : memref<64x18xf32, #tpu.memory_space<vmem>>, vector<64x2xf32>,
    %c57_i32_92 = arith.constant 57 : i32
    %222 = tpu.dynamic_rotate %182 by %c57_i32_92 dim 0 : vector<64x2xf32>, i32 -> vector<64x2xf32>
    %223 = vector.extract_strided_slice %1 {offsets = [0, 6], sizes = [64, 1], strides = [1, 1]} : vector<64x9xf32> to vector<64x1xf32>
    %224 = vector.broadcast %223 : vector<64x1xf32> to vector<64x2xf32>
    %225 = arith.mulf %222, %224 : vector<64x2xf32>
    %c0_93 = arith.constant 0 : index
    %c12_94 = arith.constant 12 : index
    %226 = vector.load %arg9[%c0_93, %c12_94] : memref<64x18xf32, #tpu.memory_space<vmem>>, vector<64x2xf32>
    tpu.vector_store %arg9[%c0_93, %c12_94], %225 {strides = array<i32>} : memref<64x18xf32, #tpu.memory_space<vmem>>, vector<64x2xf32>,
    %c56_i32_95 = arith.constant 56 : i32
    %227 = tpu.dynamic_rotate %182 by %c56_i32_95 dim 0 : vector<64x2xf32>, i32 -> vector<64x2xf32>
    %228 = vector.extract_strided_slice %1 {offsets = [0, 7], sizes = [64, 1], strides = [1, 1]} : vector<64x9xf32> to vector<64x1xf32>
    %229 = vector.broadcast %228 : vector<64x1xf32> to vector<64x2xf32>
    %230 = arith.mulf %227, %229 : vector<64x2xf32>
    %c0_96 = arith.constant 0 : index
    %c14_97 = arith.constant 14 : index
    %231 = vector.load %arg9[%c0_96, %c14_97] : memref<64x18xf32, #tpu.memory_space<vmem>>, vector<64x2xf32>
    tpu.vector_store %arg9[%c0_96, %c14_97], %230 {strides = array<i32>} : memref<64x18xf32, #tpu.memory_space<vmem>>, vector<64x2xf32>,
    %c55_i32_98 = arith.constant 55 : i32
    %232 = tpu.dynamic_rotate %182 by %c55_i32_98 dim 0 : vector<64x2xf32>, i32 -> vector<64x2xf32>
    %233 = vector.extract_strided_slice %1 {offsets = [0, 8], sizes = [64, 1], strides = [1, 1]} : vector<64x9xf32> to vector<64x1xf32>
    %234 = vector.broadcast %233 : vector<64x1xf32> to vector<64x2xf32>
    %235 = arith.mulf %232, %234 : vector<64x2xf32>
    %c0_99 = arith.constant 0 : index
    %c16_100 = arith.constant 16 : index
    %236 = vector.load %arg9[%c0_99, %c16_100] : memref<64x18xf32, #tpu.memory_space<vmem>>, vector<64x2xf32>
    tpu.vector_store %arg9[%c0_99, %c16_100], %235 {strides = array<i32>} : memref<64x18xf32, #tpu.memory_space<vmem>>, vector<64x2xf32>,
    %c0_101 = arith.constant 0 : index
    %c0_102 = arith.constant 0 : index
    %237 = vector.load %arg9[%c0_101, %c0_102] : memref<64x18xf32, #tpu.memory_space<vmem>>, vector<64x18xf32>
    %c1_103 = arith.constant 1 : index
    %c0_104 = arith.constant 0 : index
    %c0_105 = arith.constant 0 : index
    %238 = vector.load %arg4[%c1_103, %c0_104, %c0_105] : memref<2x18x2xf32, #tpu.memory_space<vmem>>, vector<1x18x2xf32>
    %239 = vector.shape_cast %238 : vector<1x18x2xf32> to vector<18x2xf32>
    %cst_106 = arith.constant dense<0.000000e+00> : vector<64x2xf32>
    %240 = tpu.matmul %237, %239, %cst_106 {dimension_numbers = #tpu.dot_dimension_numbers<[1], [0], [0], [1], [0, 0, 1, 1], [], []>} : vector<64x18xf32>, vector<18x2xf32>, vector<64x2xf32> -> vector<64x2xf32>
    %c1_107 = arith.constant 1 : index
    %c0_108 = arith.constant 0 : index
    %c0_109 = arith.constant 0 : index
    %241 = vector.load %arg5[%c1_107, %c0_108, %c0_109] : memref<2x1x2xf32, #tpu.memory_space<vmem>>, vector<1x1x2xf32>
    %242 = vector.shape_cast %241 : vector<1x1x2xf32> to vector<1x2xf32>
    %243 = vector.broadcast %242 : vector<1x2xf32> to vector<64x2xf32>
    %244 = arith.addf %240, %243 : vector<64x2xf32>
    %245 = tpu.transpose %244, [1, 0] : vector<64x2xf32> -> vector<2x64xf32>
    %cst_110 = arith.constant dense<0.000000e+00> : vector<2x16xf32>
    %246 = tpu.matmul %245, %178, %cst_110 {dimension_numbers = #tpu.dot_dimension_numbers<[1], [0], [0], [1], [0, 0, 1, 1], [], []>} : vector<2x64xf32>, vector<64x16xf32>, vector<2x16xf32> -> vector<2x16xf32>
    %c0_111 = arith.constant 0 : index
    %c1_112 = arith.constant 1 : index
    %c0_113 = arith.constant 0 : index
    %c0_114 = arith.constant 0 : index
    %247 = vector.load %arg7[%c0_111, %c1_112, %c0_113, %c0_114] : memref<1x2x2x16xf32, #tpu.memory_space<vmem>>, vector<1x1x2x16xf32>
    %248 = vector.shape_cast %247 : vector<1x1x2x16xf32> to vector<2x16xf32>
    %249 = vector.shape_cast %246 : vector<2x16xf32> to vector<1x1x2x16xf32>
    tpu.vector_store %arg7[%c0_111, %c1_112, %c0_113, %c0_114], %249 {strides = array<i32>} : memref<1x2x2x16xf32, #tpu.memory_space<vmem>>, vector<1x1x2x16xf32>,
    %cst_115 = arith.constant 0.000000e+00 : f32
    %250 = vector.broadcast %cst_115 : f32 to vector<1x1xf32>
    %251 = vector.broadcast %192 : f32 to vector<1x1xf32>
    %252 = arith.addf %250, %251 : vector<1x1xf32>
    %c0_116 = arith.constant 0 : index
    %c0_117 = arith.constant 0 : index
    %c0_118 = arith.constant 0 : index
    %253 = vector.load %arg8[%c0_116, %c0_117, %c0_118] : memref<1x1x1xf32, #tpu.memory_space<vmem>>, vector<1x1x1xf32>
    %254 = vector.shape_cast %253 : vector<1x1x1xf32> to vector<1x1xf32>
    %255 = vector.shape_cast %252 : vector<1x1xf32> to vector<1x1x1xf32>
    tpu.vector_store %arg8[%c0_116, %c0_117, %c0_118], %255 {strides = array<i32>} : memref<1x1x1xf32, #tpu.memory_space<vmem>>, vector<1x1x1xf32>,
    return
  }
  func.func @transform_0(%arg0: i32) -> (i32, i32, i32, i32) {
    %c0_i32 = arith.constant 0 : i32
    %c0_i32_0 = arith.constant 0 : i32
    %c0_i32_1 = arith.constant 0 : i32
    %c0_i32_2 = arith.constant 0 : i32
    return %arg0, %c0_i32, %c0_i32_0, %c0_i32_1 : i32, i32, i32, i32
  }
  func.func @transform_1(%arg0: i32) -> (i32, i32, i32, i32) {
    %c0_i32 = arith.constant 0 : i32
    %c0_i32_0 = arith.constant 0 : i32
    %c0_i32_1 = arith.constant 0 : i32
    %c0_i32_2 = arith.constant 0 : i32
    return %arg0, %c0_i32, %c0_i32_0, %c0_i32_1 : i32, i32, i32, i32
  }
  func.func @transform_2(%arg0: i32) -> (i32, i32, i32) {
    %c0_i32 = arith.constant 0 : i32
    %c0_i32_0 = arith.constant 0 : i32
    %c0_i32_1 = arith.constant 0 : i32
    return %arg0, %c0_i32, %c0_i32_0 : i32, i32, i32
  }
  func.func @transform_3(%arg0: i32) -> (i32, i32, i32) {
    %c0_i32 = arith.constant 0 : i32
    %c0_i32_0 = arith.constant 0 : i32
    %c0_i32_1 = arith.constant 0 : i32
    %c0_i32_2 = arith.constant 0 : i32
    return %c0_i32, %c0_i32_0, %c0_i32_1 : i32, i32, i32
  }
  func.func @transform_4(%arg0: i32) -> (i32, i32, i32) {
    %c0_i32 = arith.constant 0 : i32
    %c0_i32_0 = arith.constant 0 : i32
    %c0_i32_1 = arith.constant 0 : i32
    %c0_i32_2 = arith.constant 0 : i32
    return %c0_i32, %c0_i32_0, %c0_i32_1 : i32, i32, i32
  }
  func.func @transform_5(%arg0: i32) -> (i32, i32) {
    %c0_i32 = arith.constant 0 : i32
    %c0_i32_0 = arith.constant 0 : i32
    %c0_i32_1 = arith.constant 0 : i32
    return %c0_i32, %c0_i32_0 : i32, i32
  }
  func.func @transform_6(%arg0: i32) -> (i32, i32, i32, i32) {
    %c0_i32 = arith.constant 0 : i32
    %c0_i32_0 = arith.constant 0 : i32
    %c0_i32_1 = arith.constant 0 : i32
    %c0_i32_2 = arith.constant 0 : i32
    return %arg0, %c0_i32, %c0_i32_0, %c0_i32_1 : i32, i32, i32, i32
  }
  func.func @transform_7(%arg0: i32) -> (i32, i32, i32) {
    %c0_i32 = arith.constant 0 : i32
    %c0_i32_0 = arith.constant 0 : i32
    %c0_i32_1 = arith.constant 0 : i32
    return %arg0, %c0_i32, %c0_i32_0 : i32, i32, i32
  }
}

module attributes {stable_mosaic.version = 11 : i64} {
  func.func @kernel(%arg0: i32, %arg1: memref<1x12x16xf32, #tpu.memory_space<vmem>>, %arg2: memref<8x12xf32, #tpu.memory_space<vmem>>, %arg3: memref<1x1x16xf32, #tpu.memory_space<vmem>>, %arg4: memref<8x16xf32, #tpu.memory_space<vmem>>, %arg5: memref<8x1xf32, #tpu.memory_space<vmem>>, %arg6: memref<8x16xf32, #tpu.memory_space<vmem>>, %arg7: memref<8x1xf32, #tpu.memory_space<vmem>>, %arg8: memref<1x8x16xf32, #tpu.memory_space<vmem>>, %arg9: memref<1x8x16xf32, #tpu.memory_space<vmem>>) attributes {dimension_semantics = [#tpu.dimension_semantics<parallel>], iteration_bounds = array<i64: 2>, scalar_prefetch = 0 : i64, scratch_operands = 0 : i64, tpu.core_type = #tpu.core_type<tc>, window_params = [{transform_indices = @transform_0, window_bounds = array<i64: 1, 12, 16>}, {pipeline_mode = #tpu.pipeline_mode<synchronous>, transform_indices = @transform_1, window_bounds = array<i64: 8, 12>}, {transform_indices = @transform_2, window_bounds = array<i64: 1, 1, 16>}, {pipeline_mode = #tpu.pipeline_mode<synchronous>, transform_indices = @transform_3, window_bounds = array<i64: 8, 16>}, {pipeline_mode = #tpu.pipeline_mode<synchronous>, transform_indices = @transform_4, window_bounds = array<i64: 8, 1>}, {pipeline_mode = #tpu.pipeline_mode<synchronous>, transform_indices = @transform_5, window_bounds = array<i64: 8, 16>}, {pipeline_mode = #tpu.pipeline_mode<synchronous>, transform_indices = @transform_6, window_bounds = array<i64: 8, 1>}, {transform_indices = @transform_7, window_bounds = array<i64: 1, 8, 16>}, {transform_indices = @transform_8, window_bounds = array<i64: 1, 8, 16>}]} {
    %c0 = arith.constant 0 : index
    %c0_0 = arith.constant 0 : index
    %0 = vector.load %arg2[%c0, %c0_0] : memref<8x12xf32, #tpu.memory_space<vmem>>, vector<8x12xf32>
    %c0_1 = arith.constant 0 : index
    %c0_2 = arith.constant 0 : index
    %c0_3 = arith.constant 0 : index
    %1 = vector.load %arg1[%c0_1, %c0_2, %c0_3] : memref<1x12x16xf32, #tpu.memory_space<vmem>>, vector<1x12x16xf32>
    %2 = vector.shape_cast %1 : vector<1x12x16xf32> to vector<12x16xf32>
    %cst = arith.constant dense<0.000000e+00> : vector<8x16xf32>
    %3 = tpu.matmul %0, %2, %cst {dimension_numbers = #tpu.dot_dimension_numbers<[1], [0], [0], [1], [0, 0, 1, 1], [], []>} : vector<8x12xf32>, vector<12x16xf32>, vector<8x16xf32> -> vector<8x16xf32>
    %c0_4 = arith.constant 0 : index
    %c0_5 = arith.constant 0 : index
    %c0_6 = arith.constant 0 : index
    %4 = vector.load %arg3[%c0_4, %c0_5, %c0_6] : memref<1x1x16xf32, #tpu.memory_space<vmem>>, vector<1x1x16xf32>
    %5 = vector.shape_cast %4 : vector<1x1x16xf32> to vector<1x16xf32>
    %cst_7 = arith.constant dense<0.000000e+00> : vector<8xf32>
    %6 = vector.multi_reduction <add>, %3, %cst_7 [1] : vector<8x16xf32> to vector<8xf32>
    %7 = vector.shape_cast %6 : vector<8xf32> to vector<8x1xf32>
    %cst_8 = arith.constant 1.600000e+01 : f32
    %8 = vector.broadcast %cst_8 : f32 to vector<8x1xf32>
    %9 = arith.divf %7, %8 : vector<8x1xf32>
    %10 = vector.broadcast %9 : vector<8x1xf32> to vector<8x16xf32>
    %11 = arith.subf %3, %10 : vector<8x16xf32>
    %12 = arith.mulf %11, %11 : vector<8x16xf32>
    %cst_9 = arith.constant dense<0.000000e+00> : vector<8xf32>
    %13 = vector.multi_reduction <add>, %12, %cst_9 [1] : vector<8x16xf32> to vector<8xf32>
    %14 = vector.shape_cast %13 : vector<8xf32> to vector<8x1xf32>
    %cst_10 = arith.constant 1.600000e+01 : f32
    %15 = vector.broadcast %cst_10 : f32 to vector<8x1xf32>
    %16 = arith.divf %14, %15 : vector<8x1xf32>
    %c0_11 = arith.constant 0 : index
    %c0_12 = arith.constant 0 : index
    %17 = vector.load %arg4[%c0_11, %c0_12] : memref<8x16xf32, #tpu.memory_space<vmem>>, vector<8x16xf32>
    %18 = vector.broadcast %5 : vector<1x16xf32> to vector<8x16xf32>
    %19 = arith.mulf %17, %18 : vector<8x16xf32>
    %cst_13 = arith.constant dense<0.000000e+00> : vector<8xf32>
    %20 = vector.multi_reduction <add>, %19, %cst_13 [1] : vector<8x16xf32> to vector<8xf32>
    %21 = vector.shape_cast %20 : vector<8xf32> to vector<8x1xf32>
    %cst_14 = arith.constant 1.000000e+00 : f32
    %22 = vector.broadcast %cst_14 : f32 to vector<8x1xf32>
    %23 = arith.addf %22, %21 : vector<8x1xf32>
    %c0_15 = arith.constant 0 : index
    %c0_16 = arith.constant 0 : index
    %24 = vector.load %arg5[%c0_15, %c0_16] : memref<8x1xf32, #tpu.memory_space<vmem>>, vector<8x1xf32>
    %25 = arith.addf %23, %24 : vector<8x1xf32>
    %c0_17 = arith.constant 0 : index
    %c0_18 = arith.constant 0 : index
    %26 = vector.load %arg6[%c0_17, %c0_18] : memref<8x16xf32, #tpu.memory_space<vmem>>, vector<8x16xf32>
    %27 = vector.broadcast %5 : vector<1x16xf32> to vector<8x16xf32>
    %28 = arith.mulf %26, %27 : vector<8x16xf32>
    %cst_19 = arith.constant dense<0.000000e+00> : vector<8xf32>
    %29 = vector.multi_reduction <add>, %28, %cst_19 [1] : vector<8x16xf32> to vector<8xf32>
    %30 = vector.shape_cast %29 : vector<8xf32> to vector<8x1xf32>
    %c0_20 = arith.constant 0 : index
    %c0_21 = arith.constant 0 : index
    %31 = vector.load %arg7[%c0_20, %c0_21] : memref<8x1xf32, #tpu.memory_space<vmem>>, vector<8x1xf32>
    %32 = arith.addf %30, %31 : vector<8x1xf32>
    %33 = vector.broadcast %9 : vector<8x1xf32> to vector<8x16xf32>
    %34 = arith.subf %3, %33 : vector<8x16xf32>
    %35 = vector.broadcast %25 : vector<8x1xf32> to vector<8x16xf32>
    %36 = arith.mulf %35, %34 : vector<8x16xf32>
    %cst_22 = arith.constant 9.99999974E-6 : f32
    %37 = vector.broadcast %cst_22 : f32 to vector<8x1xf32>
    %38 = arith.addf %16, %37 : vector<8x1xf32>
    %39 = math.rsqrt %38 : vector<8x1xf32>
    %40 = vector.broadcast %39 : vector<8x1xf32> to vector<8x16xf32>
    %41 = arith.mulf %36, %40 : vector<8x16xf32>
    %42 = vector.broadcast %32 : vector<8x1xf32> to vector<8x16xf32>
    %43 = arith.addf %41, %42 : vector<8x16xf32>
    %cst_23 = arith.constant 0.000000e+00 : f32
    %44 = vector.broadcast %cst_23 : f32 to vector<8x16xf32>
    %45 = arith.maximumf %43, %44 : vector<8x16xf32>
    %c0_24 = arith.constant 0 : index
    %c0_25 = arith.constant 0 : index
    %c0_26 = arith.constant 0 : index
    %46 = vector.load %arg8[%c0_24, %c0_25, %c0_26] : memref<1x8x16xf32, #tpu.memory_space<vmem>>, vector<1x8x16xf32>
    %47 = vector.shape_cast %46 : vector<1x8x16xf32> to vector<8x16xf32>
    %48 = arith.addf %45, %47 : vector<8x16xf32>
    %c0_27 = arith.constant 0 : index
    %c0_28 = arith.constant 0 : index
    %c0_29 = arith.constant 0 : index
    %49 = vector.load %arg9[%c0_27, %c0_28, %c0_29] : memref<1x8x16xf32, #tpu.memory_space<vmem>>, vector<1x8x16xf32>
    %50 = vector.shape_cast %49 : vector<1x8x16xf32> to vector<8x16xf32>
    %51 = vector.shape_cast %48 : vector<8x16xf32> to vector<1x8x16xf32>
    tpu.vector_store %arg9[%c0_27, %c0_28, %c0_29], %51 {strides = array<i32>} : memref<1x8x16xf32, #tpu.memory_space<vmem>>, vector<1x8x16xf32>,
    return
  }
  func.func @transform_0(%arg0: i32) -> (i32, i32, i32) {
    %c0_i32 = arith.constant 0 : i32
    %c0_i32_0 = arith.constant 0 : i32
    %c0_i32_1 = arith.constant 0 : i32
    return %arg0, %c0_i32, %c0_i32_0 : i32, i32, i32
  }
  func.func @transform_1(%arg0: i32) -> (i32, i32) {
    %c0_i32 = arith.constant 0 : i32
    %c0_i32_0 = arith.constant 0 : i32
    %c0_i32_1 = arith.constant 0 : i32
    return %c0_i32, %c0_i32_0 : i32, i32
  }
  func.func @transform_2(%arg0: i32) -> (i32, i32, i32) {
    %c0_i32 = arith.constant 0 : i32
    %c0_i32_0 = arith.constant 0 : i32
    %c0_i32_1 = arith.constant 0 : i32
    return %arg0, %c0_i32, %c0_i32_0 : i32, i32, i32
  }
  func.func @transform_3(%arg0: i32) -> (i32, i32) {
    %c0_i32 = arith.constant 0 : i32
    %c0_i32_0 = arith.constant 0 : i32
    %c0_i32_1 = arith.constant 0 : i32
    return %c0_i32, %c0_i32_0 : i32, i32
  }
  func.func @transform_4(%arg0: i32) -> (i32, i32) {
    %c0_i32 = arith.constant 0 : i32
    %c0_i32_0 = arith.constant 0 : i32
    %c0_i32_1 = arith.constant 0 : i32
    return %c0_i32, %c0_i32_0 : i32, i32
  }
  func.func @transform_5(%arg0: i32) -> (i32, i32) {
    %c0_i32 = arith.constant 0 : i32
    %c0_i32_0 = arith.constant 0 : i32
    %c0_i32_1 = arith.constant 0 : i32
    return %c0_i32, %c0_i32_0 : i32, i32
  }
  func.func @transform_6(%arg0: i32) -> (i32, i32) {
    %c0_i32 = arith.constant 0 : i32
    %c0_i32_0 = arith.constant 0 : i32
    %c0_i32_1 = arith.constant 0 : i32
    return %c0_i32, %c0_i32_0 : i32, i32
  }
  func.func @transform_7(%arg0: i32) -> (i32, i32, i32) {
    %c0_i32 = arith.constant 0 : i32
    %c0_i32_0 = arith.constant 0 : i32
    %c0_i32_1 = arith.constant 0 : i32
    return %arg0, %c0_i32, %c0_i32_0 : i32, i32, i32
  }
  func.func @transform_8(%arg0: i32) -> (i32, i32, i32) {
    %c0_i32 = arith.constant 0 : i32
    %c0_i32_0 = arith.constant 0 : i32
    %c0_i32_1 = arith.constant 0 : i32
    return %arg0, %c0_i32, %c0_i32_0 : i32, i32, i32
  }
}

</mosaic_0001>

<llo_original>
// kernel: _lambda_.7
$region0: #{_lambda_.7}
  #allocation0 [shape = 'u32[]', space=smem, size = 0x4, offset = 0x4, fixed_abs, tag = 'smem constant byte address 0x4 - core index']
  #allocation1 [shape = 'u32[144,128]{1,0:T(1,128)}', space=vmem, size = 0x12000, scoped, tag = 'internal scratch']
  %s0 = inlined_call_operand.vmem [shape: f32[2,8,16], index: 0, kind: input, shape index: {}]
  %s1 = inlined_call_operand.vmem [shape: f32[2,1,16], index: 1, kind: input, shape index: {}]
  %s2 = inlined_call_operand.vmem [shape: f32[6,8], index: 2, kind: input, shape index: {}]
  %s3 = inlined_call_operand.vmem [shape: f32[8,8], index: 3, kind: input, shape index: {}]
  %s4 = inlined_call_operand.vmem [shape: f32[6,16], index: 4, kind: input, shape index: {}]
  %s5 = inlined_call_operand.vmem [shape: f32[6,1], index: 5, kind: input, shape index: {}, may-alias: {5,7}]
  %s6 = inlined_call_operand.vmem [shape: f32[6,16], index: 6, kind: input, shape index: {}]
  %s7 = inlined_call_operand.vmem [shape: f32[6,1], index: 7, kind: input, shape index: {}, may-alias: {5,7}]
  %s8 = inlined_call_operand.vmem [shape: f32[8,16], index: 8, kind: input, shape index: {}]
  %s9 = inlined_call_operand.vmem [shape: f32[8,1], index: 9, kind: input, shape index: {}, may-alias: {9,11}]
  %s10 = inlined_call_operand.vmem [shape: f32[8,16], index: 10, kind: input, shape index: {}]
  %s11 = inlined_call_operand.vmem [shape: f32[8,1], index: 11, kind: input, shape index: {}, may-alias: {9,11}]
  %s12 = inlined_call_operand.vmem [shape: f32[2,6,16], index: 12, kind: output, shape index: {0}]
  %s13 = inlined_call_operand.vmem [shape: f32[2,8,16], index: 13, kind: output, shape index: {1}]
  %14 = xla_tuple %s12, %s13
  %s15 = sld [smem:[#allocation0]]
  $region89: #{_lambda_.7} parent=0
    _
  %s17 = ssub.s32 1, %s15
  %s18 = scalar_select 0, %s17, %s15
  loop: start=0, step=1, limit=4
  $region2: #{_lambda_.7} parent=0 // loop_pre_header
    _
  $region3: #{_lambda_.7} parent=0 // loop_header
    %s20 = sphi 0, %s24
    %p21 = scmp.ge.s32.totalorder %s20, 4
    %s30 = sphi 0, %s32
    %s33 = sphi 0, %s30
    %s34 = sphi 0, %s33
    %s50 = sphi 0, %s34
    %s56 = sphi 0, %s58
    %s59 = sphi 0, %s56
    %s60 = sphi 0, %s59
    %s76 = sphi 0, %s60
    %s80 = sphi 0, %s80
    %s82 = sphi 0, %s80
    %s83 = sphi 0, %s82
    %s97 = sphi 0, %s83
    %s101 = sphi 0, %s101
    %s103 = sphi 0, %s101
    %s104 = sphi 0, %s103
    %s118 = sphi 0, %s104
    %s122 = sphi 0, %s122
    %s124 = sphi 0, %s122
    %s125 = sphi 0, %s124
    %s139 = sphi 0, %s125
    %s143 = sphi 0, %s143
    %s145 = sphi 0, %s143
    %s146 = sphi 0, %s145
    %s160 = sphi 0, %s146
    %s164 = sphi 0, %s164
    %s166 = sphi 0, %s164
    %s167 = sphi 0, %s166
    %s181 = sphi 0, %s167
    %s185 = sphi 0, %s185
    %s187 = sphi 0, %s185
    %s188 = sphi 0, %s187
    %s202 = sphi 0, %s188
    %s206 = sphi 0, %s206
    %s208 = sphi 0, %s206
    %s209 = sphi 0, %s208
    %s223 = sphi 0, %s209
    %s227 = sphi 0, %s227
    %s229 = sphi 0, %s227
    %s230 = sphi 0, %s229
    %s244 = sphi 0, %s230
    %s248 = sphi 0, %s248
    %s250 = sphi 0, %s248
    %s251 = sphi 0, %s250
    %s265 = sphi 0, %s251
    %s269 = sphi 0, %s269
    %s271 = sphi 0, %s269
    %s272 = sphi 0, %s271
    %s286 = sphi 0, %s272
    %s292 = sphi 0, %s294
    %s295 = sphi 0, %s292
    %s296 = sphi 0, %s295
    %s312 = sphi 0, %s296
    %s318 = sphi 0, %s320
    %s321 = sphi 0, %s318
    %s322 = sphi 0, %s321
    %s338 = sphi 0, %s322
  $region4: #{_lambda_.7} parent=0 // loop_header_branch
    %23 = sbr.rel (%p21) target = $region8
  $region5: #{_lambda_.7} parent=0 // loop_body
    %s25 = ssub.s32 %s20, 1
    %s26 = ssub.s32 %s20, 2
    %s27 = sadd.s32 %s20, 1
    %s28 = ssub.s32 %s20, %s27
    %p29 = scmp.eq.s32.totalorder %s28, 0
    %s31 = sadd.s32 %s30, 1
    %s32 = scalar_select %p29, %s30, %s31
    %p35 = pneg %p29
    %p36 = scmp.eq.s32.totalorder %s20, 1
    %p37 = por %p35, %p36
    %p38 = scmp.ne.s32.totalorder %s30, %s33
    %p39 = scmp.eq.s32.totalorder %s20, 0
    %p40 = por %p38, %p39
    %p41 = scmp.ne.s32.totalorder %s30, %s33
    %p42 = scmp.eq.s32.totalorder %s25, 1
    %p43 = por %p41, %p42
    %p44 = scmp.ne.s32.totalorder %s33, %s34
    %p45 = scmp.eq.s32.totalorder %s25, 0
    %p46 = por %p44, %p45
    %p47 = scmp.ne.s32.totalorder %s33, %s34
    %p48 = scmp.eq.s32.totalorder %s26, 1
    %p49 = por %p47, %p48
    %p51 = scmp.ne.s32.totalorder %s34, %s50
    %p52 = scmp.eq.s32.totalorder %s26, 0
    %p53 = por %p51, %p52
    %s54 = ssub.s32 %s20, %s27
    %p55 = scmp.eq.s32.totalorder %s54, 0
    %s57 = sadd.s32 %s56, 1
    %s58 = scalar_select %p55, %s56, %s57
    %p61 = pneg %p55
    %p62 = scmp.eq.s32.totalorder %s20, 1
    %p63 = por %p61, %p62
    %p64 = scmp.ne.s32.totalorder %s56, %s59
    %p65 = scmp.eq.s32.totalorder %s20, 0
    %p66 = por %p64, %p65
    %p67 = scmp.ne.s32.totalorder %s56, %s59
    %p68 = scmp.eq.s32.totalorder %s25, 1
    %p69 = por %p67, %p68
    %p70 = scmp.ne.s32.totalorder %s59, %s60
    %p71 = scmp.eq.s32.totalorder %s25, 0
    %p72 = por %p70, %p71
    %p73 = scmp.ne.s32.totalorder %s59, %s60
    %p74 = scmp.eq.s32.totalorder %s26, 1
    %p75 = por %p73, %p74
    %p77 = scmp.ne.s32.totalorder %s60, %s76
    %p78 = scmp.eq.s32.totalorder %s26, 0
    %p79 = por %p77, %p78
    %s81 = sadd.s32 %s80, 1
    %p84 = scmp.eq.s32.totalorder %s20, 1
    %p85 = scmp.ne.s32.totalorder %s80, %s82
    %p86 = scmp.eq.s32.totalorder %s20, 0
    %p87 = por %p85, %p86
    %p88 = scmp.ne.s32.totalorder %s80, %s82
    %p89 = scmp.eq.s32.totalorder %s25, 1
    %p90 = por %p88, %p89
    %p91 = scmp.ne.s32.totalorder %s82, %s83
    %p92 = scmp.eq.s32.totalorder %s25, 0
    %p93 = por %p91, %p92
    %p94 = scmp.ne.s32.totalorder %s82, %s83
    %p95 = scmp.eq.s32.totalorder %s26, 1
    %p96 = por %p94, %p95
    %p98 = scmp.ne.s32.totalorder %s83, %s97
    %p99 = scmp.eq.s32.totalorder %s26, 0
    %p100 = por %p98, %p99
    %s102 = sadd.s32 %s101, 1
    %p105 = scmp.eq.s32.totalorder %s20, 1
    %p106 = scmp.ne.s32.totalorder %s101, %s103
    %p107 = scmp.eq.s32.totalorder %s20, 0
    %p108 = por %p106, %p107
    %p109 = scmp.ne.s32.totalorder %s101, %s103
    %p110 = scmp.eq.s32.totalorder %s25, 1
    %p111 = por %p109, %p110
    %p112 = scmp.ne.s32.totalorder %s103, %s104
    %p113 = scmp.eq.s32.totalorder %s25, 0
    %p114 = por %p112, %p113
    %p115 = scmp.ne.s32.totalorder %s103, %s104
    %p116 = scmp.eq.s32.totalorder %s26, 1
    %p117 = por %p115, %p116
    %p119 = scmp.ne.s32.totalorder %s104, %s118
    %p120 = scmp.eq.s32.totalorder %s26, 0
    %p121 = por %p119, %p120
    %s123 = sadd.s32 %s122, 1
    %p126 = scmp.eq.s32.totalorder %s20, 1
    %p127 = scmp.ne.s32.totalorder %s122, %s124
    %p128 = scmp.eq.s32.totalorder %s20, 0
    %p129 = por %p127, %p128
    %p130 = scmp.ne.s32.totalorder %s122, %s124
    %p131 = scmp.eq.s32.totalorder %s25, 1
    %p132 = por %p130, %p131
    %p133 = scmp.ne.s32.totalorder %s124, %s125
    %p134 = scmp.eq.s32.totalorder %s25, 0
    %p135 = por %p133, %p134
    %p136 = scmp.ne.s32.totalorder %s124, %s125
    %p137 = scmp.eq.s32.totalorder %s26, 1
    %p138 = por %p136, %p137
    %p140 = scmp.ne.s32.totalorder %s125, %s139
    %p141 = scmp.eq.s32.totalorder %s26, 0
    %p142 = por %p140, %p141
    %s144 = sadd.s32 %s143, 1
    %p147 = scmp.eq.s32.totalorder %s20, 1
    %p148 = scmp.ne.s32.totalorder %s143, %s145
    %p149 = scmp.eq.s32.totalorder %s20, 0
    %p150 = por %p148, %p149
    %p151 = scmp.ne.s32.totalorder %s143, %s145
    %p152 = scmp.eq.s32.totalorder %s25, 1
    %p153 = por %p151, %p152
    %p154 = scmp.ne.s32.totalorder %s145, %s146
    %p155 = scmp.eq.s32.totalorder %s25, 0
    %p156 = por %p154, %p155
    %p157 = scmp.ne.s32.totalorder %s145, %s146
    %p158 = scmp.eq.s32.totalorder %s26, 1
    %p159 = por %p157, %p158
    %p161 = scmp.ne.s32.totalorder %s146, %s160
    %p162 = scmp.eq.s32.totalorder %s26, 0
    %p163 = por %p161, %p162
    %s165 = sadd.s32 %s164, 1
    %p168 = scmp.eq.s32.totalorder %s20, 1
    %p169 = scmp.ne.s32.totalorder %s164, %s166
    %p170 = scmp.eq.s32.totalorder %s20, 0
    %p171 = por %p169, %p170
    %p172 = scmp.ne.s32.totalorder %s164, %s166
    %p173 = scmp.eq.s32.totalorder %s25, 1
    %p174 = por %p172, %p173
    %p175 = scmp.ne.s32.totalorder %s166, %s167
    %p176 = scmp.eq.s32.totalorder %s25, 0
    %p177 = por %p175, %p176
    %p178 = scmp.ne.s32.totalorder %s166, %s167
    %p179 = scmp.eq.s32.totalorder %s26, 1
    %p180 = por %p178, %p179
    %p182 = scmp.ne.s32.totalorder %s167, %s181
    %p183 = scmp.eq.s32.totalorder %s26, 0
    %p184 = por %p182, %p183
    %s186 = sadd.s32 %s185, 1
    %p189 = scmp.eq.s32.totalorder %s20, 1
    %p190 = scmp.ne.s32.totalorder %s185, %s187
    %p191 = scmp.eq.s32.totalorder %s20, 0
    %p192 = por %p190, %p191
    %p193 = scmp.ne.s32.totalorder %s185, %s187
    %p194 = scmp.eq.s32.totalorder %s25, 1
    %p195 = por %p193, %p194
    %p196 = scmp.ne.s32.totalorder %s187, %s188
    %p197 = scmp.eq.s32.totalorder %s25, 0
    %p198 = por %p196, %p197
    %p199 = scmp.ne.s32.totalorder %s187, %s188
    %p200 = scmp.eq.s32.totalorder %s26, 1
    %p201 = por %p199, %p200
    %p203 = scmp.ne.s32.totalorder %s188, %s202
    %p204 = scmp.eq.s32.totalorder %s26, 0
    %p205 = por %p203, %p204
    %s207 = sadd.s32 %s206, 1
    %p210 = scmp.eq.s32.totalorder %s20, 1
    %p211 = scmp.ne.s32.totalorder %s206, %s208
    %p212 = scmp.eq.s32.totalorder %s20, 0
    %p213 = por %p211, %p212
    %p214 = scmp.ne.s32.totalorder %s206, %s208
    %p215 = scmp.eq.s32.totalorder %s25, 1
    %p216 = por %p214, %p215
    %p217 = scmp.ne.s32.totalorder %s208, %s209
    %p218 = scmp.eq.s32.totalorder %s25, 0
    %p219 = por %p217, %p218
    %p220 = scmp.ne.s32.totalorder %s208, %s209
    %p221 = scmp.eq.s32.totalorder %s26, 1
    %p222 = por %p220, %p221
    %p224 = scmp.ne.s32.totalorder %s209, %s223
    %p225 = scmp.eq.s32.totalorder %s26, 0
    %p226 = por %p224, %p225
    %s228 = sadd.s32 %s227, 1
    %p231 = scmp.eq.s32.totalorder %s20, 1
    %p232 = scmp.ne.s32.totalorder %s227, %s229
    %p233 = scmp.eq.s32.totalorder %s20, 0
    %p234 = por %p232, %p233
    %p235 = scmp.ne.s32.totalorder %s227, %s229
    %p236 = scmp.eq.s32.totalorder %s25, 1
    %p237 = por %p235, %p236
    %p238 = scmp.ne.s32.totalorder %s229, %s230
    %p239 = scmp.eq.s32.totalorder %s25, 0
    %p240 = por %p238, %p239
    %p241 = scmp.ne.s32.totalorder %s229, %s230
    %p242 = scmp.eq.s32.totalorder %s26, 1
    %p243 = por %p241, %p242
    %p245 = scmp.ne.s32.totalorder %s230, %s244
    %p246 = scmp.eq.s32.totalorder %s26, 0
    %p247 = por %p245, %p246
    %s249 = sadd.s32 %s248, 1
    %p252 = scmp.eq.s32.totalorder %s20, 1
    %p253 = scmp.ne.s32.totalorder %s248, %s250
    %p254 = scmp.eq.s32.totalorder %s20, 0
    %p255 = por %p253, %p254
    %p256 = scmp.ne.s32.totalorder %s248, %s250
    %p257 = scmp.eq.s32.totalorder %s25, 1
    %p258 = por %p256, %p257
    %p259 = scmp.ne.s32.totalorder %s250, %s251
    %p260 = scmp.eq.s32.totalorder %s25, 0
    %p261 = por %p259, %p260
    %p262 = scmp.ne.s32.totalorder %s250, %s251
    %p263 = scmp.eq.s32.totalorder %s26, 1
    %p264 = por %p262, %p263
    %p266 = scmp.ne.s32.totalorder %s251, %s265
    %p267 = scmp.eq.s32.totalorder %s26, 0
    %p268 = por %p266, %p267
    %s270 = sadd.s32 %s269, 1
    %p273 = scmp.eq.s32.totalorder %s20, 1
    %p274 = scmp.ne.s32.totalorder %s269, %s271
    %p275 = scmp.eq.s32.totalorder %s20, 0
    %p276 = por %p274, %p275
    %p277 = scmp.ne.s32.totalorder %s269, %s271
    %p278 = scmp.eq.s32.totalorder %s25, 1
    %p279 = por %p277, %p278
    %p280 = scmp.ne.s32.totalorder %s271, %s272
    %p281 = scmp.eq.s32.totalorder %s25, 0
    %p282 = por %p280, %p281
    %p283 = scmp.ne.s32.totalorder %s271, %s272
    %p284 = scmp.eq.s32.totalorder %s26, 1
    %p285 = por %p283, %p284
    %p287 = scmp.ne.s32.totalorder %s272, %s286
    %p288 = scmp.eq.s32.totalorder %s26, 0
    %p289 = por %p287, %p288
    %s290 = ssub.s32 %s20, %s27
    %p291 = scmp.eq.s32.totalorder %s290, 0
    %s293 = sadd.s32 %s292, 1
    %s294 = scalar_select %p291, %s292, %s293
    %p297 = pneg %p291
    %p298 = scmp.eq.s32.totalorder %s20, 1
    %p299 = por %p297, %p298
    %p300 = scmp.ne.s32.totalorder %s292, %s295
    %p301 = scmp.eq.s32.totalorder %s20, 0
    %p302 = por %p300, %p301
    %p303 = scmp.ne.s32.totalorder %s292, %s295
    %p304 = scmp.eq.s32.totalorder %s25, 1
    %p305 = por %p303, %p304
    %p306 = scmp.ne.s32.totalorder %s295, %s296
    %p307 = scmp.eq.s32.totalorder %s25, 0
    %p308 = por %p306, %p307
    %p309 = scmp.ne.s32.totalorder %s295, %s296
    %p310 = scmp.eq.s32.totalorder %s26, 1
    %p311 = por %p309, %p310
    %p313 = scmp.ne.s32.totalorder %s296, %s312
    %p314 = scmp.eq.s32.totalorder %s26, 0
    %p315 = por %p313, %p314
    %s316 = ssub.s32 %s20, %s27
    %p317 = scmp.eq.s32.totalorder %s316, 0
    %s319 = sadd.s32 %s318, 1
    %s320 = scalar_select %p317, %s318, %s319
    %p323 = pneg %p317
    %p324 = scmp.eq.s32.totalorder %s20, 1
    %p325 = por %p323, %p324
    %p326 = scmp.ne.s32.totalorder %s318, %s321
    %p327 = scmp.eq.s32.totalorder %s20, 0
    %p328 = por %p326, %p327
    %p329 = scmp.ne.s32.totalorder %s318, %s321
    %p330 = scmp.eq.s32.totalorder %s25, 1
    %p331 = por %p329, %p330
    %p332 = scmp.ne.s32.totalorder %s321, %s322
    %p333 = scmp.eq.s32.totalorder %s25, 0
    %p334 = por %p332, %p333
    %p335 = scmp.ne.s32.totalorder %s321, %s322
    %p336 = scmp.eq.s32.totalorder %s26, 1
    %p337 = por %p335, %p336
    %p339 = scmp.ne.s32.totalorder %s322, %s338
    %p340 = scmp.eq.s32.totalorder %s26, 0
    %p341 = por %p339, %p340
    %p342 = scmp.le.s32.totalorder 1, %s20
    %p343 = scmp.lt.s32.totalorder %s20, 3
    %p344 = pnand %p342, %p343
    %p345 = pneg %p344
    // Predicated region
    $region9: #{_lambda_.7} parent=5 // pred_check
      _
    $region10: #{_lambda_.7} parent=5 // pred_check_branch
      %347 = sbr.rel (%p344) target = $region12
    $region11: #{_lambda_.7} parent=5 // pred_region
      %s348 = ssub.s32 %s20, 1
      // Predicated region
      $region13: #{_lambda_.7} parent=11 // pred_check
        %p349 = pneg %p93
      $region14: #{_lambda_.7} parent=11 // pred_check_branch
        %351 = sbr.rel (%p349) target = $region16
      $region15: #{_lambda_.7} parent=11 // pred_region
        _
      $region16: #{_lambda_.7} parent=11 // pred_fallthru
        _
      // Predicated region
      $region17: #{_lambda_.7} parent=11 // pred_check
        %p352 = pneg %p114
      $region18: #{_lambda_.7} parent=11 // pred_check_branch
        %354 = sbr.rel (%p352) target = $region20
      $region19: #{_lambda_.7} parent=11 // pred_region
        _
      $region20: #{_lambda_.7} parent=11 // pred_fallthru
        _
      // Predicated region
      $region21: #{_lambda_.7} parent=11 // pred_check
        %p355 = pneg %p135
      $region22: #{_lambda_.7} parent=11 // pred_check_branch
        %357 = sbr.rel (%p355) target = $region24
      $region23: #{_lambda_.7} parent=11 // pred_region
        _
      $region24: #{_lambda_.7} parent=11 // pred_fallthru
        _
      // Predicated region
      $region25: #{_lambda_.7} parent=11 // pred_check
        %p358 = pneg %p156
      $region26: #{_lambda_.7} parent=11 // pred_check_branch
        %360 = sbr.rel (%p358) target = $region28
      $region27: #{_lambda_.7} parent=11 // pred_region
        _
      $region28: #{_lambda_.7} parent=11 // pred_fallthru
        _
      // Predicated region
      $region29: #{_lambda_.7} parent=11 // pred_check
        %p361 = pneg %p177
      $region30: #{_lambda_.7} parent=11 // pred_check_branch
        %363 = sbr.rel (%p361) target = $region32
      $region31: #{_lambda_.7} parent=11 // pred_region
        _
      $region32: #{_lambda_.7} parent=11 // pred_fallthru
        _
      // Predicated region
      $region33: #{_lambda_.7} parent=11 // pred_check
        %p364 = pneg %p198
      $region34: #{_lambda_.7} parent=11 // pred_check_branch
        %366 = sbr.rel (%p364) target = $region36
      $region35: #{_lambda_.7} parent=11 // pred_region
        _
      $region36: #{_lambda_.7} parent=11 // pred_fallthru
        _
      // Predicated region
      $region37: #{_lambda_.7} parent=11 // pred_check
        %p367 = pneg %p219
      $region38: #{_lambda_.7} parent=11 // pred_check_branch
        %369 = sbr.rel (%p367) target = $region40
      $region39: #{_lambda_.7} parent=11 // pred_region
        _
      $region40: #{_lambda_.7} parent=11 // pred_fallthru
        _
      // Predicated region
      $region41: #{_lambda_.7} parent=11 // pred_check
        %p370 = pneg %p240
      $region42: #{_lambda_.7} parent=11 // pred_check_branch
        %372 = sbr.rel (%p370) target = $region44
      $region43: #{_lambda_.7} parent=11 // pred_region
        _
      $region44: #{_lambda_.7} parent=11 // pred_fallthru
        _
      // Predicated region
      $region45: #{_lambda_.7} parent=11 // pred_check
        %p373 = pneg %p261
      $region46: #{_lambda_.7} parent=11 // pred_check_branch
        %375 = sbr.rel (%p373) target = $region48
      $region47: #{_lambda_.7} parent=11 // pred_region
        _
      $region48: #{_lambda_.7} parent=11 // pred_fallthru
        _
      // Predicated region
      $region49: #{_lambda_.7} parent=11 // pred_check
        %p376 = pneg %p282
      $region50: #{_lambda_.7} parent=11 // pred_check_branch
        %378 = sbr.rel (%p376) target = $region52
      $region51: #{_lambda_.7} parent=11 // pred_region
        _
      $region52: #{_lambda_.7} parent=11 // pred_fallthru
        _
    $region12: #{_lambda_.7} parent=5 // pred_fallthru
      _
    %p379 = scmp.lt.s32.totalorder %s20, 2
    // Predicated region
    $region53: #{_lambda_.7} parent=5 // pred_check
      %p380 = pneg %p379
    $region54: #{_lambda_.7} parent=5 // pred_check_branch
      %382 = sbr.rel (%p380) target = $region56
    $region55: #{_lambda_.7} parent=5 // pred_region
      // Predicated region
      $region57: #{_lambda_.7} parent=55 // pred_check
        %p383 = pneg %p40
      $region58: #{_lambda_.7} parent=55 // pred_check_branch
        %385 = sbr.rel (%p383) target = $region60
      $region59: #{_lambda_.7} parent=55 // pred_region
        %p386 = scmp.lt.s32.totalorder %s20, 1
        %s387 = scalar_select %p386, %s20, 1
        %s388 = smul.addr %s387, 8
        %s389 = scalar_lea.vmem %s0, %s388
      $region60: #{_lambda_.7} parent=55 // pred_fallthru
        _
      // Predicated region
      $region61: #{_lambda_.7} parent=55 // pred_check
        %p390 = pneg %p66
      $region62: #{_lambda_.7} parent=55 // pred_check_branch
        %392 = sbr.rel (%p390) target = $region64
      $region63: #{_lambda_.7} parent=55 // pred_region
        %p393 = scmp.lt.s32.totalorder %s20, 1
        %s394 = scalar_select %p393, %s20, 1
        %s395 = scalar_lea.vmem %s1, %s394
      $region64: #{_lambda_.7} parent=55 // pred_fallthru
        _
    $region56: #{_lambda_.7} parent=5 // pred_fallthru
      _
    %p396 = scmp.le.s32.totalorder 1, %s20
    %p397 = scmp.lt.s32.totalorder %s20, 3
    %p398 = pnand %p396, %p397
    %p399 = pneg %p398
    // Predicated region
    $region65: #{_lambda_.7} parent=5 // pred_check
      _
    $region66: #{_lambda_.7} parent=5 // pred_check_branch
      %401 = sbr.rel (%p398) target = $region68
    $region67: #{_lambda_.7} parent=5 // pred_region
      %s402 = ssub.s32 %s20, 1
      %p403 = scmp.lt.s32.totalorder %s25, 1
      %s404 = scalar_select %p403, %s25, 1
      %s405 = smul.addr %s404, 8
      %s406 = scalar_lea.vmem %s0, %s405
      %p407 = pneg %p46
      %p408 = pneg %p43
      %p409 = scmp.lt.s32.totalorder %s25, 1
      %s410 = scalar_select %p409, %s25, 1
      %s411 = scalar_lea.vmem %s1, %s410
      %p412 = pneg %p72
      %p413 = pneg %p69
      %p414 = pneg %p93
      %p415 = pneg %p90
      %p416 = pneg %p114
      %p417 = pneg %p111
      %p418 = pneg %p135
      %p419 = pneg %p132
      %p420 = pneg %p156
      %p421 = pneg %p153
      %p422 = pneg %p177
      %p423 = pneg %p174
      %p424 = pneg %p198
      %p425 = pneg %p195
      %p426 = pneg %p219
      %p427 = pneg %p216
      %p428 = pneg %p240
      %p429 = pneg %p237
      %p430 = pneg %p261
      %p431 = pneg %p258
      %p432 = pneg %p282
      %p433 = pneg %p279
      %p434 = pneg %p308
      %p435 = pneg %p305
      %p436 = scmp.lt.s32.totalorder %s25, 1
      %s437 = scalar_select %p436, %s25, 1
      %s438 = smul.addr %s437, 8
      %s439 = scalar_lea.vmem %s12, %s438
      %p440 = pneg %p334
      %p441 = pneg %p331
      %p442 = scmp.lt.s32.totalorder %s25, 1
      %s443 = scalar_select %p442, %s25, 1
      %s444 = smul.addr %s443, 8
      %s445 = scalar_lea.vmem %s13, %s444
      %p446 = scmp.lt.s32.totalorder %s25, 1
      %s447 = scalar_select %p446, %s25, 1
      %s448 = smul.addr %s447, 8
      %s449 = scalar_lea.vmem %s0, %s448
      %p450 = scmp.lt.s32.totalorder %s25, 1
      %s451 = scalar_select %p450, %s25, 1
      %s452 = scalar_lea.vmem %s1, %s451
      %p453 = scmp.lt.s32.totalorder %s25, 1
      %s454 = scalar_select %p453, %s25, 1
      %s455 = smul.addr %s454, 8
      %s456 = scalar_lea.vmem %s12, %s455
      %p457 = scmp.lt.s32.totalorder %s25, 1
      %s458 = scalar_select %p457, %s25, 1
      %s459 = smul.addr %s458, 8
      %s460 = scalar_lea.vmem %s13, %s459
      %v461 = vld [vmem:[%s449] sm:$0xff]
      %v462 = vld [vmem:[%s452] sm:$0x1]
      %v463 = vld [vmem:[%s2] sm:$0x3f]
      %vm464 = vcmask 64512
      %v466 = vsel %vm464, %v463, 0
      %468 = vmatprep.subr.mxu0 0.0
      %469 = vmatpush1.msra.mxu0 %v461
      %470 = vmatprep.subr.mxu0 0.0
      %471 = vmatpush1.msra.mxu0 0.0
      %472 = vmatprep.subr.mxu0 0.0
      %473 = vmatpush1.msra.mxu0 0.0
      %474 = vmatprep.subr.mxu0 0.0
      %475 = vmatpush1.msra.mxu0 0.0
      %476 = vmatprep.subr.mxu0 0.0
      %477 = vmatpush1.msra.mxu0 0.0
      %478 = vmatprep.subr.mxu0 0.0
      %479 = vmatpush1.msra.mxu0 0.0
      %480 = vmatprep.subr.mxu0 0.0
      %481 = vmatpush1.msra.mxu0 0.0
      %482 = vmatprep.subr.mxu0 0.0
      %483 = vmatpush1.msra.mxu0 0.0
      %484 = vmatprep.subr.mxu0 0.0
      %485 = vmatpush1.msra.mxu0 0.0
      %486 = vmatprep.subr.mxu0 0.0
      %487 = vmatpush1.msra.mxu0 0.0
      %488 = vmatprep.subr.mxu0 0.0
      %489 = vmatpush1.msra.mxu0 0.0
      %490 = vmatprep.subr.mxu0 0.0
      %491 = vmatpush1.msra.mxu0 0.0
      %492 = vmatprep.subr.mxu0 0.0
      %493 = vmatpush1.msra.mxu0 0.0
      %494 = vmatprep.subr.mxu0 0.0
      %495 = vmatpush1.msra.mxu0 0.0
      %496 = vmatprep.subr.mxu0 0.0
      %497 = vmatpush1.msra.mxu0 0.0
      %498 = vmatprep.subr.mxu0 0.0
      %499 = vmatpush1.msra.mxu0 0.0
      %500 = vmatprep.subr.mxu0 0.0
      %501 = vmatpush1.msra.mxu0 0.0
      %502 = vmatprep.subr.mxu0 0.0
      %503 = vmatpush1.msra.mxu0 0.0
      %504 = vmatprep.subr.mxu0 0.0
      %505 = vmatpush1.msra.mxu0 0.0
      %506 = vmatprep.subr.mxu0 0.0
      %507 = vmatpush1.msra.mxu0 0.0
      %508 = vmatprep.subr.mxu0 0.0
      %509 = vmatpush1.msra.mxu0 0.0
      %510 = vmatprep.subr.mxu0 0.0
      %511 = vmatpush1.msra.mxu0 0.0
      %512 = vmatprep.subr.mxu0 0.0
      %513 = vmatpush1.msra.mxu0 0.0
      %514 = vmatprep.subr.mxu0 0.0
      %515 = vmatpush1.msra.mxu0 0.0
      %516 = vmatprep.subr.mxu0 0.0
      %517 = vmatpush1.msra.mxu0 0.0
      %518 = vmatprep.subr.mxu0 0.0
      %519 = vmatpush1.msra.mxu0 0.0
      %520 = vmatprep.subr.mxu0 0.0
      %521 = vmatpush1.msra.mxu0 0.0
      %522 = vmatprep.subr.mxu0 0.0
      %523 = vmatpush1.msra.mxu0 0.0
      %524 = vmatprep.subr.mxu0 0.0
      %525 = vmatpush1.msra.mxu0 0.0
      %526 = vmatprep.subr.mxu0 0.0
      %527 = vmatpush1.msra.mxu0 0.0
      %528 = vmatprep.subr.mxu0 0.0
      %529 = vmatpush1.msra.mxu0 0.0
      %530 = vmatprep.subr.mxu0 0.0
      %531 = vmatpush1.msra.mxu0 0.0
      %532 = vmatprep.mubr.f32.mxu0 0.0
      %533 = vmatmul.mubr.f32.gmra.mrb[0].mxu0 %v466
      %v534 = vpop.f32.mrb[0].mxu0
      %v535 = vadd.f32 0.0, %v534
      %v536 = vpop.f32.mrb[0].mxu0
      %537 = vdwg.mxu0
      %vm538 = vcmask 128000
      %v539 = vsel %vm538, %v535, 0.0
      %540 = vadd.xlane.f32.xlu0 %v539
      %v541 = vpop.xlane.xlu0 %540
      %v542 = vrcp.pop 16.0
      %v543 = vmul.f32 %v541, %v542
      %v544 = vsub.f32 %v535, %v543
      %v545 = vmul.f32 %v544, %v544
      %v546 = vsel %vm538, %v545, 0.0
      %547 = vadd.xlane.f32.xlu0 %v546
      %v548 = vpop.xlane.xlu0 %547
      %v549 = vmul.f32 %v548, %v542
      %v550 = vld [vmem:[%s4] sm:$0x3f]
      %v552 = vlaneseq
      %v553 = vshrl.u32 %v552, 7
      %v554 = vsub.s32 0, %v553
      %v555 = vrot.slane %v462, %v554
      %v557 = vmul.f32 %v550, %v555
      %v558 = vsel %vm538, %v557, 0.0
      %559 = vadd.xlane.f32.xlu0 %v558
      %v560 = vpop.xlane.xlu0 %559
      %v561 = vadd.f32 %v560, 1.0
      %v562 = vld [vmem:[%s5] sm:$0x3f]
      %v563 = vadd.f32 %v561, %v562
      %v564 = vld [vmem:[%s6] sm:$0x3f]
      %v565 = vmul.f32 %v564, %v555
      %v566 = vsel %vm538, %v565, 0.0
      %567 = vadd.xlane.f32.xlu0 %v566
      %v568 = vpop.xlane.xlu0 %567
      %v569 = vld [vmem:[%s7] sm:$0x3f]
      %v570 = vadd.f32 %v568, %v569
      %572 = vset.pattern.permute.xlu0 0
      %573 = vperm.xlu0 %572, %v563
      %v574 = vpop.permute.xlu0 %573
      %v576 = vmul.f32 %v574, %v544
      %v577 = vadd.f32 %v549, 1e-05
      %v578 = vrsqrt.pop %v577
      %v579 = vmul.f32 %v576, %v578
      %581 = vset.pattern.permute.xlu0 0
      %582 = vperm.xlu0 %581, %v570
      %v583 = vpop.permute.xlu0 %582
      %v585 = vadd.f32 %v579, %v583
      %586 = vst.msk [vmem:[%s456] sm:$0x3f] %vm538, %v585
      %v587 = vld [vmem:[%s3] sm:$0xff]
      %v589 = vsel %vm464, %v587, 0
      %591 = vmatprep.subr.mxu0 0.0
      %592 = vmatpush1.msra.mxu0 %v461
      %593 = vmatprep.subr.mxu0 0.0
      %594 = vmatpush1.msra.mxu0 0.0
      %595 = vmatprep.subr.mxu0 0.0
      %596 = vmatpush1.msra.mxu0 0.0
      %597 = vmatprep.subr.mxu0 0.0
      %598 = vmatpush1.msra.mxu0 0.0
      %599 = vmatprep.subr.mxu0 0.0
      %600 = vmatpush1.msra.mxu0 0.0
      %601 = vmatprep.subr.mxu0 0.0
      %602 = vmatpush1.msra.mxu0 0.0
      %603 = vmatprep.subr.mxu0 0.0
      %604 = vmatpush1.msra.mxu0 0.0
      %605 = vmatprep.subr.mxu0 0.0
      %606 = vmatpush1.msra.mxu0 0.0
      %607 = vmatprep.subr.mxu0 0.0
      %608 = vmatpush1.msra.mxu0 0.0
      %609 = vmatprep.subr.mxu0 0.0
      %610 = vmatpush1.msra.mxu0 0.0
      %611 = vmatprep.subr.mxu0 0.0
      %612 = vmatpush1.msra.mxu0 0.0
      %613 = vmatprep.subr.mxu0 0.0
      %614 = vmatpush1.msra.mxu0 0.0
      %615 = vmatprep.subr.mxu0 0.0
      %616 = vmatpush1.msra.mxu0 0.0
      %617 = vmatprep.subr.mxu0 0.0
      %618 = vmatpush1.msra.mxu0 0.0
      %619 = vmatprep.subr.mxu0 0.0
      %620 = vmatpush1.msra.mxu0 0.0
      %621 = vmatprep.subr.mxu0 0.0
      %622 = vmatpush1.msra.mxu0 0.0
      %623 = vmatprep.subr.mxu0 0.0
      %624 = vmatpush1.msra.mxu0 0.0
      %625 = vmatprep.subr.mxu0 0.0
      %626 = vmatpush1.msra.mxu0 0.0
      %627 = vmatprep.subr.mxu0 0.0
      %628 = vmatpush1.msra.mxu0 0.0
      %629 = vmatprep.subr.mxu0 0.0
      %630 = vmatpush1.msra.mxu0 0.0
      %631 = vmatprep.subr.mxu0 0.0
      %632 = vmatpush1.msra.mxu0 0.0
      %633 = vmatprep.subr.mxu0 0.0
      %634 = vmatpush1.msra.mxu0 0.0
      %635 = vmatprep.subr.mxu0 0.0
      %636 = vmatpush1.msra.mxu0 0.0
      %637 = vmatprep.subr.mxu0 0.0
      %638 = vmatpush1.msra.mxu0 0.0
      %639 = vmatprep.subr.mxu0 0.0
      %640 = vmatpush1.msra.mxu0 0.0
      %641 = vmatprep.subr.mxu0 0.0
      %642 = vmatpush1.msra.mxu0 0.0
      %643 = vmatprep.subr.mxu0 0.0
      %644 = vmatpush1.msra.mxu0 0.0
      %645 = vmatprep.subr.mxu0 0.0
      %646 = vmatpush1.msra.mxu0 0.0
      %647 = vmatprep.subr.mxu0 0.0
      %648 = vmatpush1.msra.mxu0 0.0
      %649 = vmatprep.subr.mxu0 0.0
      %650 = vmatpush1.msra.mxu0 0.0
      %651 = vmatprep.subr.mxu0 0.0
      %652 = vmatpush1.msra.mxu0 0.0
      %653 = vmatprep.subr.mxu0 0.0
      %654 = vmatpush1.msra.mxu0 0.0
      %655 = vmatprep.mubr.f32.mxu0 0.0
      %656 = vmatmul.mubr.f32.gmra.mrb[0].mxu0 %v589
      %v657 = vpop.f32.mrb[0].mxu0
      %v658 = vadd.f32 0.0, %v657
      %v659 = vpop.f32.mrb[0].mxu0
      %660 = vdwg.mxu0
      %vm661 = vcmask 130048
      %v662 = vsel %vm661, %v658, 0.0
      %663 = vadd.xlane.f32.xlu0 %v662
      %v664 = vpop.xlane.xlu0 %663
      %v665 = vmul.f32 %v664, %v542
      %v666 = vsub.f32 %v658, %v665
      %v667 = vmul.f32 %v666, %v666
      %v668 = vsel %vm661, %v667, 0.0
      %669 = vadd.xlane.f32.xlu0 %v668
      %v670 = vpop.xlane.xlu0 %669
      %v671 = vmul.f32 %v670, %v542
      %v672 = vld [vmem:[%s8] sm:$0xff]
      %v673 = vmul.f32 %v672, %v555
      %v674 = vsel %vm661, %v673, 0.0
      %675 = vadd.xlane.f32.xlu0 %v674
      %v676 = vpop.xlane.xlu0 %675
      %v677 = vadd.f32 %v676, 1.0
      %v678 = vld [vmem:[%s9] sm:$0xff]
      %v679 = vadd.f32 %v677, %v678
      %v680 = vld [vmem:[%s10] sm:$0xff]
      %v681 = vmul.f32 %v680, %v555
      %v682 = vsel %vm661, %v681, 0.0
      %683 = vadd.xlane.f32.xlu0 %v682
      %v684 = vpop.xlane.xlu0 %683
      %v685 = vld [vmem:[%s11] sm:$0xff]
      %v686 = vadd.f32 %v684, %v685
      %688 = vset.pattern.permute.xlu0 0
      %689 = vperm.xlu0 %688, %v679
      %v690 = vpop.permute.xlu0 %689
      %v692 = vmul.f32 %v690, %v666
      %v693 = vadd.f32 %v671, 1e-05
      %v694 = vrsqrt.pop %v693
      %v695 = vmul.f32 %v692, %v694
      %697 = vset.pattern.permute.xlu0 0
      %698 = vperm.xlu0 %697, %v686
      %v699 = vpop.permute.xlu0 %698
      %v701 = vadd.f32 %v695, %v699
      %702 = vst.msk [vmem:[%s460] sm:$0xff] %vm661, %v701
      %p703 = scmp.lt.s32.totalorder %s25, 1
      %s704 = scalar_select %p703, %s25, 1
      %s705 = smul.addr %s704, 8
      %s706 = scalar_lea.vmem %s12, %s705
      %p707 = scmp.lt.s32.totalorder %s25, 1
      %s708 = scalar_select %p707, %s25, 1
      %s709 = smul.addr %s708, 8
      %s710 = scalar_lea.vmem %s13, %s709
      // Predicated region
      $region69: #{_lambda_.7} parent=67 // pred_check
        %p711 = pneg %p305
      $region70: #{_lambda_.7} parent=67 // pred_check_branch
        %713 = sbr.rel (%p711) target = $region72
      $region71: #{_lambda_.7} parent=67 // pred_region
        _
      $region72: #{_lambda_.7} parent=67 // pred_fallthru
        _
      // Predicated region
      $region73: #{_lambda_.7} parent=67 // pred_check
        %p714 = pneg %p331
      $region74: #{_lambda_.7} parent=67 // pred_check_branch
        %716 = sbr.rel (%p714) target = $region76
      $region75: #{_lambda_.7} parent=67 // pred_region
        _
      $region76: #{_lambda_.7} parent=67 // pred_fallthru
        _
    $region68: #{_lambda_.7} parent=5 // pred_fallthru
      _
    %p717 = scmp.le.s32.totalorder 2, %s20
    // Predicated region
    $region77: #{_lambda_.7} parent=5 // pred_check
      %p718 = pneg %p717
    $region78: #{_lambda_.7} parent=5 // pred_check_branch
      %720 = sbr.rel (%p718) target = $region80
    $region79: #{_lambda_.7} parent=5 // pred_region
      %s721 = ssub.s32 %s20, 2
      // Predicated region
      $region81: #{_lambda_.7} parent=79 // pred_check
        %p722 = pneg %p311
      $region82: #{_lambda_.7} parent=79 // pred_check_branch
        %724 = sbr.rel (%p722) target = $region84
      $region83: #{_lambda_.7} parent=79 // pred_region
        %p725 = scmp.lt.s32.totalorder %s26, 1
        %s726 = scalar_select %p725, %s26, 1
        %s727 = smul.addr %s726, 8
        %s728 = scalar_lea.vmem %s12, %s727
      $region84: #{_lambda_.7} parent=79 // pred_fallthru
        _
      // Predicated region
      $region85: #{_lambda_.7} parent=79 // pred_check
        %p729 = pneg %p337
      $region86: #{_lambda_.7} parent=79 // pred_check_branch
        %731 = sbr.rel (%p729) target = $region88
      $region87: #{_lambda_.7} parent=79 // pred_region
        %p732 = scmp.lt.s32.totalorder %s26, 1
        %s733 = scalar_select %p732, %s26, 1
        %s734 = smul.addr %s733, 8
        %s735 = scalar_lea.vmem %s13, %s734
      $region88: #{_lambda_.7} parent=79 // pred_fallthru
        _
    $region80: #{_lambda_.7} parent=5 // pred_fallthru
      _
  $region6: #{_lambda_.7} parent=0 // loop_footer
    %s24 = sadd.s32 1, %s20
  $region7: #{_lambda_.7} parent=0 // loop_footer_branch
    %19 = sbr.rel target = $region3
  $region8: #{_lambda_.7} parent=0 // loop_exit
    _

// kernel: _lambda_.10
$region0: #{_lambda_.10}
  #allocation0 [shape = 'u32[]', space=smem, size = 0x4, offset = 0x4, fixed_abs, tag = 'smem constant byte address 0x4 - core index']
  #allocation1 [shape = 'u32[144,128]{1,0:T(1,128)}', space=vmem, size = 0x12000, scoped, tag = 'internal scratch']
  %s0 = inlined_call_operand.vmem [shape: f32[2,8,16], index: 0, kind: input, shape index: {}]
  %s1 = inlined_call_operand.vmem [shape: f32[2,1,16], index: 1, kind: input, shape index: {}]
  %s2 = inlined_call_operand.vmem [shape: f32[6,8], index: 2, kind: input, shape index: {}]
  %s3 = inlined_call_operand.vmem [shape: f32[4,8], index: 3, kind: input, shape index: {}]
  %s4 = inlined_call_operand.vmem [shape: f32[6,16], index: 4, kind: input, shape index: {}]
  %s5 = inlined_call_operand.vmem [shape: f32[6,1], index: 5, kind: input, shape index: {}, may-alias: {5,7}]
  %s6 = inlined_call_operand.vmem [shape: f32[6,16], index: 6, kind: input, shape index: {}]
  %s7 = inlined_call_operand.vmem [shape: f32[6,1], index: 7, kind: input, shape index: {}, may-alias: {5,7}]
  %s8 = inlined_call_operand.vmem [shape: f32[4,16], index: 8, kind: input, shape index: {}]
  %s9 = inlined_call_operand.vmem [shape: f32[4,1], index: 9, kind: input, shape index: {}, may-alias: {9,11}]
  %s10 = inlined_call_operand.vmem [shape: f32[4,16], index: 10, kind: input, shape index: {}]
  %s11 = inlined_call_operand.vmem [shape: f32[4,1], index: 11, kind: input, shape index: {}, may-alias: {9,11}]
  %s12 = inlined_call_operand.vmem [shape: f32[2,6,16], index: 12, kind: output, shape index: {0}]
  %s13 = inlined_call_operand.vmem [shape: f32[2,4,16], index: 13, kind: output, shape index: {1}]
  %14 = xla_tuple %s12, %s13
  %s15 = sld [smem:[#allocation0]]
  $region89: #{_lambda_.10} parent=0
    _
  %s17 = ssub.s32 1, %s15
  %s18 = scalar_select 0, %s17, %s15
  loop: start=0, step=1, limit=4
  $region2: #{_lambda_.10} parent=0 // loop_pre_header
    _
  $region3: #{_lambda_.10} parent=0 // loop_header
    %s20 = sphi 0, %s24
    %p21 = scmp.ge.s32.totalorder %s20, 4
    %s30 = sphi 0, %s32
    %s33 = sphi 0, %s30
    %s34 = sphi 0, %s33
    %s50 = sphi 0, %s34
    %s56 = sphi 0, %s58
    %s59 = sphi 0, %s56
    %s60 = sphi 0, %s59
    %s76 = sphi 0, %s60
    %s80 = sphi 0, %s80
    %s82 = sphi 0, %s80
    %s83 = sphi 0, %s82
    %s97 = sphi 0, %s83
    %s101 = sphi 0, %s101
    %s103 = sphi 0, %s101
    %s104 = sphi 0, %s103
    %s118 = sphi 0, %s104
    %s122 = sphi 0, %s122
    %s124 = sphi 0, %s122
    %s125 = sphi 0, %s124
    %s139 = sphi 0, %s125
    %s143 = sphi 0, %s143
    %s145 = sphi 0, %s143
    %s146 = sphi 0, %s145
    %s160 = sphi 0, %s146
    %s164 = sphi 0, %s164
    %s166 = sphi 0, %s164
    %s167 = sphi 0, %s166
    %s181 = sphi 0, %s167
    %s185 = sphi 0, %s185
    %s187 = sphi 0, %s185
    %s188 = sphi 0, %s187
    %s202 = sphi 0, %s188
    %s206 = sphi 0, %s206
    %s208 = sphi 0, %s206
    %s209 = sphi 0, %s208
    %s223 = sphi 0, %s209
    %s227 = sphi 0, %s227
    %s229 = sphi 0, %s227
    %s230 = sphi 0, %s229
    %s244 = sphi 0, %s230
    %s248 = sphi 0, %s248
    %s250 = sphi 0, %s248
    %s251 = sphi 0, %s250
    %s265 = sphi 0, %s251
    %s269 = sphi 0, %s269
    %s271 = sphi 0, %s269
    %s272 = sphi 0, %s271
    %s286 = sphi 0, %s272
    %s292 = sphi 0, %s294
    %s295 = sphi 0, %s292
    %s296 = sphi 0, %s295
    %s312 = sphi 0, %s296
    %s318 = sphi 0, %s320
    %s321 = sphi 0, %s318
    %s322 = sphi 0, %s321
    %s338 = sphi 0, %s322
  $region4: #{_lambda_.10} parent=0 // loop_header_branch
    %23 = sbr.rel (%p21) target = $region8
  $region5: #{_lambda_.10} parent=0 // loop_body
    %s25 = ssub.s32 %s20, 1
    %s26 = ssub.s32 %s20, 2
    %s27 = sadd.s32 %s20, 1
    %s28 = ssub.s32 %s20, %s27
    %p29 = scmp.eq.s32.totalorder %s28, 0
    %s31 = sadd.s32 %s30, 1
    %s32 = scalar_select %p29, %s30, %s31
    %p35 = pneg %p29
    %p36 = scmp.eq.s32.totalorder %s20, 1
    %p37 = por %p35, %p36
    %p38 = scmp.ne.s32.totalorder %s30, %s33
    %p39 = scmp.eq.s32.totalorder %s20, 0
    %p40 = por %p38, %p39
    %p41 = scmp.ne.s32.totalorder %s30, %s33
    %p42 = scmp.eq.s32.totalorder %s25, 1
    %p43 = por %p41, %p42
    %p44 = scmp.ne.s32.totalorder %s33, %s34
    %p45 = scmp.eq.s32.totalorder %s25, 0
    %p46 = por %p44, %p45
    %p47 = scmp.ne.s32.totalorder %s33, %s34
    %p48 = scmp.eq.s32.totalorder %s26, 1
    %p49 = por %p47, %p48
    %p51 = scmp.ne.s32.totalorder %s34, %s50
    %p52 = scmp.eq.s32.totalorder %s26, 0
    %p53 = por %p51, %p52
    %s54 = ssub.s32 %s20, %s27
    %p55 = scmp.eq.s32.totalorder %s54, 0
    %s57 = sadd.s32 %s56, 1
    %s58 = scalar_select %p55, %s56, %s57
    %p61 = pneg %p55
    %p62 = scmp.eq.s32.totalorder %s20, 1
    %p63 = por %p61, %p62
    %p64 = scmp.ne.s32.totalorder %s56, %s59
    %p65 = scmp.eq.s32.totalorder %s20, 0
    %p66 = por %p64, %p65
    %p67 = scmp.ne.s32.totalorder %s56, %s59
    %p68 = scmp.eq.s32.totalorder %s25, 1
    %p69 = por %p67, %p68
    %p70 = scmp.ne.s32.totalorder %s59, %s60
    %p71 = scmp.eq.s32.totalorder %s25, 0
    %p72 = por %p70, %p71
    %p73 = scmp.ne.s32.totalorder %s59, %s60
    %p74 = scmp.eq.s32.totalorder %s26, 1
    %p75 = por %p73, %p74
    %p77 = scmp.ne.s32.totalorder %s60, %s76
    %p78 = scmp.eq.s32.totalorder %s26, 0
    %p79 = por %p77, %p78
    %s81 = sadd.s32 %s80, 1
    %p84 = scmp.eq.s32.totalorder %s20, 1
    %p85 = scmp.ne.s32.totalorder %s80, %s82
    %p86 = scmp.eq.s32.totalorder %s20, 0
    %p87 = por %p85, %p86
    %p88 = scmp.ne.s32.totalorder %s80, %s82
    %p89 = scmp.eq.s32.totalorder %s25, 1
    %p90 = por %p88, %p89
    %p91 = scmp.ne.s32.totalorder %s82, %s83
    %p92 = scmp.eq.s32.totalorder %s25, 0
    %p93 = por %p91, %p92
    %p94 = scmp.ne.s32.totalorder %s82, %s83
    %p95 = scmp.eq.s32.totalorder %s26, 1
    %p96 = por %p94, %p95
    %p98 = scmp.ne.s32.totalorder %s83, %s97
    %p99 = scmp.eq.s32.totalorder %s26, 0
    %p100 = por %p98, %p99
    %s102 = sadd.s32 %s101, 1
    %p105 = scmp.eq.s32.totalorder %s20, 1
    %p106 = scmp.ne.s32.totalorder %s101, %s103
    %p107 = scmp.eq.s32.totalorder %s20, 0
    %p108 = por %p106, %p107
    %p109 = scmp.ne.s32.totalorder %s101, %s103
    %p110 = scmp.eq.s32.totalorder %s25, 1
    %p111 = por %p109, %p110
    %p112 = scmp.ne.s32.totalorder %s103, %s104
    %p113 = scmp.eq.s32.totalorder %s25, 0
    %p114 = por %p112, %p113
    %p115 = scmp.ne.s32.totalorder %s103, %s104
    %p116 = scmp.eq.s32.totalorder %s26, 1
    %p117 = por %p115, %p116
    %p119 = scmp.ne.s32.totalorder %s104, %s118
    %p120 = scmp.eq.s32.totalorder %s26, 0
    %p121 = por %p119, %p120
    %s123 = sadd.s32 %s122, 1
    %p126 = scmp.eq.s32.totalorder %s20, 1
    %p127 = scmp.ne.s32.totalorder %s122, %s124
    %p128 = scmp.eq.s32.totalorder %s20, 0
    %p129 = por %p127, %p128
    %p130 = scmp.ne.s32.totalorder %s122, %s124
    %p131 = scmp.eq.s32.totalorder %s25, 1
    %p132 = por %p130, %p131
    %p133 = scmp.ne.s32.totalorder %s124, %s125
    %p134 = scmp.eq.s32.totalorder %s25, 0
    %p135 = por %p133, %p134
    %p136 = scmp.ne.s32.totalorder %s124, %s125
    %p137 = scmp.eq.s32.totalorder %s26, 1
    %p138 = por %p136, %p137
    %p140 = scmp.ne.s32.totalorder %s125, %s139
    %p141 = scmp.eq.s32.totalorder %s26, 0
    %p142 = por %p140, %p141
    %s144 = sadd.s32 %s143, 1
    %p147 = scmp.eq.s32.totalorder %s20, 1
    %p148 = scmp.ne.s32.totalorder %s143, %s145
    %p149 = scmp.eq.s32.totalorder %s20, 0
    %p150 = por %p148, %p149
    %p151 = scmp.ne.s32.totalorder %s143, %s145
    %p152 = scmp.eq.s32.totalorder %s25, 1
    %p153 = por %p151, %p152
    %p154 = scmp.ne.s32.totalorder %s145, %s146
    %p155 = scmp.eq.s32.totalorder %s25, 0
    %p156 = por %p154, %p155
    %p157 = scmp.ne.s32.totalorder %s145, %s146
    %p158 = scmp.eq.s32.totalorder %s26, 1
    %p159 = por %p157, %p158
    %p161 = scmp.ne.s32.totalorder %s146, %s160
    %p162 = scmp.eq.s32.totalorder %s26, 0
    %p163 = por %p161, %p162
    %s165 = sadd.s32 %s164, 1
    %p168 = scmp.eq.s32.totalorder %s20, 1
    %p169 = scmp.ne.s32.totalorder %s164, %s166
    %p170 = scmp.eq.s32.totalorder %s20, 0
    %p171 = por %p169, %p170
    %p172 = scmp.ne.s32.totalorder %s164, %s166
    %p173 = scmp.eq.s32.totalorder %s25, 1
    %p174 = por %p172, %p173
    %p175 = scmp.ne.s32.totalorder %s166, %s167
    %p176 = scmp.eq.s32.totalorder %s25, 0
    %p177 = por %p175, %p176
    %p178 = scmp.ne.s32.totalorder %s166, %s167
    %p179 = scmp.eq.s32.totalorder %s26, 1
    %p180 = por %p178, %p179
    %p182 = scmp.ne.s32.totalorder %s167, %s181
    %p183 = scmp.eq.s32.totalorder %s26, 0
    %p184 = por %p182, %p183
    %s186 = sadd.s32 %s185, 1
    %p189 = scmp.eq.s32.totalorder %s20, 1
    %p190 = scmp.ne.s32.totalorder %s185, %s187
    %p191 = scmp.eq.s32.totalorder %s20, 0
    %p192 = por %p190, %p191
    %p193 = scmp.ne.s32.totalorder %s185, %s187
    %p194 = scmp.eq.s32.totalorder %s25, 1
    %p195 = por %p193, %p194
    %p196 = scmp.ne.s32.totalorder %s187, %s188
    %p197 = scmp.eq.s32.totalorder %s25, 0
    %p198 = por %p196, %p197
    %p199 = scmp.ne.s32.totalorder %s187, %s188
    %p200 = scmp.eq.s32.totalorder %s26, 1
    %p201 = por %p199, %p200
    %p203 = scmp.ne.s32.totalorder %s188, %s202
    %p204 = scmp.eq.s32.totalorder %s26, 0
    %p205 = por %p203, %p204
    %s207 = sadd.s32 %s206, 1
    %p210 = scmp.eq.s32.totalorder %s20, 1
    %p211 = scmp.ne.s32.totalorder %s206, %s208
    %p212 = scmp.eq.s32.totalorder %s20, 0
    %p213 = por %p211, %p212
    %p214 = scmp.ne.s32.totalorder %s206, %s208
    %p215 = scmp.eq.s32.totalorder %s25, 1
    %p216 = por %p214, %p215
    %p217 = scmp.ne.s32.totalorder %s208, %s209
    %p218 = scmp.eq.s32.totalorder %s25, 0
    %p219 = por %p217, %p218
    %p220 = scmp.ne.s32.totalorder %s208, %s209
    %p221 = scmp.eq.s32.totalorder %s26, 1
    %p222 = por %p220, %p221
    %p224 = scmp.ne.s32.totalorder %s209, %s223
    %p225 = scmp.eq.s32.totalorder %s26, 0
    %p226 = por %p224, %p225
    %s228 = sadd.s32 %s227, 1
    %p231 = scmp.eq.s32.totalorder %s20, 1
    %p232 = scmp.ne.s32.totalorder %s227, %s229
    %p233 = scmp.eq.s32.totalorder %s20, 0
    %p234 = por %p232, %p233
    %p235 = scmp.ne.s32.totalorder %s227, %s229
    %p236 = scmp.eq.s32.totalorder %s25, 1
    %p237 = por %p235, %p236
    %p238 = scmp.ne.s32.totalorder %s229, %s230
    %p239 = scmp.eq.s32.totalorder %s25, 0
    %p240 = por %p238, %p239
    %p241 = scmp.ne.s32.totalorder %s229, %s230
    %p242 = scmp.eq.s32.totalorder %s26, 1
    %p243 = por %p241, %p242
    %p245 = scmp.ne.s32.totalorder %s230, %s244
    %p246 = scmp.eq.s32.totalorder %s26, 0
    %p247 = por %p245, %p246
    %s249 = sadd.s32 %s248, 1
    %p252 = scmp.eq.s32.totalorder %s20, 1
    %p253 = scmp.ne.s32.totalorder %s248, %s250
    %p254 = scmp.eq.s32.totalorder %s20, 0
    %p255 = por %p253, %p254
    %p256 = scmp.ne.s32.totalorder %s248, %s250
    %p257 = scmp.eq.s32.totalorder %s25, 1
    %p258 = por %p256, %p257
    %p259 = scmp.ne.s32.totalorder %s250, %s251
    %p260 = scmp.eq.s32.totalorder %s25, 0
    %p261 = por %p259, %p260
    %p262 = scmp.ne.s32.totalorder %s250, %s251
    %p263 = scmp.eq.s32.totalorder %s26, 1
    %p264 = por %p262, %p263
    %p266 = scmp.ne.s32.totalorder %s251, %s265
    %p267 = scmp.eq.s32.totalorder %s26, 0
    %p268 = por %p266, %p267
    %s270 = sadd.s32 %s269, 1
    %p273 = scmp.eq.s32.totalorder %s20, 1
    %p274 = scmp.ne.s32.totalorder %s269, %s271
    %p275 = scmp.eq.s32.totalorder %s20, 0
    %p276 = por %p274, %p275
    %p277 = scmp.ne.s32.totalorder %s269, %s271
    %p278 = scmp.eq.s32.totalorder %s25, 1
    %p279 = por %p277, %p278
    %p280 = scmp.ne.s32.totalorder %s271, %s272
    %p281 = scmp.eq.s32.totalorder %s25, 0
    %p282 = por %p280, %p281
    %p283 = scmp.ne.s32.totalorder %s271, %s272
    %p284 = scmp.eq.s32.totalorder %s26, 1
    %p285 = por %p283, %p284
    %p287 = scmp.ne.s32.totalorder %s272, %s286
    %p288 = scmp.eq.s32.totalorder %s26, 0
    %p289 = por %p287, %p288
    %s290 = ssub.s32 %s20, %s27
    %p291 = scmp.eq.s32.totalorder %s290, 0
    %s293 = sadd.s32 %s292, 1
    %s294 = scalar_select %p291, %s292, %s293
    %p297 = pneg %p291
    %p298 = scmp.eq.s32.totalorder %s20, 1
    %p299 = por %p297, %p298
    %p300 = scmp.ne.s32.totalorder %s292, %s295
    %p301 = scmp.eq.s32.totalorder %s20, 0
    %p302 = por %p300, %p301
    %p303 = scmp.ne.s32.totalorder %s292, %s295
    %p304 = scmp.eq.s32.totalorder %s25, 1
    %p305 = por %p303, %p304
    %p306 = scmp.ne.s32.totalorder %s295, %s296
    %p307 = scmp.eq.s32.totalorder %s25, 0
    %p308 = por %p306, %p307
    %p309 = scmp.ne.s32.totalorder %s295, %s296
    %p310 = scmp.eq.s32.totalorder %s26, 1
    %p311 = por %p309, %p310
    %p313 = scmp.ne.s32.totalorder %s296, %s312
    %p314 = scmp.eq.s32.totalorder %s26, 0
    %p315 = por %p313, %p314
    %s316 = ssub.s32 %s20, %s27
    %p317 = scmp.eq.s32.totalorder %s316, 0
    %s319 = sadd.s32 %s318, 1
    %s320 = scalar_select %p317, %s318, %s319
    %p323 = pneg %p317
    %p324 = scmp.eq.s32.totalorder %s20, 1
    %p325 = por %p323, %p324
    %p326 = scmp.ne.s32.totalorder %s318, %s321
    %p327 = scmp.eq.s32.totalorder %s20, 0
    %p328 = por %p326, %p327
    %p329 = scmp.ne.s32.totalorder %s318, %s321
    %p330 = scmp.eq.s32.totalorder %s25, 1
    %p331 = por %p329, %p330
    %p332 = scmp.ne.s32.totalorder %s321, %s322
    %p333 = scmp.eq.s32.totalorder %s25, 0
    %p334 = por %p332, %p333
    %p335 = scmp.ne.s32.totalorder %s321, %s322
    %p336 = scmp.eq.s32.totalorder %s26, 1
    %p337 = por %p335, %p336
    %p339 = scmp.ne.s32.totalorder %s322, %s338
    %p340 = scmp.eq.s32.totalorder %s26, 0
    %p341 = por %p339, %p340
    %p342 = scmp.le.s32.totalorder 1, %s20
    %p343 = scmp.lt.s32.totalorder %s20, 3
    %p344 = pnand %p342, %p343
    %p345 = pneg %p344
    // Predicated region
    $region9: #{_lambda_.10} parent=5 // pred_check
      _
    $region10: #{_lambda_.10} parent=5 // pred_check_branch
      %347 = sbr.rel (%p344) target = $region12
    $region11: #{_lambda_.10} parent=5 // pred_region
      %s348 = ssub.s32 %s20, 1
      // Predicated region
      $region13: #{_lambda_.10} parent=11 // pred_check
        %p349 = pneg %p93
      $region14: #{_lambda_.10} parent=11 // pred_check_branch
        %351 = sbr.rel (%p349) target = $region16
      $region15: #{_lambda_.10} parent=11 // pred_region
        _
      $region16: #{_lambda_.10} parent=11 // pred_fallthru
        _
      // Predicated region
      $region17: #{_lambda_.10} parent=11 // pred_check
        %p352 = pneg %p114
      $region18: #{_lambda_.10} parent=11 // pred_check_branch
        %354 = sbr.rel (%p352) target = $region20
      $region19: #{_lambda_.10} parent=11 // pred_region
        _
      $region20: #{_lambda_.10} parent=11 // pred_fallthru
        _
      // Predicated region
      $region21: #{_lambda_.10} parent=11 // pred_check
        %p355 = pneg %p135
      $region22: #{_lambda_.10} parent=11 // pred_check_branch
        %357 = sbr.rel (%p355) target = $region24
      $region23: #{_lambda_.10} parent=11 // pred_region
        _
      $region24: #{_lambda_.10} parent=11 // pred_fallthru
        _
      // Predicated region
      $region25: #{_lambda_.10} parent=11 // pred_check
        %p358 = pneg %p156
      $region26: #{_lambda_.10} parent=11 // pred_check_branch
        %360 = sbr.rel (%p358) target = $region28
      $region27: #{_lambda_.10} parent=11 // pred_region
        _
      $region28: #{_lambda_.10} parent=11 // pred_fallthru
        _
      // Predicated region
      $region29: #{_lambda_.10} parent=11 // pred_check
        %p361 = pneg %p177
      $region30: #{_lambda_.10} parent=11 // pred_check_branch
        %363 = sbr.rel (%p361) target = $region32
      $region31: #{_lambda_.10} parent=11 // pred_region
        _
      $region32: #{_lambda_.10} parent=11 // pred_fallthru
        _
      // Predicated region
      $region33: #{_lambda_.10} parent=11 // pred_check
        %p364 = pneg %p198
      $region34: #{_lambda_.10} parent=11 // pred_check_branch
        %366 = sbr.rel (%p364) target = $region36
      $region35: #{_lambda_.10} parent=11 // pred_region
        _
      $region36: #{_lambda_.10} parent=11 // pred_fallthru
        _
      // Predicated region
      $region37: #{_lambda_.10} parent=11 // pred_check
        %p367 = pneg %p219
      $region38: #{_lambda_.10} parent=11 // pred_check_branch
        %369 = sbr.rel (%p367) target = $region40
      $region39: #{_lambda_.10} parent=11 // pred_region
        _
      $region40: #{_lambda_.10} parent=11 // pred_fallthru
        _
      // Predicated region
      $region41: #{_lambda_.10} parent=11 // pred_check
        %p370 = pneg %p240
      $region42: #{_lambda_.10} parent=11 // pred_check_branch
        %372 = sbr.rel (%p370) target = $region44
      $region43: #{_lambda_.10} parent=11 // pred_region
        _
      $region44: #{_lambda_.10} parent=11 // pred_fallthru
        _
      // Predicated region
      $region45: #{_lambda_.10} parent=11 // pred_check
        %p373 = pneg %p261
      $region46: #{_lambda_.10} parent=11 // pred_check_branch
        %375 = sbr.rel (%p373) target = $region48
      $region47: #{_lambda_.10} parent=11 // pred_region
        _
      $region48: #{_lambda_.10} parent=11 // pred_fallthru
        _
      // Predicated region
      $region49: #{_lambda_.10} parent=11 // pred_check
        %p376 = pneg %p282
      $region50: #{_lambda_.10} parent=11 // pred_check_branch
        %378 = sbr.rel (%p376) target = $region52
      $region51: #{_lambda_.10} parent=11 // pred_region
        _
      $region52: #{_lambda_.10} parent=11 // pred_fallthru
        _
    $region12: #{_lambda_.10} parent=5 // pred_fallthru
      _
    %p379 = scmp.lt.s32.totalorder %s20, 2
    // Predicated region
    $region53: #{_lambda_.10} parent=5 // pred_check
      %p380 = pneg %p379
    $region54: #{_lambda_.10} parent=5 // pred_check_branch
      %382 = sbr.rel (%p380) target = $region56
    $region55: #{_lambda_.10} parent=5 // pred_region
      // Predicated region
      $region57: #{_lambda_.10} parent=55 // pred_check
        %p383 = pneg %p40
      $region58: #{_lambda_.10} parent=55 // pred_check_branch
        %385 = sbr.rel (%p383) target = $region60
      $region59: #{_lambda_.10} parent=55 // pred_region
        %p386 = scmp.lt.s32.totalorder %s20, 1
        %s387 = scalar_select %p386, %s20, 1
        %s388 = smul.addr %s387, 8
        %s389 = scalar_lea.vmem %s0, %s388
      $region60: #{_lambda_.10} parent=55 // pred_fallthru
        _
      // Predicated region
      $region61: #{_lambda_.10} parent=55 // pred_check
        %p390 = pneg %p66
      $region62: #{_lambda_.10} parent=55 // pred_check_branch
        %392 = sbr.rel (%p390) target = $region64
      $region63: #{_lambda_.10} parent=55 // pred_region
        %p393 = scmp.lt.s32.totalorder %s20, 1
        %s394 = scalar_select %p393, %s20, 1
        %s395 = scalar_lea.vmem %s1, %s394
      $region64: #{_lambda_.10} parent=55 // pred_fallthru
        _
    $region56: #{_lambda_.10} parent=5 // pred_fallthru
      _
    %p396 = scmp.le.s32.totalorder 1, %s20
    %p397 = scmp.lt.s32.totalorder %s20, 3
    %p398 = pnand %p396, %p397
    %p399 = pneg %p398
    // Predicated region
    $region65: #{_lambda_.10} parent=5 // pred_check
      _
    $region66: #{_lambda_.10} parent=5 // pred_check_branch
      %401 = sbr.rel (%p398) target = $region68
    $region67: #{_lambda_.10} parent=5 // pred_region
      %s402 = ssub.s32 %s20, 1
      %p403 = scmp.lt.s32.totalorder %s25, 1
      %s404 = scalar_select %p403, %s25, 1
      %s405 = smul.addr %s404, 8
      %s406 = scalar_lea.vmem %s0, %s405
      %p407 = pneg %p46
      %p408 = pneg %p43
      %p409 = scmp.lt.s32.totalorder %s25, 1
      %s410 = scalar_select %p409, %s25, 1
      %s411 = scalar_lea.vmem %s1, %s410
      %p412 = pneg %p72
      %p413 = pneg %p69
      %p414 = pneg %p93
      %p415 = pneg %p90
      %p416 = pneg %p114
      %p417 = pneg %p111
      %p418 = pneg %p135
      %p419 = pneg %p132
      %p420 = pneg %p156
      %p421 = pneg %p153
      %p422 = pneg %p177
      %p423 = pneg %p174
      %p424 = pneg %p198
      %p425 = pneg %p195
      %p426 = pneg %p219
      %p427 = pneg %p216
      %p428 = pneg %p240
      %p429 = pneg %p237
      %p430 = pneg %p261
      %p431 = pneg %p258
      %p432 = pneg %p282
      %p433 = pneg %p279
      %p434 = pneg %p308
      %p435 = pneg %p305
      %p436 = scmp.lt.s32.totalorder %s25, 1
      %s437 = scalar_select %p436, %s25, 1
      %s438 = smul.addr %s437, 8
      %s439 = scalar_lea.vmem %s12, %s438
      %p440 = pneg %p334
      %p441 = pneg %p331
      %p442 = scmp.lt.s32.totalorder %s25, 1
      %s443 = scalar_select %p442, %s25, 1
      %s444 = smul.addr %s443, 4
      %s445 = scalar_lea.vmem %s13, %s444
      %p446 = scmp.lt.s32.totalorder %s25, 1
      %s447 = scalar_select %p446, %s25, 1
      %s448 = smul.addr %s447, 8
      %s449 = scalar_lea.vmem %s0, %s448
      %p450 = scmp.lt.s32.totalorder %s25, 1
      %s451 = scalar_select %p450, %s25, 1
      %s452 = scalar_lea.vmem %s1, %s451
      %p453 = scmp.lt.s32.totalorder %s25, 1
      %s454 = scalar_select %p453, %s25, 1
      %s455 = smul.addr %s454, 8
      %s456 = scalar_lea.vmem %s12, %s455
      %p457 = scmp.lt.s32.totalorder %s25, 1
      %s458 = scalar_select %p457, %s25, 1
      %s459 = smul.addr %s458, 4
      %s460 = scalar_lea.vmem %s13, %s459
      %v461 = vld [vmem:[%s449] sm:$0xff]
      %v462 = vld [vmem:[%s452] sm:$0x1]
      %v463 = vld [vmem:[%s2] sm:$0x3f]
      %vm464 = vcmask 64512
      %v466 = vsel %vm464, %v463, 0
      %468 = vmatprep.subr.mxu0 0.0
      %469 = vmatpush1.msra.mxu0 %v461
      %470 = vmatprep.subr.mxu0 0.0
      %471 = vmatpush1.msra.mxu0 0.0
      %472 = vmatprep.subr.mxu0 0.0
      %473 = vmatpush1.msra.mxu0 0.0
      %474 = vmatprep.subr.mxu0 0.0
      %475 = vmatpush1.msra.mxu0 0.0
      %476 = vmatprep.subr.mxu0 0.0
      %477 = vmatpush1.msra.mxu0 0.0
      %478 = vmatprep.subr.mxu0 0.0
      %479 = vmatpush1.msra.mxu0 0.0
      %480 = vmatprep.subr.mxu0 0.0
      %481 = vmatpush1.msra.mxu0 0.0
      %482 = vmatprep.subr.mxu0 0.0
      %483 = vmatpush1.msra.mxu0 0.0
      %484 = vmatprep.subr.mxu0 0.0
      %485 = vmatpush1.msra.mxu0 0.0
      %486 = vmatprep.subr.mxu0 0.0
      %487 = vmatpush1.msra.mxu0 0.0
      %488 = vmatprep.subr.mxu0 0.0
      %489 = vmatpush1.msra.mxu0 0.0
      %490 = vmatprep.subr.mxu0 0.0
      %491 = vmatpush1.msra.mxu0 0.0
      %492 = vmatprep.subr.mxu0 0.0
      %493 = vmatpush1.msra.mxu0 0.0
      %494 = vmatprep.subr.mxu0 0.0
      %495 = vmatpush1.msra.mxu0 0.0
      %496 = vmatprep.subr.mxu0 0.0
      %497 = vmatpush1.msra.mxu0 0.0
      %498 = vmatprep.subr.mxu0 0.0
      %499 = vmatpush1.msra.mxu0 0.0
      %500 = vmatprep.subr.mxu0 0.0
      %501 = vmatpush1.msra.mxu0 0.0
      %502 = vmatprep.subr.mxu0 0.0
      %503 = vmatpush1.msra.mxu0 0.0
      %504 = vmatprep.subr.mxu0 0.0
      %505 = vmatpush1.msra.mxu0 0.0
      %506 = vmatprep.subr.mxu0 0.0
      %507 = vmatpush1.msra.mxu0 0.0
      %508 = vmatprep.subr.mxu0 0.0
      %509 = vmatpush1.msra.mxu0 0.0
      %510 = vmatprep.subr.mxu0 0.0
      %511 = vmatpush1.msra.mxu0 0.0
      %512 = vmatprep.subr.mxu0 0.0
      %513 = vmatpush1.msra.mxu0 0.0
      %514 = vmatprep.subr.mxu0 0.0
      %515 = vmatpush1.msra.mxu0 0.0
      %516 = vmatprep.subr.mxu0 0.0
      %517 = vmatpush1.msra.mxu0 0.0
      %518 = vmatprep.subr.mxu0 0.0
      %519 = vmatpush1.msra.mxu0 0.0
      %520 = vmatprep.subr.mxu0 0.0
      %521 = vmatpush1.msra.mxu0 0.0
      %522 = vmatprep.subr.mxu0 0.0
      %523 = vmatpush1.msra.mxu0 0.0
      %524 = vmatprep.subr.mxu0 0.0
      %525 = vmatpush1.msra.mxu0 0.0
      %526 = vmatprep.subr.mxu0 0.0
      %527 = vmatpush1.msra.mxu0 0.0
      %528 = vmatprep.subr.mxu0 0.0
      %529 = vmatpush1.msra.mxu0 0.0
      %530 = vmatprep.subr.mxu0 0.0
      %531 = vmatpush1.msra.mxu0 0.0
      %532 = vmatprep.mubr.f32.mxu0 0.0
      %533 = vmatmul.mubr.f32.gmra.mrb[0].mxu0 %v466
      %v534 = vpop.f32.mrb[0].mxu0
      %v535 = vadd.f32 0.0, %v534
      %v536 = vpop.f32.mrb[0].mxu0
      %537 = vdwg.mxu0
      %vm538 = vcmask 128000
      %v539 = vsel %vm538, %v535, 0.0
      %540 = vadd.xlane.f32.xlu0 %v539
      %v541 = vpop.xlane.xlu0 %540
      %v542 = vrcp.pop 16.0
      %v543 = vmul.f32 %v541, %v542
      %v544 = vsub.f32 %v535, %v543
      %v545 = vmul.f32 %v544, %v544
      %v546 = vsel %vm538, %v545, 0.0
      %547 = vadd.xlane.f32.xlu0 %v546
      %v548 = vpop.xlane.xlu0 %547
      %v549 = vmul.f32 %v548, %v542
      %v550 = vld [vmem:[%s4] sm:$0x3f]
      %v552 = vlaneseq
      %v553 = vshrl.u32 %v552, 7
      %v554 = vsub.s32 0, %v553
      %v555 = vrot.slane %v462, %v554
      %v557 = vmul.f32 %v550, %v555
      %v558 = vsel %vm538, %v557, 0.0
      %559 = vadd.xlane.f32.xlu0 %v558
      %v560 = vpop.xlane.xlu0 %559
      %v561 = vadd.f32 %v560, 1.0
      %v562 = vld [vmem:[%s5] sm:$0x3f]
      %v563 = vadd.f32 %v561, %v562
      %v564 = vld [vmem:[%s6] sm:$0x3f]
      %v565 = vmul.f32 %v564, %v555
      %v566 = vsel %vm538, %v565, 0.0
      %567 = vadd.xlane.f32.xlu0 %v566
      %v568 = vpop.xlane.xlu0 %567
      %v569 = vld [vmem:[%s7] sm:$0x3f]
      %v570 = vadd.f32 %v568, %v569
      %572 = vset.pattern.permute.xlu0 0
      %573 = vperm.xlu0 %572, %v563
      %v574 = vpop.permute.xlu0 %573
      %v576 = vmul.f32 %v574, %v544
      %v577 = vadd.f32 %v549, 1e-05
      %v578 = vrsqrt.pop %v577
      %v579 = vmul.f32 %v576, %v578
      %581 = vset.pattern.permute.xlu0 0
      %582 = vperm.xlu0 %581, %v570
      %v583 = vpop.permute.xlu0 %582
      %v585 = vadd.f32 %v579, %v583
      %586 = vst.msk [vmem:[%s456] sm:$0x3f] %vm538, %v585
      %v587 = vld [vmem:[%s3] sm:$0xf]
      %v589 = vsel %vm464, %v587, 0
      %591 = vmatprep.subr.mxu0 0.0
      %592 = vmatpush1.msra.mxu0 %v461
      %593 = vmatprep.subr.mxu0 0.0
      %594 = vmatpush1.msra.mxu0 0.0
      %595 = vmatprep.subr.mxu0 0.0
      %596 = vmatpush1.msra.mxu0 0.0
      %597 = vmatprep.subr.mxu0 0.0
      %598 = vmatpush1.msra.mxu0 0.0
      %599 = vmatprep.subr.mxu0 0.0
      %600 = vmatpush1.msra.mxu0 0.0
      %601 = vmatprep.subr.mxu0 0.0
      %602 = vmatpush1.msra.mxu0 0.0
      %603 = vmatprep.subr.mxu0 0.0
      %604 = vmatpush1.msra.mxu0 0.0
      %605 = vmatprep.subr.mxu0 0.0
      %606 = vmatpush1.msra.mxu0 0.0
      %607 = vmatprep.subr.mxu0 0.0
      %608 = vmatpush1.msra.mxu0 0.0
      %609 = vmatprep.subr.mxu0 0.0
      %610 = vmatpush1.msra.mxu0 0.0
      %611 = vmatprep.subr.mxu0 0.0
      %612 = vmatpush1.msra.mxu0 0.0
      %613 = vmatprep.subr.mxu0 0.0
      %614 = vmatpush1.msra.mxu0 0.0
      %615 = vmatprep.subr.mxu0 0.0
      %616 = vmatpush1.msra.mxu0 0.0
      %617 = vmatprep.subr.mxu0 0.0
      %618 = vmatpush1.msra.mxu0 0.0
      %619 = vmatprep.subr.mxu0 0.0
      %620 = vmatpush1.msra.mxu0 0.0
      %621 = vmatprep.subr.mxu0 0.0
      %622 = vmatpush1.msra.mxu0 0.0
      %623 = vmatprep.subr.mxu0 0.0
      %624 = vmatpush1.msra.mxu0 0.0
      %625 = vmatprep.subr.mxu0 0.0
      %626 = vmatpush1.msra.mxu0 0.0
      %627 = vmatprep.subr.mxu0 0.0
      %628 = vmatpush1.msra.mxu0 0.0
      %629 = vmatprep.subr.mxu0 0.0
      %630 = vmatpush1.msra.mxu0 0.0
      %631 = vmatprep.subr.mxu0 0.0
      %632 = vmatpush1.msra.mxu0 0.0
      %633 = vmatprep.subr.mxu0 0.0
      %634 = vmatpush1.msra.mxu0 0.0
      %635 = vmatprep.subr.mxu0 0.0
      %636 = vmatpush1.msra.mxu0 0.0
      %637 = vmatprep.subr.mxu0 0.0
      %638 = vmatpush1.msra.mxu0 0.0
      %639 = vmatprep.subr.mxu0 0.0
      %640 = vmatpush1.msra.mxu0 0.0
      %641 = vmatprep.subr.mxu0 0.0
      %642 = vmatpush1.msra.mxu0 0.0
      %643 = vmatprep.subr.mxu0 0.0
      %644 = vmatpush1.msra.mxu0 0.0
      %645 = vmatprep.subr.mxu0 0.0
      %646 = vmatpush1.msra.mxu0 0.0
      %647 = vmatprep.subr.mxu0 0.0
      %648 = vmatpush1.msra.mxu0 0.0
      %649 = vmatprep.subr.mxu0 0.0
      %650 = vmatpush1.msra.mxu0 0.0
      %651 = vmatprep.subr.mxu0 0.0
      %652 = vmatpush1.msra.mxu0 0.0
      %653 = vmatprep.subr.mxu0 0.0
      %654 = vmatpush1.msra.mxu0 0.0
      %655 = vmatprep.mubr.f32.mxu0 0.0
      %656 = vmatmul.mubr.f32.gmra.mrb[0].mxu0 %v589
      %v657 = vpop.f32.mrb[0].mxu0
      %v658 = vadd.f32 0.0, %v657
      %v659 = vpop.f32.mrb[0].mxu0
      %660 = vdwg.mxu0
      %vm661 = vcmask 125952
      %v662 = vsel %vm661, %v658, 0.0
      %663 = vadd.xlane.f32.xlu0 %v662
      %v664 = vpop.xlane.xlu0 %663
      %v665 = vmul.f32 %v664, %v542
      %v666 = vsub.f32 %v658, %v665
      %v667 = vmul.f32 %v666, %v666
      %v668 = vsel %vm661, %v667, 0.0
      %669 = vadd.xlane.f32.xlu0 %v668
      %v670 = vpop.xlane.xlu0 %669
      %v671 = vmul.f32 %v670, %v542
      %v672 = vld [vmem:[%s8] sm:$0xf]
      %v673 = vmul.f32 %v672, %v555
      %v674 = vsel %vm661, %v673, 0.0
      %675 = vadd.xlane.f32.xlu0 %v674
      %v676 = vpop.xlane.xlu0 %675
      %v677 = vadd.f32 %v676, 1.0
      %v678 = vld [vmem:[%s9] sm:$0xf]
      %v679 = vadd.f32 %v677, %v678
      %v680 = vld [vmem:[%s10] sm:$0xf]
      %v681 = vmul.f32 %v680, %v555
      %v682 = vsel %vm661, %v681, 0.0
      %683 = vadd.xlane.f32.xlu0 %v682
      %v684 = vpop.xlane.xlu0 %683
      %v685 = vld [vmem:[%s11] sm:$0xf]
      %v686 = vadd.f32 %v684, %v685
      %688 = vset.pattern.permute.xlu0 0
      %689 = vperm.xlu0 %688, %v679
      %v690 = vpop.permute.xlu0 %689
      %v692 = vmul.f32 %v690, %v666
      %v693 = vadd.f32 %v671, 1e-05
      %v694 = vrsqrt.pop %v693
      %v695 = vmul.f32 %v692, %v694
      %697 = vset.pattern.permute.xlu0 0
      %698 = vperm.xlu0 %697, %v686
      %v699 = vpop.permute.xlu0 %698
      %v701 = vadd.f32 %v695, %v699
      %702 = vst.msk [vmem:[%s460] sm:$0xf] %vm661, %v701
      %p703 = scmp.lt.s32.totalorder %s25, 1
      %s704 = scalar_select %p703, %s25, 1
      %s705 = smul.addr %s704, 8
      %s706 = scalar_lea.vmem %s12, %s705
      %p707 = scmp.lt.s32.totalorder %s25, 1
      %s708 = scalar_select %p707, %s25, 1
      %s709 = smul.addr %s708, 4
      %s710 = scalar_lea.vmem %s13, %s709
      // Predicated region
      $region69: #{_lambda_.10} parent=67 // pred_check
        %p711 = pneg %p305
      $region70: #{_lambda_.10} parent=67 // pred_check_branch
        %713 = sbr.rel (%p711) target = $region72
      $region71: #{_lambda_.10} parent=67 // pred_region
        _
      $region72: #{_lambda_.10} parent=67 // pred_fallthru
        _
      // Predicated region
      $region73: #{_lambda_.10} parent=67 // pred_check
        %p714 = pneg %p331
      $region74: #{_lambda_.10} parent=67 // pred_check_branch
        %716 = sbr.rel (%p714) target = $region76
      $region75: #{_lambda_.10} parent=67 // pred_region
        _
      $region76: #{_lambda_.10} parent=67 // pred_fallthru
        _
    $region68: #{_lambda_.10} parent=5 // pred_fallthru
      _
    %p717 = scmp.le.s32.totalorder 2, %s20
    // Predicated region
    $region77: #{_lambda_.10} parent=5 // pred_check
      %p718 = pneg %p717
    $region78: #{_lambda_.10} parent=5 // pred_check_branch
      %720 = sbr.rel (%p718) target = $region80
    $region79: #{_lambda_.10} parent=5 // pred_region
      %s721 = ssub.s32 %s20, 2
      // Predicated region
      $region81: #{_lambda_.10} parent=79 // pred_check
        %p722 = pneg %p311
      $region82: #{_lambda_.10} parent=79 // pred_check_branch
        %724 = sbr.rel (%p722) target = $region84
      $region83: #{_lambda_.10} parent=79 // pred_region
        %p725 = scmp.lt.s32.totalorder %s26, 1
        %s726 = scalar_select %p725, %s26, 1
        %s727 = smul.addr %s726, 8
        %s728 = scalar_lea.vmem %s12, %s727
      $region84: #{_lambda_.10} parent=79 // pred_fallthru
        _
      // Predicated region
      $region85: #{_lambda_.10} parent=79 // pred_check
        %p729 = pneg %p337
      $region86: #{_lambda_.10} parent=79 // pred_check_branch
        %731 = sbr.rel (%p729) target = $region88
      $region87: #{_lambda_.10} parent=79 // pred_region
        %p732 = scmp.lt.s32.totalorder %s26, 1
        %s733 = scalar_select %p732, %s26, 1
        %s734 = smul.addr %s733, 4
        %s735 = scalar_lea.vmem %s13, %s734
      $region88: #{_lambda_.10} parent=79 // pred_fallthru
        _
    $region80: #{_lambda_.10} parent=5 // pred_fallthru
      _
  $region6: #{_lambda_.10} parent=0 // loop_footer
    %s24 = sadd.s32 1, %s20
  $region7: #{_lambda_.10} parent=0 // loop_footer_branch
    %19 = sbr.rel target = $region3
  $region8: #{_lambda_.10} parent=0 // loop_exit
    _

// kernel: _lambda_.9
$region0: #{_lambda_.9}
  #allocation0 [shape = 'u32[]', space=smem, size = 0x4, offset = 0x4, fixed_abs, tag = 'smem constant byte address 0x4 - core index']
  #allocation1 [shape = 'u32[144,128]{1,0:T(1,128)}', space=vmem, size = 0x12000, scoped, tag = 'internal scratch']
  %s0 = inlined_call_operand.vmem [shape: f32[2,8,16], index: 0, kind: input, shape index: {}]
  %s1 = inlined_call_operand.vmem [shape: f32[2,1,16], index: 1, kind: input, shape index: {}]
  %s2 = inlined_call_operand.vmem [shape: f32[8,16], index: 2, kind: input, shape index: {}]
  %s3 = inlined_call_operand.vmem [shape: f32[8,1], index: 3, kind: input, shape index: {}, may-alias: {3,5}]
  %s4 = inlined_call_operand.vmem [shape: f32[8,16], index: 4, kind: input, shape index: {}]
  %s5 = inlined_call_operand.vmem [shape: f32[8,1], index: 5, kind: input, shape index: {}, may-alias: {3,5}]
  %s6 = inlined_call_operand.vmem [shape: f32[2,8,16], index: 6, kind: output, shape index: {}]
  %s7 = sld [smem:[#allocation0]]
  $region57: #{_lambda_.9} parent=0
    _
  %s9 = ssub.s32 1, %s7
  %s10 = scalar_select 0, %s9, %s7
  loop: start=0, step=1, limit=4
  $region2: #{_lambda_.9} parent=0 // loop_pre_header
    _
  $region3: #{_lambda_.9} parent=0 // loop_header
    %s12 = sphi 0, %s16
    %p13 = scmp.ge.s32.totalorder %s12, 4
    %s22 = sphi 0, %s24
    %s25 = sphi 0, %s22
    %s26 = sphi 0, %s25
    %s42 = sphi 0, %s26
    %s48 = sphi 0, %s50
    %s51 = sphi 0, %s48
    %s52 = sphi 0, %s51
    %s68 = sphi 0, %s52
    %s72 = sphi 0, %s72
    %s74 = sphi 0, %s72
    %s75 = sphi 0, %s74
    %s89 = sphi 0, %s75
    %s93 = sphi 0, %s93
    %s95 = sphi 0, %s93
    %s96 = sphi 0, %s95
    %s110 = sphi 0, %s96
    %s114 = sphi 0, %s114
    %s116 = sphi 0, %s114
    %s117 = sphi 0, %s116
    %s131 = sphi 0, %s117
    %s135 = sphi 0, %s135
    %s137 = sphi 0, %s135
    %s138 = sphi 0, %s137
    %s152 = sphi 0, %s138
    %s158 = sphi 0, %s160
    %s161 = sphi 0, %s158
    %s162 = sphi 0, %s161
    %s178 = sphi 0, %s162
  $region4: #{_lambda_.9} parent=0 // loop_header_branch
    %15 = sbr.rel (%p13) target = $region8
  $region5: #{_lambda_.9} parent=0 // loop_body
    %s17 = ssub.s32 %s12, 1
    %s18 = ssub.s32 %s12, 2
    %s19 = sadd.s32 %s12, 1
    %s20 = ssub.s32 %s12, %s19
    %p21 = scmp.eq.s32.totalorder %s20, 0
    %s23 = sadd.s32 %s22, 1
    %s24 = scalar_select %p21, %s22, %s23
    %p27 = pneg %p21
    %p28 = scmp.eq.s32.totalorder %s12, 1
    %p29 = por %p27, %p28
    %p30 = scmp.ne.s32.totalorder %s22, %s25
    %p31 = scmp.eq.s32.totalorder %s12, 0
    %p32 = por %p30, %p31
    %p33 = scmp.ne.s32.totalorder %s22, %s25
    %p34 = scmp.eq.s32.totalorder %s17, 1
    %p35 = por %p33, %p34
    %p36 = scmp.ne.s32.totalorder %s25, %s26
    %p37 = scmp.eq.s32.totalorder %s17, 0
    %p38 = por %p36, %p37
    %p39 = scmp.ne.s32.totalorder %s25, %s26
    %p40 = scmp.eq.s32.totalorder %s18, 1
    %p41 = por %p39, %p40
    %p43 = scmp.ne.s32.totalorder %s26, %s42
    %p44 = scmp.eq.s32.totalorder %s18, 0
    %p45 = por %p43, %p44
    %s46 = ssub.s32 %s12, %s19
    %p47 = scmp.eq.s32.totalorder %s46, 0
    %s49 = sadd.s32 %s48, 1
    %s50 = scalar_select %p47, %s48, %s49
    %p53 = pneg %p47
    %p54 = scmp.eq.s32.totalorder %s12, 1
    %p55 = por %p53, %p54
    %p56 = scmp.ne.s32.totalorder %s48, %s51
    %p57 = scmp.eq.s32.totalorder %s12, 0
    %p58 = por %p56, %p57
    %p59 = scmp.ne.s32.totalorder %s48, %s51
    %p60 = scmp.eq.s32.totalorder %s17, 1
    %p61 = por %p59, %p60
    %p62 = scmp.ne.s32.totalorder %s51, %s52
    %p63 = scmp.eq.s32.totalorder %s17, 0
    %p64 = por %p62, %p63
    %p65 = scmp.ne.s32.totalorder %s51, %s52
    %p66 = scmp.eq.s32.totalorder %s18, 1
    %p67 = por %p65, %p66
    %p69 = scmp.ne.s32.totalorder %s52, %s68
    %p70 = scmp.eq.s32.totalorder %s18, 0
    %p71 = por %p69, %p70
    %s73 = sadd.s32 %s72, 1
    %p76 = scmp.eq.s32.totalorder %s12, 1
    %p77 = scmp.ne.s32.totalorder %s72, %s74
    %p78 = scmp.eq.s32.totalorder %s12, 0
    %p79 = por %p77, %p78
    %p80 = scmp.ne.s32.totalorder %s72, %s74
    %p81 = scmp.eq.s32.totalorder %s17, 1
    %p82 = por %p80, %p81
    %p83 = scmp.ne.s32.totalorder %s74, %s75
    %p84 = scmp.eq.s32.totalorder %s17, 0
    %p85 = por %p83, %p84
    %p86 = scmp.ne.s32.totalorder %s74, %s75
    %p87 = scmp.eq.s32.totalorder %s18, 1
    %p88 = por %p86, %p87
    %p90 = scmp.ne.s32.totalorder %s75, %s89
    %p91 = scmp.eq.s32.totalorder %s18, 0
    %p92 = por %p90, %p91
    %s94 = sadd.s32 %s93, 1
    %p97 = scmp.eq.s32.totalorder %s12, 1
    %p98 = scmp.ne.s32.totalorder %s93, %s95
    %p99 = scmp.eq.s32.totalorder %s12, 0
    %p100 = por %p98, %p99
    %p101 = scmp.ne.s32.totalorder %s93, %s95
    %p102 = scmp.eq.s32.totalorder %s17, 1
    %p103 = por %p101, %p102
    %p104 = scmp.ne.s32.totalorder %s95, %s96
    %p105 = scmp.eq.s32.totalorder %s17, 0
    %p106 = por %p104, %p105
    %p107 = scmp.ne.s32.totalorder %s95, %s96
    %p108 = scmp.eq.s32.totalorder %s18, 1
    %p109 = por %p107, %p108
    %p111 = scmp.ne.s32.totalorder %s96, %s110
    %p112 = scmp.eq.s32.totalorder %s18, 0
    %p113 = por %p111, %p112
    %s115 = sadd.s32 %s114, 1
    %p118 = scmp.eq.s32.totalorder %s12, 1
    %p119 = scmp.ne.s32.totalorder %s114, %s116
    %p120 = scmp.eq.s32.totalorder %s12, 0
    %p121 = por %p119, %p120
    %p122 = scmp.ne.s32.totalorder %s114, %s116
    %p123 = scmp.eq.s32.totalorder %s17, 1
    %p124 = por %p122, %p123
    %p125 = scmp.ne.s32.totalorder %s116, %s117
    %p126 = scmp.eq.s32.totalorder %s17, 0
    %p127 = por %p125, %p126
    %p128 = scmp.ne.s32.totalorder %s116, %s117
    %p129 = scmp.eq.s32.totalorder %s18, 1
    %p130 = por %p128, %p129
    %p132 = scmp.ne.s32.totalorder %s117, %s131
    %p133 = scmp.eq.s32.totalorder %s18, 0
    %p134 = por %p132, %p133
    %s136 = sadd.s32 %s135, 1
    %p139 = scmp.eq.s32.totalorder %s12, 1
    %p140 = scmp.ne.s32.totalorder %s135, %s137
    %p141 = scmp.eq.s32.totalorder %s12, 0
    %p142 = por %p140, %p141
    %p143 = scmp.ne.s32.totalorder %s135, %s137
    %p144 = scmp.eq.s32.totalorder %s17, 1
    %p145 = por %p143, %p144
    %p146 = scmp.ne.s32.totalorder %s137, %s138
    %p147 = scmp.eq.s32.totalorder %s17, 0
    %p148 = por %p146, %p147
    %p149 = scmp.ne.s32.totalorder %s137, %s138
    %p150 = scmp.eq.s32.totalorder %s18, 1
    %p151 = por %p149, %p150
    %p153 = scmp.ne.s32.totalorder %s138, %s152
    %p154 = scmp.eq.s32.totalorder %s18, 0
    %p155 = por %p153, %p154
    %s156 = ssub.s32 %s12, %s19
    %p157 = scmp.eq.s32.totalorder %s156, 0
    %s159 = sadd.s32 %s158, 1
    %s160 = scalar_select %p157, %s158, %s159
    %p163 = pneg %p157
    %p164 = scmp.eq.s32.totalorder %s12, 1
    %p165 = por %p163, %p164
    %p166 = scmp.ne.s32.totalorder %s158, %s161
    %p167 = scmp.eq.s32.totalorder %s12, 0
    %p168 = por %p166, %p167
    %p169 = scmp.ne.s32.totalorder %s158, %s161
    %p170 = scmp.eq.s32.totalorder %s17, 1
    %p171 = por %p169, %p170
    %p172 = scmp.ne.s32.totalorder %s161, %s162
    %p173 = scmp.eq.s32.totalorder %s17, 0
    %p174 = por %p172, %p173
    %p175 = scmp.ne.s32.totalorder %s161, %s162
    %p176 = scmp.eq.s32.totalorder %s18, 1
    %p177 = por %p175, %p176
    %p179 = scmp.ne.s32.totalorder %s162, %s178
    %p180 = scmp.eq.s32.totalorder %s18, 0
    %p181 = por %p179, %p180
    %p182 = scmp.le.s32.totalorder 1, %s12
    %p183 = scmp.lt.s32.totalorder %s12, 3
    %p184 = pnand %p182, %p183
    %p185 = pneg %p184
    // Predicated region
    $region9: #{_lambda_.9} parent=5 // pred_check
      _
    $region10: #{_lambda_.9} parent=5 // pred_check_branch
      %187 = sbr.rel (%p184) target = $region12
    $region11: #{_lambda_.9} parent=5 // pred_region
      %s188 = ssub.s32 %s12, 1
      // Predicated region
      $region13: #{_lambda_.9} parent=11 // pred_check
        %p189 = pneg %p85
      $region14: #{_lambda_.9} parent=11 // pred_check_branch
        %191 = sbr.rel (%p189) target = $region16
      $region15: #{_lambda_.9} parent=11 // pred_region
        _
      $region16: #{_lambda_.9} parent=11 // pred_fallthru
        _
      // Predicated region
      $region17: #{_lambda_.9} parent=11 // pred_check
        %p192 = pneg %p106
      $region18: #{_lambda_.9} parent=11 // pred_check_branch
        %194 = sbr.rel (%p192) target = $region20
      $region19: #{_lambda_.9} parent=11 // pred_region
        _
      $region20: #{_lambda_.9} parent=11 // pred_fallthru
        _
      // Predicated region
      $region21: #{_lambda_.9} parent=11 // pred_check
        %p195 = pneg %p127
      $region22: #{_lambda_.9} parent=11 // pred_check_branch
        %197 = sbr.rel (%p195) target = $region24
      $region23: #{_lambda_.9} parent=11 // pred_region
        _
      $region24: #{_lambda_.9} parent=11 // pred_fallthru
        _
      // Predicated region
      $region25: #{_lambda_.9} parent=11 // pred_check
        %p198 = pneg %p148
      $region26: #{_lambda_.9} parent=11 // pred_check_branch
        %200 = sbr.rel (%p198) target = $region28
      $region27: #{_lambda_.9} parent=11 // pred_region
        _
      $region28: #{_lambda_.9} parent=11 // pred_fallthru
        _
    $region12: #{_lambda_.9} parent=5 // pred_fallthru
      _
    %p201 = scmp.lt.s32.totalorder %s12, 2
    // Predicated region
    $region29: #{_lambda_.9} parent=5 // pred_check
      %p202 = pneg %p201
    $region30: #{_lambda_.9} parent=5 // pred_check_branch
      %204 = sbr.rel (%p202) target = $region32
    $region31: #{_lambda_.9} parent=5 // pred_region
      // Predicated region
      $region33: #{_lambda_.9} parent=31 // pred_check
        %p205 = pneg %p32
      $region34: #{_lambda_.9} parent=31 // pred_check_branch
        %207 = sbr.rel (%p205) target = $region36
      $region35: #{_lambda_.9} parent=31 // pred_region
        %p208 = scmp.lt.s32.totalorder %s12, 1
        %s209 = scalar_select %p208, %s12, 1
        %s210 = smul.addr %s209, 8
        %s211 = scalar_lea.vmem %s0, %s210
      $region36: #{_lambda_.9} parent=31 // pred_fallthru
        _
      // Predicated region
      $region37: #{_lambda_.9} parent=31 // pred_check
        %p212 = pneg %p58
      $region38: #{_lambda_.9} parent=31 // pred_check_branch
        %214 = sbr.rel (%p212) target = $region40
      $region39: #{_lambda_.9} parent=31 // pred_region
        %p215 = scmp.lt.s32.totalorder %s12, 1
        %s216 = scalar_select %p215, %s12, 1
        %s217 = scalar_lea.vmem %s1, %s216
      $region40: #{_lambda_.9} parent=31 // pred_fallthru
        _
    $region32: #{_lambda_.9} parent=5 // pred_fallthru
      _
    %p218 = scmp.le.s32.totalorder 1, %s12
    %p219 = scmp.lt.s32.totalorder %s12, 3
    %p220 = pnand %p218, %p219
    %p221 = pneg %p220
    // Predicated region
    $region41: #{_lambda_.9} parent=5 // pred_check
      _
    $region42: #{_lambda_.9} parent=5 // pred_check_branch
      %223 = sbr.rel (%p220) target = $region44
    $region43: #{_lambda_.9} parent=5 // pred_region
      %s224 = ssub.s32 %s12, 1
      %p225 = scmp.lt.s32.totalorder %s17, 1
      %s226 = scalar_select %p225, %s17, 1
      %s227 = smul.addr %s226, 8
      %s228 = scalar_lea.vmem %s0, %s227
      %p229 = pneg %p38
      %p230 = pneg %p35
      %p231 = scmp.lt.s32.totalorder %s17, 1
      %s232 = scalar_select %p231, %s17, 1
      %s233 = scalar_lea.vmem %s1, %s232
      %p234 = pneg %p64
      %p235 = pneg %p61
      %p236 = pneg %p85
      %p237 = pneg %p82
      %p238 = pneg %p106
      %p239 = pneg %p103
      %p240 = pneg %p127
      %p241 = pneg %p124
      %p242 = pneg %p148
      %p243 = pneg %p145
      %p244 = pneg %p174
      %p245 = pneg %p171
      %p246 = scmp.lt.s32.totalorder %s17, 1
      %s247 = scalar_select %p246, %s17, 1
      %s248 = smul.addr %s247, 8
      %s249 = scalar_lea.vmem %s6, %s248
      %p250 = scmp.lt.s32.totalorder %s17, 1
      %s251 = scalar_select %p250, %s17, 1
      %s252 = smul.addr %s251, 8
      %s253 = scalar_lea.vmem %s0, %s252
      %p254 = scmp.lt.s32.totalorder %s17, 1
      %s255 = scalar_select %p254, %s17, 1
      %s256 = scalar_lea.vmem %s1, %s255
      %p257 = scmp.lt.s32.totalorder %s17, 1
      %s258 = scalar_select %p257, %s17, 1
      %s259 = smul.addr %s258, 8
      %s260 = scalar_lea.vmem %s6, %s259
      %v261 = vld [vmem:[%s253] sm:$0xff]
      %v262 = vld [vmem:[%s256] sm:$0x1]
      %vm263 = vcmask 130048
      %v264 = vsel %vm263, %v261, 0.0
      %265 = vadd.xlane.f32.xlu0 %v264
      %v266 = vpop.xlane.xlu0 %265
      %v267 = vrcp.pop 16.0
      %v268 = vmul.f32 %v266, %v267
      %v269 = vsub.f32 %v261, %v268
      %v270 = vmul.f32 %v269, %v269
      %v271 = vsel %vm263, %v270, 0.0
      %272 = vadd.xlane.f32.xlu0 %v271
      %v273 = vpop.xlane.xlu0 %272
      %v274 = vmul.f32 %v273, %v267
      %v275 = vld [vmem:[%s2] sm:$0xff]
      %v277 = vlaneseq
      %v278 = vshrl.u32 %v277, 7
      %v279 = vsub.s32 0, %v278
      %v280 = vrot.slane %v262, %v279
      %v282 = vmul.f32 %v275, %v280
      %v283 = vsel %vm263, %v282, 0.0
      %284 = vadd.xlane.f32.xlu0 %v283
      %v285 = vpop.xlane.xlu0 %284
      %v286 = vadd.f32 %v285, 1.0
      %v287 = vld [vmem:[%s3] sm:$0xff]
      %v288 = vadd.f32 %v286, %v287
      %v289 = vld [vmem:[%s4] sm:$0xff]
      %v290 = vmul.f32 %v289, %v280
      %v291 = vsel %vm263, %v290, 0.0
      %292 = vadd.xlane.f32.xlu0 %v291
      %v293 = vpop.xlane.xlu0 %292
      %v294 = vld [vmem:[%s5] sm:$0xff]
      %v295 = vadd.f32 %v293, %v294
      %297 = vset.pattern.permute.xlu0 0
      %298 = vperm.xlu0 %297, %v288
      %v299 = vpop.permute.xlu0 %298
      %v301 = vmul.f32 %v299, %v269
      %v302 = vadd.f32 %v274, 1e-05
      %v303 = vrsqrt.pop %v302
      %v304 = vmul.f32 %v301, %v303
      %306 = vset.pattern.permute.xlu0 0
      %307 = vperm.xlu0 %306, %v295
      %v308 = vpop.permute.xlu0 %307
      %v310 = vadd.f32 %v304, %v308
      %v311 = vmax.f32 %v310, 0.0
      %312 = vst.msk [vmem:[%s260] sm:$0xff] %vm263, %v311
      %p313 = scmp.lt.s32.totalorder %s17, 1
      %s314 = scalar_select %p313, %s17, 1
      %s315 = smul.addr %s314, 8
      %s316 = scalar_lea.vmem %s6, %s315
      // Predicated region
      $region45: #{_lambda_.9} parent=43 // pred_check
        %p317 = pneg %p171
      $region46: #{_lambda_.9} parent=43 // pred_check_branch
        %319 = sbr.rel (%p317) target = $region48
      $region47: #{_lambda_.9} parent=43 // pred_region
        _
      $region48: #{_lambda_.9} parent=43 // pred_fallthru
        _
    $region44: #{_lambda_.9} parent=5 // pred_fallthru
      _
    %p320 = scmp.le.s32.totalorder 2, %s12
    // Predicated region
    $region49: #{_lambda_.9} parent=5 // pred_check
      %p321 = pneg %p320
    $region50: #{_lambda_.9} parent=5 // pred_check_branch
      %323 = sbr.rel (%p321) target = $region52
    $region51: #{_lambda_.9} parent=5 // pred_region
      %s324 = ssub.s32 %s12, 2
      // Predicated region
      $region53: #{_lambda_.9} parent=51 // pred_check
        %p325 = pneg %p177
      $region54: #{_lambda_.9} parent=51 // pred_check_branch
        %327 = sbr.rel (%p325) target = $region56
      $region55: #{_lambda_.9} parent=51 // pred_region
        %p328 = scmp.lt.s32.totalorder %s18, 1
        %s329 = scalar_select %p328, %s18, 1
        %s330 = smul.addr %s329, 8
        %s331 = scalar_lea.vmem %s6, %s330
      $region56: #{_lambda_.9} parent=51 // pred_fallthru
        _
    $region52: #{_lambda_.9} parent=5 // pred_fallthru
      _
  $region6: #{_lambda_.9} parent=0 // loop_footer
    %s16 = sadd.s32 1, %s12
  $region7: #{_lambda_.9} parent=0 // loop_footer_branch
    %11 = sbr.rel target = $region3
  $region8: #{_lambda_.9} parent=0 // loop_exit
    _

// kernel: _lambda_.12
$region0: #{_lambda_.12}
  #allocation0 [shape = 'u32[]', space=smem, size = 0x4, offset = 0x4, fixed_abs, tag = 'smem constant byte address 0x4 - core index']
  #allocation1 [shape = 'u32[144,128]{1,0:T(1,128)}', space=vmem, size = 0x12000, scoped, tag = 'internal scratch']
  %s0 = inlined_call_operand.vmem [shape: f32[2,4,16], index: 0, kind: input, shape index: {}]
  %s1 = inlined_call_operand.vmem [shape: f32[2,1,16], index: 1, kind: input, shape index: {}]
  %s2 = inlined_call_operand.vmem [shape: f32[4,16], index: 2, kind: input, shape index: {}]
  %s3 = inlined_call_operand.vmem [shape: f32[4,1], index: 3, kind: input, shape index: {}, may-alias: {3,5}]
  %s4 = inlined_call_operand.vmem [shape: f32[4,16], index: 4, kind: input, shape index: {}]
  %s5 = inlined_call_operand.vmem [shape: f32[4,1], index: 5, kind: input, shape index: {}, may-alias: {3,5}]
  %s6 = inlined_call_operand.vmem [shape: f32[2,4,16], index: 6, kind: output, shape index: {}]
  %s7 = sld [smem:[#allocation0]]
  $region57: #{_lambda_.12} parent=0
    _
  %s9 = ssub.s32 1, %s7
  %s10 = scalar_select 0, %s9, %s7
  loop: start=0, step=1, limit=4
  $region2: #{_lambda_.12} parent=0 // loop_pre_header
    _
  $region3: #{_lambda_.12} parent=0 // loop_header
    %s12 = sphi 0, %s16
    %p13 = scmp.ge.s32.totalorder %s12, 4
    %s22 = sphi 0, %s24
    %s25 = sphi 0, %s22
    %s26 = sphi 0, %s25
    %s42 = sphi 0, %s26
    %s48 = sphi 0, %s50
    %s51 = sphi 0, %s48
    %s52 = sphi 0, %s51
    %s68 = sphi 0, %s52
    %s72 = sphi 0, %s72
    %s74 = sphi 0, %s72
    %s75 = sphi 0, %s74
    %s89 = sphi 0, %s75
    %s93 = sphi 0, %s93
    %s95 = sphi 0, %s93
    %s96 = sphi 0, %s95
    %s110 = sphi 0, %s96
    %s114 = sphi 0, %s114
    %s116 = sphi 0, %s114
    %s117 = sphi 0, %s116
    %s131 = sphi 0, %s117
    %s135 = sphi 0, %s135
    %s137 = sphi 0, %s135
    %s138 = sphi 0, %s137
    %s152 = sphi 0, %s138
    %s158 = sphi 0, %s160
    %s161 = sphi 0, %s158
    %s162 = sphi 0, %s161
    %s178 = sphi 0, %s162
  $region4: #{_lambda_.12} parent=0 // loop_header_branch
    %15 = sbr.rel (%p13) target = $region8
  $region5: #{_lambda_.12} parent=0 // loop_body
    %s17 = ssub.s32 %s12, 1
    %s18 = ssub.s32 %s12, 2
    %s19 = sadd.s32 %s12, 1
    %s20 = ssub.s32 %s12, %s19
    %p21 = scmp.eq.s32.totalorder %s20, 0
    %s23 = sadd.s32 %s22, 1
    %s24 = scalar_select %p21, %s22, %s23
    %p27 = pneg %p21
    %p28 = scmp.eq.s32.totalorder %s12, 1
    %p29 = por %p27, %p28
    %p30 = scmp.ne.s32.totalorder %s22, %s25
    %p31 = scmp.eq.s32.totalorder %s12, 0
    %p32 = por %p30, %p31
    %p33 = scmp.ne.s32.totalorder %s22, %s25
    %p34 = scmp.eq.s32.totalorder %s17, 1
    %p35 = por %p33, %p34
    %p36 = scmp.ne.s32.totalorder %s25, %s26
    %p37 = scmp.eq.s32.totalorder %s17, 0
    %p38 = por %p36, %p37
    %p39 = scmp.ne.s32.totalorder %s25, %s26
    %p40 = scmp.eq.s32.totalorder %s18, 1
    %p41 = por %p39, %p40
    %p43 = scmp.ne.s32.totalorder %s26, %s42
    %p44 = scmp.eq.s32.totalorder %s18, 0
    %p45 = por %p43, %p44
    %s46 = ssub.s32 %s12, %s19
    %p47 = scmp.eq.s32.totalorder %s46, 0
    %s49 = sadd.s32 %s48, 1
    %s50 = scalar_select %p47, %s48, %s49
    %p53 = pneg %p47
    %p54 = scmp.eq.s32.totalorder %s12, 1
    %p55 = por %p53, %p54
    %p56 = scmp.ne.s32.totalorder %s48, %s51
    %p57 = scmp.eq.s32.totalorder %s12, 0
    %p58 = por %p56, %p57
    %p59 = scmp.ne.s32.totalorder %s48, %s51
    %p60 = scmp.eq.s32.totalorder %s17, 1
    %p61 = por %p59, %p60
    %p62 = scmp.ne.s32.totalorder %s51, %s52
    %p63 = scmp.eq.s32.totalorder %s17, 0
    %p64 = por %p62, %p63
    %p65 = scmp.ne.s32.totalorder %s51, %s52
    %p66 = scmp.eq.s32.totalorder %s18, 1
    %p67 = por %p65, %p66
    %p69 = scmp.ne.s32.totalorder %s52, %s68
    %p70 = scmp.eq.s32.totalorder %s18, 0
    %p71 = por %p69, %p70
    %s73 = sadd.s32 %s72, 1
    %p76 = scmp.eq.s32.totalorder %s12, 1
    %p77 = scmp.ne.s32.totalorder %s72, %s74
    %p78 = scmp.eq.s32.totalorder %s12, 0
    %p79 = por %p77, %p78
    %p80 = scmp.ne.s32.totalorder %s72, %s74
    %p81 = scmp.eq.s32.totalorder %s17, 1
    %p82 = por %p80, %p81
    %p83 = scmp.ne.s32.totalorder %s74, %s75
    %p84 = scmp.eq.s32.totalorder %s17, 0
    %p85 = por %p83, %p84
    %p86 = scmp.ne.s32.totalorder %s74, %s75
    %p87 = scmp.eq.s32.totalorder %s18, 1
    %p88 = por %p86, %p87
    %p90 = scmp.ne.s32.totalorder %s75, %s89
    %p91 = scmp.eq.s32.totalorder %s18, 0
    %p92 = por %p90, %p91
    %s94 = sadd.s32 %s93, 1
    %p97 = scmp.eq.s32.totalorder %s12, 1
    %p98 = scmp.ne.s32.totalorder %s93, %s95
    %p99 = scmp.eq.s32.totalorder %s12, 0
    %p100 = por %p98, %p99
    %p101 = scmp.ne.s32.totalorder %s93, %s95
    %p102 = scmp.eq.s32.totalorder %s17, 1
    %p103 = por %p101, %p102
    %p104 = scmp.ne.s32.totalorder %s95, %s96
    %p105 = scmp.eq.s32.totalorder %s17, 0
    %p106 = por %p104, %p105
    %p107 = scmp.ne.s32.totalorder %s95, %s96
    %p108 = scmp.eq.s32.totalorder %s18, 1
    %p109 = por %p107, %p108
    %p111 = scmp.ne.s32.totalorder %s96, %s110
    %p112 = scmp.eq.s32.totalorder %s18, 0
    %p113 = por %p111, %p112
    %s115 = sadd.s32 %s114, 1
    %p118 = scmp.eq.s32.totalorder %s12, 1
    %p119 = scmp.ne.s32.totalorder %s114, %s116
    %p120 = scmp.eq.s32.totalorder %s12, 0
    %p121 = por %p119, %p120
    %p122 = scmp.ne.s32.totalorder %s114, %s116
    %p123 = scmp.eq.s32.totalorder %s17, 1
    %p124 = por %p122, %p123
    %p125 = scmp.ne.s32.totalorder %s116, %s117
    %p126 = scmp.eq.s32.totalorder %s17, 0
    %p127 = por %p125, %p126
    %p128 = scmp.ne.s32.totalorder %s116, %s117
    %p129 = scmp.eq.s32.totalorder %s18, 1
    %p130 = por %p128, %p129
    %p132 = scmp.ne.s32.totalorder %s117, %s131
    %p133 = scmp.eq.s32.totalorder %s18, 0
    %p134 = por %p132, %p133
    %s136 = sadd.s32 %s135, 1
    %p139 = scmp.eq.s32.totalorder %s12, 1
    %p140 = scmp.ne.s32.totalorder %s135, %s137
    %p141 = scmp.eq.s32.totalorder %s12, 0
    %p142 = por %p140, %p141
    %p143 = scmp.ne.s32.totalorder %s135, %s137
    %p144 = scmp.eq.s32.totalorder %s17, 1
    %p145 = por %p143, %p144
    %p146 = scmp.ne.s32.totalorder %s137, %s138
    %p147 = scmp.eq.s32.totalorder %s17, 0
    %p148 = por %p146, %p147
    %p149 = scmp.ne.s32.totalorder %s137, %s138
    %p150 = scmp.eq.s32.totalorder %s18, 1
    %p151 = por %p149, %p150
    %p153 = scmp.ne.s32.totalorder %s138, %s152
    %p154 = scmp.eq.s32.totalorder %s18, 0
    %p155 = por %p153, %p154
    %s156 = ssub.s32 %s12, %s19
    %p157 = scmp.eq.s32.totalorder %s156, 0
    %s159 = sadd.s32 %s158, 1
    %s160 = scalar_select %p157, %s158, %s159
    %p163 = pneg %p157
    %p164 = scmp.eq.s32.totalorder %s12, 1
    %p165 = por %p163, %p164
    %p166 = scmp.ne.s32.totalorder %s158, %s161
    %p167 = scmp.eq.s32.totalorder %s12, 0
    %p168 = por %p166, %p167
    %p169 = scmp.ne.s32.totalorder %s158, %s161
    %p170 = scmp.eq.s32.totalorder %s17, 1
    %p171 = por %p169, %p170
    %p172 = scmp.ne.s32.totalorder %s161, %s162
    %p173 = scmp.eq.s32.totalorder %s17, 0
    %p174 = por %p172, %p173
    %p175 = scmp.ne.s32.totalorder %s161, %s162
    %p176 = scmp.eq.s32.totalorder %s18, 1
    %p177 = por %p175, %p176
    %p179 = scmp.ne.s32.totalorder %s162, %s178
    %p180 = scmp.eq.s32.totalorder %s18, 0
    %p181 = por %p179, %p180
    %p182 = scmp.le.s32.totalorder 1, %s12
    %p183 = scmp.lt.s32.totalorder %s12, 3
    %p184 = pnand %p182, %p183
    %p185 = pneg %p184
    // Predicated region
    $region9: #{_lambda_.12} parent=5 // pred_check
      _
    $region10: #{_lambda_.12} parent=5 // pred_check_branch
      %187 = sbr.rel (%p184) target = $region12
    $region11: #{_lambda_.12} parent=5 // pred_region
      %s188 = ssub.s32 %s12, 1
      // Predicated region
      $region13: #{_lambda_.12} parent=11 // pred_check
        %p189 = pneg %p85
      $region14: #{_lambda_.12} parent=11 // pred_check_branch
        %191 = sbr.rel (%p189) target = $region16
      $region15: #{_lambda_.12} parent=11 // pred_region
        _
      $region16: #{_lambda_.12} parent=11 // pred_fallthru
        _
      // Predicated region
      $region17: #{_lambda_.12} parent=11 // pred_check
        %p192 = pneg %p106
      $region18: #{_lambda_.12} parent=11 // pred_check_branch
        %194 = sbr.rel (%p192) target = $region20
      $region19: #{_lambda_.12} parent=11 // pred_region
        _
      $region20: #{_lambda_.12} parent=11 // pred_fallthru
        _
      // Predicated region
      $region21: #{_lambda_.12} parent=11 // pred_check
        %p195 = pneg %p127
      $region22: #{_lambda_.12} parent=11 // pred_check_branch
        %197 = sbr.rel (%p195) target = $region24
      $region23: #{_lambda_.12} parent=11 // pred_region
        _
      $region24: #{_lambda_.12} parent=11 // pred_fallthru
        _
      // Predicated region
      $region25: #{_lambda_.12} parent=11 // pred_check
        %p198 = pneg %p148
      $region26: #{_lambda_.12} parent=11 // pred_check_branch
        %200 = sbr.rel (%p198) target = $region28
      $region27: #{_lambda_.12} parent=11 // pred_region
        _
      $region28: #{_lambda_.12} parent=11 // pred_fallthru
        _
    $region12: #{_lambda_.12} parent=5 // pred_fallthru
      _
    %p201 = scmp.lt.s32.totalorder %s12, 2
    // Predicated region
    $region29: #{_lambda_.12} parent=5 // pred_check
      %p202 = pneg %p201
    $region30: #{_lambda_.12} parent=5 // pred_check_branch
      %204 = sbr.rel (%p202) target = $region32
    $region31: #{_lambda_.12} parent=5 // pred_region
      // Predicated region
      $region33: #{_lambda_.12} parent=31 // pred_check
        %p205 = pneg %p32
      $region34: #{_lambda_.12} parent=31 // pred_check_branch
        %207 = sbr.rel (%p205) target = $region36
      $region35: #{_lambda_.12} parent=31 // pred_region
        %p208 = scmp.lt.s32.totalorder %s12, 1
        %s209 = scalar_select %p208, %s12, 1
        %s210 = smul.addr %s209, 4
        %s211 = scalar_lea.vmem %s0, %s210
      $region36: #{_lambda_.12} parent=31 // pred_fallthru
        _
      // Predicated region
      $region37: #{_lambda_.12} parent=31 // pred_check
        %p212 = pneg %p58
      $region38: #{_lambda_.12} parent=31 // pred_check_branch
        %214 = sbr.rel (%p212) target = $region40
      $region39: #{_lambda_.12} parent=31 // pred_region
        %p215 = scmp.lt.s32.totalorder %s12, 1
        %s216 = scalar_select %p215, %s12, 1
        %s217 = scalar_lea.vmem %s1, %s216
      $region40: #{_lambda_.12} parent=31 // pred_fallthru
        _
    $region32: #{_lambda_.12} parent=5 // pred_fallthru
      _
    %p218 = scmp.le.s32.totalorder 1, %s12
    %p219 = scmp.lt.s32.totalorder %s12, 3
    %p220 = pnand %p218, %p219
    %p221 = pneg %p220
    // Predicated region
    $region41: #{_lambda_.12} parent=5 // pred_check
      _
    $region42: #{_lambda_.12} parent=5 // pred_check_branch
      %223 = sbr.rel (%p220) target = $region44
    $region43: #{_lambda_.12} parent=5 // pred_region
      %s224 = ssub.s32 %s12, 1
      %p225 = scmp.lt.s32.totalorder %s17, 1
      %s226 = scalar_select %p225, %s17, 1
      %s227 = smul.addr %s226, 4
      %s228 = scalar_lea.vmem %s0, %s227
      %p229 = pneg %p38
      %p230 = pneg %p35
      %p231 = scmp.lt.s32.totalorder %s17, 1
      %s232 = scalar_select %p231, %s17, 1
      %s233 = scalar_lea.vmem %s1, %s232
      %p234 = pneg %p64
      %p235 = pneg %p61
      %p236 = pneg %p85
      %p237 = pneg %p82
      %p238 = pneg %p106
      %p239 = pneg %p103
      %p240 = pneg %p127
      %p241 = pneg %p124
      %p242 = pneg %p148
      %p243 = pneg %p145
      %p244 = pneg %p174
      %p245 = pneg %p171
      %p246 = scmp.lt.s32.totalorder %s17, 1
      %s247 = scalar_select %p246, %s17, 1
      %s248 = smul.addr %s247, 4
      %s249 = scalar_lea.vmem %s6, %s248
      %p250 = scmp.lt.s32.totalorder %s17, 1
      %s251 = scalar_select %p250, %s17, 1
      %s252 = smul.addr %s251, 4
      %s253 = scalar_lea.vmem %s0, %s252
      %p254 = scmp.lt.s32.totalorder %s17, 1
      %s255 = scalar_select %p254, %s17, 1
      %s256 = scalar_lea.vmem %s1, %s255
      %p257 = scmp.lt.s32.totalorder %s17, 1
      %s258 = scalar_select %p257, %s17, 1
      %s259 = smul.addr %s258, 4
      %s260 = scalar_lea.vmem %s6, %s259
      %v261 = vld [vmem:[%s253] sm:$0xf]
      %v262 = vld [vmem:[%s256] sm:$0x1]
      %vm263 = vcmask 125952
      %v264 = vsel %vm263, %v261, 0.0
      %265 = vadd.xlane.f32.xlu0 %v264
      %v266 = vpop.xlane.xlu0 %265
      %v267 = vrcp.pop 16.0
      %v268 = vmul.f32 %v266, %v267
      %v269 = vsub.f32 %v261, %v268
      %v270 = vmul.f32 %v269, %v269
      %v271 = vsel %vm263, %v270, 0.0
      %272 = vadd.xlane.f32.xlu0 %v271
      %v273 = vpop.xlane.xlu0 %272
      %v274 = vmul.f32 %v273, %v267
      %v275 = vld [vmem:[%s2] sm:$0xf]
      %v277 = vlaneseq
      %v278 = vshrl.u32 %v277, 7
      %v279 = vsub.s32 0, %v278
      %v280 = vrot.slane %v262, %v279
      %v282 = vmul.f32 %v275, %v280
      %v283 = vsel %vm263, %v282, 0.0
      %284 = vadd.xlane.f32.xlu0 %v283
      %v285 = vpop.xlane.xlu0 %284
      %v286 = vadd.f32 %v285, 1.0
      %v287 = vld [vmem:[%s3] sm:$0xf]
      %v288 = vadd.f32 %v286, %v287
      %v289 = vld [vmem:[%s4] sm:$0xf]
      %v290 = vmul.f32 %v289, %v280
      %v291 = vsel %vm263, %v290, 0.0
      %292 = vadd.xlane.f32.xlu0 %v291
      %v293 = vpop.xlane.xlu0 %292
      %v294 = vld [vmem:[%s5] sm:$0xf]
      %v295 = vadd.f32 %v293, %v294
      %297 = vset.pattern.permute.xlu0 0
      %298 = vperm.xlu0 %297, %v288
      %v299 = vpop.permute.xlu0 %298
      %v301 = vmul.f32 %v299, %v269
      %v302 = vadd.f32 %v274, 1e-05
      %v303 = vrsqrt.pop %v302
      %v304 = vmul.f32 %v301, %v303
      %306 = vset.pattern.permute.xlu0 0
      %307 = vperm.xlu0 %306, %v295
      %v308 = vpop.permute.xlu0 %307
      %v310 = vadd.f32 %v304, %v308
      %v311 = vmax.f32 %v310, 0.0
      %312 = vst.msk [vmem:[%s260] sm:$0xf] %vm263, %v311
      %p313 = scmp.lt.s32.totalorder %s17, 1
      %s314 = scalar_select %p313, %s17, 1
      %s315 = smul.addr %s314, 4
      %s316 = scalar_lea.vmem %s6, %s315
      // Predicated region
      $region45: #{_lambda_.12} parent=43 // pred_check
        %p317 = pneg %p171
      $region46: #{_lambda_.12} parent=43 // pred_check_branch
        %319 = sbr.rel (%p317) target = $region48
      $region47: #{_lambda_.12} parent=43 // pred_region
        _
      $region48: #{_lambda_.12} parent=43 // pred_fallthru
        _
    $region44: #{_lambda_.12} parent=5 // pred_fallthru
      _
    %p320 = scmp.le.s32.totalorder 2, %s12
    // Predicated region
    $region49: #{_lambda_.12} parent=5 // pred_check
      %p321 = pneg %p320
    $region50: #{_lambda_.12} parent=5 // pred_check_branch
      %323 = sbr.rel (%p321) target = $region52
    $region51: #{_lambda_.12} parent=5 // pred_region
      %s324 = ssub.s32 %s12, 2
      // Predicated region
      $region53: #{_lambda_.12} parent=51 // pred_check
        %p325 = pneg %p177
      $region54: #{_lambda_.12} parent=51 // pred_check_branch
        %327 = sbr.rel (%p325) target = $region56
      $region55: #{_lambda_.12} parent=51 // pred_region
        %p328 = scmp.lt.s32.totalorder %s18, 1
        %s329 = scalar_select %p328, %s18, 1
        %s330 = smul.addr %s329, 4
        %s331 = scalar_lea.vmem %s6, %s330
      $region56: #{_lambda_.12} parent=51 // pred_fallthru
        _
    $region52: #{_lambda_.12} parent=5 // pred_fallthru
      _
  $region6: #{_lambda_.12} parent=0 // loop_footer
    %s16 = sadd.s32 1, %s12
  $region7: #{_lambda_.12} parent=0 // loop_footer_branch
    %11 = sbr.rel target = $region3
  $region8: #{_lambda_.12} parent=0 // loop_exit
    _

// kernel: _lambda_.13
$region0: #{_lambda_.13}
  #allocation0 [shape = 'u32[]', space=smem, size = 0x4, offset = 0x4, fixed_abs, tag = 'smem constant byte address 0x4 - core index']
  #allocation1 [shape = 'u32[144,128]{1,0:T(1,128)}', space=vmem, size = 0x12000, scoped, tag = 'internal scratch']
  %s0 = inlined_call_operand.vmem [shape: f32[2,12,16], index: 0, kind: input, shape index: {}]
  %s1 = inlined_call_operand.vmem [shape: f32[8,12], index: 1, kind: input, shape index: {}]
  %s2 = inlined_call_operand.vmem [shape: f32[2,1,16], index: 2, kind: input, shape index: {}]
  %s3 = inlined_call_operand.vmem [shape: f32[8,16], index: 3, kind: input, shape index: {}]
  %s4 = inlined_call_operand.vmem [shape: f32[8,1], index: 4, kind: input, shape index: {}, may-alias: {4,6}]
  %s5 = inlined_call_operand.vmem [shape: f32[8,16], index: 5, kind: input, shape index: {}]
  %s6 = inlined_call_operand.vmem [shape: f32[8,1], index: 6, kind: input, shape index: {}, may-alias: {4,6}]
  %s7 = inlined_call_operand.vmem [shape: f32[2,8,16], index: 7, kind: input, shape index: {}]
  %s8 = inlined_call_operand.hbm [shape: f32[2,8,16], index: 8, kind: output, shape index: {}]
  %s9 = sld [smem:[#allocation0]]
  $region65: #{_lambda_.13} parent=0
    _
  %s11 = ssub.s32 1, %s9
  %s12 = scalar_select 0, %s11, %s9
  $region1: #{_lambda_.13} parent=0
    #allocation2 [shape = 'u8[8192]{0}', space=vmem, size = 0x2000, scoped, tag = 'output window, operand 0']
    #allocation3 [shape = 's32[2]{0}', space=sflag, size = 0x8, scoped, tag = 'scoped memory for _lambda_.13']
    %13 = vsyncpa [#allocation3], 0
    %s14 = scalar_lea.sflag [#allocation3], 1
    %15 = vsyncpa %s14, 0
    loop: start=0, step=1, limit=4
    $region2: #{_lambda_.13} parent=1 // loop_pre_header
      _
    $region3: #{_lambda_.13} parent=1 // loop_header
      %s17 = sphi 0, %s21
      %p18 = scmp.ge.s32.totalorder %s17, 4
      %s27 = sphi 0, %s29
      %s30 = sphi 0, %s27
      %s31 = sphi 0, %s30
      %s47 = sphi 0, %s31
      %s51 = sphi 0, %s51
      %s53 = sphi 0, %s51
      %s54 = sphi 0, %s53
      %s68 = sphi 0, %s54
      %s74 = sphi 0, %s76
      %s77 = sphi 0, %s74
      %s78 = sphi 0, %s77
      %s94 = sphi 0, %s78
      %s98 = sphi 0, %s98
      %s100 = sphi 0, %s98
      %s101 = sphi 0, %s100
      %s115 = sphi 0, %s101
      %s119 = sphi 0, %s119
      %s121 = sphi 0, %s119
      %s122 = sphi 0, %s121
      %s136 = sphi 0, %s122
      %s140 = sphi 0, %s140
      %s142 = sphi 0, %s140
      %s143 = sphi 0, %s142
      %s157 = sphi 0, %s143
      %s161 = sphi 0, %s161
      %s163 = sphi 0, %s161
      %s164 = sphi 0, %s163
      %s178 = sphi 0, %s164
      %s184 = sphi 0, %s186
      %s187 = sphi 0, %s184
      %s188 = sphi 0, %s187
      %s204 = sphi 0, %s188
      %s210 = sphi 0, %s212
      %s213 = sphi 0, %s210
      %s214 = sphi 0, %s213
      %s230 = sphi 0, %s214
    $region4: #{_lambda_.13} parent=1 // loop_header_branch
      %20 = sbr.rel (%p18) target = $region8
    $region5: #{_lambda_.13} parent=1 // loop_body
      %s22 = ssub.s32 %s17, 1
      %s23 = ssub.s32 %s17, 2
      %s24 = sadd.s32 %s17, 1
      %s25 = ssub.s32 %s17, %s24
      %p26 = scmp.eq.s32.totalorder %s25, 0
      %s28 = sadd.s32 %s27, 1
      %s29 = scalar_select %p26, %s27, %s28
      %p32 = pneg %p26
      %p33 = scmp.eq.s32.totalorder %s17, 1
      %p34 = por %p32, %p33
      %p35 = scmp.ne.s32.totalorder %s27, %s30
      %p36 = scmp.eq.s32.totalorder %s17, 0
      %p37 = por %p35, %p36
      %p38 = scmp.ne.s32.totalorder %s27, %s30
      %p39 = scmp.eq.s32.totalorder %s22, 1
      %p40 = por %p38, %p39
      %p41 = scmp.ne.s32.totalorder %s30, %s31
      %p42 = scmp.eq.s32.totalorder %s22, 0
      %p43 = por %p41, %p42
      %p44 = scmp.ne.s32.totalorder %s30, %s31
      %p45 = scmp.eq.s32.totalorder %s23, 1
      %p46 = por %p44, %p45
      %p48 = scmp.ne.s32.totalorder %s31, %s47
      %p49 = scmp.eq.s32.totalorder %s23, 0
      %p50 = por %p48, %p49
      %s52 = sadd.s32 %s51, 1
      %p55 = scmp.eq.s32.totalorder %s17, 1
      %p56 = scmp.ne.s32.totalorder %s51, %s53
      %p57 = scmp.eq.s32.totalorder %s17, 0
      %p58 = por %p56, %p57
      %p59 = scmp.ne.s32.totalorder %s51, %s53
      %p60 = scmp.eq.s32.totalorder %s22, 1
      %p61 = por %p59, %p60
      %p62 = scmp.ne.s32.totalorder %s53, %s54
      %p63 = scmp.eq.s32.totalorder %s22, 0
      %p64 = por %p62, %p63
      %p65 = scmp.ne.s32.totalorder %s53, %s54
      %p66 = scmp.eq.s32.totalorder %s23, 1
      %p67 = por %p65, %p66
      %p69 = scmp.ne.s32.totalorder %s54, %s68
      %p70 = scmp.eq.s32.totalorder %s23, 0
      %p71 = por %p69, %p70
      %s72 = ssub.s32 %s17, %s24
      %p73 = scmp.eq.s32.totalorder %s72, 0
      %s75 = sadd.s32 %s74, 1
      %s76 = scalar_select %p73, %s74, %s75
      %p79 = pneg %p73
      %p80 = scmp.eq.s32.totalorder %s17, 1
      %p81 = por %p79, %p80
      %p82 = scmp.ne.s32.totalorder %s74, %s77
      %p83 = scmp.eq.s32.totalorder %s17, 0
      %p84 = por %p82, %p83
      %p85 = scmp.ne.s32.totalorder %s74, %s77
      %p86 = scmp.eq.s32.totalorder %s22, 1
      %p87 = por %p85, %p86
      %p88 = scmp.ne.s32.totalorder %s77, %s78
      %p89 = scmp.eq.s32.totalorder %s22, 0
      %p90 = por %p88, %p89
      %p91 = scmp.ne.s32.totalorder %s77, %s78
      %p92 = scmp.eq.s32.totalorder %s23, 1
      %p93 = por %p91, %p92
      %p95 = scmp.ne.s32.totalorder %s78, %s94
      %p96 = scmp.eq.s32.totalorder %s23, 0
      %p97 = por %p95, %p96
      %s99 = sadd.s32 %s98, 1
      %p102 = scmp.eq.s32.totalorder %s17, 1
      %p103 = scmp.ne.s32.totalorder %s98, %s100
      %p104 = scmp.eq.s32.totalorder %s17, 0
      %p105 = por %p103, %p104
      %p106 = scmp.ne.s32.totalorder %s98, %s100
      %p107 = scmp.eq.s32.totalorder %s22, 1
      %p108 = por %p106, %p107
      %p109 = scmp.ne.s32.totalorder %s100, %s101
      %p110 = scmp.eq.s32.totalorder %s22, 0
      %p111 = por %p109, %p110
      %p112 = scmp.ne.s32.totalorder %s100, %s101
      %p113 = scmp.eq.s32.totalorder %s23, 1
      %p114 = por %p112, %p113
      %p116 = scmp.ne.s32.totalorder %s101, %s115
      %p117 = scmp.eq.s32.totalorder %s23, 0
      %p118 = por %p116, %p117
      %s120 = sadd.s32 %s119, 1
      %p123 = scmp.eq.s32.totalorder %s17, 1
      %p124 = scmp.ne.s32.totalorder %s119, %s121
      %p125 = scmp.eq.s32.totalorder %s17, 0
      %p126 = por %p124, %p125
      %p127 = scmp.ne.s32.totalorder %s119, %s121
      %p128 = scmp.eq.s32.totalorder %s22, 1
      %p129 = por %p127, %p128
      %p130 = scmp.ne.s32.totalorder %s121, %s122
      %p131 = scmp.eq.s32.totalorder %s22, 0
      %p132 = por %p130, %p131
      %p133 = scmp.ne.s32.totalorder %s121, %s122
      %p134 = scmp.eq.s32.totalorder %s23, 1
      %p135 = por %p133, %p134
      %p137 = scmp.ne.s32.totalorder %s122, %s136
      %p138 = scmp.eq.s32.totalorder %s23, 0
      %p139 = por %p137, %p138
      %s141 = sadd.s32 %s140, 1
      %p144 = scmp.eq.s32.totalorder %s17, 1
      %p145 = scmp.ne.s32.totalorder %s140, %s142
      %p146 = scmp.eq.s32.totalorder %s17, 0
      %p147 = por %p145, %p146
      %p148 = scmp.ne.s32.totalorder %s140, %s142
      %p149 = scmp.eq.s32.totalorder %s22, 1
      %p150 = por %p148, %p149
      %p151 = scmp.ne.s32.totalorder %s142, %s143
      %p152 = scmp.eq.s32.totalorder %s22, 0
      %p153 = por %p151, %p152
      %p154 = scmp.ne.s32.totalorder %s142, %s143
      %p155 = scmp.eq.s32.totalorder %s23, 1
      %p156 = por %p154, %p155
      %p158 = scmp.ne.s32.totalorder %s143, %s157
      %p159 = scmp.eq.s32.totalorder %s23, 0
      %p160 = por %p158, %p159
      %s162 = sadd.s32 %s161, 1
      %p165 = scmp.eq.s32.totalorder %s17, 1
      %p166 = scmp.ne.s32.totalorder %s161, %s163
      %p167 = scmp.eq.s32.totalorder %s17, 0
      %p168 = por %p166, %p167
      %p169 = scmp.ne.s32.totalorder %s161, %s163
      %p170 = scmp.eq.s32.totalorder %s22, 1
      %p171 = por %p169, %p170
      %p172 = scmp.ne.s32.totalorder %s163, %s164
      %p173 = scmp.eq.s32.totalorder %s22, 0
      %p174 = por %p172, %p173
      %p175 = scmp.ne.s32.totalorder %s163, %s164
      %p176 = scmp.eq.s32.totalorder %s23, 1
      %p177 = por %p175, %p176
      %p179 = scmp.ne.s32.totalorder %s164, %s178
      %p180 = scmp.eq.s32.totalorder %s23, 0
      %p181 = por %p179, %p180
      %s182 = ssub.s32 %s17, %s24
      %p183 = scmp.eq.s32.totalorder %s182, 0
      %s185 = sadd.s32 %s184, 1
      %s186 = scalar_select %p183, %s184, %s185
      %p189 = pneg %p183
      %p190 = scmp.eq.s32.totalorder %s17, 1
      %p191 = por %p189, %p190
      %p192 = scmp.ne.s32.totalorder %s184, %s187
      %p193 = scmp.eq.s32.totalorder %s17, 0
      %p194 = por %p192, %p193
      %p195 = scmp.ne.s32.totalorder %s184, %s187
      %p196 = scmp.eq.s32.totalorder %s22, 1
      %p197 = por %p195, %p196
      %p198 = scmp.ne.s32.totalorder %s187, %s188
      %p199 = scmp.eq.s32.totalorder %s22, 0
      %p200 = por %p198, %p199
      %p201 = scmp.ne.s32.totalorder %s187, %s188
      %p202 = scmp.eq.s32.totalorder %s23, 1
      %p203 = por %p201, %p202
      %p205 = scmp.ne.s32.totalorder %s188, %s204
      %p206 = scmp.eq.s32.totalorder %s23, 0
      %p207 = por %p205, %p206
      %s208 = ssub.s32 %s17, %s24
      %p209 = scmp.eq.s32.totalorder %s208, 0
      %s211 = sadd.s32 %s210, 1
      %s212 = scalar_select %p209, %s210, %s211
      %p215 = pneg %p209
      %p216 = scmp.eq.s32.totalorder %s17, 1
      %p217 = por %p215, %p216
      %p218 = scmp.ne.s32.totalorder %s210, %s213
      %p219 = scmp.eq.s32.totalorder %s17, 0
      %p220 = por %p218, %p219
      %p221 = scmp.ne.s32.totalorder %s210, %s213
      %p222 = scmp.eq.s32.totalorder %s22, 1
      %p223 = por %p221, %p222
      %p224 = scmp.ne.s32.totalorder %s213, %s214
      %p225 = scmp.eq.s32.totalorder %s22, 0
      %p226 = por %p224, %p225
      %p227 = scmp.ne.s32.totalorder %s213, %s214
      %p228 = scmp.eq.s32.totalorder %s23, 1
      %p229 = por %p227, %p228
      %p231 = scmp.ne.s32.totalorder %s214, %s230
      %p232 = scmp.eq.s32.totalorder %s23, 0
      %p233 = por %p231, %p232
      %p234 = scmp.le.s32.totalorder 1, %s17
      %p235 = scmp.lt.s32.totalorder %s17, 3
      %p236 = pnand %p234, %p235
      %p237 = pneg %p236
      // Predicated region
      $region9: #{_lambda_.13} parent=5 // pred_check
        _
      $region10: #{_lambda_.13} parent=5 // pred_check_branch
        %239 = sbr.rel (%p236) target = $region12
      $region11: #{_lambda_.13} parent=5 // pred_region
        %s240 = ssub.s32 %s17, 1
        // Predicated region
        $region13: #{_lambda_.13} parent=11 // pred_check
          %p241 = pneg %p64
        $region14: #{_lambda_.13} parent=11 // pred_check_branch
          %243 = sbr.rel (%p241) target = $region16
        $region15: #{_lambda_.13} parent=11 // pred_region
          _
        $region16: #{_lambda_.13} parent=11 // pred_fallthru
          _
        // Predicated region
        $region17: #{_lambda_.13} parent=11 // pred_check
          %p244 = pneg %p111
        $region18: #{_lambda_.13} parent=11 // pred_check_branch
          %246 = sbr.rel (%p244) target = $region20
        $region19: #{_lambda_.13} parent=11 // pred_region
          _
        $region20: #{_lambda_.13} parent=11 // pred_fallthru
          _
        // Predicated region
        $region21: #{_lambda_.13} parent=11 // pred_check
          %p247 = pneg %p132
        $region22: #{_lambda_.13} parent=11 // pred_check_branch
          %249 = sbr.rel (%p247) target = $region24
        $region23: #{_lambda_.13} parent=11 // pred_region
          _
        $region24: #{_lambda_.13} parent=11 // pred_fallthru
          _
        // Predicated region
        $region25: #{_lambda_.13} parent=11 // pred_check
          %p250 = pneg %p153
        $region26: #{_lambda_.13} parent=11 // pred_check_branch
          %252 = sbr.rel (%p250) target = $region28
        $region27: #{_lambda_.13} parent=11 // pred_region
          _
        $region28: #{_lambda_.13} parent=11 // pred_fallthru
          _
        // Predicated region
        $region29: #{_lambda_.13} parent=11 // pred_check
          %p253 = pneg %p174
        $region30: #{_lambda_.13} parent=11 // pred_check_branch
          %255 = sbr.rel (%p253) target = $region32
        $region31: #{_lambda_.13} parent=11 // pred_region
          _
        $region32: #{_lambda_.13} parent=11 // pred_fallthru
          _
      $region12: #{_lambda_.13} parent=5 // pred_fallthru
        _
      %p256 = scmp.lt.s32.totalorder %s17, 2
      // Predicated region
      $region33: #{_lambda_.13} parent=5 // pred_check
        %p257 = pneg %p256
      $region34: #{_lambda_.13} parent=5 // pred_check_branch
        %259 = sbr.rel (%p257) target = $region36
      $region35: #{_lambda_.13} parent=5 // pred_region
        // Predicated region
        $region37: #{_lambda_.13} parent=35 // pred_check
          %p260 = pneg %p37
        $region38: #{_lambda_.13} parent=35 // pred_check_branch
          %262 = sbr.rel (%p260) target = $region40
        $region39: #{_lambda_.13} parent=35 // pred_region
          %p263 = scmp.lt.s32.totalorder %s17, 1
          %s264 = scalar_select %p263, %s17, 1
          %s265 = smul.addr %s264, 2
          %s266 = smul.addr %s265, 8
          %s267 = scalar_lea.vmem %s0, %s266
        $region40: #{_lambda_.13} parent=35 // pred_fallthru
          _
        // Predicated region
        $region41: #{_lambda_.13} parent=35 // pred_check
          %p268 = pneg %p84
        $region42: #{_lambda_.13} parent=35 // pred_check_branch
          %270 = sbr.rel (%p268) target = $region44
        $region43: #{_lambda_.13} parent=35 // pred_region
          %p271 = scmp.lt.s32.totalorder %s17, 1
          %s272 = scalar_select %p271, %s17, 1
          %s273 = scalar_lea.vmem %s2, %s272
        $region44: #{_lambda_.13} parent=35 // pred_fallthru
          _
        // Predicated region
        $region45: #{_lambda_.13} parent=35 // pred_check
          %p274 = pneg %p194
        $region46: #{_lambda_.13} parent=35 // pred_check_branch
          %276 = sbr.rel (%p274) target = $region48
        $region47: #{_lambda_.13} parent=35 // pred_region
          %p277 = scmp.lt.s32.totalorder %s17, 1
          %s278 = scalar_select %p277, %s17, 1
          %s279 = smul.addr %s278, 8
          %s280 = scalar_lea.vmem %s7, %s279
        $region48: #{_lambda_.13} parent=35 // pred_fallthru
          _
      $region36: #{_lambda_.13} parent=5 // pred_fallthru
        _
      %p281 = scmp.le.s32.totalorder 1, %s17
      %p282 = scmp.lt.s32.totalorder %s17, 3
      %p283 = pnand %p281, %p282
      %p284 = pneg %p283
      // Predicated region
      $region49: #{_lambda_.13} parent=5 // pred_check
        _
      $region50: #{_lambda_.13} parent=5 // pred_check_branch
        %286 = sbr.rel (%p283) target = $region52
      $region51: #{_lambda_.13} parent=5 // pred_region
        %s287 = ssub.s32 %s17, 1
        %p288 = scmp.lt.s32.totalorder %s22, 1
        %s289 = scalar_select %p288, %s22, 1
        %s290 = smul.addr %s289, 2
        %s291 = smul.addr %s290, 8
        %s292 = scalar_lea.vmem %s0, %s291
        %p293 = pneg %p43
        %p294 = pneg %p40
        %p295 = pneg %p64
        %p296 = pneg %p61
        %p297 = scmp.lt.s32.totalorder %s22, 1
        %s298 = scalar_select %p297, %s22, 1
        %s299 = scalar_lea.vmem %s2, %s298
        %p300 = pneg %p90
        %p301 = pneg %p87
        %p302 = pneg %p111
        %p303 = pneg %p108
        %p304 = pneg %p132
        %p305 = pneg %p129
        %p306 = pneg %p153
        %p307 = pneg %p150
        %p308 = pneg %p174
        %p309 = pneg %p171
        %p310 = scmp.lt.s32.totalorder %s22, 1
        %s311 = scalar_select %p310, %s22, 1
        %s312 = smul.addr %s311, 8
        %s313 = scalar_lea.vmem %s7, %s312
        %p314 = pneg %p200
        %p315 = pneg %p197
        %p316 = pneg %p226
        %p317 = pneg %p223
        %s318 = sand.u32 %s213, 1
        %s319 = scalar_lea.sflag [#allocation3], %s318
        %s320 = sand.u32 %s213, 1
        %s321 = smul.addr %s320, 8
        %s322 = scalar_lea.vmem [#allocation2], %s321
        %p323 = scmp.lt.s32.totalorder %s22, 1
        %s324 = scalar_select %p323, %s22, 1
        %s325 = smul.addr %s324, 2
        %s326 = smul.addr %s325, 8
        %s327 = scalar_lea.vmem %s0, %s326
        %p328 = scmp.lt.s32.totalorder %s22, 1
        %s329 = scalar_select %p328, %s22, 1
        %s330 = scalar_lea.vmem %s2, %s329
        %p331 = scmp.lt.s32.totalorder %s22, 1
        %s332 = scalar_select %p331, %s22, 1
        %s333 = smul.addr %s332, 8
        %s334 = scalar_lea.vmem %s7, %s333
        %v335 = vld [vmem:[%s1] sm:$0xff]
        %v336 = vld [vmem:[%s327] sm:$0xff]
        %v337 = vld [vmem:[%s327 + $0x8] sm:$0xf]
        %vm338 = vcmask 97280
        %v340 = vsel %vm338, %v335, 0
        %vm342 = vcmask 1043456
        %v344 = vsel %vm342, %v337, 0
        %346 = vmatprep.subr.mxu0 0.0
        %347 = vmatpush1.msra.mxu0 %v336
        %348 = vmatprep.subr.mxu0 0.0
        %349 = vmatpush1.msra.mxu0 %v344
        %350 = vmatprep.subr.mxu0 0.0
        %351 = vmatpush1.msra.mxu0 0.0
        %352 = vmatprep.subr.mxu0 0.0
        %353 = vmatpush1.msra.mxu0 0.0
        %354 = vmatprep.subr.mxu0 0.0
        %355 = vmatpush1.msra.mxu0 0.0
        %356 = vmatprep.subr.mxu0 0.0
        %357 = vmatpush1.msra.mxu0 0.0
        %358 = vmatprep.subr.mxu0 0.0
        %359 = vmatpush1.msra.mxu0 0.0
        %360 = vmatprep.subr.mxu0 0.0
        %361 = vmatpush1.msra.mxu0 0.0
        %362 = vmatprep.subr.mxu0 0.0
        %363 = vmatpush1.msra.mxu0 0.0
        %364 = vmatprep.subr.mxu0 0.0
        %365 = vmatpush1.msra.mxu0 0.0
        %366 = vmatprep.subr.mxu0 0.0
        %367 = vmatpush1.msra.mxu0 0.0
        %368 = vmatprep.subr.mxu0 0.0
        %369 = vmatpush1.msra.mxu0 0.0
        %370 = vmatprep.subr.mxu0 0.0
        %371 = vmatpush1.msra.mxu0 0.0
        %372 = vmatprep.subr.mxu0 0.0
        %373 = vmatpush1.msra.mxu0 0.0
        %374 = vmatprep.subr.mxu0 0.0
        %375 = vmatpush1.msra.mxu0 0.0
        %376 = vmatprep.subr.mxu0 0.0
        %377 = vmatpush1.msra.mxu0 0.0
        %378 = vmatprep.subr.mxu0 0.0
        %379 = vmatpush1.msra.mxu0 0.0
        %380 = vmatprep.subr.mxu0 0.0
        %381 = vmatpush1.msra.mxu0 0.0
        %382 = vmatprep.subr.mxu0 0.0
        %383 = vmatpush1.msra.mxu0 0.0
        %384 = vmatprep.subr.mxu0 0.0
        %385 = vmatpush1.msra.mxu0 0.0
        %386 = vmatprep.subr.mxu0 0.0
        %387 = vmatpush1.msra.mxu0 0.0
        %388 = vmatprep.subr.mxu0 0.0
        %389 = vmatpush1.msra.mxu0 0.0
        %390 = vmatprep.subr.mxu0 0.0
        %391 = vmatpush1.msra.mxu0 0.0
        %392 = vmatprep.subr.mxu0 0.0
        %393 = vmatpush1.msra.mxu0 0.0
        %394 = vmatprep.subr.mxu0 0.0
        %395 = vmatpush1.msra.mxu0 0.0
        %396 = vmatprep.subr.mxu0 0.0
        %397 = vmatpush1.msra.mxu0 0.0
        %398 = vmatprep.subr.mxu0 0.0
        %399 = vmatpush1.msra.mxu0 0.0
        %400 = vmatprep.subr.mxu0 0.0
        %401 = vmatpush1.msra.mxu0 0.0
        %402 = vmatprep.subr.mxu0 0.0
        %403 = vmatpush1.msra.mxu0 0.0
        %404 = vmatprep.subr.mxu0 0.0
        %405 = vmatpush1.msra.mxu0 0.0
        %406 = vmatprep.subr.mxu0 0.0
        %407 = vmatpush1.msra.mxu0 0.0
        %408 = vmatprep.subr.mxu0 0.0
        %409 = vmatpush1.msra.mxu0 0.0
        %410 = vmatprep.mubr.f32.mxu0 0.0
        %411 = vmatmul.mubr.f32.gmra.mrb[0].mxu0 %v340
        %v412 = vpop.f32.mrb[0].mxu0
        %v413 = vadd.f32 0.0, %v412
        %v414 = vpop.f32.mrb[0].mxu0
        %415 = vdwg.mxu0
        %v416 = vld [vmem:[%s330] sm:$0x1]
        %vm417 = vcmask 130048
        %v418 = vsel %vm417, %v413, 0.0
        %419 = vadd.xlane.f32.xlu0 %v418
        %v420 = vpop.xlane.xlu0 %419
        %v421 = vrcp.pop 16.0
        %v422 = vmul.f32 %v420, %v421
        %v423 = vsub.f32 %v413, %v422
        %v424 = vmul.f32 %v423, %v423
        %v425 = vsel %vm417, %v424, 0.0
        %426 = vadd.xlane.f32.xlu0 %v425
        %v427 = vpop.xlane.xlu0 %426
        %v428 = vmul.f32 %v427, %v421
        %v429 = vld [vmem:[%s3] sm:$0xff]
        %v431 = vlaneseq
        %v432 = vshrl.u32 %v431, 7
        %v433 = vsub.s32 0, %v432
        %v434 = vrot.slane %v416, %v433
        %v436 = vmul.f32 %v429, %v434
        %v437 = vsel %vm417, %v436, 0.0
        %438 = vadd.xlane.f32.xlu0 %v437
        %v439 = vpop.xlane.xlu0 %438
        %v440 = vadd.f32 %v439, 1.0
        %v441 = vld [vmem:[%s4] sm:$0xff]
        %v442 = vadd.f32 %v440, %v441
        %v443 = vld [vmem:[%s5] sm:$0xff]
        %v444 = vmul.f32 %v443, %v434
        %v445 = vsel %vm417, %v444, 0.0
        %446 = vadd.xlane.f32.xlu0 %v445
        %v447 = vpop.xlane.xlu0 %446
        %v448 = vld [vmem:[%s6] sm:$0xff]
        %v449 = vadd.f32 %v447, %v448
        %451 = vset.pattern.permute.xlu0 0
        %452 = vperm.xlu0 %451, %v442
        %v453 = vpop.permute.xlu0 %452
        %v455 = vmul.f32 %v453, %v423
        %v456 = vadd.f32 %v428, 1e-05
        %v457 = vrsqrt.pop %v456
        %v458 = vmul.f32 %v455, %v457
        %460 = vset.pattern.permute.xlu0 0
        %461 = vperm.xlu0 %460, %v449
        %v462 = vpop.permute.xlu0 %461
        %v464 = vadd.f32 %v458, %v462
        %v465 = vmax.f32 %v464, 0.0
        %v466 = vld [vmem:[%s334] sm:$0xff]
        %v467 = vadd.f32 %v465, %v466
        %468 = vst.msk [vmem:[%s322] sm:$0xff] %vm417, %v467
        %s469 = sand.u32 %s213, 1
        %s470 = scalar_lea.sflag [#allocation3], %s469
        %s471 = sand.u32 %s213, 1
        %s472 = smul.addr %s471, 8
        %s473 = scalar_lea.vmem [#allocation2], %s472
        // Predicated region
        $region53: #{_lambda_.13} parent=51 // pred_check
          %p474 = pneg %p223
        $region54: #{_lambda_.13} parent=51 // pred_check_branch
          %476 = sbr.rel (%p474) target = $region56
        $region55: #{_lambda_.13} parent=51 // pred_region
          %s478 = ssub.s32 128, 128
          %479 = vsyncadd %s470, %s478
          %s480 = smul.addr %s22, 128
          %s481 = scalar_lea.hbm %s8, %s480
          %s483 = sshll.u32 %s473, 4
          %s484 = int_to_ptr.vmem [resolvable:$true] %s483
          %486 = dma.vmem_to_hbm [thread:$0]  %s484, 128, %s481, %s470
        $region56: #{_lambda_.13} parent=51 // pred_fallthru
          _
      $region52: #{_lambda_.13} parent=5 // pred_fallthru
        _
      %p487 = scmp.le.s32.totalorder 2, %s17
      // Predicated region
      $region57: #{_lambda_.13} parent=5 // pred_check
        %p488 = pneg %p487
      $region58: #{_lambda_.13} parent=5 // pred_check_branch
        %490 = sbr.rel (%p488) target = $region60
      $region59: #{_lambda_.13} parent=5 // pred_region
        %s491 = ssub.s32 %s17, 2
        // Predicated region
        $region61: #{_lambda_.13} parent=59 // pred_check
          %p492 = pneg %p229
        $region62: #{_lambda_.13} parent=59 // pred_check_branch
          %494 = sbr.rel (%p492) target = $region64
        $region63: #{_lambda_.13} parent=59 // pred_region
          %s495 = sand.u32 %s214, 1
          %s496 = scalar_lea.sflag [#allocation3], %s495
          %s497 = sand.u32 %s214, 1
          %s498 = smul.addr %s497, 8
          %s499 = scalar_lea.vmem [#allocation2], %s498
          %500 = dma.done %s496, 128
        $region64: #{_lambda_.13} parent=59 // pred_fallthru
          _
      $region60: #{_lambda_.13} parent=5 // pred_fallthru
        _
    $region6: #{_lambda_.13} parent=1 // loop_footer
      %s21 = sadd.s32 1, %s17
    $region7: #{_lambda_.13} parent=1 // loop_footer_branch
      %16 = sbr.rel target = $region3
    $region8: #{_lambda_.13} parent=1 // loop_exit
      _
    %501 = vsyncpa [#allocation3], 1
    %s502 = scalar_lea.sflag [#allocation3], 1
    %503 = vsyncpa %s502, 1

// kernel: _lambda_.8
$region0: #{_lambda_.8}
  #allocation0 [shape = 'u32[]', space=smem, size = 0x4, offset = 0x4, fixed_abs, tag = 'smem constant byte address 0x4 - core index']
  #allocation1 [shape = 'u32[144,128]{1,0:T(1,128)}', space=vmem, size = 0x12000, scoped, tag = 'internal scratch']
  #allocation2 [shape = 'f32[64,36]{1,0:T(8,128)}', space=vmem, size = 0x8000, scoped, tag = 'scratch operand']
  %s0 = inlined_call_operand.vmem [shape: f32[2,2,4,16], index: 0, kind: input, shape index: {}]
  %s1 = inlined_call_operand.vmem [shape: f32[2,2,2,16], index: 1, kind: input, shape index: {}]
  %s2 = inlined_call_operand.vmem [shape: s32[2,2,16], index: 2, kind: input, shape index: {}]
  %s3 = inlined_call_operand.vmem [shape: f32[2,36,4], index: 3, kind: input, shape index: {}]
  %s4 = inlined_call_operand.vmem [shape: f32[2,1,4], index: 4, kind: input, shape index: {}]
  %s5 = inlined_call_operand.vmem [shape: f32[64,9], index: 5, kind: input, shape index: {}]
  %s6 = inlined_call_operand.vmem [shape: f32[2,2,4,16], index: 6, kind: output, shape index: {0}]
  %s7 = inlined_call_operand.vmem [shape: f32[2,1,1], index: 7, kind: output, shape index: {1}]
  %8 = xla_tuple %s6, %s7
  %s9 = sld [smem:[#allocation0]]
  $region65: #{_lambda_.8} parent=0
    _
  %s11 = ssub.s32 1, %s9
  %s12 = scalar_select 0, %s11, %s9
  loop: start=0, step=1, limit=4
  $region2: #{_lambda_.8} parent=0 // loop_pre_header
    _
  $region3: #{_lambda_.8} parent=0 // loop_header
    %s14 = sphi 0, %s18
    %p15 = scmp.ge.s32.totalorder %s14, 4
    %s24 = sphi 0, %s26
    %s27 = sphi 0, %s24
    %s28 = sphi 0, %s27
    %s44 = sphi 0, %s28
    %s50 = sphi 0, %s52
    %s53 = sphi 0, %s50
    %s54 = sphi 0, %s53
    %s70 = sphi 0, %s54
    %s76 = sphi 0, %s78
    %s79 = sphi 0, %s76
    %s80 = sphi 0, %s79
    %s96 = sphi 0, %s80
    %s100 = sphi 0, %s100
    %s102 = sphi 0, %s100
    %s103 = sphi 0, %s102
    %s117 = sphi 0, %s103
    %s121 = sphi 0, %s121
    %s123 = sphi 0, %s121
    %s124 = sphi 0, %s123
    %s138 = sphi 0, %s124
    %s142 = sphi 0, %s142
    %s144 = sphi 0, %s142
    %s145 = sphi 0, %s144
    %s159 = sphi 0, %s145
    %s165 = sphi 0, %s167
    %s168 = sphi 0, %s165
    %s169 = sphi 0, %s168
    %s185 = sphi 0, %s169
    %s191 = sphi 0, %s193
    %s194 = sphi 0, %s191
    %s195 = sphi 0, %s194
    %s211 = sphi 0, %s195
  $region4: #{_lambda_.8} parent=0 // loop_header_branch
    %17 = sbr.rel (%p15) target = $region8
  $region5: #{_lambda_.8} parent=0 // loop_body
    %s19 = ssub.s32 %s14, 1
    %s20 = ssub.s32 %s14, 2
    %s21 = sadd.s32 %s14, 1
    %s22 = ssub.s32 %s14, %s21
    %p23 = scmp.eq.s32.totalorder %s22, 0
    %s25 = sadd.s32 %s24, 1
    %s26 = scalar_select %p23, %s24, %s25
    %p29 = pneg %p23
    %p30 = scmp.eq.s32.totalorder %s14, 1
    %p31 = por %p29, %p30
    %p32 = scmp.ne.s32.totalorder %s24, %s27
    %p33 = scmp.eq.s32.totalorder %s14, 0
    %p34 = por %p32, %p33
    %p35 = scmp.ne.s32.totalorder %s24, %s27
    %p36 = scmp.eq.s32.totalorder %s19, 1
    %p37 = por %p35, %p36
    %p38 = scmp.ne.s32.totalorder %s27, %s28
    %p39 = scmp.eq.s32.totalorder %s19, 0
    %p40 = por %p38, %p39
    %p41 = scmp.ne.s32.totalorder %s27, %s28
    %p42 = scmp.eq.s32.totalorder %s20, 1
    %p43 = por %p41, %p42
    %p45 = scmp.ne.s32.totalorder %s28, %s44
    %p46 = scmp.eq.s32.totalorder %s20, 0
    %p47 = por %p45, %p46
    %s48 = ssub.s32 %s14, %s21
    %p49 = scmp.eq.s32.totalorder %s48, 0
    %s51 = sadd.s32 %s50, 1
    %s52 = scalar_select %p49, %s50, %s51
    %p55 = pneg %p49
    %p56 = scmp.eq.s32.totalorder %s14, 1
    %p57 = por %p55, %p56
    %p58 = scmp.ne.s32.totalorder %s50, %s53
    %p59 = scmp.eq.s32.totalorder %s14, 0
    %p60 = por %p58, %p59
    %p61 = scmp.ne.s32.totalorder %s50, %s53
    %p62 = scmp.eq.s32.totalorder %s19, 1
    %p63 = por %p61, %p62
    %p64 = scmp.ne.s32.totalorder %s53, %s54
    %p65 = scmp.eq.s32.totalorder %s19, 0
    %p66 = por %p64, %p65
    %p67 = scmp.ne.s32.totalorder %s53, %s54
    %p68 = scmp.eq.s32.totalorder %s20, 1
    %p69 = por %p67, %p68
    %p71 = scmp.ne.s32.totalorder %s54, %s70
    %p72 = scmp.eq.s32.totalorder %s20, 0
    %p73 = por %p71, %p72
    %s74 = ssub.s32 %s14, %s21
    %p75 = scmp.eq.s32.totalorder %s74, 0
    %s77 = sadd.s32 %s76, 1
    %s78 = scalar_select %p75, %s76, %s77
    %p81 = pneg %p75
    %p82 = scmp.eq.s32.totalorder %s14, 1
    %p83 = por %p81, %p82
    %p84 = scmp.ne.s32.totalorder %s76, %s79
    %p85 = scmp.eq.s32.totalorder %s14, 0
    %p86 = por %p84, %p85
    %p87 = scmp.ne.s32.totalorder %s76, %s79
    %p88 = scmp.eq.s32.totalorder %s19, 1
    %p89 = por %p87, %p88
    %p90 = scmp.ne.s32.totalorder %s79, %s80
    %p91 = scmp.eq.s32.totalorder %s19, 0
    %p92 = por %p90, %p91
    %p93 = scmp.ne.s32.totalorder %s79, %s80
    %p94 = scmp.eq.s32.totalorder %s20, 1
    %p95 = por %p93, %p94
    %p97 = scmp.ne.s32.totalorder %s80, %s96
    %p98 = scmp.eq.s32.totalorder %s20, 0
    %p99 = por %p97, %p98
    %s101 = sadd.s32 %s100, 1
    %p104 = scmp.eq.s32.totalorder %s14, 1
    %p105 = scmp.ne.s32.totalorder %s100, %s102
    %p106 = scmp.eq.s32.totalorder %s14, 0
    %p107 = por %p105, %p106
    %p108 = scmp.ne.s32.totalorder %s100, %s102
    %p109 = scmp.eq.s32.totalorder %s19, 1
    %p110 = por %p108, %p109
    %p111 = scmp.ne.s32.totalorder %s102, %s103
    %p112 = scmp.eq.s32.totalorder %s19, 0
    %p113 = por %p111, %p112
    %p114 = scmp.ne.s32.totalorder %s102, %s103
    %p115 = scmp.eq.s32.totalorder %s20, 1
    %p116 = por %p114, %p115
    %p118 = scmp.ne.s32.totalorder %s103, %s117
    %p119 = scmp.eq.s32.totalorder %s20, 0
    %p120 = por %p118, %p119
    %s122 = sadd.s32 %s121, 1
    %p125 = scmp.eq.s32.totalorder %s14, 1
    %p126 = scmp.ne.s32.totalorder %s121, %s123
    %p127 = scmp.eq.s32.totalorder %s14, 0
    %p128 = por %p126, %p127
    %p129 = scmp.ne.s32.totalorder %s121, %s123
    %p130 = scmp.eq.s32.totalorder %s19, 1
    %p131 = por %p129, %p130
    %p132 = scmp.ne.s32.totalorder %s123, %s124
    %p133 = scmp.eq.s32.totalorder %s19, 0
    %p134 = por %p132, %p133
    %p135 = scmp.ne.s32.totalorder %s123, %s124
    %p136 = scmp.eq.s32.totalorder %s20, 1
    %p137 = por %p135, %p136
    %p139 = scmp.ne.s32.totalorder %s124, %s138
    %p140 = scmp.eq.s32.totalorder %s20, 0
    %p141 = por %p139, %p140
    %s143 = sadd.s32 %s142, 1
    %p146 = scmp.eq.s32.totalorder %s14, 1
    %p147 = scmp.ne.s32.totalorder %s142, %s144
    %p148 = scmp.eq.s32.totalorder %s14, 0
    %p149 = por %p147, %p148
    %p150 = scmp.ne.s32.totalorder %s142, %s144
    %p151 = scmp.eq.s32.totalorder %s19, 1
    %p152 = por %p150, %p151
    %p153 = scmp.ne.s32.totalorder %s144, %s145
    %p154 = scmp.eq.s32.totalorder %s19, 0
    %p155 = por %p153, %p154
    %p156 = scmp.ne.s32.totalorder %s144, %s145
    %p157 = scmp.eq.s32.totalorder %s20, 1
    %p158 = por %p156, %p157
    %p160 = scmp.ne.s32.totalorder %s145, %s159
    %p161 = scmp.eq.s32.totalorder %s20, 0
    %p162 = por %p160, %p161
    %s163 = ssub.s32 %s14, %s21
    %p164 = scmp.eq.s32.totalorder %s163, 0
    %s166 = sadd.s32 %s165, 1
    %s167 = scalar_select %p164, %s165, %s166
    %p170 = pneg %p164
    %p171 = scmp.eq.s32.totalorder %s14, 1
    %p172 = por %p170, %p171
    %p173 = scmp.ne.s32.totalorder %s165, %s168
    %p174 = scmp.eq.s32.totalorder %s14, 0
    %p175 = por %p173, %p174
    %p176 = scmp.ne.s32.totalorder %s165, %s168
    %p177 = scmp.eq.s32.totalorder %s19, 1
    %p178 = por %p176, %p177
    %p179 = scmp.ne.s32.totalorder %s168, %s169
    %p180 = scmp.eq.s32.totalorder %s19, 0
    %p181 = por %p179, %p180
    %p182 = scmp.ne.s32.totalorder %s168, %s169
    %p183 = scmp.eq.s32.totalorder %s20, 1
    %p184 = por %p182, %p183
    %p186 = scmp.ne.s32.totalorder %s169, %s185
    %p187 = scmp.eq.s32.totalorder %s20, 0
    %p188 = por %p186, %p187
    %s189 = ssub.s32 %s14, %s21
    %p190 = scmp.eq.s32.totalorder %s189, 0
    %s192 = sadd.s32 %s191, 1
    %s193 = scalar_select %p190, %s191, %s192
    %p196 = pneg %p190
    %p197 = scmp.eq.s32.totalorder %s14, 1
    %p198 = por %p196, %p197
    %p199 = scmp.ne.s32.totalorder %s191, %s194
    %p200 = scmp.eq.s32.totalorder %s14, 0
    %p201 = por %p199, %p200
    %p202 = scmp.ne.s32.totalorder %s191, %s194
    %p203 = scmp.eq.s32.totalorder %s19, 1
    %p204 = por %p202, %p203
    %p205 = scmp.ne.s32.totalorder %s194, %s195
    %p206 = scmp.eq.s32.totalorder %s19, 0
    %p207 = por %p205, %p206
    %p208 = scmp.ne.s32.totalorder %s194, %s195
    %p209 = scmp.eq.s32.totalorder %s20, 1
    %p210 = por %p208, %p209
    %p212 = scmp.ne.s32.totalorder %s195, %s211
    %p213 = scmp.eq.s32.totalorder %s20, 0
    %p214 = por %p212, %p213
    %p215 = scmp.le.s32.totalorder 1, %s14
    %p216 = scmp.lt.s32.totalorder %s14, 3
    %p217 = pnand %p215, %p216
    %p218 = pneg %p217
    // Predicated region
    $region9: #{_lambda_.8} parent=5 // pred_check
      _
    $region10: #{_lambda_.8} parent=5 // pred_check_branch
      %220 = sbr.rel (%p217) target = $region12
    $region11: #{_lambda_.8} parent=5 // pred_region
      %s221 = ssub.s32 %s14, 1
      // Predicated region
      $region13: #{_lambda_.8} parent=11 // pred_check
        %p222 = pneg %p113
      $region14: #{_lambda_.8} parent=11 // pred_check_branch
        %224 = sbr.rel (%p222) target = $region16
      $region15: #{_lambda_.8} parent=11 // pred_region
        _
      $region16: #{_lambda_.8} parent=11 // pred_fallthru
        _
      // Predicated region
      $region17: #{_lambda_.8} parent=11 // pred_check
        %p225 = pneg %p134
      $region18: #{_lambda_.8} parent=11 // pred_check_branch
        %227 = sbr.rel (%p225) target = $region20
      $region19: #{_lambda_.8} parent=11 // pred_region
        _
      $region20: #{_lambda_.8} parent=11 // pred_fallthru
        _
      // Predicated region
      $region21: #{_lambda_.8} parent=11 // pred_check
        %p228 = pneg %p155
      $region22: #{_lambda_.8} parent=11 // pred_check_branch
        %230 = sbr.rel (%p228) target = $region24
      $region23: #{_lambda_.8} parent=11 // pred_region
        _
      $region24: #{_lambda_.8} parent=11 // pred_fallthru
        _
    $region12: #{_lambda_.8} parent=5 // pred_fallthru
      _
    %p231 = scmp.lt.s32.totalorder %s14, 2
    // Predicated region
    $region25: #{_lambda_.8} parent=5 // pred_check
      %p232 = pneg %p231
    $region26: #{_lambda_.8} parent=5 // pred_check_branch
      %234 = sbr.rel (%p232) target = $region28
    $region27: #{_lambda_.8} parent=5 // pred_region
      // Predicated region
      $region29: #{_lambda_.8} parent=27 // pred_check
        %p235 = pneg %p34
      $region30: #{_lambda_.8} parent=27 // pred_check_branch
        %237 = sbr.rel (%p235) target = $region32
      $region31: #{_lambda_.8} parent=27 // pred_region
        %p238 = scmp.lt.s32.totalorder %s14, 1
        %s239 = scalar_select %p238, %s14, 1
        %s240 = smul.addr %s239, 2
        %s241 = smul.addr %s240, 4
        %s242 = scalar_lea.vmem %s0, %s241
      $region32: #{_lambda_.8} parent=27 // pred_fallthru
        _
      // Predicated region
      $region33: #{_lambda_.8} parent=27 // pred_check
        %p243 = pneg %p60
      $region34: #{_lambda_.8} parent=27 // pred_check_branch
        %245 = sbr.rel (%p243) target = $region36
      $region35: #{_lambda_.8} parent=27 // pred_region
        %p246 = scmp.lt.s32.totalorder %s14, 1
        %s247 = scalar_select %p246, %s14, 1
        %s248 = smul.addr %s247, 2
        %s249 = smul.addr %s248, 2
        %s250 = scalar_lea.vmem %s1, %s249
      $region36: #{_lambda_.8} parent=27 // pred_fallthru
        _
      // Predicated region
      $region37: #{_lambda_.8} parent=27 // pred_check
        %p251 = pneg %p86
      $region38: #{_lambda_.8} parent=27 // pred_check_branch
        %253 = sbr.rel (%p251) target = $region40
      $region39: #{_lambda_.8} parent=27 // pred_region
        %p254 = scmp.lt.s32.totalorder %s14, 1
        %s255 = scalar_select %p254, %s14, 1
        %s256 = smul.addr %s255, 2
        %s257 = scalar_lea.vmem %s2, %s256
      $region40: #{_lambda_.8} parent=27 // pred_fallthru
        _
    $region28: #{_lambda_.8} parent=5 // pred_fallthru
      _
    %p258 = scmp.le.s32.totalorder 1, %s14
    %p259 = scmp.lt.s32.totalorder %s14, 3
    %p260 = pnand %p258, %p259
    %p261 = pneg %p260
    // Predicated region
    $region41: #{_lambda_.8} parent=5 // pred_check
      _
    $region42: #{_lambda_.8} parent=5 // pred_check_branch
      %263 = sbr.rel (%p260) target = $region44
    $region43: #{_lambda_.8} parent=5 // pred_region
      %s264 = ssub.s32 %s14, 1
      %p265 = scmp.lt.s32.totalorder %s19, 1
      %s266 = scalar_select %p265, %s19, 1
      %s267 = smul.addr %s266, 2
      %s268 = smul.addr %s267, 4
      %s269 = scalar_lea.vmem %s0, %s268
      %p270 = pneg %p40
      %p271 = pneg %p37
      %p272 = scmp.lt.s32.totalorder %s19, 1
      %s273 = scalar_select %p272, %s19, 1
      %s274 = smul.addr %s273, 2
      %s275 = smul.addr %s274, 2
      %s276 = scalar_lea.vmem %s1, %s275
      %p277 = pneg %p66
      %p278 = pneg %p63
      %p279 = scmp.lt.s32.totalorder %s19, 1
      %s280 = scalar_select %p279, %s19, 1
      %s281 = smul.addr %s280, 2
      %s282 = scalar_lea.vmem %s2, %s281
      %p283 = pneg %p92
      %p284 = pneg %p89
      %p285 = pneg %p113
      %p286 = pneg %p110
      %p287 = pneg %p134
      %p288 = pneg %p131
      %p289 = pneg %p155
      %p290 = pneg %p152
      %p291 = pneg %p181
      %p292 = pneg %p178
      %p293 = scmp.lt.s32.totalorder %s19, 1
      %s294 = scalar_select %p293, %s19, 1
      %s295 = smul.addr %s294, 2
      %s296 = smul.addr %s295, 4
      %s297 = scalar_lea.vmem %s6, %s296
      %p298 = pneg %p207
      %p299 = pneg %p204
      %p300 = scmp.lt.s32.totalorder %s19, 1
      %s301 = scalar_select %p300, %s19, 1
      %s302 = scalar_lea.vmem %s7, %s301
      %p303 = scmp.lt.s32.totalorder %s19, 1
      %s304 = scalar_select %p303, %s19, 1
      %s305 = smul.addr %s304, 2
      %s306 = smul.addr %s305, 4
      %s307 = scalar_lea.vmem %s0, %s306
      %p308 = scmp.lt.s32.totalorder %s19, 1
      %s309 = scalar_select %p308, %s19, 1
      %s310 = smul.addr %s309, 2
      %s311 = smul.addr %s310, 2
      %s312 = scalar_lea.vmem %s1, %s311
      %p313 = scmp.lt.s32.totalorder %s19, 1
      %s314 = scalar_select %p313, %s19, 1
      %s315 = smul.addr %s314, 2
      %s316 = scalar_lea.vmem %s2, %s315
      %p317 = scmp.lt.s32.totalorder %s19, 1
      %s318 = scalar_select %p317, %s19, 1
      %s319 = smul.addr %s318, 2
      %s320 = smul.addr %s319, 4
      %s321 = scalar_lea.vmem %s6, %s320
      %p322 = scmp.lt.s32.totalorder %s19, 1
      %s323 = scalar_select %p322, %s19, 1
      %s324 = scalar_lea.vmem %s7, %s323
      %v325 = vlaneseq
      %v326 = vshrl.u32 %v325, 7
      %v327 = vadd.s32 %v326, 8
      %v328 = vadd.s32 %v326, 16
      %v329 = vadd.s32 %v326, 24
      %v330 = vadd.s32 %v326, 32
      %v331 = vadd.s32 %v326, 40
      %v332 = vadd.s32 %v326, 48
      %v333 = vadd.s32 %v326, 56
      %v334 = vld [vmem:[%s5] sm:$0xff]
      %v335 = vld [vmem:[%s5 + $0x8] sm:$0xff]
      %v336 = vld [vmem:[%s5 + $0x10] sm:$0xff]
      %v337 = vld [vmem:[%s5 + $0x18] sm:$0xff]
      %v338 = vld [vmem:[%s5 + $0x20] sm:$0xff]
      %v339 = vld [vmem:[%s5 + $0x28] sm:$0xff]
      %v340 = vld [vmem:[%s5 + $0x30] sm:$0xff]
      %v341 = vld [vmem:[%s5 + $0x38] sm:$0xff]
      %v342 = vld [vmem:[%s312] sm:$0x3]
      %v343 = vld [vmem:[%s316] sm:$0x1]
      %v344 = vsub.f32 1.0, %v342
      %v345 = vlaneseq
      %v346 = vshrl.u32 %v345, 7
      %v347 = vsub.s32 0, %v346
      %v348 = vrot.slane %v343, %v347
      %vm349 = vcmp.eq.s32.totalorder %v326, %v348
      %vm350 = vcmp.eq.s32.totalorder %v327, %v348
      %vm351 = vcmp.eq.s32.totalorder %v328, %v348
      %vm352 = vcmp.eq.s32.totalorder %v329, %v348
      %vm353 = vcmp.eq.s32.totalorder %v330, %v348
      %vm354 = vcmp.eq.s32.totalorder %v331, %v348
      %vm355 = vcmp.eq.s32.totalorder %v332, %v348
      %vm356 = vcmp.eq.s32.totalorder %v333, %v348
      %v358 = vrot.slane %v344, 1
      %v360 = vmul.f32 %v344, %v358
      %v361 = vlaneseq
      %v362 = vshrl.u32 %v361, 7
      %v363 = vsub.s32 0, %v362
      %v364 = vrot.slane %v360, %v363
      %v365 = vsel %vm349, %v364, 0.0
      %v366 = vsel %vm350, %v364, 0.0
      %v367 = vsel %vm351, %v364, 0.0
      %v368 = vsel %vm352, %v364, 0.0
      %v369 = vsel %vm353, %v364, 0.0
      %v370 = vsel %vm354, %v364, 0.0
      %v371 = vsel %vm355, %v364, 0.0
      %v372 = vsel %vm356, %v364, 0.0
      %v373 = vadd.f32 %v365, 0.0
      %v374 = vadd.f32 %v366, 0.0
      %v375 = vadd.f32 %v367, 0.0
      %v376 = vadd.f32 %v368, 0.0
      %v377 = vadd.f32 %v369, 0.0
      %v378 = vadd.f32 %v370, 0.0
      %v379 = vadd.f32 %v371, 0.0
      %v380 = vadd.f32 %v372, 0.0
      %v381 = vadd.s32 %v343, 1
      %v382 = vlaneseq
      %v383 = vshrl.u32 %v382, 7
      %v384 = vsub.s32 0, %v383
      %v385 = vrot.slane %v381, %v384
      %vm386 = vcmp.eq.s32.totalorder %v326, %v385
      %vm387 = vcmp.eq.s32.totalorder %v327, %v385
      %vm388 = vcmp.eq.s32.totalorder %v328, %v385
      %vm389 = vcmp.eq.s32.totalorder %v329, %v385
      %vm390 = vcmp.eq.s32.totalorder %v330, %v385
      %vm391 = vcmp.eq.s32.totalorder %v331, %v385
      %vm392 = vcmp.eq.s32.totalorder %v332, %v385
      %vm393 = vcmp.eq.s32.totalorder %v333, %v385
      %v395 = vrot.slane %v342, 1
      %v397 = vmul.f32 %v344, %v395
      %v398 = vlaneseq
      %v399 = vshrl.u32 %v398, 7
      %v400 = vsub.s32 0, %v399
      %v401 = vrot.slane %v397, %v400
      %v402 = vsel %vm386, %v401, 0.0
      %v403 = vsel %vm387, %v401, 0.0
      %v404 = vsel %vm388, %v401, 0.0
      %v405 = vsel %vm389, %v401, 0.0
      %v406 = vsel %vm390, %v401, 0.0
      %v407 = vsel %vm391, %v401, 0.0
      %v408 = vsel %vm392, %v401, 0.0
      %v409 = vsel %vm393, %v401, 0.0
      %v410 = vadd.f32 %v373, %v402
      %v411 = vadd.f32 %v374, %v403
      %v412 = vadd.f32 %v375, %v404
      %v413 = vadd.f32 %v376, %v405
      %v414 = vadd.f32 %v377, %v406
      %v415 = vadd.f32 %v378, %v407
      %v416 = vadd.f32 %v379, %v408
      %v417 = vadd.f32 %v380, %v409
      %v418 = vadd.s32 %v343, 8
      %v419 = vlaneseq
      %v420 = vshrl.u32 %v419, 7
      %v421 = vsub.s32 0, %v420
      %v422 = vrot.slane %v418, %v421
      %vm423 = vcmp.eq.s32.totalorder %v326, %v422
      %vm424 = vcmp.eq.s32.totalorder %v327, %v422
      %vm425 = vcmp.eq.s32.totalorder %v328, %v422
      %vm426 = vcmp.eq.s32.totalorder %v329, %v422
      %vm427 = vcmp.eq.s32.totalorder %v330, %v422
      %vm428 = vcmp.eq.s32.totalorder %v331, %v422
      %vm429 = vcmp.eq.s32.totalorder %v332, %v422
      %vm430 = vcmp.eq.s32.totalorder %v333, %v422
      %v431 = vmul.f32 %v342, %v358
      %v432 = vlaneseq
      %v433 = vshrl.u32 %v432, 7
      %v434 = vsub.s32 0, %v433
      %v435 = vrot.slane %v431, %v434
      %v436 = vsel %vm423, %v435, 0.0
      %v437 = vsel %vm424, %v435, 0.0
      %v438 = vsel %vm425, %v435, 0.0
      %v439 = vsel %vm426, %v435, 0.0
      %v440 = vsel %vm427, %v435, 0.0
      %v441 = vsel %vm428, %v435, 0.0
      %v442 = vsel %vm429, %v435, 0.0
      %v443 = vsel %vm430, %v435, 0.0
      %v444 = vadd.f32 %v410, %v436
      %v445 = vadd.f32 %v411, %v437
      %v446 = vadd.f32 %v412, %v438
      %v447 = vadd.f32 %v413, %v439
      %v448 = vadd.f32 %v414, %v440
      %v449 = vadd.f32 %v415, %v441
      %v450 = vadd.f32 %v416, %v442
      %v451 = vadd.f32 %v417, %v443
      %v452 = vadd.s32 %v343, 9
      %v453 = vlaneseq
      %v454 = vshrl.u32 %v453, 7
      %v455 = vsub.s32 0, %v454
      %v456 = vrot.slane %v452, %v455
      %vm457 = vcmp.eq.s32.totalorder %v326, %v456
      %vm458 = vcmp.eq.s32.totalorder %v327, %v456
      %vm459 = vcmp.eq.s32.totalorder %v328, %v456
      %vm460 = vcmp.eq.s32.totalorder %v329, %v456
      %vm461 = vcmp.eq.s32.totalorder %v330, %v456
      %vm462 = vcmp.eq.s32.totalorder %v331, %v456
      %vm463 = vcmp.eq.s32.totalorder %v332, %v456
      %vm464 = vcmp.eq.s32.totalorder %v333, %v456
      %v465 = vmul.f32 %v342, %v395
      %v466 = vlaneseq
      %v467 = vshrl.u32 %v466, 7
      %v468 = vsub.s32 0, %v467
      %v469 = vrot.slane %v465, %v468
      %v470 = vsel %vm457, %v469, 0.0
      %v471 = vsel %vm458, %v469, 0.0
      %v472 = vsel %vm459, %v469, 0.0
      %v473 = vsel %vm460, %v469, 0.0
      %v474 = vsel %vm461, %v469, 0.0
      %v475 = vsel %vm462, %v469, 0.0
      %v476 = vsel %vm463, %v469, 0.0
      %v477 = vsel %vm464, %v469, 0.0
      %v478 = vadd.f32 %v444, %v470
      %v479 = vadd.f32 %v445, %v471
      %v480 = vadd.f32 %v446, %v472
      %v481 = vadd.f32 %v447, %v473
      %v482 = vadd.f32 %v448, %v474
      %v483 = vadd.f32 %v449, %v475
      %v484 = vadd.f32 %v450, %v476
      %v485 = vadd.f32 %v451, %v477
      %v486 = vld [vmem:[%s307] sm:$0xf]
      %vm487 = vcmask 130048
      %v489 = vsel %vm487, %v478, 0
      %v492 = vsel %vm487, %v479, 0
      %v495 = vsel %vm487, %v480, 0
      %v498 = vsel %vm487, %v481, 0
      %v501 = vsel %vm487, %v482, 0
      %v504 = vsel %vm487, %v483, 0
      %v507 = vsel %vm487, %v484, 0
      %v510 = vsel %vm487, %v485, 0
      %v513 = vsel %vm487, %v486, 0
      %515 = vmatprep.subr.mxu0 0.0
      %516 = vmatpush1.xpose.msra.mxu0 %v513
      %517 = vmatprep.subr.mxu0 0.0
      %518 = vmatpush1.xpose.msra.mxu0 0.0
      %519 = vmatprep.subr.mxu0 0.0
      %520 = vmatpush1.xpose.msra.mxu0 0.0
      %521 = vmatprep.subr.mxu0 0.0
      %522 = vmatpush1.xpose.msra.mxu0 0.0
      %523 = vmatprep.subr.mxu0 0.0
      %524 = vmatpush1.xpose.msra.mxu0 0.0
      %525 = vmatprep.subr.mxu0 0.0
      %526 = vmatpush1.xpose.msra.mxu0 0.0
      %527 = vmatprep.subr.mxu0 0.0
      %528 = vmatpush1.xpose.msra.mxu0 0.0
      %529 = vmatprep.subr.mxu0 0.0
      %530 = vmatpush1.xpose.msra.mxu0 0.0
      %531 = vmatprep.subr.mxu0 0.0
      %532 = vmatpush1.xpose.msra.mxu0 0.0
      %533 = vmatprep.subr.mxu0 0.0
      %534 = vmatpush1.xpose.msra.mxu0 0.0
      %535 = vmatprep.subr.mxu0 0.0
      %536 = vmatpush1.xpose.msra.mxu0 0.0
      %537 = vmatprep.subr.mxu0 0.0
      %538 = vmatpush1.xpose.msra.mxu0 0.0
      %539 = vmatprep.subr.mxu0 0.0
      %540 = vmatpush1.xpose.msra.mxu0 0.0
      %541 = vmatprep.subr.mxu0 0.0
      %542 = vmatpush1.xpose.msra.mxu0 0.0
      %543 = vmatprep.subr.mxu0 0.0
      %544 = vmatpush1.xpose.msra.mxu0 0.0
      %545 = vmatprep.subr.mxu0 0.0
      %546 = vmatpush1.xpose.msra.mxu0 0.0
      %547 = vmatprep.subr.mxu0 0.0
      %548 = vmatpush1.xpose.msra.mxu0 0.0
      %549 = vmatprep.subr.mxu0 0.0
      %550 = vmatpush1.xpose.msra.mxu0 0.0
      %551 = vmatprep.subr.mxu0 0.0
      %552 = vmatpush1.xpose.msra.mxu0 0.0
      %553 = vmatprep.subr.mxu0 0.0
      %554 = vmatpush1.xpose.msra.mxu0 0.0
      %555 = vmatprep.subr.mxu0 0.0
      %556 = vmatpush1.xpose.msra.mxu0 0.0
      %557 = vmatprep.subr.mxu0 0.0
      %558 = vmatpush1.xpose.msra.mxu0 0.0
      %559 = vmatprep.subr.mxu0 0.0
      %560 = vmatpush1.xpose.msra.mxu0 0.0
      %561 = vmatprep.subr.mxu0 0.0
      %562 = vmatpush1.xpose.msra.mxu0 0.0
      %563 = vmatprep.subr.mxu0 0.0
      %564 = vmatpush1.xpose.msra.mxu0 0.0
      %565 = vmatprep.subr.mxu0 0.0
      %566 = vmatpush1.xpose.msra.mxu0 0.0
      %567 = vmatprep.subr.mxu0 0.0
      %568 = vmatpush1.xpose.msra.mxu0 0.0
      %569 = vmatprep.subr.mxu0 0.0
      %570 = vmatpush1.xpose.msra.mxu0 0.0
      %571 = vmatprep.subr.mxu0 0.0
      %572 = vmatpush1.xpose.msra.mxu0 0.0
      %573 = vmatprep.subr.mxu0 0.0
      %574 = vmatpush1.xpose.msra.mxu0 0.0
      %575 = vmatprep.subr.mxu0 0.0
      %576 = vmatpush1.xpose.msra.mxu0 0.0
      %577 = vmatprep.subr.mxu0 0.0
      %578 = vmatpush1.xpose.msra.mxu0 0.0
      %579 = vmatprep.mubr.f32.mxu0 0.0
      %580 = vmatmul.mubr.f32.gmra.mrb[0].mxu0 %v489
      %v581 = vpop.f32.mrb[0].mxu0
      %v582 = vadd.f32 0.0, %v581
      %v583 = vpop.f32.mrb[0].mxu0
      %584 = vmatprep.mubr.f32.mxu0 0.0
      %585 = vmatmul.mubr.f32.gmra.mrb[0].mxu0 %v492
      %v586 = vpop.f32.mrb[0].mxu0
      %v587 = vadd.f32 0.0, %v586
      %v588 = vpop.f32.mrb[0].mxu0
      %589 = vmatprep.mubr.f32.mxu0 0.0
      %590 = vmatmul.mubr.f32.gmra.mrb[0].mxu0 %v495
      %v591 = vpop.f32.mrb[0].mxu0
      %v592 = vadd.f32 0.0, %v591
      %v593 = vpop.f32.mrb[0].mxu0
      %594 = vmatprep.mubr.f32.mxu0 0.0
      %595 = vmatmul.mubr.f32.gmra.mrb[0].mxu0 %v498
      %v596 = vpop.f32.mrb[0].mxu0
      %v597 = vadd.f32 0.0, %v596
      %v598 = vpop.f32.mrb[0].mxu0
      %599 = vmatprep.mubr.f32.mxu0 0.0
      %600 = vmatmul.mubr.f32.gmra.mrb[0].mxu0 %v501
      %v601 = vpop.f32.mrb[0].mxu0
      %v602 = vadd.f32 0.0, %v601
      %v603 = vpop.f32.mrb[0].mxu0
      %604 = vmatprep.mubr.f32.mxu0 0.0
      %605 = vmatmul.mubr.f32.gmra.mrb[0].mxu0 %v504
      %v606 = vpop.f32.mrb[0].mxu0
      %v607 = vadd.f32 0.0, %v606
      %v608 = vpop.f32.mrb[0].mxu0
      %609 = vmatprep.mubr.f32.mxu0 0.0
      %610 = vmatmul.mubr.f32.gmra.mrb[0].mxu0 %v507
      %v611 = vpop.f32.mrb[0].mxu0
      %v612 = vadd.f32 0.0, %v611
      %v613 = vpop.f32.mrb[0].mxu0
      %614 = vmatprep.mubr.f32.mxu0 0.0
      %615 = vmatmul.mubr.f32.gmra.mrb[0].mxu0 %v510
      %v616 = vpop.f32.mrb[0].mxu0
      %v617 = vadd.f32 0.0, %v616
      %v618 = vpop.f32.mrb[0].mxu0
      %619 = vdwg.mxu0
      %v620 = vand.u32 2147483647, %v582
      %v621 = vand.u32 2147483647, %v587
      %v622 = vand.u32 2147483647, %v592
      %v623 = vand.u32 2147483647, %v597
      %v624 = vand.u32 2147483647, %v602
      %v625 = vand.u32 2147483647, %v607
      %v626 = vand.u32 2147483647, %v612
      %v627 = vand.u32 2147483647, %v617
      %vm628 = vcmp.gt.f32.partialorder %v620, 1e-09
      %vm629 = vcmp.gt.f32.partialorder %v621, 1e-09
      %vm630 = vcmp.gt.f32.partialorder %v622, 1e-09
      %vm631 = vcmp.gt.f32.partialorder %v623, 1e-09
      %vm632 = vcmp.gt.f32.partialorder %v624, 1e-09
      %vm633 = vcmp.gt.f32.partialorder %v625, 1e-09
      %vm634 = vcmp.gt.f32.partialorder %v626, 1e-09
      %vm635 = vcmp.gt.f32.partialorder %v627, 1e-09
      %v636 = vsel %vm628, 1, 0
      %v637 = vsel %vm629, 1, 0
      %v638 = vsel %vm630, 1, 0
      %v639 = vsel %vm631, 1, 0
      %v640 = vsel %vm632, 1, 0
      %v641 = vsel %vm633, 1, 0
      %v642 = vsel %vm634, 1, 0
      %v643 = vsel %vm635, 1, 0
      %v644 = vcvt.s32.f32 %v636
      %v645 = vcvt.s32.f32 %v637
      %v646 = vcvt.s32.f32 %v638
      %v647 = vcvt.s32.f32 %v639
      %v648 = vcvt.s32.f32 %v640
      %v649 = vcvt.s32.f32 %v641
      %v650 = vcvt.s32.f32 %v642
      %v651 = vcvt.s32.f32 %v643
      %vm652 = vcmask 31744
      %v653 = vsel %vm652, %v644, 0.0
      %v654 = vsel %vm652, %v645, 0.0
      %v655 = vadd.f32 %v653, %v654
      %v656 = vsel %vm652, %v646, 0.0
      %v657 = vadd.f32 %v655, %v656
      %v658 = vsel %vm652, %v647, 0.0
      %v659 = vadd.f32 %v657, %v658
      %v660 = vsel %vm652, %v648, 0.0
      %v661 = vadd.f32 %v659, %v660
      %v662 = vsel %vm652, %v649, 0.0
      %v663 = vadd.f32 %v661, %v662
      %v664 = vsel %vm652, %v650, 0.0
      %v665 = vadd.f32 %v663, %v664
      %v666 = vsel %vm652, %v651, 0.0
      %v667 = vadd.f32 %v665, %v666
      %668 = vadd.xlane.f32.xlu0 %v667
      %v669 = vpop.xlane.xlu0 %668
      %v670 = vrot.slane %v669, 4
      %v671 = vadd.f32 %v669, %v670
      %v672 = vrot.slane %v671, 2
      %v673 = vadd.f32 %v671, %v672
      %v674 = vrot.slane %v673, 1
      %v675 = vadd.f32 %v673, %v674
      %s676 = vtos %v675
      %s677 = sadd.f32 %s676, 0.0
      %v678 = vrot.slane %v582, 7
      %v679 = vrot.slane %v587, 7
      %v680 = vrot.slane %v592, 7
      %v681 = vrot.slane %v597, 7
      %v682 = vrot.slane %v602, 7
      %v683 = vrot.slane %v607, 7
      %v684 = vrot.slane %v612, 7
      %v685 = vrot.slane %v617, 7
      %vm686 = vcmp.lt.s32.totalorder %v326, 1
      %v687 = vsel %vm686, %v684, %v685
      %v688 = vsel %vm686, %v683, %v684
      %v689 = vsel %vm686, %v682, %v683
      %v690 = vsel %vm686, %v681, %v682
      %v691 = vsel %vm686, %v680, %v681
      %v692 = vsel %vm686, %v679, %v680
      %v693 = vsel %vm686, %v678, %v679
      %v694 = vsel %vm686, %v685, %v678
      %696 = vset.pattern.permute.xlu0 0
      %697 = vperm.xlu0 %696, %v334
      %v698 = vpop.permute.xlu0 %697
      %701 = vset.pattern.permute.xlu0 0
      %702 = vperm.xlu0 %701, %v335
      %v703 = vpop.permute.xlu0 %702
      %706 = vset.pattern.permute.xlu0 0
      %707 = vperm.xlu0 %706, %v336
      %v708 = vpop.permute.xlu0 %707
      %711 = vset.pattern.permute.xlu0 0
      %712 = vperm.xlu0 %711, %v337
      %v713 = vpop.permute.xlu0 %712
      %716 = vset.pattern.permute.xlu0 0
      %717 = vperm.xlu0 %716, %v338
      %v718 = vpop.permute.xlu0 %717
      %721 = vset.pattern.permute.xlu0 0
      %722 = vperm.xlu0 %721, %v339
      %v723 = vpop.permute.xlu0 %722
      %726 = vset.pattern.permute.xlu0 0
      %727 = vperm.xlu0 %726, %v340
      %v728 = vpop.permute.xlu0 %727
      %731 = vset.pattern.permute.xlu0 0
      %732 = vperm.xlu0 %731, %v341
      %v733 = vpop.permute.xlu0 %732
      %v735 = vmul.f32 %v687, %v698
      %v736 = vmul.f32 %v694, %v703
      %v737 = vmul.f32 %v693, %v708
      %v738 = vmul.f32 %v692, %v713
      %v739 = vmul.f32 %v691, %v718
      %v740 = vmul.f32 %v690, %v723
      %v741 = vmul.f32 %v689, %v728
      %v742 = vmul.f32 %v688, %v733
      %743 = vst.msk [vmem:[#allocation2] sm:$0xff] %vm652, %v735
      %744 = vst.msk [vmem:[#allocation2 + $0x8] sm:$0xff] %vm652, %v736
      %745 = vst.msk [vmem:[#allocation2 + $0x10] sm:$0xff] %vm652, %v737
      %746 = vst.msk [vmem:[#allocation2 + $0x18] sm:$0xff] %vm652, %v738
      %747 = vst.msk [vmem:[#allocation2 + $0x20] sm:$0xff] %vm652, %v739
      %748 = vst.msk [vmem:[#allocation2 + $0x28] sm:$0xff] %vm652, %v740
      %749 = vst.msk [vmem:[#allocation2 + $0x30] sm:$0xff] %vm652, %v741
      %750 = vst.msk [vmem:[#allocation2 + $0x38] sm:$0xff] %vm652, %v742
      %751 = vset.pattern.permute.xlu0 1
      %752 = vperm.xlu0 %751, %v334
      %v753 = vpop.permute.xlu0 %752
      %755 = vset.pattern.permute.xlu0 1
      %756 = vperm.xlu0 %755, %v335
      %v757 = vpop.permute.xlu0 %756
      %759 = vset.pattern.permute.xlu0 1
      %760 = vperm.xlu0 %759, %v336
      %v761 = vpop.permute.xlu0 %760
      %763 = vset.pattern.permute.xlu0 1
      %764 = vperm.xlu0 %763, %v337
      %v765 = vpop.permute.xlu0 %764
      %767 = vset.pattern.permute.xlu0 1
      %768 = vperm.xlu0 %767, %v338
      %v769 = vpop.permute.xlu0 %768
      %771 = vset.pattern.permute.xlu0 1
      %772 = vperm.xlu0 %771, %v339
      %v773 = vpop.permute.xlu0 %772
      %775 = vset.pattern.permute.xlu0 1
      %776 = vperm.xlu0 %775, %v340
      %v777 = vpop.permute.xlu0 %776
      %779 = vset.pattern.permute.xlu0 1
      %780 = vperm.xlu0 %779, %v341
      %v781 = vpop.permute.xlu0 %780
      %v783 = vmul.f32 %v617, %v753
      %v784 = vmul.f32 %v582, %v757
      %v785 = vmul.f32 %v587, %v761
      %v786 = vmul.f32 %v592, %v765
      %v787 = vmul.f32 %v597, %v769
      %v788 = vmul.f32 %v602, %v773
      %v789 = vmul.f32 %v607, %v777
      %v790 = vmul.f32 %v612, %v781
      %799 = vrot.lane.b32.xlu0 %v783, 4
      %v800 = vpop.permute.xlu0 %799
      %801 = vrot.lane.b32.xlu0 %v784, 4
      %v802 = vpop.permute.xlu0 %801
      %803 = vrot.lane.b32.xlu0 %v785, 4
      %v804 = vpop.permute.xlu0 %803
      %805 = vrot.lane.b32.xlu0 %v786, 4
      %v806 = vpop.permute.xlu0 %805
      %807 = vrot.lane.b32.xlu0 %v787, 4
      %v808 = vpop.permute.xlu0 %807
      %809 = vrot.lane.b32.xlu0 %v788, 4
      %v810 = vpop.permute.xlu0 %809
      %811 = vrot.lane.b32.xlu0 %v789, 4
      %v812 = vpop.permute.xlu0 %811
      %813 = vrot.lane.b32.xlu0 %v790, 4
      %v814 = vpop.permute.xlu0 %813
      %vm823 = vcmask 64544
      %824 = vst.msk [vmem:[#allocation2] sm:$0xff] %vm823, %v800
      %825 = vst.msk [vmem:[#allocation2 + $0x8] sm:$0xff] %vm823, %v802
      %826 = vst.msk [vmem:[#allocation2 + $0x10] sm:$0xff] %vm823, %v804
      %827 = vst.msk [vmem:[#allocation2 + $0x18] sm:$0xff] %vm823, %v806
      %828 = vst.msk [vmem:[#allocation2 + $0x20] sm:$0xff] %vm823, %v808
      %829 = vst.msk [vmem:[#allocation2 + $0x28] sm:$0xff] %vm823, %v810
      %830 = vst.msk [vmem:[#allocation2 + $0x30] sm:$0xff] %vm823, %v812
      %831 = vst.msk [vmem:[#allocation2 + $0x38] sm:$0xff] %vm823, %v814
      %v832 = vrot.slane %v582, 1
      %v833 = vrot.slane %v587, 1
      %v834 = vrot.slane %v592, 1
      %v835 = vrot.slane %v597, 1
      %v836 = vrot.slane %v602, 1
      %v837 = vrot.slane %v607, 1
      %v838 = vrot.slane %v612, 1
      %v839 = vrot.slane %v617, 1
      %vm840 = vcmp.lt.s32.totalorder %v326, 7
      %v841 = vsel %vm840, %v838, %v839
      %v842 = vsel %vm840, %v837, %v838
      %v843 = vsel %vm840, %v836, %v837
      %v844 = vsel %vm840, %v835, %v836
      %v845 = vsel %vm840, %v834, %v835
      %v846 = vsel %vm840, %v833, %v834
      %v847 = vsel %vm840, %v832, %v833
      %v848 = vsel %vm840, %v839, %v832
      %849 = vset.pattern.permute.xlu0 2
      %850 = vperm.xlu0 %849, %v334
      %v851 = vpop.permute.xlu0 %850
      %853 = vset.pattern.permute.xlu0 2
      %854 = vperm.xlu0 %853, %v335
      %v855 = vpop.permute.xlu0 %854
      %857 = vset.pattern.permute.xlu0 2
      %858 = vperm.xlu0 %857, %v336
      %v859 = vpop.permute.xlu0 %858
      %861 = vset.pattern.permute.xlu0 2
      %862 = vperm.xlu0 %861, %v337
      %v863 = vpop.permute.xlu0 %862
      %865 = vset.pattern.permute.xlu0 2
      %866 = vperm.xlu0 %865, %v338
      %v867 = vpop.permute.xlu0 %866
      %869 = vset.pattern.permute.xlu0 2
      %870 = vperm.xlu0 %869, %v339
      %v871 = vpop.permute.xlu0 %870
      %873 = vset.pattern.permute.xlu0 2
      %874 = vperm.xlu0 %873, %v340
      %v875 = vpop.permute.xlu0 %874
      %877 = vset.pattern.permute.xlu0 2
      %878 = vperm.xlu0 %877, %v341
      %v879 = vpop.permute.xlu0 %878
      %v881 = vmul.f32 %v848, %v851
      %v882 = vmul.f32 %v847, %v855
      %v883 = vmul.f32 %v846, %v859
      %v884 = vmul.f32 %v845, %v863
      %v885 = vmul.f32 %v844, %v867
      %v886 = vmul.f32 %v843, %v871
      %v887 = vmul.f32 %v842, %v875
      %v888 = vmul.f32 %v841, %v879
      %897 = vrot.lane.b32.xlu0 %v881, 8
      %v898 = vpop.permute.xlu0 %897
      %899 = vrot.lane.b32.xlu0 %v882, 8
      %v900 = vpop.permute.xlu0 %899
      %901 = vrot.lane.b32.xlu0 %v883, 8
      %v902 = vpop.permute.xlu0 %901
      %903 = vrot.lane.b32.xlu0 %v884, 8
      %v904 = vpop.permute.xlu0 %903
      %905 = vrot.lane.b32.xlu0 %v885, 8
      %v906 = vpop.permute.xlu0 %905
      %907 = vrot.lane.b32.xlu0 %v886, 8
      %v908 = vpop.permute.xlu0 %907
      %909 = vrot.lane.b32.xlu0 %v887, 8
      %v910 = vpop.permute.xlu0 %909
      %911 = vrot.lane.b32.xlu0 %v888, 8
      %v912 = vpop.permute.xlu0 %911
      %vm921 = vcmask 97344
      %922 = vst.msk [vmem:[#allocation2] sm:$0xff] %vm921, %v898
      %923 = vst.msk [vmem:[#allocation2 + $0x8] sm:$0xff] %vm921, %v900
      %924 = vst.msk [vmem:[#allocation2 + $0x10] sm:$0xff] %vm921, %v902
      %925 = vst.msk [vmem:[#allocation2 + $0x18] sm:$0xff] %vm921, %v904
      %926 = vst.msk [vmem:[#allocation2 + $0x20] sm:$0xff] %vm921, %v906
      %927 = vst.msk [vmem:[#allocation2 + $0x28] sm:$0xff] %vm921, %v908
      %928 = vst.msk [vmem:[#allocation2 + $0x30] sm:$0xff] %vm921, %v910
      %929 = vst.msk [vmem:[#allocation2 + $0x38] sm:$0xff] %vm921, %v912
      %930 = vset.pattern.permute.xlu0 3
      %931 = vperm.xlu0 %930, %v334
      %v932 = vpop.permute.xlu0 %931
      %934 = vset.pattern.permute.xlu0 3
      %935 = vperm.xlu0 %934, %v335
      %v936 = vpop.permute.xlu0 %935
      %938 = vset.pattern.permute.xlu0 3
      %939 = vperm.xlu0 %938, %v336
      %v940 = vpop.permute.xlu0 %939
      %942 = vset.pattern.permute.xlu0 3
      %943 = vperm.xlu0 %942, %v337
      %v944 = vpop.permute.xlu0 %943
      %946 = vset.pattern.permute.xlu0 3
      %947 = vperm.xlu0 %946, %v338
      %v948 = vpop.permute.xlu0 %947
      %950 = vset.pattern.permute.xlu0 3
      %951 = vperm.xlu0 %950, %v339
      %v952 = vpop.permute.xlu0 %951
      %954 = vset.pattern.permute.xlu0 3
      %955 = vperm.xlu0 %954, %v340
      %v956 = vpop.permute.xlu0 %955
      %958 = vset.pattern.permute.xlu0 3
      %959 = vperm.xlu0 %958, %v341
      %v960 = vpop.permute.xlu0 %959
      %v962 = vmul.f32 %v694, %v932
      %v963 = vmul.f32 %v693, %v936
      %v964 = vmul.f32 %v692, %v940
      %v965 = vmul.f32 %v691, %v944
      %v966 = vmul.f32 %v690, %v948
      %v967 = vmul.f32 %v689, %v952
      %v968 = vmul.f32 %v688, %v956
      %v969 = vmul.f32 %v687, %v960
      %978 = vrot.lane.b32.xlu0 %v962, 12
      %v979 = vpop.permute.xlu0 %978
      %980 = vrot.lane.b32.xlu0 %v963, 12
      %v981 = vpop.permute.xlu0 %980
      %982 = vrot.lane.b32.xlu0 %v964, 12
      %v983 = vpop.permute.xlu0 %982
      %984 = vrot.lane.b32.xlu0 %v965, 12
      %v985 = vpop.permute.xlu0 %984
      %986 = vrot.lane.b32.xlu0 %v966, 12
      %v987 = vpop.permute.xlu0 %986
      %988 = vrot.lane.b32.xlu0 %v967, 12
      %v989 = vpop.permute.xlu0 %988
      %990 = vrot.lane.b32.xlu0 %v968, 12
      %v991 = vpop.permute.xlu0 %990
      %992 = vrot.lane.b32.xlu0 %v969, 12
      %v993 = vpop.permute.xlu0 %992
      %vm1002 = vcmask 130144
      %1003 = vst.msk [vmem:[#allocation2] sm:$0xff] %vm1002, %v979
      %1004 = vst.msk [vmem:[#allocation2 + $0x8] sm:$0xff] %vm1002, %v981
      %1005 = vst.msk [vmem:[#allocation2 + $0x10] sm:$0xff] %vm1002, %v983
      %1006 = vst.msk [vmem:[#allocation2 + $0x18] sm:$0xff] %vm1002, %v985
      %1007 = vst.msk [vmem:[#allocation2 + $0x20] sm:$0xff] %vm1002, %v987
      %1008 = vst.msk [vmem:[#allocation2 + $0x28] sm:$0xff] %vm1002, %v989
      %1009 = vst.msk [vmem:[#allocation2 + $0x30] sm:$0xff] %vm1002, %v991
      %1010 = vst.msk [vmem:[#allocation2 + $0x38] sm:$0xff] %vm1002, %v993
      %1011 = vset.pattern.permute.xlu0 4
      %1012 = vperm.xlu0 %1011, %v334
      %v1013 = vpop.permute.xlu0 %1012
      %1015 = vset.pattern.permute.xlu0 4
      %1016 = vperm.xlu0 %1015, %v335
      %v1017 = vpop.permute.xlu0 %1016
      %1019 = vset.pattern.permute.xlu0 4
      %1020 = vperm.xlu0 %1019, %v336
      %v1021 = vpop.permute.xlu0 %1020
      %1023 = vset.pattern.permute.xlu0 4
      %1024 = vperm.xlu0 %1023, %v337
      %v1025 = vpop.permute.xlu0 %1024
      %1027 = vset.pattern.permute.xlu0 4
      %1028 = vperm.xlu0 %1027, %v338
      %v1029 = vpop.permute.xlu0 %1028
      %1031 = vset.pattern.permute.xlu0 4
      %1032 = vperm.xlu0 %1031, %v339
      %v1033 = vpop.permute.xlu0 %1032
      %1035 = vset.pattern.permute.xlu0 4
      %1036 = vperm.xlu0 %1035, %v340
      %v1037 = vpop.permute.xlu0 %1036
      %1039 = vset.pattern.permute.xlu0 4
      %1040 = vperm.xlu0 %1039, %v341
      %v1041 = vpop.permute.xlu0 %1040
      %v1043 = vmul.f32 %v582, %v1013
      %v1044 = vmul.f32 %v587, %v1017
      %v1045 = vmul.f32 %v592, %v1021
      %v1046 = vmul.f32 %v597, %v1025
      %v1047 = vmul.f32 %v602, %v1029
      %v1048 = vmul.f32 %v607, %v1033
      %v1049 = vmul.f32 %v612, %v1037
      %v1050 = vmul.f32 %v617, %v1041
      %1059 = vrot.lane.b32.xlu0 %v1043, 16
      %v1060 = vpop.permute.xlu0 %1059
      %1061 = vrot.lane.b32.xlu0 %v1044, 16
      %v1062 = vpop.permute.xlu0 %1061
      %1063 = vrot.lane.b32.xlu0 %v1045, 16
      %v1064 = vpop.permute.xlu0 %1063
      %1065 = vrot.lane.b32.xlu0 %v1046, 16
      %v1066 = vpop.permute.xlu0 %1065
      %1067 = vrot.lane.b32.xlu0 %v1047, 16
      %v1068 = vpop.permute.xlu0 %1067
      %1069 = vrot.lane.b32.xlu0 %v1048, 16
      %v1070 = vpop.permute.xlu0 %1069
      %1071 = vrot.lane.b32.xlu0 %v1049, 16
      %v1072 = vpop.permute.xlu0 %1071
      %1073 = vrot.lane.b32.xlu0 %v1050, 16
      %v1074 = vpop.permute.xlu0 %1073
      %vm1083 = vcmask 162944
      %1084 = vst.msk [vmem:[#allocation2] sm:$0xff] %vm1083, %v1060
      %1085 = vst.msk [vmem:[#allocation2 + $0x8] sm:$0xff] %vm1083, %v1062
      %1086 = vst.msk [vmem:[#allocation2 + $0x10] sm:$0xff] %vm1083, %v1064
      %1087 = vst.msk [vmem:[#allocation2 + $0x18] sm:$0xff] %vm1083, %v1066
      %1088 = vst.msk [vmem:[#allocation2 + $0x20] sm:$0xff] %vm1083, %v1068
      %1089 = vst.msk [vmem:[#allocation2 + $0x28] sm:$0xff] %vm1083, %v1070
      %1090 = vst.msk [vmem:[#allocation2 + $0x30] sm:$0xff] %vm1083, %v1072
      %1091 = vst.msk [vmem:[#allocation2 + $0x38] sm:$0xff] %vm1083, %v1074
      %1092 = vset.pattern.permute.xlu0 5
      %1093 = vperm.xlu0 %1092, %v334
      %v1094 = vpop.permute.xlu0 %1093
      %1096 = vset.pattern.permute.xlu0 5
      %1097 = vperm.xlu0 %1096, %v335
      %v1098 = vpop.permute.xlu0 %1097
      %1100 = vset.pattern.permute.xlu0 5
      %1101 = vperm.xlu0 %1100, %v336
      %v1102 = vpop.permute.xlu0 %1101
      %1104 = vset.pattern.permute.xlu0 5
      %1105 = vperm.xlu0 %1104, %v337
      %v1106 = vpop.permute.xlu0 %1105
      %1108 = vset.pattern.permute.xlu0 5
      %1109 = vperm.xlu0 %1108, %v338
      %v1110 = vpop.permute.xlu0 %1109
      %1112 = vset.pattern.permute.xlu0 5
      %1113 = vperm.xlu0 %1112, %v339
      %v1114 = vpop.permute.xlu0 %1113
      %1116 = vset.pattern.permute.xlu0 5
      %1117 = vperm.xlu0 %1116, %v340
      %v1118 = vpop.permute.xlu0 %1117
      %1120 = vset.pattern.permute.xlu0 5
      %1121 = vperm.xlu0 %1120, %v341
      %v1122 = vpop.permute.xlu0 %1121
      %v1124 = vmul.f32 %v847, %v1094
      %v1125 = vmul.f32 %v846, %v1098
      %v1126 = vmul.f32 %v845, %v1102
      %v1127 = vmul.f32 %v844, %v1106
      %v1128 = vmul.f32 %v843, %v1110
      %v1129 = vmul.f32 %v842, %v1114
      %v1130 = vmul.f32 %v841, %v1118
      %v1131 = vmul.f32 %v848, %v1122
      %1140 = vrot.lane.b32.xlu0 %v1124, 20
      %v1141 = vpop.permute.xlu0 %1140
      %1142 = vrot.lane.b32.xlu0 %v1125, 20
      %v1143 = vpop.permute.xlu0 %1142
      %1144 = vrot.lane.b32.xlu0 %v1126, 20
      %v1145 = vpop.permute.xlu0 %1144
      %1146 = vrot.lane.b32.xlu0 %v1127, 20
      %v1147 = vpop.permute.xlu0 %1146
      %1148 = vrot.lane.b32.xlu0 %v1128, 20
      %v1149 = vpop.permute.xlu0 %1148
      %1150 = vrot.lane.b32.xlu0 %v1129, 20
      %v1151 = vpop.permute.xlu0 %1150
      %1152 = vrot.lane.b32.xlu0 %v1130, 20
      %v1153 = vpop.permute.xlu0 %1152
      %1154 = vrot.lane.b32.xlu0 %v1131, 20
      %v1155 = vpop.permute.xlu0 %1154
      %vm1164 = vcmask 195744
      %1165 = vst.msk [vmem:[#allocation2] sm:$0xff] %vm1164, %v1141
      %1166 = vst.msk [vmem:[#allocation2 + $0x8] sm:$0xff] %vm1164, %v1143
      %1167 = vst.msk [vmem:[#allocation2 + $0x10] sm:$0xff] %vm1164, %v1145
      %1168 = vst.msk [vmem:[#allocation2 + $0x18] sm:$0xff] %vm1164, %v1147
      %1169 = vst.msk [vmem:[#allocation2 + $0x20] sm:$0xff] %vm1164, %v1149
      %1170 = vst.msk [vmem:[#allocation2 + $0x28] sm:$0xff] %vm1164, %v1151
      %1171 = vst.msk [vmem:[#allocation2 + $0x30] sm:$0xff] %vm1164, %v1153
      %1172 = vst.msk [vmem:[#allocation2 + $0x38] sm:$0xff] %vm1164, %v1155
      %1173 = vset.pattern.permute.xlu0 6
      %1174 = vperm.xlu0 %1173, %v334
      %v1175 = vpop.permute.xlu0 %1174
      %1177 = vset.pattern.permute.xlu0 6
      %1178 = vperm.xlu0 %1177, %v335
      %v1179 = vpop.permute.xlu0 %1178
      %1181 = vset.pattern.permute.xlu0 6
      %1182 = vperm.xlu0 %1181, %v336
      %v1183 = vpop.permute.xlu0 %1182
      %1185 = vset.pattern.permute.xlu0 6
      %1186 = vperm.xlu0 %1185, %v337
      %v1187 = vpop.permute.xlu0 %1186
      %1189 = vset.pattern.permute.xlu0 6
      %1190 = vperm.xlu0 %1189, %v338
      %v1191 = vpop.permute.xlu0 %1190
      %1193 = vset.pattern.permute.xlu0 6
      %1194 = vperm.xlu0 %1193, %v339
      %v1195 = vpop.permute.xlu0 %1194
      %1197 = vset.pattern.permute.xlu0 6
      %1198 = vperm.xlu0 %1197, %v340
      %v1199 = vpop.permute.xlu0 %1198
      %1201 = vset.pattern.permute.xlu0 6
      %1202 = vperm.xlu0 %1201, %v341
      %v1203 = vpop.permute.xlu0 %1202
      %v1205 = vmul.f32 %v693, %v1175
      %v1206 = vmul.f32 %v692, %v1179
      %v1207 = vmul.f32 %v691, %v1183
      %v1208 = vmul.f32 %v690, %v1187
      %v1209 = vmul.f32 %v689, %v1191
      %v1210 = vmul.f32 %v688, %v1195
      %v1211 = vmul.f32 %v687, %v1199
      %v1212 = vmul.f32 %v694, %v1203
      %1221 = vrot.lane.b32.xlu0 %v1205, 24
      %v1222 = vpop.permute.xlu0 %1221
      %1223 = vrot.lane.b32.xlu0 %v1206, 24
      %v1224 = vpop.permute.xlu0 %1223
      %1225 = vrot.lane.b32.xlu0 %v1207, 24
      %v1226 = vpop.permute.xlu0 %1225
      %1227 = vrot.lane.b32.xlu0 %v1208, 24
      %v1228 = vpop.permute.xlu0 %1227
      %1229 = vrot.lane.b32.xlu0 %v1209, 24
      %v1230 = vpop.permute.xlu0 %1229
      %1231 = vrot.lane.b32.xlu0 %v1210, 24
      %v1232 = vpop.permute.xlu0 %1231
      %1233 = vrot.lane.b32.xlu0 %v1211, 24
      %v1234 = vpop.permute.xlu0 %1233
      %1235 = vrot.lane.b32.xlu0 %v1212, 24
      %v1236 = vpop.permute.xlu0 %1235
      %vm1245 = vcmask 228544
      %1246 = vst.msk [vmem:[#allocation2] sm:$0xff] %vm1245, %v1222
      %1247 = vst.msk [vmem:[#allocation2 + $0x8] sm:$0xff] %vm1245, %v1224
      %1248 = vst.msk [vmem:[#allocation2 + $0x10] sm:$0xff] %vm1245, %v1226
      %1249 = vst.msk [vmem:[#allocation2 + $0x18] sm:$0xff] %vm1245, %v1228
      %1250 = vst.msk [vmem:[#allocation2 + $0x20] sm:$0xff] %vm1245, %v1230
      %1251 = vst.msk [vmem:[#allocation2 + $0x28] sm:$0xff] %vm1245, %v1232
      %1252 = vst.msk [vmem:[#allocation2 + $0x30] sm:$0xff] %vm1245, %v1234
      %1253 = vst.msk [vmem:[#allocation2 + $0x38] sm:$0xff] %vm1245, %v1236
      %1254 = vset.pattern.permute.xlu0 7
      %1255 = vperm.xlu0 %1254, %v334
      %v1256 = vpop.permute.xlu0 %1255
      %1258 = vset.pattern.permute.xlu0 7
      %1259 = vperm.xlu0 %1258, %v335
      %v1260 = vpop.permute.xlu0 %1259
      %1262 = vset.pattern.permute.xlu0 7
      %1263 = vperm.xlu0 %1262, %v336
      %v1264 = vpop.permute.xlu0 %1263
      %1266 = vset.pattern.permute.xlu0 7
      %1267 = vperm.xlu0 %1266, %v337
      %v1268 = vpop.permute.xlu0 %1267
      %1270 = vset.pattern.permute.xlu0 7
      %1271 = vperm.xlu0 %1270, %v338
      %v1272 = vpop.permute.xlu0 %1271
      %1274 = vset.pattern.permute.xlu0 7
      %1275 = vperm.xlu0 %1274, %v339
      %v1276 = vpop.permute.xlu0 %1275
      %1278 = vset.pattern.permute.xlu0 7
      %1279 = vperm.xlu0 %1278, %v340
      %v1280 = vpop.permute.xlu0 %1279
      %1282 = vset.pattern.permute.xlu0 7
      %1283 = vperm.xlu0 %1282, %v341
      %v1284 = vpop.permute.xlu0 %1283
      %v1286 = vmul.f32 %v587, %v1256
      %v1287 = vmul.f32 %v592, %v1260
      %v1288 = vmul.f32 %v597, %v1264
      %v1289 = vmul.f32 %v602, %v1268
      %v1290 = vmul.f32 %v607, %v1272
      %v1291 = vmul.f32 %v612, %v1276
      %v1292 = vmul.f32 %v617, %v1280
      %v1293 = vmul.f32 %v582, %v1284
      %1302 = vrot.lane.b32.xlu0 %v1286, 28
      %v1303 = vpop.permute.xlu0 %1302
      %1304 = vrot.lane.b32.xlu0 %v1287, 28
      %v1305 = vpop.permute.xlu0 %1304
      %1306 = vrot.lane.b32.xlu0 %v1288, 28
      %v1307 = vpop.permute.xlu0 %1306
      %1308 = vrot.lane.b32.xlu0 %v1289, 28
      %v1309 = vpop.permute.xlu0 %1308
      %1310 = vrot.lane.b32.xlu0 %v1290, 28
      %v1311 = vpop.permute.xlu0 %1310
      %1312 = vrot.lane.b32.xlu0 %v1291, 28
      %v1313 = vpop.permute.xlu0 %1312
      %1314 = vrot.lane.b32.xlu0 %v1292, 28
      %v1315 = vpop.permute.xlu0 %1314
      %1316 = vrot.lane.b32.xlu0 %v1293, 28
      %v1317 = vpop.permute.xlu0 %1316
      %vm1326 = vcmask 261344
      %1327 = vst.msk [vmem:[#allocation2] sm:$0xff] %vm1326, %v1303
      %1328 = vst.msk [vmem:[#allocation2 + $0x8] sm:$0xff] %vm1326, %v1305
      %1329 = vst.msk [vmem:[#allocation2 + $0x10] sm:$0xff] %vm1326, %v1307
      %1330 = vst.msk [vmem:[#allocation2 + $0x18] sm:$0xff] %vm1326, %v1309
      %1331 = vst.msk [vmem:[#allocation2 + $0x20] sm:$0xff] %vm1326, %v1311
      %1332 = vst.msk [vmem:[#allocation2 + $0x28] sm:$0xff] %vm1326, %v1313
      %1333 = vst.msk [vmem:[#allocation2 + $0x30] sm:$0xff] %vm1326, %v1315
      %1334 = vst.msk [vmem:[#allocation2 + $0x38] sm:$0xff] %vm1326, %v1317
      %1335 = vset.pattern.permute.xlu0 8
      %1336 = vperm.xlu0 %1335, %v334
      %v1337 = vpop.permute.xlu0 %1336
      %1339 = vset.pattern.permute.xlu0 8
      %1340 = vperm.xlu0 %1339, %v335
      %v1341 = vpop.permute.xlu0 %1340
      %1343 = vset.pattern.permute.xlu0 8
      %1344 = vperm.xlu0 %1343, %v336
      %v1345 = vpop.permute.xlu0 %1344
      %1347 = vset.pattern.permute.xlu0 8
      %1348 = vperm.xlu0 %1347, %v337
      %v1349 = vpop.permute.xlu0 %1348
      %1351 = vset.pattern.permute.xlu0 8
      %1352 = vperm.xlu0 %1351, %v338
      %v1353 = vpop.permute.xlu0 %1352
      %1355 = vset.pattern.permute.xlu0 8
      %1356 = vperm.xlu0 %1355, %v339
      %v1357 = vpop.permute.xlu0 %1356
      %1359 = vset.pattern.permute.xlu0 8
      %1360 = vperm.xlu0 %1359, %v340
      %v1361 = vpop.permute.xlu0 %1360
      %1363 = vset.pattern.permute.xlu0 8
      %1364 = vperm.xlu0 %1363, %v341
      %v1365 = vpop.permute.xlu0 %1364
      %v1367 = vmul.f32 %v846, %v1337
      %v1368 = vmul.f32 %v845, %v1341
      %v1369 = vmul.f32 %v844, %v1345
      %v1370 = vmul.f32 %v843, %v1349
      %v1371 = vmul.f32 %v842, %v1353
      %v1372 = vmul.f32 %v841, %v1357
      %v1373 = vmul.f32 %v848, %v1361
      %v1374 = vmul.f32 %v847, %v1365
      %1383 = vrot.lane.b32.xlu0 %v1367, 32
      %v1384 = vpop.permute.xlu0 %1383
      %1385 = vrot.lane.b32.xlu0 %v1368, 32
      %v1386 = vpop.permute.xlu0 %1385
      %1387 = vrot.lane.b32.xlu0 %v1369, 32
      %v1388 = vpop.permute.xlu0 %1387
      %1389 = vrot.lane.b32.xlu0 %v1370, 32
      %v1390 = vpop.permute.xlu0 %1389
      %1391 = vrot.lane.b32.xlu0 %v1371, 32
      %v1392 = vpop.permute.xlu0 %1391
      %1393 = vrot.lane.b32.xlu0 %v1372, 32
      %v1394 = vpop.permute.xlu0 %1393
      %1395 = vrot.lane.b32.xlu0 %v1373, 32
      %v1396 = vpop.permute.xlu0 %1395
      %1397 = vrot.lane.b32.xlu0 %v1374, 32
      %v1398 = vpop.permute.xlu0 %1397
      %vm1407 = vcmask 294144
      %1408 = vst.msk [vmem:[#allocation2] sm:$0xff] %vm1407, %v1384
      %1409 = vst.msk [vmem:[#allocation2 + $0x8] sm:$0xff] %vm1407, %v1386
      %1410 = vst.msk [vmem:[#allocation2 + $0x10] sm:$0xff] %vm1407, %v1388
      %1411 = vst.msk [vmem:[#allocation2 + $0x18] sm:$0xff] %vm1407, %v1390
      %1412 = vst.msk [vmem:[#allocation2 + $0x20] sm:$0xff] %vm1407, %v1392
      %1413 = vst.msk [vmem:[#allocation2 + $0x28] sm:$0xff] %vm1407, %v1394
      %1414 = vst.msk [vmem:[#allocation2 + $0x30] sm:$0xff] %vm1407, %v1396
      %1415 = vst.msk [vmem:[#allocation2 + $0x38] sm:$0xff] %vm1407, %v1398
      %v1416 = vld [vmem:[#allocation2] sm:$0xff]
      %v1417 = vld [vmem:[#allocation2 + $0x8] sm:$0xff]
      %v1418 = vld [vmem:[#allocation2 + $0x10] sm:$0xff]
      %v1419 = vld [vmem:[#allocation2 + $0x18] sm:$0xff]
      %v1420 = vld [vmem:[#allocation2 + $0x20] sm:$0xff]
      %v1421 = vld [vmem:[#allocation2 + $0x28] sm:$0xff]
      %v1422 = vld [vmem:[#allocation2 + $0x30] sm:$0xff]
      %v1423 = vld [vmem:[#allocation2 + $0x38] sm:$0xff]
      %v1424 = vld [vmem:[%s3] sm:$0xff]
      %v1425 = vld [vmem:[%s3 + $0x8] sm:$0xff]
      %v1426 = vld [vmem:[%s3 + $0x10] sm:$0xff]
      %v1427 = vld [vmem:[%s3 + $0x18] sm:$0xff]
      %v1428 = vld [vmem:[%s3 + $0x20] sm:$0xf]
      %v1429 = vld [vmem:[%s4] sm:$0x1]
      %v1431 = vlaneseq
      %v1432 = vshrl.u32 %v1431, 7
      %v1433 = vsub.s32 0, %v1432
      %v1434 = vrot.slane %v1429, %v1433
      %vm1436 = vcmask 293888
      %v1438 = vsel %vm1436, %v1416, 0
      %v1441 = vsel %vm1436, %v1417, 0
      %v1444 = vsel %vm1436, %v1418, 0
      %v1447 = vsel %vm1436, %v1419, 0
      %v1450 = vsel %vm1436, %v1420, 0
      %v1453 = vsel %vm1436, %v1421, 0
      %v1456 = vsel %vm1436, %v1422, 0
      %v1459 = vsel %vm1436, %v1423, 0
      %vm1461 = vcmask 1043456
      %v1463 = vsel %vm1461, %v1428, 0
      %1465 = vmatprep.subr.mxu0 0.0
      %1466 = vmatpush1.msra.mxu0 %v1424
      %1467 = vmatprep.subr.mxu0 0.0
      %1468 = vmatpush1.msra.mxu0 %v1425
      %1469 = vmatprep.subr.mxu0 0.0
      %1470 = vmatpush1.msra.mxu0 %v1426
      %1471 = vmatprep.subr.mxu0 0.0
      %1472 = vmatpush1.msra.mxu0 %v1427
      %1473 = vmatprep.subr.mxu0 0.0
      %1474 = vmatpush1.msra.mxu0 %v1463
      %1475 = vmatprep.subr.mxu0 0.0
      %1476 = vmatpush1.msra.mxu0 0.0
      %1477 = vmatprep.subr.mxu0 0.0
      %1478 = vmatpush1.msra.mxu0 0.0
      %1479 = vmatprep.subr.mxu0 0.0
      %1480 = vmatpush1.msra.mxu0 0.0
      %1481 = vmatprep.subr.mxu0 0.0
      %1482 = vmatpush1.msra.mxu0 0.0
      %1483 = vmatprep.subr.mxu0 0.0
      %1484 = vmatpush1.msra.mxu0 0.0
      %1485 = vmatprep.subr.mxu0 0.0
      %1486 = vmatpush1.msra.mxu0 0.0
      %1487 = vmatprep.subr.mxu0 0.0
      %1488 = vmatpush1.msra.mxu0 0.0
      %1489 = vmatprep.subr.mxu0 0.0
      %1490 = vmatpush1.msra.mxu0 0.0
      %1491 = vmatprep.subr.mxu0 0.0
      %1492 = vmatpush1.msra.mxu0 0.0
      %1493 = vmatprep.subr.mxu0 0.0
      %1494 = vmatpush1.msra.mxu0 0.0
      %1495 = vmatprep.subr.mxu0 0.0
      %1496 = vmatpush1.msra.mxu0 0.0
      %1497 = vmatprep.subr.mxu0 0.0
      %1498 = vmatpush1.msra.mxu0 0.0
      %1499 = vmatprep.subr.mxu0 0.0
      %1500 = vmatpush1.msra.mxu0 0.0
      %1501 = vmatprep.subr.mxu0 0.0
      %1502 = vmatpush1.msra.mxu0 0.0
      %1503 = vmatprep.subr.mxu0 0.0
      %1504 = vmatpush1.msra.mxu0 0.0
      %1505 = vmatprep.subr.mxu0 0.0
      %1506 = vmatpush1.msra.mxu0 0.0
      %1507 = vmatprep.subr.mxu0 0.0
      %1508 = vmatpush1.msra.mxu0 0.0
      %1509 = vmatprep.subr.mxu0 0.0
      %1510 = vmatpush1.msra.mxu0 0.0
      %1511 = vmatprep.subr.mxu0 0.0
      %1512 = vmatpush1.msra.mxu0 0.0
      %1513 = vmatprep.subr.mxu0 0.0
      %1514 = vmatpush1.msra.mxu0 0.0
      %1515 = vmatprep.subr.mxu0 0.0
      %1516 = vmatpush1.msra.mxu0 0.0
      %1517 = vmatprep.subr.mxu0 0.0
      %1518 = vmatpush1.msra.mxu0 0.0
      %1519 = vmatprep.subr.mxu0 0.0
      %1520 = vmatpush1.msra.mxu0 0.0
      %1521 = vmatprep.subr.mxu0 0.0
      %1522 = vmatpush1.msra.mxu0 0.0
      %1523 = vmatprep.subr.mxu0 0.0
      %1524 = vmatpush1.msra.mxu0 0.0
      %1525 = vmatprep.subr.mxu0 0.0
      %1526 = vmatpush1.msra.mxu0 0.0
      %1527 = vmatprep.subr.mxu0 0.0
      %1528 = vmatpush1.msra.mxu0 0.0
      %1529 = vmatprep.mubr.f32.mxu0 0.0
      %1530 = vmatmul.mubr.f32.gmra.mrb[0].mxu0 %v1438
      %v1531 = vpop.f32.mrb[0].mxu0
      %v1532 = vadd.f32 %v1434, %v1531
      %v1533 = vpop.f32.mrb[0].mxu0
      %1534 = vmatprep.mubr.f32.mxu0 0.0
      %1535 = vmatmul.mubr.f32.gmra.mrb[0].mxu0 %v1441
      %v1536 = vpop.f32.mrb[0].mxu0
      %v1537 = vadd.f32 %v1434, %v1536
      %v1538 = vpop.f32.mrb[0].mxu0
      %1539 = vmatprep.mubr.f32.mxu0 0.0
      %1540 = vmatmul.mubr.f32.gmra.mrb[0].mxu0 %v1444
      %v1541 = vpop.f32.mrb[0].mxu0
      %v1542 = vadd.f32 %v1434, %v1541
      %v1543 = vpop.f32.mrb[0].mxu0
      %1544 = vmatprep.mubr.f32.mxu0 0.0
      %1545 = vmatmul.mubr.f32.gmra.mrb[0].mxu0 %v1447
      %v1546 = vpop.f32.mrb[0].mxu0
      %v1547 = vadd.f32 %v1434, %v1546
      %v1548 = vpop.f32.mrb[0].mxu0
      %1549 = vmatprep.mubr.f32.mxu0 0.0
      %1550 = vmatmul.mubr.f32.gmra.mrb[0].mxu0 %v1450
      %v1551 = vpop.f32.mrb[0].mxu0
      %v1552 = vadd.f32 %v1434, %v1551
      %v1553 = vpop.f32.mrb[0].mxu0
      %1554 = vmatprep.mubr.f32.mxu0 0.0
      %1555 = vmatmul.mubr.f32.gmra.mrb[0].mxu0 %v1453
      %v1556 = vpop.f32.mrb[0].mxu0
      %v1557 = vadd.f32 %v1434, %v1556
      %v1558 = vpop.f32.mrb[0].mxu0
      %1559 = vmatprep.mubr.f32.mxu0 0.0
      %1560 = vmatmul.mubr.f32.gmra.mrb[0].mxu0 %v1456
      %v1561 = vpop.f32.mrb[0].mxu0
      %v1562 = vadd.f32 %v1434, %v1561
      %v1563 = vpop.f32.mrb[0].mxu0
      %1564 = vmatprep.mubr.f32.mxu0 0.0
      %1565 = vmatmul.mubr.f32.gmra.mrb[0].mxu0 %v1459
      %v1566 = vpop.f32.mrb[0].mxu0
      %v1567 = vadd.f32 %v1434, %v1566
      %v1568 = vpop.f32.mrb[0].mxu0
      %1569 = vdwg.mxu0
      %1570 = vxpose.xlu0.b32.start [1/16] %v1532, 128
      %1571 = vxpose.xlu0.b32.cont [2/16] %v1537, 128
      %1572 = vxpose.xlu0.b32.cont [3/16] %v1542, 128
      %1573 = vxpose.xlu0.b32.cont [4/16] %v1547, 128
      %1574 = vxpose.xlu0.b32.cont [5/16] %v1552, 128
      %1575 = vxpose.xlu0.b32.cont [6/16] %v1557, 128
      %1576 = vxpose.xlu0.b32.cont [7/16] %v1562, 128
      %1577 = vxpose.xlu0.b32.cont [8/16] %v1567, 128
      %1578 = vxpose.xlu0.b32.cont [9/16] 0.0, 128
      %1579 = vxpose.xlu0.b32.cont [10/16] 0.0, 128
      %1580 = vxpose.xlu0.b32.cont [11/16] 0.0, 128
      %1581 = vxpose.xlu0.b32.cont [12/16] 0.0, 128
      %1582 = vxpose.xlu0.b32.cont [13/16] 0.0, 128
      %1583 = vxpose.xlu0.b32.cont [14/16] 0.0, 128
      %1584 = vxpose.xlu0.b32.cont [15/16] 0.0, 128
      %1585 = vxpose.xlu0.b32.end [16/16] 0.0, 128
      %v1586 = vpop.trf.xlu0
      %v1587 = vpop.trf.xlu0
      %v1588 = vpop.trf.xlu0
      %v1589 = vpop.trf.xlu0
      %v1590 = vpop.trf.xlu0
      %v1591 = vpop.trf.xlu0
      %v1592 = vpop.trf.xlu0
      %v1593 = vpop.trf.xlu0
      %v1594 = vpop.trf.xlu0
      %v1595 = vpop.trf.xlu0
      %v1596 = vpop.trf.xlu0
      %v1597 = vpop.trf.xlu0
      %v1598 = vpop.trf.xlu0
      %v1599 = vpop.trf.xlu0
      %v1600 = vpop.trf.xlu0
      %v1601 = vpop.trf.xlu0
      %vm1602 = vcmask 523264
      %v1604 = vsel %vm1602, %v1586, 0
      %1606 = vmatprep.subr.mxu0 0.0
      %1607 = vmatpush1.msra.mxu0 %v478
      %1608 = vmatprep.subr.mxu0 0.0
      %1609 = vmatpush1.msra.mxu0 %v479
      %1610 = vmatprep.subr.mxu0 0.0
      %1611 = vmatpush1.msra.mxu0 %v480
      %1612 = vmatprep.subr.mxu0 0.0
      %1613 = vmatpush1.msra.mxu0 %v481
      %1614 = vmatprep.subr.mxu0 0.0
      %1615 = vmatpush1.msra.mxu0 %v482
      %1616 = vmatprep.subr.mxu0 0.0
      %1617 = vmatpush1.msra.mxu0 %v483
      %1618 = vmatprep.subr.mxu0 0.0
      %1619 = vmatpush1.msra.mxu0 %v484
      %1620 = vmatprep.subr.mxu0 0.0
      %1621 = vmatpush1.msra.mxu0 %v485
      %1622 = vmatprep.subr.mxu0 0.0
      %1623 = vmatpush1.msra.mxu0 0.0
      %1624 = vmatprep.subr.mxu0 0.0
      %1625 = vmatpush1.msra.mxu0 0.0
      %1626 = vmatprep.subr.mxu0 0.0
      %1627 = vmatpush1.msra.mxu0 0.0
      %1628 = vmatprep.subr.mxu0 0.0
      %1629 = vmatpush1.msra.mxu0 0.0
      %1630 = vmatprep.subr.mxu0 0.0
      %1631 = vmatpush1.msra.mxu0 0.0
      %1632 = vmatprep.subr.mxu0 0.0
      %1633 = vmatpush1.msra.mxu0 0.0
      %1634 = vmatprep.subr.mxu0 0.0
      %1635 = vmatpush1.msra.mxu0 0.0
      %1636 = vmatprep.subr.mxu0 0.0
      %1637 = vmatpush1.msra.mxu0 0.0
      %1638 = vmatprep.subr.mxu0 0.0
      %1639 = vmatpush1.msra.mxu0 0.0
      %1640 = vmatprep.subr.mxu0 0.0
      %1641 = vmatpush1.msra.mxu0 0.0
      %1642 = vmatprep.subr.mxu0 0.0
      %1643 = vmatpush1.msra.mxu0 0.0
      %1644 = vmatprep.subr.mxu0 0.0
      %1645 = vmatpush1.msra.mxu0 0.0
      %1646 = vmatprep.subr.mxu0 0.0
      %1647 = vmatpush1.msra.mxu0 0.0
      %1648 = vmatprep.subr.mxu0 0.0
      %1649 = vmatpush1.msra.mxu0 0.0
      %1650 = vmatprep.subr.mxu0 0.0
      %1651 = vmatpush1.msra.mxu0 0.0
      %1652 = vmatprep.subr.mxu0 0.0
      %1653 = vmatpush1.msra.mxu0 0.0
      %1654 = vmatprep.subr.mxu0 0.0
      %1655 = vmatpush1.msra.mxu0 0.0
      %1656 = vmatprep.subr.mxu0 0.0
      %1657 = vmatpush1.msra.mxu0 0.0
      %1658 = vmatprep.subr.mxu0 0.0
      %1659 = vmatpush1.msra.mxu0 0.0
      %1660 = vmatprep.subr.mxu0 0.0
      %1661 = vmatpush1.msra.mxu0 0.0
      %1662 = vmatprep.subr.mxu0 0.0
      %1663 = vmatpush1.msra.mxu0 0.0
      %1664 = vmatprep.subr.mxu0 0.0
      %1665 = vmatpush1.msra.mxu0 0.0
      %1666 = vmatprep.subr.mxu0 0.0
      %1667 = vmatpush1.msra.mxu0 0.0
      %1668 = vmatprep.subr.mxu0 0.0
      %1669 = vmatpush1.msra.mxu0 0.0
      %1670 = vmatprep.mubr.f32.mxu0 0.0
      %1671 = vmatmul.mubr.f32.gmra.mrb[0].mxu0 %v1604
      %v1672 = vpop.f32.mrb[0].mxu0
      %v1673 = vadd.f32 0.0, %v1672
      %v1674 = vpop.f32.mrb[0].mxu0
      %1675 = vdwg.mxu0
      %vm1676 = vcmask 125952
      %1677 = vst.msk [vmem:[%s321] sm:$0xf] %vm1676, %v1673
      %s1678 = scalar_lea.vmem %s312, 2
      %v1679 = vld [vmem:[%s1678] sm:$0x3]
      %v1680 = vld [vmem:[%s316 + $0x1] sm:$0x1]
      %v1681 = vsub.f32 1.0, %v1679
      %v1682 = vlaneseq
      %v1683 = vshrl.u32 %v1682, 7
      %v1684 = vsub.s32 0, %v1683
      %v1685 = vrot.slane %v1680, %v1684
      %vm1686 = vcmp.eq.s32.totalorder %v326, %v1685
      %vm1687 = vcmp.eq.s32.totalorder %v327, %v1685
      %vm1688 = vcmp.eq.s32.totalorder %v328, %v1685
      %vm1689 = vcmp.eq.s32.totalorder %v329, %v1685
      %vm1690 = vcmp.eq.s32.totalorder %v330, %v1685
      %vm1691 = vcmp.eq.s32.totalorder %v331, %v1685
      %vm1692 = vcmp.eq.s32.totalorder %v332, %v1685
      %vm1693 = vcmp.eq.s32.totalorder %v333, %v1685
      %v1695 = vrot.slane %v1681, 1
      %v1697 = vmul.f32 %v1681, %v1695
      %v1698 = vlaneseq
      %v1699 = vshrl.u32 %v1698, 7
      %v1700 = vsub.s32 0, %v1699
      %v1701 = vrot.slane %v1697, %v1700
      %v1702 = vsel %vm1686, %v1701, 0.0
      %v1703 = vsel %vm1687, %v1701, 0.0
      %v1704 = vsel %vm1688, %v1701, 0.0
      %v1705 = vsel %vm1689, %v1701, 0.0
      %v1706 = vsel %vm1690, %v1701, 0.0
      %v1707 = vsel %vm1691, %v1701, 0.0
      %v1708 = vsel %vm1692, %v1701, 0.0
      %v1709 = vsel %vm1693, %v1701, 0.0
      %v1710 = vadd.f32 %v1702, 0.0
      %v1711 = vadd.f32 %v1703, 0.0
      %v1712 = vadd.f32 %v1704, 0.0
      %v1713 = vadd.f32 %v1705, 0.0
      %v1714 = vadd.f32 %v1706, 0.0
      %v1715 = vadd.f32 %v1707, 0.0
      %v1716 = vadd.f32 %v1708, 0.0
      %v1717 = vadd.f32 %v1709, 0.0
      %v1718 = vadd.s32 %v1680, 1
      %v1719 = vlaneseq
      %v1720 = vshrl.u32 %v1719, 7
      %v1721 = vsub.s32 0, %v1720
      %v1722 = vrot.slane %v1718, %v1721
      %vm1723 = vcmp.eq.s32.totalorder %v326, %v1722
      %vm1724 = vcmp.eq.s32.totalorder %v327, %v1722
      %vm1725 = vcmp.eq.s32.totalorder %v328, %v1722
      %vm1726 = vcmp.eq.s32.totalorder %v329, %v1722
      %vm1727 = vcmp.eq.s32.totalorder %v330, %v1722
      %vm1728 = vcmp.eq.s32.totalorder %v331, %v1722
      %vm1729 = vcmp.eq.s32.totalorder %v332, %v1722
      %vm1730 = vcmp.eq.s32.totalorder %v333, %v1722
      %v1732 = vrot.slane %v1679, 1
      %v1734 = vmul.f32 %v1681, %v1732
      %v1735 = vlaneseq
      %v1736 = vshrl.u32 %v1735, 7
      %v1737 = vsub.s32 0, %v1736
      %v1738 = vrot.slane %v1734, %v1737
      %v1739 = vsel %vm1723, %v1738, 0.0
      %v1740 = vsel %vm1724, %v1738, 0.0
      %v1741 = vsel %vm1725, %v1738, 0.0
      %v1742 = vsel %vm1726, %v1738, 0.0
      %v1743 = vsel %vm1727, %v1738, 0.0
      %v1744 = vsel %vm1728, %v1738, 0.0
      %v1745 = vsel %vm1729, %v1738, 0.0
      %v1746 = vsel %vm1730, %v1738, 0.0
      %v1747 = vadd.f32 %v1710, %v1739
      %v1748 = vadd.f32 %v1711, %v1740
      %v1749 = vadd.f32 %v1712, %v1741
      %v1750 = vadd.f32 %v1713, %v1742
      %v1751 = vadd.f32 %v1714, %v1743
      %v1752 = vadd.f32 %v1715, %v1744
      %v1753 = vadd.f32 %v1716, %v1745
      %v1754 = vadd.f32 %v1717, %v1746
      %v1755 = vadd.s32 %v1680, 8
      %v1756 = vlaneseq
      %v1757 = vshrl.u32 %v1756, 7
      %v1758 = vsub.s32 0, %v1757
      %v1759 = vrot.slane %v1755, %v1758
      %vm1760 = vcmp.eq.s32.totalorder %v326, %v1759
      %vm1761 = vcmp.eq.s32.totalorder %v327, %v1759
      %vm1762 = vcmp.eq.s32.totalorder %v328, %v1759
      %vm1763 = vcmp.eq.s32.totalorder %v329, %v1759
      %vm1764 = vcmp.eq.s32.totalorder %v330, %v1759
      %vm1765 = vcmp.eq.s32.totalorder %v331, %v1759
      %vm1766 = vcmp.eq.s32.totalorder %v332, %v1759
      %vm1767 = vcmp.eq.s32.totalorder %v333, %v1759
      %v1768 = vmul.f32 %v1679, %v1695
      %v1769 = vlaneseq
      %v1770 = vshrl.u32 %v1769, 7
      %v1771 = vsub.s32 0, %v1770
      %v1772 = vrot.slane %v1768, %v1771
      %v1773 = vsel %vm1760, %v1772, 0.0
      %v1774 = vsel %vm1761, %v1772, 0.0
      %v1775 = vsel %vm1762, %v1772, 0.0
      %v1776 = vsel %vm1763, %v1772, 0.0
      %v1777 = vsel %vm1764, %v1772, 0.0
      %v1778 = vsel %vm1765, %v1772, 0.0
      %v1779 = vsel %vm1766, %v1772, 0.0
      %v1780 = vsel %vm1767, %v1772, 0.0
      %v1781 = vadd.f32 %v1747, %v1773
      %v1782 = vadd.f32 %v1748, %v1774
      %v1783 = vadd.f32 %v1749, %v1775
      %v1784 = vadd.f32 %v1750, %v1776
      %v1785 = vadd.f32 %v1751, %v1777
      %v1786 = vadd.f32 %v1752, %v1778
      %v1787 = vadd.f32 %v1753, %v1779
      %v1788 = vadd.f32 %v1754, %v1780
      %v1789 = vadd.s32 %v1680, 9
      %v1790 = vlaneseq
      %v1791 = vshrl.u32 %v1790, 7
      %v1792 = vsub.s32 0, %v1791
      %v1793 = vrot.slane %v1789, %v1792
      %vm1794 = vcmp.eq.s32.totalorder %v326, %v1793
      %vm1795 = vcmp.eq.s32.totalorder %v327, %v1793
      %vm1796 = vcmp.eq.s32.totalorder %v328, %v1793
      %vm1797 = vcmp.eq.s32.totalorder %v329, %v1793
      %vm1798 = vcmp.eq.s32.totalorder %v330, %v1793
      %vm1799 = vcmp.eq.s32.totalorder %v331, %v1793
      %vm1800 = vcmp.eq.s32.totalorder %v332, %v1793
      %vm1801 = vcmp.eq.s32.totalorder %v333, %v1793
      %v1802 = vmul.f32 %v1679, %v1732
      %v1803 = vlaneseq
      %v1804 = vshrl.u32 %v1803, 7
      %v1805 = vsub.s32 0, %v1804
      %v1806 = vrot.slane %v1802, %v1805
      %v1807 = vsel %vm1794, %v1806, 0.0
      %v1808 = vsel %vm1795, %v1806, 0.0
      %v1809 = vsel %vm1796, %v1806, 0.0
      %v1810 = vsel %vm1797, %v1806, 0.0
      %v1811 = vsel %vm1798, %v1806, 0.0
      %v1812 = vsel %vm1799, %v1806, 0.0
      %v1813 = vsel %vm1800, %v1806, 0.0
      %v1814 = vsel %vm1801, %v1806, 0.0
      %v1815 = vadd.f32 %v1781, %v1807
      %v1816 = vadd.f32 %v1782, %v1808
      %v1817 = vadd.f32 %v1783, %v1809
      %v1818 = vadd.f32 %v1784, %v1810
      %v1819 = vadd.f32 %v1785, %v1811
      %v1820 = vadd.f32 %v1786, %v1812
      %v1821 = vadd.f32 %v1787, %v1813
      %v1822 = vadd.f32 %v1788, %v1814
      %s1823 = scalar_lea.vmem %s307, 4
      %v1824 = vld [vmem:[%s1823] sm:$0xf]
      %v1826 = vsel %vm487, %v1815, 0
      %v1829 = vsel %vm487, %v1816, 0
      %v1832 = vsel %vm487, %v1817, 0
      %v1835 = vsel %vm487, %v1818, 0
      %v1838 = vsel %vm487, %v1819, 0
      %v1841 = vsel %vm487, %v1820, 0
      %v1844 = vsel %vm487, %v1821, 0
      %v1847 = vsel %vm487, %v1822, 0
      %v1850 = vsel %vm487, %v1824, 0
      %1852 = vmatprep.subr.mxu0 0.0
      %1853 = vmatpush1.xpose.msra.mxu0 %v1850
      %1854 = vmatprep.subr.mxu0 0.0
      %1855 = vmatpush1.xpose.msra.mxu0 0.0
      %1856 = vmatprep.subr.mxu0 0.0
      %1857 = vmatpush1.xpose.msra.mxu0 0.0
      %1858 = vmatprep.subr.mxu0 0.0
      %1859 = vmatpush1.xpose.msra.mxu0 0.0
      %1860 = vmatprep.subr.mxu0 0.0
      %1861 = vmatpush1.xpose.msra.mxu0 0.0
      %1862 = vmatprep.subr.mxu0 0.0
      %1863 = vmatpush1.xpose.msra.mxu0 0.0
      %1864 = vmatprep.subr.mxu0 0.0
      %1865 = vmatpush1.xpose.msra.mxu0 0.0
      %1866 = vmatprep.subr.mxu0 0.0
      %1867 = vmatpush1.xpose.msra.mxu0 0.0
      %1868 = vmatprep.subr.mxu0 0.0
      %1869 = vmatpush1.xpose.msra.mxu0 0.0
      %1870 = vmatprep.subr.mxu0 0.0
      %1871 = vmatpush1.xpose.msra.mxu0 0.0
      %1872 = vmatprep.subr.mxu0 0.0
      %1873 = vmatpush1.xpose.msra.mxu0 0.0
      %1874 = vmatprep.subr.mxu0 0.0
      %1875 = vmatpush1.xpose.msra.mxu0 0.0
      %1876 = vmatprep.subr.mxu0 0.0
      %1877 = vmatpush1.xpose.msra.mxu0 0.0
      %1878 = vmatprep.subr.mxu0 0.0
      %1879 = vmatpush1.xpose.msra.mxu0 0.0
      %1880 = vmatprep.subr.mxu0 0.0
      %1881 = vmatpush1.xpose.msra.mxu0 0.0
      %1882 = vmatprep.subr.mxu0 0.0
      %1883 = vmatpush1.xpose.msra.mxu0 0.0
      %1884 = vmatprep.subr.mxu0 0.0
      %1885 = vmatpush1.xpose.msra.mxu0 0.0
      %1886 = vmatprep.subr.mxu0 0.0
      %1887 = vmatpush1.xpose.msra.mxu0 0.0
      %1888 = vmatprep.subr.mxu0 0.0
      %1889 = vmatpush1.xpose.msra.mxu0 0.0
      %1890 = vmatprep.subr.mxu0 0.0
      %1891 = vmatpush1.xpose.msra.mxu0 0.0
      %1892 = vmatprep.subr.mxu0 0.0
      %1893 = vmatpush1.xpose.msra.mxu0 0.0
      %1894 = vmatprep.subr.mxu0 0.0
      %1895 = vmatpush1.xpose.msra.mxu0 0.0
      %1896 = vmatprep.subr.mxu0 0.0
      %1897 = vmatpush1.xpose.msra.mxu0 0.0
      %1898 = vmatprep.subr.mxu0 0.0
      %1899 = vmatpush1.xpose.msra.mxu0 0.0
      %1900 = vmatprep.subr.mxu0 0.0
      %1901 = vmatpush1.xpose.msra.mxu0 0.0
      %1902 = vmatprep.subr.mxu0 0.0
      %1903 = vmatpush1.xpose.msra.mxu0 0.0
      %1904 = vmatprep.subr.mxu0 0.0
      %1905 = vmatpush1.xpose.msra.mxu0 0.0
      %1906 = vmatprep.subr.mxu0 0.0
      %1907 = vmatpush1.xpose.msra.mxu0 0.0
      %1908 = vmatprep.subr.mxu0 0.0
      %1909 = vmatpush1.xpose.msra.mxu0 0.0
      %1910 = vmatprep.subr.mxu0 0.0
      %1911 = vmatpush1.xpose.msra.mxu0 0.0
      %1912 = vmatprep.subr.mxu0 0.0
      %1913 = vmatpush1.xpose.msra.mxu0 0.0
      %1914 = vmatprep.subr.mxu0 0.0
      %1915 = vmatpush1.xpose.msra.mxu0 0.0
      %1916 = vmatprep.mubr.f32.mxu0 0.0
      %1917 = vmatmul.mubr.f32.gmra.mrb[0].mxu0 %v1826
      %v1918 = vpop.f32.mrb[0].mxu0
      %v1919 = vadd.f32 0.0, %v1918
      %v1920 = vpop.f32.mrb[0].mxu0
      %1921 = vmatprep.mubr.f32.mxu0 0.0
      %1922 = vmatmul.mubr.f32.gmra.mrb[0].mxu0 %v1829
      %v1923 = vpop.f32.mrb[0].mxu0
      %v1924 = vadd.f32 0.0, %v1923
      %v1925 = vpop.f32.mrb[0].mxu0
      %1926 = vmatprep.mubr.f32.mxu0 0.0
      %1927 = vmatmul.mubr.f32.gmra.mrb[0].mxu0 %v1832
      %v1928 = vpop.f32.mrb[0].mxu0
      %v1929 = vadd.f32 0.0, %v1928
      %v1930 = vpop.f32.mrb[0].mxu0
      %1931 = vmatprep.mubr.f32.mxu0 0.0
      %1932 = vmatmul.mubr.f32.gmra.mrb[0].mxu0 %v1835
      %v1933 = vpop.f32.mrb[0].mxu0
      %v1934 = vadd.f32 0.0, %v1933
      %v1935 = vpop.f32.mrb[0].mxu0
      %1936 = vmatprep.mubr.f32.mxu0 0.0
      %1937 = vmatmul.mubr.f32.gmra.mrb[0].mxu0 %v1838
      %v1938 = vpop.f32.mrb[0].mxu0
      %v1939 = vadd.f32 0.0, %v1938
      %v1940 = vpop.f32.mrb[0].mxu0
      %1941 = vmatprep.mubr.f32.mxu0 0.0
      %1942 = vmatmul.mubr.f32.gmra.mrb[0].mxu0 %v1841
      %v1943 = vpop.f32.mrb[0].mxu0
      %v1944 = vadd.f32 0.0, %v1943
      %v1945 = vpop.f32.mrb[0].mxu0
      %1946 = vmatprep.mubr.f32.mxu0 0.0
      %1947 = vmatmul.mubr.f32.gmra.mrb[0].mxu0 %v1844
      %v1948 = vpop.f32.mrb[0].mxu0
      %v1949 = vadd.f32 0.0, %v1948
      %v1950 = vpop.f32.mrb[0].mxu0
      %1951 = vmatprep.mubr.f32.mxu0 0.0
      %1952 = vmatmul.mubr.f32.gmra.mrb[0].mxu0 %v1847
      %v1953 = vpop.f32.mrb[0].mxu0
      %v1954 = vadd.f32 0.0, %v1953
      %v1955 = vpop.f32.mrb[0].mxu0
      %1956 = vdwg.mxu0
      %v1957 = vand.u32 2147483647, %v1919
      %v1958 = vand.u32 2147483647, %v1924
      %v1959 = vand.u32 2147483647, %v1929
      %v1960 = vand.u32 2147483647, %v1934
      %v1961 = vand.u32 2147483647, %v1939
      %v1962 = vand.u32 2147483647, %v1944
      %v1963 = vand.u32 2147483647, %v1949
      %v1964 = vand.u32 2147483647, %v1954
      %vm1965 = vcmp.gt.f32.partialorder %v1957, 1e-09
      %vm1966 = vcmp.gt.f32.partialorder %v1958, 1e-09
      %vm1967 = vcmp.gt.f32.partialorder %v1959, 1e-09
      %vm1968 = vcmp.gt.f32.partialorder %v1960, 1e-09
      %vm1969 = vcmp.gt.f32.partialorder %v1961, 1e-09
      %vm1970 = vcmp.gt.f32.partialorder %v1962, 1e-09
      %vm1971 = vcmp.gt.f32.partialorder %v1963, 1e-09
      %vm1972 = vcmp.gt.f32.partialorder %v1964, 1e-09
      %v1973 = vsel %vm1965, 1, 0
      %v1974 = vsel %vm1966, 1, 0
      %v1975 = vsel %vm1967, 1, 0
      %v1976 = vsel %vm1968, 1, 0
      %v1977 = vsel %vm1969, 1, 0
      %v1978 = vsel %vm1970, 1, 0
      %v1979 = vsel %vm1971, 1, 0
      %v1980 = vsel %vm1972, 1, 0
      %v1981 = vcvt.s32.f32 %v1973
      %v1982 = vcvt.s32.f32 %v1974
      %v1983 = vcvt.s32.f32 %v1975
      %v1984 = vcvt.s32.f32 %v1976
      %v1985 = vcvt.s32.f32 %v1977
      %v1986 = vcvt.s32.f32 %v1978
      %v1987 = vcvt.s32.f32 %v1979
      %v1988 = vcvt.s32.f32 %v1980
      %v1989 = vsel %vm652, %v1981, 0.0
      %v1990 = vsel %vm652, %v1982, 0.0
      %v1991 = vadd.f32 %v1989, %v1990
      %v1992 = vsel %vm652, %v1983, 0.0
      %v1993 = vadd.f32 %v1991, %v1992
      %v1994 = vsel %vm652, %v1984, 0.0
      %v1995 = vadd.f32 %v1993, %v1994
      %v1996 = vsel %vm652, %v1985, 0.0
      %v1997 = vadd.f32 %v1995, %v1996
      %v1998 = vsel %vm652, %v1986, 0.0
      %v1999 = vadd.f32 %v1997, %v1998
      %v2000 = vsel %vm652, %v1987, 0.0
      %v2001 = vadd.f32 %v1999, %v2000
      %v2002 = vsel %vm652, %v1988, 0.0
      %v2003 = vadd.f32 %v2001, %v2002
      %2004 = vadd.xlane.f32.xlu0 %v2003
      %v2005 = vpop.xlane.xlu0 %2004
      %v2006 = vrot.slane %v2005, 4
      %v2007 = vadd.f32 %v2005, %v2006
      %v2008 = vrot.slane %v2007, 2
      %v2009 = vadd.f32 %v2007, %v2008
      %v2010 = vrot.slane %v2009, 1
      %v2011 = vadd.f32 %v2009, %v2010
      %s2012 = vtos %v2011
      %s2013 = sadd.f32 %s677, %s2012
      %v2014 = vrot.slane %v1919, 7
      %v2015 = vrot.slane %v1924, 7
      %v2016 = vrot.slane %v1929, 7
      %v2017 = vrot.slane %v1934, 7
      %v2018 = vrot.slane %v1939, 7
      %v2019 = vrot.slane %v1944, 7
      %v2020 = vrot.slane %v1949, 7
      %v2021 = vrot.slane %v1954, 7
      %v2022 = vsel %vm686, %v2020, %v2021
      %v2023 = vsel %vm686, %v2019, %v2020
      %v2024 = vsel %vm686, %v2018, %v2019
      %v2025 = vsel %vm686, %v2017, %v2018
      %v2026 = vsel %vm686, %v2016, %v2017
      %v2027 = vsel %vm686, %v2015, %v2016
      %v2028 = vsel %vm686, %v2014, %v2015
      %v2029 = vsel %vm686, %v2021, %v2014
      %v2030 = vmul.f32 %v2022, %v698
      %v2031 = vmul.f32 %v2029, %v703
      %v2032 = vmul.f32 %v2028, %v708
      %v2033 = vmul.f32 %v2027, %v713
      %v2034 = vmul.f32 %v2026, %v718
      %v2035 = vmul.f32 %v2025, %v723
      %v2036 = vmul.f32 %v2024, %v728
      %v2037 = vmul.f32 %v2023, %v733
      %2038 = vst.msk [vmem:[#allocation2] sm:$0xff] %vm652, %v2030
      %2039 = vst.msk [vmem:[#allocation2 + $0x8] sm:$0xff] %vm652, %v2031
      %2040 = vst.msk [vmem:[#allocation2 + $0x10] sm:$0xff] %vm652, %v2032
      %2041 = vst.msk [vmem:[#allocation2 + $0x18] sm:$0xff] %vm652, %v2033
      %2042 = vst.msk [vmem:[#allocation2 + $0x20] sm:$0xff] %vm652, %v2034
      %2043 = vst.msk [vmem:[#allocation2 + $0x28] sm:$0xff] %vm652, %v2035
      %2044 = vst.msk [vmem:[#allocation2 + $0x30] sm:$0xff] %vm652, %v2036
      %2045 = vst.msk [vmem:[#allocation2 + $0x38] sm:$0xff] %vm652, %v2037
      %v2046 = vmul.f32 %v1954, %v753
      %v2047 = vmul.f32 %v1919, %v757
      %v2048 = vmul.f32 %v1924, %v761
      %v2049 = vmul.f32 %v1929, %v765
      %v2050 = vmul.f32 %v1934, %v769
      %v2051 = vmul.f32 %v1939, %v773
      %v2052 = vmul.f32 %v1944, %v777
      %v2053 = vmul.f32 %v1949, %v781
      %2062 = vrot.lane.b32.xlu0 %v2046, 4
      %v2063 = vpop.permute.xlu0 %2062
      %2064 = vrot.lane.b32.xlu0 %v2047, 4
      %v2065 = vpop.permute.xlu0 %2064
      %2066 = vrot.lane.b32.xlu0 %v2048, 4
      %v2067 = vpop.permute.xlu0 %2066
      %2068 = vrot.lane.b32.xlu0 %v2049, 4
      %v2069 = vpop.permute.xlu0 %2068
      %2070 = vrot.lane.b32.xlu0 %v2050, 4
      %v2071 = vpop.permute.xlu0 %2070
      %2072 = vrot.lane.b32.xlu0 %v2051, 4
      %v2073 = vpop.permute.xlu0 %2072
      %2074 = vrot.lane.b32.xlu0 %v2052, 4
      %v2075 = vpop.permute.xlu0 %2074
      %2076 = vrot.lane.b32.xlu0 %v2053, 4
      %v2077 = vpop.permute.xlu0 %2076
      %2086 = vst.msk [vmem:[#allocation2] sm:$0xff] %vm823, %v2063
      %2087 = vst.msk [vmem:[#allocation2 + $0x8] sm:$0xff] %vm823, %v2065
      %2088 = vst.msk [vmem:[#allocation2 + $0x10] sm:$0xff] %vm823, %v2067
      %2089 = vst.msk [vmem:[#allocation2 + $0x18] sm:$0xff] %vm823, %v2069
      %2090 = vst.msk [vmem:[#allocation2 + $0x20] sm:$0xff] %vm823, %v2071
      %2091 = vst.msk [vmem:[#allocation2 + $0x28] sm:$0xff] %vm823, %v2073
      %2092 = vst.msk [vmem:[#allocation2 + $0x30] sm:$0xff] %vm823, %v2075
      %2093 = vst.msk [vmem:[#allocation2 + $0x38] sm:$0xff] %vm823, %v2077
      %v2094 = vrot.slane %v1919, 1
      %v2095 = vrot.slane %v1924, 1
      %v2096 = vrot.slane %v1929, 1
      %v2097 = vrot.slane %v1934, 1
      %v2098 = vrot.slane %v1939, 1
      %v2099 = vrot.slane %v1944, 1
      %v2100 = vrot.slane %v1949, 1
      %v2101 = vrot.slane %v1954, 1
      %v2102 = vsel %vm840, %v2100, %v2101
      %v2103 = vsel %vm840, %v2099, %v2100
      %v2104 = vsel %vm840, %v2098, %v2099
      %v2105 = vsel %vm840, %v2097, %v2098
      %v2106 = vsel %vm840, %v2096, %v2097
      %v2107 = vsel %vm840, %v2095, %v2096
      %v2108 = vsel %vm840, %v2094, %v2095
      %v2109 = vsel %vm840, %v2101, %v2094
      %v2110 = vmul.f32 %v2109, %v851
      %v2111 = vmul.f32 %v2108, %v855
      %v2112 = vmul.f32 %v2107, %v859
      %v2113 = vmul.f32 %v2106, %v863
      %v2114 = vmul.f32 %v2105, %v867
      %v2115 = vmul.f32 %v2104, %v871
      %v2116 = vmul.f32 %v2103, %v875
      %v2117 = vmul.f32 %v2102, %v879
      %2126 = vrot.lane.b32.xlu0 %v2110, 8
      %v2127 = vpop.permute.xlu0 %2126
      %2128 = vrot.lane.b32.xlu0 %v2111, 8
      %v2129 = vpop.permute.xlu0 %2128
      %2130 = vrot.lane.b32.xlu0 %v2112, 8
      %v2131 = vpop.permute.xlu0 %2130
      %2132 = vrot.lane.b32.xlu0 %v2113, 8
      %v2133 = vpop.permute.xlu0 %2132
      %2134 = vrot.lane.b32.xlu0 %v2114, 8
      %v2135 = vpop.permute.xlu0 %2134
      %2136 = vrot.lane.b32.xlu0 %v2115, 8
      %v2137 = vpop.permute.xlu0 %2136
      %2138 = vrot.lane.b32.xlu0 %v2116, 8
      %v2139 = vpop.permute.xlu0 %2138
      %2140 = vrot.lane.b32.xlu0 %v2117, 8
      %v2141 = vpop.permute.xlu0 %2140
      %2150 = vst.msk [vmem:[#allocation2] sm:$0xff] %vm921, %v2127
      %2151 = vst.msk [vmem:[#allocation2 + $0x8] sm:$0xff] %vm921, %v2129
      %2152 = vst.msk [vmem:[#allocation2 + $0x10] sm:$0xff] %vm921, %v2131
      %2153 = vst.msk [vmem:[#allocation2 + $0x18] sm:$0xff] %vm921, %v2133
      %2154 = vst.msk [vmem:[#allocation2 + $0x20] sm:$0xff] %vm921, %v2135
      %2155 = vst.msk [vmem:[#allocation2 + $0x28] sm:$0xff] %vm921, %v2137
      %2156 = vst.msk [vmem:[#allocation2 + $0x30] sm:$0xff] %vm921, %v2139
      %2157 = vst.msk [vmem:[#allocation2 + $0x38] sm:$0xff] %vm921, %v2141
      %v2158 = vmul.f32 %v2029, %v932
      %v2159 = vmul.f32 %v2028, %v936
      %v2160 = vmul.f32 %v2027, %v940
      %v2161 = vmul.f32 %v2026, %v944
      %v2162 = vmul.f32 %v2025, %v948
      %v2163 = vmul.f32 %v2024, %v952
      %v2164 = vmul.f32 %v2023, %v956
      %v2165 = vmul.f32 %v2022, %v960
      %2174 = vrot.lane.b32.xlu0 %v2158, 12
      %v2175 = vpop.permute.xlu0 %2174
      %2176 = vrot.lane.b32.xlu0 %v2159, 12
      %v2177 = vpop.permute.xlu0 %2176
      %2178 = vrot.lane.b32.xlu0 %v2160, 12
      %v2179 = vpop.permute.xlu0 %2178
      %2180 = vrot.lane.b32.xlu0 %v2161, 12
      %v2181 = vpop.permute.xlu0 %2180
      %2182 = vrot.lane.b32.xlu0 %v2162, 12
      %v2183 = vpop.permute.xlu0 %2182
      %2184 = vrot.lane.b32.xlu0 %v2163, 12
      %v2185 = vpop.permute.xlu0 %2184
      %2186 = vrot.lane.b32.xlu0 %v2164, 12
      %v2187 = vpop.permute.xlu0 %2186
      %2188 = vrot.lane.b32.xlu0 %v2165, 12
      %v2189 = vpop.permute.xlu0 %2188
      %2198 = vst.msk [vmem:[#allocation2] sm:$0xff] %vm1002, %v2175
      %2199 = vst.msk [vmem:[#allocation2 + $0x8] sm:$0xff] %vm1002, %v2177
      %2200 = vst.msk [vmem:[#allocation2 + $0x10] sm:$0xff] %vm1002, %v2179
      %2201 = vst.msk [vmem:[#allocation2 + $0x18] sm:$0xff] %vm1002, %v2181
      %2202 = vst.msk [vmem:[#allocation2 + $0x20] sm:$0xff] %vm1002, %v2183
      %2203 = vst.msk [vmem:[#allocation2 + $0x28] sm:$0xff] %vm1002, %v2185
      %2204 = vst.msk [vmem:[#allocation2 + $0x30] sm:$0xff] %vm1002, %v2187
      %2205 = vst.msk [vmem:[#allocation2 + $0x38] sm:$0xff] %vm1002, %v2189
      %v2206 = vmul.f32 %v1919, %v1013
      %v2207 = vmul.f32 %v1924, %v1017
      %v2208 = vmul.f32 %v1929, %v1021
      %v2209 = vmul.f32 %v1934, %v1025
      %v2210 = vmul.f32 %v1939, %v1029
      %v2211 = vmul.f32 %v1944, %v1033
      %v2212 = vmul.f32 %v1949, %v1037
      %v2213 = vmul.f32 %v1954, %v1041
      %2222 = vrot.lane.b32.xlu0 %v2206, 16
      %v2223 = vpop.permute.xlu0 %2222
      %2224 = vrot.lane.b32.xlu0 %v2207, 16
      %v2225 = vpop.permute.xlu0 %2224
      %2226 = vrot.lane.b32.xlu0 %v2208, 16
      %v2227 = vpop.permute.xlu0 %2226
      %2228 = vrot.lane.b32.xlu0 %v2209, 16
      %v2229 = vpop.permute.xlu0 %2228
      %2230 = vrot.lane.b32.xlu0 %v2210, 16
      %v2231 = vpop.permute.xlu0 %2230
      %2232 = vrot.lane.b32.xlu0 %v2211, 16
      %v2233 = vpop.permute.xlu0 %2232
      %2234 = vrot.lane.b32.xlu0 %v2212, 16
      %v2235 = vpop.permute.xlu0 %2234
      %2236 = vrot.lane.b32.xlu0 %v2213, 16
      %v2237 = vpop.permute.xlu0 %2236
      %2246 = vst.msk [vmem:[#allocation2] sm:$0xff] %vm1083, %v2223
      %2247 = vst.msk [vmem:[#allocation2 + $0x8] sm:$0xff] %vm1083, %v2225
      %2248 = vst.msk [vmem:[#allocation2 + $0x10] sm:$0xff] %vm1083, %v2227
      %2249 = vst.msk [vmem:[#allocation2 + $0x18] sm:$0xff] %vm1083, %v2229
      %2250 = vst.msk [vmem:[#allocation2 + $0x20] sm:$0xff] %vm1083, %v2231
      %2251 = vst.msk [vmem:[#allocation2 + $0x28] sm:$0xff] %vm1083, %v2233
      %2252 = vst.msk [vmem:[#allocation2 + $0x30] sm:$0xff] %vm1083, %v2235
      %2253 = vst.msk [vmem:[#allocation2 + $0x38] sm:$0xff] %vm1083, %v2237
      %v2254 = vmul.f32 %v2108, %v1094
      %v2255 = vmul.f32 %v2107, %v1098
      %v2256 = vmul.f32 %v2106, %v1102
      %v2257 = vmul.f32 %v2105, %v1106
      %v2258 = vmul.f32 %v2104, %v1110
      %v2259 = vmul.f32 %v2103, %v1114
      %v2260 = vmul.f32 %v2102, %v1118
      %v2261 = vmul.f32 %v2109, %v1122
      %2270 = vrot.lane.b32.xlu0 %v2254, 20
      %v2271 = vpop.permute.xlu0 %2270
      %2272 = vrot.lane.b32.xlu0 %v2255, 20
      %v2273 = vpop.permute.xlu0 %2272
      %2274 = vrot.lane.b32.xlu0 %v2256, 20
      %v2275 = vpop.permute.xlu0 %2274
      %2276 = vrot.lane.b32.xlu0 %v2257, 20
      %v2277 = vpop.permute.xlu0 %2276
      %2278 = vrot.lane.b32.xlu0 %v2258, 20
      %v2279 = vpop.permute.xlu0 %2278
      %2280 = vrot.lane.b32.xlu0 %v2259, 20
      %v2281 = vpop.permute.xlu0 %2280
      %2282 = vrot.lane.b32.xlu0 %v2260, 20
      %v2283 = vpop.permute.xlu0 %2282
      %2284 = vrot.lane.b32.xlu0 %v2261, 20
      %v2285 = vpop.permute.xlu0 %2284
      %2294 = vst.msk [vmem:[#allocation2] sm:$0xff] %vm1164, %v2271
      %2295 = vst.msk [vmem:[#allocation2 + $0x8] sm:$0xff] %vm1164, %v2273
      %2296 = vst.msk [vmem:[#allocation2 + $0x10] sm:$0xff] %vm1164, %v2275
      %2297 = vst.msk [vmem:[#allocation2 + $0x18] sm:$0xff] %vm1164, %v2277
      %2298 = vst.msk [vmem:[#allocation2 + $0x20] sm:$0xff] %vm1164, %v2279
      %2299 = vst.msk [vmem:[#allocation2 + $0x28] sm:$0xff] %vm1164, %v2281
      %2300 = vst.msk [vmem:[#allocation2 + $0x30] sm:$0xff] %vm1164, %v2283
      %2301 = vst.msk [vmem:[#allocation2 + $0x38] sm:$0xff] %vm1164, %v2285
      %v2302 = vmul.f32 %v2028, %v1175
      %v2303 = vmul.f32 %v2027, %v1179
      %v2304 = vmul.f32 %v2026, %v1183
      %v2305 = vmul.f32 %v2025, %v1187
      %v2306 = vmul.f32 %v2024, %v1191
      %v2307 = vmul.f32 %v2023, %v1195
      %v2308 = vmul.f32 %v2022, %v1199
      %v2309 = vmul.f32 %v2029, %v1203
      %2318 = vrot.lane.b32.xlu0 %v2302, 24
      %v2319 = vpop.permute.xlu0 %2318
      %2320 = vrot.lane.b32.xlu0 %v2303, 24
      %v2321 = vpop.permute.xlu0 %2320
      %2322 = vrot.lane.b32.xlu0 %v2304, 24
      %v2323 = vpop.permute.xlu0 %2322
      %2324 = vrot.lane.b32.xlu0 %v2305, 24
      %v2325 = vpop.permute.xlu0 %2324
      %2326 = vrot.lane.b32.xlu0 %v2306, 24
      %v2327 = vpop.permute.xlu0 %2326
      %2328 = vrot.lane.b32.xlu0 %v2307, 24
      %v2329 = vpop.permute.xlu0 %2328
      %2330 = vrot.lane.b32.xlu0 %v2308, 24
      %v2331 = vpop.permute.xlu0 %2330
      %2332 = vrot.lane.b32.xlu0 %v2309, 24
      %v2333 = vpop.permute.xlu0 %2332
      %2342 = vst.msk [vmem:[#allocation2] sm:$0xff] %vm1245, %v2319
      %2343 = vst.msk [vmem:[#allocation2 + $0x8] sm:$0xff] %vm1245, %v2321
      %2344 = vst.msk [vmem:[#allocation2 + $0x10] sm:$0xff] %vm1245, %v2323
      %2345 = vst.msk [vmem:[#allocation2 + $0x18] sm:$0xff] %vm1245, %v2325
      %2346 = vst.msk [vmem:[#allocation2 + $0x20] sm:$0xff] %vm1245, %v2327
      %2347 = vst.msk [vmem:[#allocation2 + $0x28] sm:$0xff] %vm1245, %v2329
      %2348 = vst.msk [vmem:[#allocation2 + $0x30] sm:$0xff] %vm1245, %v2331
      %2349 = vst.msk [vmem:[#allocation2 + $0x38] sm:$0xff] %vm1245, %v2333
      %v2350 = vmul.f32 %v1924, %v1256
      %v2351 = vmul.f32 %v1929, %v1260
      %v2352 = vmul.f32 %v1934, %v1264
      %v2353 = vmul.f32 %v1939, %v1268
      %v2354 = vmul.f32 %v1944, %v1272
      %v2355 = vmul.f32 %v1949, %v1276
      %v2356 = vmul.f32 %v1954, %v1280
      %v2357 = vmul.f32 %v1919, %v1284
      %2366 = vrot.lane.b32.xlu0 %v2350, 28
      %v2367 = vpop.permute.xlu0 %2366
      %2368 = vrot.lane.b32.xlu0 %v2351, 28
      %v2369 = vpop.permute.xlu0 %2368
      %2370 = vrot.lane.b32.xlu0 %v2352, 28
      %v2371 = vpop.permute.xlu0 %2370
      %2372 = vrot.lane.b32.xlu0 %v2353, 28
      %v2373 = vpop.permute.xlu0 %2372
      %2374 = vrot.lane.b32.xlu0 %v2354, 28
      %v2375 = vpop.permute.xlu0 %2374
      %2376 = vrot.lane.b32.xlu0 %v2355, 28
      %v2377 = vpop.permute.xlu0 %2376
      %2378 = vrot.lane.b32.xlu0 %v2356, 28
      %v2379 = vpop.permute.xlu0 %2378
      %2380 = vrot.lane.b32.xlu0 %v2357, 28
      %v2381 = vpop.permute.xlu0 %2380
      %2390 = vst.msk [vmem:[#allocation2] sm:$0xff] %vm1326, %v2367
      %2391 = vst.msk [vmem:[#allocation2 + $0x8] sm:$0xff] %vm1326, %v2369
      %2392 = vst.msk [vmem:[#allocation2 + $0x10] sm:$0xff] %vm1326, %v2371
      %2393 = vst.msk [vmem:[#allocation2 + $0x18] sm:$0xff] %vm1326, %v2373
      %2394 = vst.msk [vmem:[#allocation2 + $0x20] sm:$0xff] %vm1326, %v2375
      %2395 = vst.msk [vmem:[#allocation2 + $0x28] sm:$0xff] %vm1326, %v2377
      %2396 = vst.msk [vmem:[#allocation2 + $0x30] sm:$0xff] %vm1326, %v2379
      %2397 = vst.msk [vmem:[#allocation2 + $0x38] sm:$0xff] %vm1326, %v2381
      %v2398 = vmul.f32 %v2107, %v1337
      %v2399 = vmul.f32 %v2106, %v1341
      %v2400 = vmul.f32 %v2105, %v1345
      %v2401 = vmul.f32 %v2104, %v1349
      %v2402 = vmul.f32 %v2103, %v1353
      %v2403 = vmul.f32 %v2102, %v1357
      %v2404 = vmul.f32 %v2109, %v1361
      %v2405 = vmul.f32 %v2108, %v1365
      %2414 = vrot.lane.b32.xlu0 %v2398, 32
      %v2415 = vpop.permute.xlu0 %2414
      %2416 = vrot.lane.b32.xlu0 %v2399, 32
      %v2417 = vpop.permute.xlu0 %2416
      %2418 = vrot.lane.b32.xlu0 %v2400, 32
      %v2419 = vpop.permute.xlu0 %2418
      %2420 = vrot.lane.b32.xlu0 %v2401, 32
      %v2421 = vpop.permute.xlu0 %2420
      %2422 = vrot.lane.b32.xlu0 %v2402, 32
      %v2423 = vpop.permute.xlu0 %2422
      %2424 = vrot.lane.b32.xlu0 %v2403, 32
      %v2425 = vpop.permute.xlu0 %2424
      %2426 = vrot.lane.b32.xlu0 %v2404, 32
      %v2427 = vpop.permute.xlu0 %2426
      %2428 = vrot.lane.b32.xlu0 %v2405, 32
      %v2429 = vpop.permute.xlu0 %2428
      %2438 = vst.msk [vmem:[#allocation2] sm:$0xff] %vm1407, %v2415
      %2439 = vst.msk [vmem:[#allocation2 + $0x8] sm:$0xff] %vm1407, %v2417
      %2440 = vst.msk [vmem:[#allocation2 + $0x10] sm:$0xff] %vm1407, %v2419
      %2441 = vst.msk [vmem:[#allocation2 + $0x18] sm:$0xff] %vm1407, %v2421
      %2442 = vst.msk [vmem:[#allocation2 + $0x20] sm:$0xff] %vm1407, %v2423
      %2443 = vst.msk [vmem:[#allocation2 + $0x28] sm:$0xff] %vm1407, %v2425
      %2444 = vst.msk [vmem:[#allocation2 + $0x30] sm:$0xff] %vm1407, %v2427
      %2445 = vst.msk [vmem:[#allocation2 + $0x38] sm:$0xff] %vm1407, %v2429
      %v2446 = vld [vmem:[#allocation2] sm:$0xff]
      %v2447 = vld [vmem:[#allocation2 + $0x8] sm:$0xff]
      %v2448 = vld [vmem:[#allocation2 + $0x10] sm:$0xff]
      %v2449 = vld [vmem:[#allocation2 + $0x18] sm:$0xff]
      %v2450 = vld [vmem:[#allocation2 + $0x20] sm:$0xff]
      %v2451 = vld [vmem:[#allocation2 + $0x28] sm:$0xff]
      %v2452 = vld [vmem:[#allocation2 + $0x30] sm:$0xff]
      %v2453 = vld [vmem:[#allocation2 + $0x38] sm:$0xff]
      %s2454 = scalar_lea.vmem %s3, 40
      %v2455 = vld [vmem:[%s2454] sm:$0xff]
      %v2456 = vld [vmem:[%s2454 + $0x8] sm:$0xff]
      %v2457 = vld [vmem:[%s2454 + $0x10] sm:$0xff]
      %v2458 = vld [vmem:[%s2454 + $0x18] sm:$0xff]
      %v2459 = vld [vmem:[%s2454 + $0x20] sm:$0xf]
      %s2460 = scalar_lea.vmem %s4, 1
      %v2461 = vld [vmem:[%s2460] sm:$0x1]
      %v2463 = vlaneseq
      %v2464 = vshrl.u32 %v2463, 7
      %v2465 = vsub.s32 0, %v2464
      %v2466 = vrot.slane %v2461, %v2465
      %v2469 = vsel %vm1436, %v2446, 0
      %v2472 = vsel %vm1436, %v2447, 0
      %v2475 = vsel %vm1436, %v2448, 0
      %v2478 = vsel %vm1436, %v2449, 0
      %v2481 = vsel %vm1436, %v2450, 0
      %v2484 = vsel %vm1436, %v2451, 0
      %v2487 = vsel %vm1436, %v2452, 0
      %v2490 = vsel %vm1436, %v2453, 0
      %v2493 = vsel %vm1461, %v2459, 0
      %2495 = vmatprep.subr.mxu0 0.0
      %2496 = vmatpush1.msra.mxu0 %v2455
      %2497 = vmatprep.subr.mxu0 0.0
      %2498 = vmatpush1.msra.mxu0 %v2456
      %2499 = vmatprep.subr.mxu0 0.0
      %2500 = vmatpush1.msra.mxu0 %v2457
      %2501 = vmatprep.subr.mxu0 0.0
      %2502 = vmatpush1.msra.mxu0 %v2458
      %2503 = vmatprep.subr.mxu0 0.0
      %2504 = vmatpush1.msra.mxu0 %v2493
      %2505 = vmatprep.subr.mxu0 0.0
      %2506 = vmatpush1.msra.mxu0 0.0
      %2507 = vmatprep.subr.mxu0 0.0
      %2508 = vmatpush1.msra.mxu0 0.0
      %2509 = vmatprep.subr.mxu0 0.0
      %2510 = vmatpush1.msra.mxu0 0.0
      %2511 = vmatprep.subr.mxu0 0.0
      %2512 = vmatpush1.msra.mxu0 0.0
      %2513 = vmatprep.subr.mxu0 0.0
      %2514 = vmatpush1.msra.mxu0 0.0
      %2515 = vmatprep.subr.mxu0 0.0
      %2516 = vmatpush1.msra.mxu0 0.0
      %2517 = vmatprep.subr.mxu0 0.0
      %2518 = vmatpush1.msra.mxu0 0.0
      %2519 = vmatprep.subr.mxu0 0.0
      %2520 = vmatpush1.msra.mxu0 0.0
      %2521 = vmatprep.subr.mxu0 0.0
      %2522 = vmatpush1.msra.mxu0 0.0
      %2523 = vmatprep.subr.mxu0 0.0
      %2524 = vmatpush1.msra.mxu0 0.0
      %2525 = vmatprep.subr.mxu0 0.0
      %2526 = vmatpush1.msra.mxu0 0.0
      %2527 = vmatprep.subr.mxu0 0.0
      %2528 = vmatpush1.msra.mxu0 0.0
      %2529 = vmatprep.subr.mxu0 0.0
      %2530 = vmatpush1.msra.mxu0 0.0
      %2531 = vmatprep.subr.mxu0 0.0
      %2532 = vmatpush1.msra.mxu0 0.0
      %2533 = vmatprep.subr.mxu0 0.0
      %2534 = vmatpush1.msra.mxu0 0.0
      %2535 = vmatprep.subr.mxu0 0.0
      %2536 = vmatpush1.msra.mxu0 0.0
      %2537 = vmatprep.subr.mxu0 0.0
      %2538 = vmatpush1.msra.mxu0 0.0
      %2539 = vmatprep.subr.mxu0 0.0
      %2540 = vmatpush1.msra.mxu0 0.0
      %2541 = vmatprep.subr.mxu0 0.0
      %2542 = vmatpush1.msra.mxu0 0.0
      %2543 = vmatprep.subr.mxu0 0.0
      %2544 = vmatpush1.msra.mxu0 0.0
      %2545 = vmatprep.subr.mxu0 0.0
      %2546 = vmatpush1.msra.mxu0 0.0
      %2547 = vmatprep.subr.mxu0 0.0
      %2548 = vmatpush1.msra.mxu0 0.0
      %2549 = vmatprep.subr.mxu0 0.0
      %2550 = vmatpush1.msra.mxu0 0.0
      %2551 = vmatprep.subr.mxu0 0.0
      %2552 = vmatpush1.msra.mxu0 0.0
      %2553 = vmatprep.subr.mxu0 0.0
      %2554 = vmatpush1.msra.mxu0 0.0
      %2555 = vmatprep.subr.mxu0 0.0
      %2556 = vmatpush1.msra.mxu0 0.0
      %2557 = vmatprep.subr.mxu0 0.0
      %2558 = vmatpush1.msra.mxu0 0.0
      %2559 = vmatprep.mubr.f32.mxu0 0.0
      %2560 = vmatmul.mubr.f32.gmra.mrb[0].mxu0 %v2469
      %v2561 = vpop.f32.mrb[0].mxu0
      %v2562 = vadd.f32 %v2466, %v2561
      %v2563 = vpop.f32.mrb[0].mxu0
      %2564 = vmatprep.mubr.f32.mxu0 0.0
      %2565 = vmatmul.mubr.f32.gmra.mrb[0].mxu0 %v2472
      %v2566 = vpop.f32.mrb[0].mxu0
      %v2567 = vadd.f32 %v2466, %v2566
      %v2568 = vpop.f32.mrb[0].mxu0
      %2569 = vmatprep.mubr.f32.mxu0 0.0
      %2570 = vmatmul.mubr.f32.gmra.mrb[0].mxu0 %v2475
      %v2571 = vpop.f32.mrb[0].mxu0
      %v2572 = vadd.f32 %v2466, %v2571
      %v2573 = vpop.f32.mrb[0].mxu0
      %2574 = vmatprep.mubr.f32.mxu0 0.0
      %2575 = vmatmul.mubr.f32.gmra.mrb[0].mxu0 %v2478
      %v2576 = vpop.f32.mrb[0].mxu0
      %v2577 = vadd.f32 %v2466, %v2576
      %v2578 = vpop.f32.mrb[0].mxu0
      %2579 = vmatprep.mubr.f32.mxu0 0.0
      %2580 = vmatmul.mubr.f32.gmra.mrb[0].mxu0 %v2481
      %v2581 = vpop.f32.mrb[0].mxu0
      %v2582 = vadd.f32 %v2466, %v2581
      %v2583 = vpop.f32.mrb[0].mxu0
      %2584 = vmatprep.mubr.f32.mxu0 0.0
      %2585 = vmatmul.mubr.f32.gmra.mrb[0].mxu0 %v2484
      %v2586 = vpop.f32.mrb[0].mxu0
      %v2587 = vadd.f32 %v2466, %v2586
      %v2588 = vpop.f32.mrb[0].mxu0
      %2589 = vmatprep.mubr.f32.mxu0 0.0
      %2590 = vmatmul.mubr.f32.gmra.mrb[0].mxu0 %v2487
      %v2591 = vpop.f32.mrb[0].mxu0
      %v2592 = vadd.f32 %v2466, %v2591
      %v2593 = vpop.f32.mrb[0].mxu0
      %2594 = vmatprep.mubr.f32.mxu0 0.0
      %2595 = vmatmul.mubr.f32.gmra.mrb[0].mxu0 %v2490
      %v2596 = vpop.f32.mrb[0].mxu0
      %v2597 = vadd.f32 %v2466, %v2596
      %v2598 = vpop.f32.mrb[0].mxu0
      %2599 = vdwg.mxu0
      %2600 = vxpose.xlu0.b32.start [1/16] %v2562, 128
      %2601 = vxpose.xlu0.b32.cont [2/16] %v2567, 128
      %2602 = vxpose.xlu0.b32.cont [3/16] %v2572, 128
      %2603 = vxpose.xlu0.b32.cont [4/16] %v2577, 128
      %2604 = vxpose.xlu0.b32.cont [5/16] %v2582, 128
      %2605 = vxpose.xlu0.b32.cont [6/16] %v2587, 128
      %2606 = vxpose.xlu0.b32.cont [7/16] %v2592, 128
      %2607 = vxpose.xlu0.b32.cont [8/16] %v2597, 128
      %2608 = vxpose.xlu0.b32.cont [9/16] 0.0, 128
      %2609 = vxpose.xlu0.b32.cont [10/16] 0.0, 128
      %2610 = vxpose.xlu0.b32.cont [11/16] 0.0, 128
      %2611 = vxpose.xlu0.b32.cont [12/16] 0.0, 128
      %2612 = vxpose.xlu0.b32.cont [13/16] 0.0, 128
      %2613 = vxpose.xlu0.b32.cont [14/16] 0.0, 128
      %2614 = vxpose.xlu0.b32.cont [15/16] 0.0, 128
      %2615 = vxpose.xlu0.b32.end [16/16] 0.0, 128
      %v2616 = vpop.trf.xlu0
      %v2617 = vpop.trf.xlu0
      %v2618 = vpop.trf.xlu0
      %v2619 = vpop.trf.xlu0
      %v2620 = vpop.trf.xlu0
      %v2621 = vpop.trf.xlu0
      %v2622 = vpop.trf.xlu0
      %v2623 = vpop.trf.xlu0
      %v2624 = vpop.trf.xlu0
      %v2625 = vpop.trf.xlu0
      %v2626 = vpop.trf.xlu0
      %v2627 = vpop.trf.xlu0
      %v2628 = vpop.trf.xlu0
      %v2629 = vpop.trf.xlu0
      %v2630 = vpop.trf.xlu0
      %v2631 = vpop.trf.xlu0
      %v2633 = vsel %vm1602, %v2616, 0
      %2635 = vmatprep.subr.mxu0 0.0
      %2636 = vmatpush1.msra.mxu0 %v1815
      %2637 = vmatprep.subr.mxu0 0.0
      %2638 = vmatpush1.msra.mxu0 %v1816
      %2639 = vmatprep.subr.mxu0 0.0
      %2640 = vmatpush1.msra.mxu0 %v1817
      %2641 = vmatprep.subr.mxu0 0.0
      %2642 = vmatpush1.msra.mxu0 %v1818
      %2643 = vmatprep.subr.mxu0 0.0
      %2644 = vmatpush1.msra.mxu0 %v1819
      %2645 = vmatprep.subr.mxu0 0.0
      %2646 = vmatpush1.msra.mxu0 %v1820
      %2647 = vmatprep.subr.mxu0 0.0
      %2648 = vmatpush1.msra.mxu0 %v1821
      %2649 = vmatprep.subr.mxu0 0.0
      %2650 = vmatpush1.msra.mxu0 %v1822
      %2651 = vmatprep.subr.mxu0 0.0
      %2652 = vmatpush1.msra.mxu0 0.0
      %2653 = vmatprep.subr.mxu0 0.0
      %2654 = vmatpush1.msra.mxu0 0.0
      %2655 = vmatprep.subr.mxu0 0.0
      %2656 = vmatpush1.msra.mxu0 0.0
      %2657 = vmatprep.subr.mxu0 0.0
      %2658 = vmatpush1.msra.mxu0 0.0
      %2659 = vmatprep.subr.mxu0 0.0
      %2660 = vmatpush1.msra.mxu0 0.0
      %2661 = vmatprep.subr.mxu0 0.0
      %2662 = vmatpush1.msra.mxu0 0.0
      %2663 = vmatprep.subr.mxu0 0.0
      %2664 = vmatpush1.msra.mxu0 0.0
      %2665 = vmatprep.subr.mxu0 0.0
      %2666 = vmatpush1.msra.mxu0 0.0
      %2667 = vmatprep.subr.mxu0 0.0
      %2668 = vmatpush1.msra.mxu0 0.0
      %2669 = vmatprep.subr.mxu0 0.0
      %2670 = vmatpush1.msra.mxu0 0.0
      %2671 = vmatprep.subr.mxu0 0.0
      %2672 = vmatpush1.msra.mxu0 0.0
      %2673 = vmatprep.subr.mxu0 0.0
      %2674 = vmatpush1.msra.mxu0 0.0
      %2675 = vmatprep.subr.mxu0 0.0
      %2676 = vmatpush1.msra.mxu0 0.0
      %2677 = vmatprep.subr.mxu0 0.0
      %2678 = vmatpush1.msra.mxu0 0.0
      %2679 = vmatprep.subr.mxu0 0.0
      %2680 = vmatpush1.msra.mxu0 0.0
      %2681 = vmatprep.subr.mxu0 0.0
      %2682 = vmatpush1.msra.mxu0 0.0
      %2683 = vmatprep.subr.mxu0 0.0
      %2684 = vmatpush1.msra.mxu0 0.0
      %2685 = vmatprep.subr.mxu0 0.0
      %2686 = vmatpush1.msra.mxu0 0.0
      %2687 = vmatprep.subr.mxu0 0.0
      %2688 = vmatpush1.msra.mxu0 0.0
      %2689 = vmatprep.subr.mxu0 0.0
      %2690 = vmatpush1.msra.mxu0 0.0
      %2691 = vmatprep.subr.mxu0 0.0
      %2692 = vmatpush1.msra.mxu0 0.0
      %2693 = vmatprep.subr.mxu0 0.0
      %2694 = vmatpush1.msra.mxu0 0.0
      %2695 = vmatprep.subr.mxu0 0.0
      %2696 = vmatpush1.msra.mxu0 0.0
      %2697 = vmatprep.subr.mxu0 0.0
      %2698 = vmatpush1.msra.mxu0 0.0
      %2699 = vmatprep.mubr.f32.mxu0 0.0
      %2700 = vmatmul.mubr.f32.gmra.mrb[0].mxu0 %v2633
      %v2701 = vpop.f32.mrb[0].mxu0
      %v2702 = vadd.f32 0.0, %v2701
      %v2703 = vpop.f32.mrb[0].mxu0
      %2704 = vdwg.mxu0
      %s2705 = scalar_lea.vmem %s321, 4
      %2706 = vst.msk [vmem:[%s2705] sm:$0xf] %vm1676, %v2702
      %v2707 = vstv %s2013
      %v2708 = vadd.f32 %v2707, 0.0
      %vm2709 = vcmask 0
      %2710 = vst.msk [vmem:[%s324] sm:$0x1] %vm2709, %v2708
      %p2711 = scmp.lt.s32.totalorder %s19, 1
      %s2712 = scalar_select %p2711, %s19, 1
      %s2713 = smul.addr %s2712, 2
      %s2714 = smul.addr %s2713, 4
      %s2715 = scalar_lea.vmem %s6, %s2714
      %p2716 = scmp.lt.s32.totalorder %s19, 1
      %s2717 = scalar_select %p2716, %s19, 1
      %s2718 = scalar_lea.vmem %s7, %s2717
      // Predicated region
      $region45: #{_lambda_.8} parent=43 // pred_check
        %p2719 = pneg %p178
      $region46: #{_lambda_.8} parent=43 // pred_check_branch
        %2721 = sbr.rel (%p2719) target = $region48
      $region47: #{_lambda_.8} parent=43 // pred_region
        _
      $region48: #{_lambda_.8} parent=43 // pred_fallthru
        _
      // Predicated region
      $region49: #{_lambda_.8} parent=43 // pred_check
        %p2722 = pneg %p204
      $region50: #{_lambda_.8} parent=43 // pred_check_branch
        %2724 = sbr.rel (%p2722) target = $region52
      $region51: #{_lambda_.8} parent=43 // pred_region
        _
      $region52: #{_lambda_.8} parent=43 // pred_fallthru
        _
    $region44: #{_lambda_.8} parent=5 // pred_fallthru
      _
    %p2725 = scmp.le.s32.totalorder 2, %s14
    // Predicated region
    $region53: #{_lambda_.8} parent=5 // pred_check
      %p2726 = pneg %p2725
    $region54: #{_lambda_.8} parent=5 // pred_check_branch
      %2728 = sbr.rel (%p2726) target = $region56
    $region55: #{_lambda_.8} parent=5 // pred_region
      %s2729 = ssub.s32 %s14, 2
      // Predicated region
      $region57: #{_lambda_.8} parent=55 // pred_check
        %p2730 = pneg %p184
      $region58: #{_lambda_.8} parent=55 // pred_check_branch
        %2732 = sbr.rel (%p2730) target = $region60
      $region59: #{_lambda_.8} parent=55 // pred_region
        %p2733 = scmp.lt.s32.totalorder %s20, 1
        %s2734 = scalar_select %p2733, %s20, 1
        %s2735 = smul.addr %s2734, 2
        %s2736 = smul.addr %s2735, 4
        %s2737 = scalar_lea.vmem %s6, %s2736
      $region60: #{_lambda_.8} parent=55 // pred_fallthru
        _
      // Predicated region
      $region61: #{_lambda_.8} parent=55 // pred_check
        %p2738 = pneg %p210
      $region62: #{_lambda_.8} parent=55 // pred_check_branch
        %2740 = sbr.rel (%p2738) target = $region64
      $region63: #{_lambda_.8} parent=55 // pred_region
        %p2741 = scmp.lt.s32.totalorder %s20, 1
        %s2742 = scalar_select %p2741, %s20, 1
        %s2743 = scalar_lea.vmem %s7, %s2742
      $region64: #{_lambda_.8} parent=55 // pred_fallthru
        _
    $region56: #{_lambda_.8} parent=5 // pred_fallthru
      _
  $region6: #{_lambda_.8} parent=0 // loop_footer
    %s18 = sadd.s32 1, %s14
  $region7: #{_lambda_.8} parent=0 // loop_footer_branch
    %13 = sbr.rel target = $region3
  $region8: #{_lambda_.8} parent=0 // loop_exit
    _

// kernel: _lambda_.11
$region0: #{_lambda_.11}
  #allocation0 [shape = 'u32[]', space=smem, size = 0x4, offset = 0x4, fixed_abs, tag = 'smem constant byte address 0x4 - core index']
  #allocation1 [shape = 'u32[144,128]{1,0:T(1,128)}', space=vmem, size = 0x12000, scoped, tag = 'internal scratch']
  #allocation2 [shape = 'f32[64,18]{1,0:T(8,128)}', space=vmem, size = 0x8000, scoped, tag = 'scratch operand']
  %s0 = inlined_call_operand.vmem [shape: f32[2,2,2,16], index: 0, kind: input, shape index: {}]
  %s1 = inlined_call_operand.vmem [shape: f32[2,2,2,16], index: 1, kind: input, shape index: {}]
  %s2 = inlined_call_operand.vmem [shape: s32[2,2,16], index: 2, kind: input, shape index: {}]
  %s3 = inlined_call_operand.vmem [shape: f32[2,18,2], index: 3, kind: input, shape index: {}]
  %s4 = inlined_call_operand.vmem [shape: f32[2,1,2], index: 4, kind: input, shape index: {}]
  %s5 = inlined_call_operand.vmem [shape: f32[64,9], index: 5, kind: input, shape index: {}]
  %s6 = inlined_call_operand.vmem [shape: f32[2,2,2,16], index: 6, kind: output, shape index: {0}]
  %s7 = inlined_call_operand.vmem [shape: f32[2,1,1], index: 7, kind: output, shape index: {1}]
  %8 = xla_tuple %s6, %s7
  %s9 = sld [smem:[#allocation0]]
  $region65: #{_lambda_.11} parent=0
    _
  %s11 = ssub.s32 1, %s9
  %s12 = scalar_select 0, %s11, %s9
  loop: start=0, step=1, limit=4
  $region2: #{_lambda_.11} parent=0 // loop_pre_header
    _
  $region3: #{_lambda_.11} parent=0 // loop_header
    %s14 = sphi 0, %s18
    %p15 = scmp.ge.s32.totalorder %s14, 4
    %s24 = sphi 0, %s26
    %s27 = sphi 0, %s24
    %s28 = sphi 0, %s27
    %s44 = sphi 0, %s28
    %s50 = sphi 0, %s52
    %s53 = sphi 0, %s50
    %s54 = sphi 0, %s53
    %s70 = sphi 0, %s54
    %s76 = sphi 0, %s78
    %s79 = sphi 0, %s76
    %s80 = sphi 0, %s79
    %s96 = sphi 0, %s80
    %s100 = sphi 0, %s100
    %s102 = sphi 0, %s100
    %s103 = sphi 0, %s102
    %s117 = sphi 0, %s103
    %s121 = sphi 0, %s121
    %s123 = sphi 0, %s121
    %s124 = sphi 0, %s123
    %s138 = sphi 0, %s124
    %s142 = sphi 0, %s142
    %s144 = sphi 0, %s142
    %s145 = sphi 0, %s144
    %s159 = sphi 0, %s145
    %s165 = sphi 0, %s167
    %s168 = sphi 0, %s165
    %s169 = sphi 0, %s168
    %s185 = sphi 0, %s169
    %s191 = sphi 0, %s193
    %s194 = sphi 0, %s191
    %s195 = sphi 0, %s194
    %s211 = sphi 0, %s195
  $region4: #{_lambda_.11} parent=0 // loop_header_branch
    %17 = sbr.rel (%p15) target = $region8
  $region5: #{_lambda_.11} parent=0 // loop_body
    %s19 = ssub.s32 %s14, 1
    %s20 = ssub.s32 %s14, 2
    %s21 = sadd.s32 %s14, 1
    %s22 = ssub.s32 %s14, %s21
    %p23 = scmp.eq.s32.totalorder %s22, 0
    %s25 = sadd.s32 %s24, 1
    %s26 = scalar_select %p23, %s24, %s25
    %p29 = pneg %p23
    %p30 = scmp.eq.s32.totalorder %s14, 1
    %p31 = por %p29, %p30
    %p32 = scmp.ne.s32.totalorder %s24, %s27
    %p33 = scmp.eq.s32.totalorder %s14, 0
    %p34 = por %p32, %p33
    %p35 = scmp.ne.s32.totalorder %s24, %s27
    %p36 = scmp.eq.s32.totalorder %s19, 1
    %p37 = por %p35, %p36
    %p38 = scmp.ne.s32.totalorder %s27, %s28
    %p39 = scmp.eq.s32.totalorder %s19, 0
    %p40 = por %p38, %p39
    %p41 = scmp.ne.s32.totalorder %s27, %s28
    %p42 = scmp.eq.s32.totalorder %s20, 1
    %p43 = por %p41, %p42
    %p45 = scmp.ne.s32.totalorder %s28, %s44
    %p46 = scmp.eq.s32.totalorder %s20, 0
    %p47 = por %p45, %p46
    %s48 = ssub.s32 %s14, %s21
    %p49 = scmp.eq.s32.totalorder %s48, 0
    %s51 = sadd.s32 %s50, 1
    %s52 = scalar_select %p49, %s50, %s51
    %p55 = pneg %p49
    %p56 = scmp.eq.s32.totalorder %s14, 1
    %p57 = por %p55, %p56
    %p58 = scmp.ne.s32.totalorder %s50, %s53
    %p59 = scmp.eq.s32.totalorder %s14, 0
    %p60 = por %p58, %p59
    %p61 = scmp.ne.s32.totalorder %s50, %s53
    %p62 = scmp.eq.s32.totalorder %s19, 1
    %p63 = por %p61, %p62
    %p64 = scmp.ne.s32.totalorder %s53, %s54
    %p65 = scmp.eq.s32.totalorder %s19, 0
    %p66 = por %p64, %p65
    %p67 = scmp.ne.s32.totalorder %s53, %s54
    %p68 = scmp.eq.s32.totalorder %s20, 1
    %p69 = por %p67, %p68
    %p71 = scmp.ne.s32.totalorder %s54, %s70
    %p72 = scmp.eq.s32.totalorder %s20, 0
    %p73 = por %p71, %p72
    %s74 = ssub.s32 %s14, %s21
    %p75 = scmp.eq.s32.totalorder %s74, 0
    %s77 = sadd.s32 %s76, 1
    %s78 = scalar_select %p75, %s76, %s77
    %p81 = pneg %p75
    %p82 = scmp.eq.s32.totalorder %s14, 1
    %p83 = por %p81, %p82
    %p84 = scmp.ne.s32.totalorder %s76, %s79
    %p85 = scmp.eq.s32.totalorder %s14, 0
    %p86 = por %p84, %p85
    %p87 = scmp.ne.s32.totalorder %s76, %s79
    %p88 = scmp.eq.s32.totalorder %s19, 1
    %p89 = por %p87, %p88
    %p90 = scmp.ne.s32.totalorder %s79, %s80
    %p91 = scmp.eq.s32.totalorder %s19, 0
    %p92 = por %p90, %p91
    %p93 = scmp.ne.s32.totalorder %s79, %s80
    %p94 = scmp.eq.s32.totalorder %s20, 1
    %p95 = por %p93, %p94
    %p97 = scmp.ne.s32.totalorder %s80, %s96
    %p98 = scmp.eq.s32.totalorder %s20, 0
    %p99 = por %p97, %p98
    %s101 = sadd.s32 %s100, 1
    %p104 = scmp.eq.s32.totalorder %s14, 1
    %p105 = scmp.ne.s32.totalorder %s100, %s102
    %p106 = scmp.eq.s32.totalorder %s14, 0
    %p107 = por %p105, %p106
    %p108 = scmp.ne.s32.totalorder %s100, %s102
    %p109 = scmp.eq.s32.totalorder %s19, 1
    %p110 = por %p108, %p109
    %p111 = scmp.ne.s32.totalorder %s102, %s103
    %p112 = scmp.eq.s32.totalorder %s19, 0
    %p113 = por %p111, %p112
    %p114 = scmp.ne.s32.totalorder %s102, %s103
    %p115 = scmp.eq.s32.totalorder %s20, 1
    %p116 = por %p114, %p115
    %p118 = scmp.ne.s32.totalorder %s103, %s117
    %p119 = scmp.eq.s32.totalorder %s20, 0
    %p120 = por %p118, %p119
    %s122 = sadd.s32 %s121, 1
    %p125 = scmp.eq.s32.totalorder %s14, 1
    %p126 = scmp.ne.s32.totalorder %s121, %s123
    %p127 = scmp.eq.s32.totalorder %s14, 0
    %p128 = por %p126, %p127
    %p129 = scmp.ne.s32.totalorder %s121, %s123
    %p130 = scmp.eq.s32.totalorder %s19, 1
    %p131 = por %p129, %p130
    %p132 = scmp.ne.s32.totalorder %s123, %s124
    %p133 = scmp.eq.s32.totalorder %s19, 0
    %p134 = por %p132, %p133
    %p135 = scmp.ne.s32.totalorder %s123, %s124
    %p136 = scmp.eq.s32.totalorder %s20, 1
    %p137 = por %p135, %p136
    %p139 = scmp.ne.s32.totalorder %s124, %s138
    %p140 = scmp.eq.s32.totalorder %s20, 0
    %p141 = por %p139, %p140
    %s143 = sadd.s32 %s142, 1
    %p146 = scmp.eq.s32.totalorder %s14, 1
    %p147 = scmp.ne.s32.totalorder %s142, %s144
    %p148 = scmp.eq.s32.totalorder %s14, 0
    %p149 = por %p147, %p148
    %p150 = scmp.ne.s32.totalorder %s142, %s144
    %p151 = scmp.eq.s32.totalorder %s19, 1
    %p152 = por %p150, %p151
    %p153 = scmp.ne.s32.totalorder %s144, %s145
    %p154 = scmp.eq.s32.totalorder %s19, 0
    %p155 = por %p153, %p154
    %p156 = scmp.ne.s32.totalorder %s144, %s145
    %p157 = scmp.eq.s32.totalorder %s20, 1
    %p158 = por %p156, %p157
    %p160 = scmp.ne.s32.totalorder %s145, %s159
    %p161 = scmp.eq.s32.totalorder %s20, 0
    %p162 = por %p160, %p161
    %s163 = ssub.s32 %s14, %s21
    %p164 = scmp.eq.s32.totalorder %s163, 0
    %s166 = sadd.s32 %s165, 1
    %s167 = scalar_select %p164, %s165, %s166
    %p170 = pneg %p164
    %p171 = scmp.eq.s32.totalorder %s14, 1
    %p172 = por %p170, %p171
    %p173 = scmp.ne.s32.totalorder %s165, %s168
    %p174 = scmp.eq.s32.totalorder %s14, 0
    %p175 = por %p173, %p174
    %p176 = scmp.ne.s32.totalorder %s165, %s168
    %p177 = scmp.eq.s32.totalorder %s19, 1
    %p178 = por %p176, %p177
    %p179 = scmp.ne.s32.totalorder %s168, %s169
    %p180 = scmp.eq.s32.totalorder %s19, 0
    %p181 = por %p179, %p180
    %p182 = scmp.ne.s32.totalorder %s168, %s169
    %p183 = scmp.eq.s32.totalorder %s20, 1
    %p184 = por %p182, %p183
    %p186 = scmp.ne.s32.totalorder %s169, %s185
    %p187 = scmp.eq.s32.totalorder %s20, 0
    %p188 = por %p186, %p187
    %s189 = ssub.s32 %s14, %s21
    %p190 = scmp.eq.s32.totalorder %s189, 0
    %s192 = sadd.s32 %s191, 1
    %s193 = scalar_select %p190, %s191, %s192
    %p196 = pneg %p190
    %p197 = scmp.eq.s32.totalorder %s14, 1
    %p198 = por %p196, %p197
    %p199 = scmp.ne.s32.totalorder %s191, %s194
    %p200 = scmp.eq.s32.totalorder %s14, 0
    %p201 = por %p199, %p200
    %p202 = scmp.ne.s32.totalorder %s191, %s194
    %p203 = scmp.eq.s32.totalorder %s19, 1
    %p204 = por %p202, %p203
    %p205 = scmp.ne.s32.totalorder %s194, %s195
    %p206 = scmp.eq.s32.totalorder %s19, 0
    %p207 = por %p205, %p206
    %p208 = scmp.ne.s32.totalorder %s194, %s195
    %p209 = scmp.eq.s32.totalorder %s20, 1
    %p210 = por %p208, %p209
    %p212 = scmp.ne.s32.totalorder %s195, %s211
    %p213 = scmp.eq.s32.totalorder %s20, 0
    %p214 = por %p212, %p213
    %p215 = scmp.le.s32.totalorder 1, %s14
    %p216 = scmp.lt.s32.totalorder %s14, 3
    %p217 = pnand %p215, %p216
    %p218 = pneg %p217
    // Predicated region
    $region9: #{_lambda_.11} parent=5 // pred_check
      _
    $region10: #{_lambda_.11} parent=5 // pred_check_branch
      %220 = sbr.rel (%p217) target = $region12
    $region11: #{_lambda_.11} parent=5 // pred_region
      %s221 = ssub.s32 %s14, 1
      // Predicated region
      $region13: #{_lambda_.11} parent=11 // pred_check
        %p222 = pneg %p113
      $region14: #{_lambda_.11} parent=11 // pred_check_branch
        %224 = sbr.rel (%p222) target = $region16
      $region15: #{_lambda_.11} parent=11 // pred_region
        _
      $region16: #{_lambda_.11} parent=11 // pred_fallthru
        _
      // Predicated region
      $region17: #{_lambda_.11} parent=11 // pred_check
        %p225 = pneg %p134
      $region18: #{_lambda_.11} parent=11 // pred_check_branch
        %227 = sbr.rel (%p225) target = $region20
      $region19: #{_lambda_.11} parent=11 // pred_region
        _
      $region20: #{_lambda_.11} parent=11 // pred_fallthru
        _
      // Predicated region
      $region21: #{_lambda_.11} parent=11 // pred_check
        %p228 = pneg %p155
      $region22: #{_lambda_.11} parent=11 // pred_check_branch
        %230 = sbr.rel (%p228) target = $region24
      $region23: #{_lambda_.11} parent=11 // pred_region
        _
      $region24: #{_lambda_.11} parent=11 // pred_fallthru
        _
    $region12: #{_lambda_.11} parent=5 // pred_fallthru
      _
    %p231 = scmp.lt.s32.totalorder %s14, 2
    // Predicated region
    $region25: #{_lambda_.11} parent=5 // pred_check
      %p232 = pneg %p231
    $region26: #{_lambda_.11} parent=5 // pred_check_branch
      %234 = sbr.rel (%p232) target = $region28
    $region27: #{_lambda_.11} parent=5 // pred_region
      // Predicated region
      $region29: #{_lambda_.11} parent=27 // pred_check
        %p235 = pneg %p34
      $region30: #{_lambda_.11} parent=27 // pred_check_branch
        %237 = sbr.rel (%p235) target = $region32
      $region31: #{_lambda_.11} parent=27 // pred_region
        %p238 = scmp.lt.s32.totalorder %s14, 1
        %s239 = scalar_select %p238, %s14, 1
        %s240 = smul.addr %s239, 2
        %s241 = smul.addr %s240, 2
        %s242 = scalar_lea.vmem %s0, %s241
      $region32: #{_lambda_.11} parent=27 // pred_fallthru
        _
      // Predicated region
      $region33: #{_lambda_.11} parent=27 // pred_check
        %p243 = pneg %p60
      $region34: #{_lambda_.11} parent=27 // pred_check_branch
        %245 = sbr.rel (%p243) target = $region36
      $region35: #{_lambda_.11} parent=27 // pred_region
        %p246 = scmp.lt.s32.totalorder %s14, 1
        %s247 = scalar_select %p246, %s14, 1
        %s248 = smul.addr %s247, 2
        %s249 = smul.addr %s248, 2
        %s250 = scalar_lea.vmem %s1, %s249
      $region36: #{_lambda_.11} parent=27 // pred_fallthru
        _
      // Predicated region
      $region37: #{_lambda_.11} parent=27 // pred_check
        %p251 = pneg %p86
      $region38: #{_lambda_.11} parent=27 // pred_check_branch
        %253 = sbr.rel (%p251) target = $region40
      $region39: #{_lambda_.11} parent=27 // pred_region
        %p254 = scmp.lt.s32.totalorder %s14, 1
        %s255 = scalar_select %p254, %s14, 1
        %s256 = smul.addr %s255, 2
        %s257 = scalar_lea.vmem %s2, %s256
      $region40: #{_lambda_.11} parent=27 // pred_fallthru
        _
    $region28: #{_lambda_.11} parent=5 // pred_fallthru
      _
    %p258 = scmp.le.s32.totalorder 1, %s14
    %p259 = scmp.lt.s32.totalorder %s14, 3
    %p260 = pnand %p258, %p259
    %p261 = pneg %p260
    // Predicated region
    $region41: #{_lambda_.11} parent=5 // pred_check
      _
    $region42: #{_lambda_.11} parent=5 // pred_check_branch
      %263 = sbr.rel (%p260) target = $region44
    $region43: #{_lambda_.11} parent=5 // pred_region
      %s264 = ssub.s32 %s14, 1
      %p265 = scmp.lt.s32.totalorder %s19, 1
      %s266 = scalar_select %p265, %s19, 1
      %s267 = smul.addr %s266, 2
      %s268 = smul.addr %s267, 2
      %s269 = scalar_lea.vmem %s0, %s268
      %p270 = pneg %p40
      %p271 = pneg %p37
      %p272 = scmp.lt.s32.totalorder %s19, 1
      %s273 = scalar_select %p272, %s19, 1
      %s274 = smul.addr %s273, 2
      %s275 = smul.addr %s274, 2
      %s276 = scalar_lea.vmem %s1, %s275
      %p277 = pneg %p66
      %p278 = pneg %p63
      %p279 = scmp.lt.s32.totalorder %s19, 1
      %s280 = scalar_select %p279, %s19, 1
      %s281 = smul.addr %s280, 2
      %s282 = scalar_lea.vmem %s2, %s281
      %p283 = pneg %p92
      %p284 = pneg %p89
      %p285 = pneg %p113
      %p286 = pneg %p110
      %p287 = pneg %p134
      %p288 = pneg %p131
      %p289 = pneg %p155
      %p290 = pneg %p152
      %p291 = pneg %p181
      %p292 = pneg %p178
      %p293 = scmp.lt.s32.totalorder %s19, 1
      %s294 = scalar_select %p293, %s19, 1
      %s295 = smul.addr %s294, 2
      %s296 = smul.addr %s295, 2
      %s297 = scalar_lea.vmem %s6, %s296
      %p298 = pneg %p207
      %p299 = pneg %p204
      %p300 = scmp.lt.s32.totalorder %s19, 1
      %s301 = scalar_select %p300, %s19, 1
      %s302 = scalar_lea.vmem %s7, %s301
      %p303 = scmp.lt.s32.totalorder %s19, 1
      %s304 = scalar_select %p303, %s19, 1
      %s305 = smul.addr %s304, 2
      %s306 = smul.addr %s305, 2
      %s307 = scalar_lea.vmem %s0, %s306
      %p308 = scmp.lt.s32.totalorder %s19, 1
      %s309 = scalar_select %p308, %s19, 1
      %s310 = smul.addr %s309, 2
      %s311 = smul.addr %s310, 2
      %s312 = scalar_lea.vmem %s1, %s311
      %p313 = scmp.lt.s32.totalorder %s19, 1
      %s314 = scalar_select %p313, %s19, 1
      %s315 = smul.addr %s314, 2
      %s316 = scalar_lea.vmem %s2, %s315
      %p317 = scmp.lt.s32.totalorder %s19, 1
      %s318 = scalar_select %p317, %s19, 1
      %s319 = smul.addr %s318, 2
      %s320 = smul.addr %s319, 2
      %s321 = scalar_lea.vmem %s6, %s320
      %p322 = scmp.lt.s32.totalorder %s19, 1
      %s323 = scalar_select %p322, %s19, 1
      %s324 = scalar_lea.vmem %s7, %s323
      %v325 = vlaneseq
      %v326 = vshrl.u32 %v325, 7
      %v327 = vadd.s32 %v326, 8
      %v328 = vadd.s32 %v326, 16
      %v329 = vadd.s32 %v326, 24
      %v330 = vadd.s32 %v326, 32
      %v331 = vadd.s32 %v326, 40
      %v332 = vadd.s32 %v326, 48
      %v333 = vadd.s32 %v326, 56
      %v334 = vld [vmem:[%s5] sm:$0xff]
      %v335 = vld [vmem:[%s5 + $0x8] sm:$0xff]
      %v336 = vld [vmem:[%s5 + $0x10] sm:$0xff]
      %v337 = vld [vmem:[%s5 + $0x18] sm:$0xff]
      %v338 = vld [vmem:[%s5 + $0x20] sm:$0xff]
      %v339 = vld [vmem:[%s5 + $0x28] sm:$0xff]
      %v340 = vld [vmem:[%s5 + $0x30] sm:$0xff]
      %v341 = vld [vmem:[%s5 + $0x38] sm:$0xff]
      %v342 = vld [vmem:[%s312] sm:$0x3]
      %v343 = vld [vmem:[%s316] sm:$0x1]
      %v344 = vsub.f32 1.0, %v342
      %v345 = vlaneseq
      %v346 = vshrl.u32 %v345, 7
      %v347 = vsub.s32 0, %v346
      %v348 = vrot.slane %v343, %v347
      %vm349 = vcmp.eq.s32.totalorder %v326, %v348
      %vm350 = vcmp.eq.s32.totalorder %v327, %v348
      %vm351 = vcmp.eq.s32.totalorder %v328, %v348
      %vm352 = vcmp.eq.s32.totalorder %v329, %v348
      %vm353 = vcmp.eq.s32.totalorder %v330, %v348
      %vm354 = vcmp.eq.s32.totalorder %v331, %v348
      %vm355 = vcmp.eq.s32.totalorder %v332, %v348
      %vm356 = vcmp.eq.s32.totalorder %v333, %v348
      %v358 = vrot.slane %v344, 1
      %v360 = vmul.f32 %v344, %v358
      %v361 = vlaneseq
      %v362 = vshrl.u32 %v361, 7
      %v363 = vsub.s32 0, %v362
      %v364 = vrot.slane %v360, %v363
      %v365 = vsel %vm349, %v364, 0.0
      %v366 = vsel %vm350, %v364, 0.0
      %v367 = vsel %vm351, %v364, 0.0
      %v368 = vsel %vm352, %v364, 0.0
      %v369 = vsel %vm353, %v364, 0.0
      %v370 = vsel %vm354, %v364, 0.0
      %v371 = vsel %vm355, %v364, 0.0
      %v372 = vsel %vm356, %v364, 0.0
      %v373 = vadd.f32 %v365, 0.0
      %v374 = vadd.f32 %v366, 0.0
      %v375 = vadd.f32 %v367, 0.0
      %v376 = vadd.f32 %v368, 0.0
      %v377 = vadd.f32 %v369, 0.0
      %v378 = vadd.f32 %v370, 0.0
      %v379 = vadd.f32 %v371, 0.0
      %v380 = vadd.f32 %v372, 0.0
      %v381 = vadd.s32 %v343, 1
      %v382 = vlaneseq
      %v383 = vshrl.u32 %v382, 7
      %v384 = vsub.s32 0, %v383
      %v385 = vrot.slane %v381, %v384
      %vm386 = vcmp.eq.s32.totalorder %v326, %v385
      %vm387 = vcmp.eq.s32.totalorder %v327, %v385
      %vm388 = vcmp.eq.s32.totalorder %v328, %v385
      %vm389 = vcmp.eq.s32.totalorder %v329, %v385
      %vm390 = vcmp.eq.s32.totalorder %v330, %v385
      %vm391 = vcmp.eq.s32.totalorder %v331, %v385
      %vm392 = vcmp.eq.s32.totalorder %v332, %v385
      %vm393 = vcmp.eq.s32.totalorder %v333, %v385
      %v395 = vrot.slane %v342, 1
      %v397 = vmul.f32 %v344, %v395
      %v398 = vlaneseq
      %v399 = vshrl.u32 %v398, 7
      %v400 = vsub.s32 0, %v399
      %v401 = vrot.slane %v397, %v400
      %v402 = vsel %vm386, %v401, 0.0
      %v403 = vsel %vm387, %v401, 0.0
      %v404 = vsel %vm388, %v401, 0.0
      %v405 = vsel %vm389, %v401, 0.0
      %v406 = vsel %vm390, %v401, 0.0
      %v407 = vsel %vm391, %v401, 0.0
      %v408 = vsel %vm392, %v401, 0.0
      %v409 = vsel %vm393, %v401, 0.0
      %v410 = vadd.f32 %v373, %v402
      %v411 = vadd.f32 %v374, %v403
      %v412 = vadd.f32 %v375, %v404
      %v413 = vadd.f32 %v376, %v405
      %v414 = vadd.f32 %v377, %v406
      %v415 = vadd.f32 %v378, %v407
      %v416 = vadd.f32 %v379, %v408
      %v417 = vadd.f32 %v380, %v409
      %v418 = vadd.s32 %v343, 8
      %v419 = vlaneseq
      %v420 = vshrl.u32 %v419, 7
      %v421 = vsub.s32 0, %v420
      %v422 = vrot.slane %v418, %v421
      %vm423 = vcmp.eq.s32.totalorder %v326, %v422
      %vm424 = vcmp.eq.s32.totalorder %v327, %v422
      %vm425 = vcmp.eq.s32.totalorder %v328, %v422
      %vm426 = vcmp.eq.s32.totalorder %v329, %v422
      %vm427 = vcmp.eq.s32.totalorder %v330, %v422
      %vm428 = vcmp.eq.s32.totalorder %v331, %v422
      %vm429 = vcmp.eq.s32.totalorder %v332, %v422
      %vm430 = vcmp.eq.s32.totalorder %v333, %v422
      %v431 = vmul.f32 %v342, %v358
      %v432 = vlaneseq
      %v433 = vshrl.u32 %v432, 7
      %v434 = vsub.s32 0, %v433
      %v435 = vrot.slane %v431, %v434
      %v436 = vsel %vm423, %v435, 0.0
      %v437 = vsel %vm424, %v435, 0.0
      %v438 = vsel %vm425, %v435, 0.0
      %v439 = vsel %vm426, %v435, 0.0
      %v440 = vsel %vm427, %v435, 0.0
      %v441 = vsel %vm428, %v435, 0.0
      %v442 = vsel %vm429, %v435, 0.0
      %v443 = vsel %vm430, %v435, 0.0
      %v444 = vadd.f32 %v410, %v436
      %v445 = vadd.f32 %v411, %v437
      %v446 = vadd.f32 %v412, %v438
      %v447 = vadd.f32 %v413, %v439
      %v448 = vadd.f32 %v414, %v440
      %v449 = vadd.f32 %v415, %v441
      %v450 = vadd.f32 %v416, %v442
      %v451 = vadd.f32 %v417, %v443
      %v452 = vadd.s32 %v343, 9
      %v453 = vlaneseq
      %v454 = vshrl.u32 %v453, 7
      %v455 = vsub.s32 0, %v454
      %v456 = vrot.slane %v452, %v455
      %vm457 = vcmp.eq.s32.totalorder %v326, %v456
      %vm458 = vcmp.eq.s32.totalorder %v327, %v456
      %vm459 = vcmp.eq.s32.totalorder %v328, %v456
      %vm460 = vcmp.eq.s32.totalorder %v329, %v456
      %vm461 = vcmp.eq.s32.totalorder %v330, %v456
      %vm462 = vcmp.eq.s32.totalorder %v331, %v456
      %vm463 = vcmp.eq.s32.totalorder %v332, %v456
      %vm464 = vcmp.eq.s32.totalorder %v333, %v456
      %v465 = vmul.f32 %v342, %v395
      %v466 = vlaneseq
      %v467 = vshrl.u32 %v466, 7
      %v468 = vsub.s32 0, %v467
      %v469 = vrot.slane %v465, %v468
      %v470 = vsel %vm457, %v469, 0.0
      %v471 = vsel %vm458, %v469, 0.0
      %v472 = vsel %vm459, %v469, 0.0
      %v473 = vsel %vm460, %v469, 0.0
      %v474 = vsel %vm461, %v469, 0.0
      %v475 = vsel %vm462, %v469, 0.0
      %v476 = vsel %vm463, %v469, 0.0
      %v477 = vsel %vm464, %v469, 0.0
      %v478 = vadd.f32 %v444, %v470
      %v479 = vadd.f32 %v445, %v471
      %v480 = vadd.f32 %v446, %v472
      %v481 = vadd.f32 %v447, %v473
      %v482 = vadd.f32 %v448, %v474
      %v483 = vadd.f32 %v449, %v475
      %v484 = vadd.f32 %v450, %v476
      %v485 = vadd.f32 %v451, %v477
      %v486 = vld [vmem:[%s307] sm:$0x3]
      %vm487 = vcmask 130048
      %v489 = vsel %vm487, %v478, 0
      %v492 = vsel %vm487, %v479, 0
      %v495 = vsel %vm487, %v480, 0
      %v498 = vsel %vm487, %v481, 0
      %v501 = vsel %vm487, %v482, 0
      %v504 = vsel %vm487, %v483, 0
      %v507 = vsel %vm487, %v484, 0
      %v510 = vsel %vm487, %v485, 0
      %v513 = vsel %vm487, %v486, 0
      %515 = vmatprep.subr.mxu0 0.0
      %516 = vmatpush1.xpose.msra.mxu0 %v513
      %517 = vmatprep.subr.mxu0 0.0
      %518 = vmatpush1.xpose.msra.mxu0 0.0
      %519 = vmatprep.subr.mxu0 0.0
      %520 = vmatpush1.xpose.msra.mxu0 0.0
      %521 = vmatprep.subr.mxu0 0.0
      %522 = vmatpush1.xpose.msra.mxu0 0.0
      %523 = vmatprep.subr.mxu0 0.0
      %524 = vmatpush1.xpose.msra.mxu0 0.0
      %525 = vmatprep.subr.mxu0 0.0
      %526 = vmatpush1.xpose.msra.mxu0 0.0
      %527 = vmatprep.subr.mxu0 0.0
      %528 = vmatpush1.xpose.msra.mxu0 0.0
      %529 = vmatprep.subr.mxu0 0.0
      %530 = vmatpush1.xpose.msra.mxu0 0.0
      %531 = vmatprep.subr.mxu0 0.0
      %532 = vmatpush1.xpose.msra.mxu0 0.0
      %533 = vmatprep.subr.mxu0 0.0
      %534 = vmatpush1.xpose.msra.mxu0 0.0
      %535 = vmatprep.subr.mxu0 0.0
      %536 = vmatpush1.xpose.msra.mxu0 0.0
      %537 = vmatprep.subr.mxu0 0.0
      %538 = vmatpush1.xpose.msra.mxu0 0.0
      %539 = vmatprep.subr.mxu0 0.0
      %540 = vmatpush1.xpose.msra.mxu0 0.0
      %541 = vmatprep.subr.mxu0 0.0
      %542 = vmatpush1.xpose.msra.mxu0 0.0
      %543 = vmatprep.subr.mxu0 0.0
      %544 = vmatpush1.xpose.msra.mxu0 0.0
      %545 = vmatprep.subr.mxu0 0.0
      %546 = vmatpush1.xpose.msra.mxu0 0.0
      %547 = vmatprep.subr.mxu0 0.0
      %548 = vmatpush1.xpose.msra.mxu0 0.0
      %549 = vmatprep.subr.mxu0 0.0
      %550 = vmatpush1.xpose.msra.mxu0 0.0
      %551 = vmatprep.subr.mxu0 0.0
      %552 = vmatpush1.xpose.msra.mxu0 0.0
      %553 = vmatprep.subr.mxu0 0.0
      %554 = vmatpush1.xpose.msra.mxu0 0.0
      %555 = vmatprep.subr.mxu0 0.0
      %556 = vmatpush1.xpose.msra.mxu0 0.0
      %557 = vmatprep.subr.mxu0 0.0
      %558 = vmatpush1.xpose.msra.mxu0 0.0
      %559 = vmatprep.subr.mxu0 0.0
      %560 = vmatpush1.xpose.msra.mxu0 0.0
      %561 = vmatprep.subr.mxu0 0.0
      %562 = vmatpush1.xpose.msra.mxu0 0.0
      %563 = vmatprep.subr.mxu0 0.0
      %564 = vmatpush1.xpose.msra.mxu0 0.0
      %565 = vmatprep.subr.mxu0 0.0
      %566 = vmatpush1.xpose.msra.mxu0 0.0
      %567 = vmatprep.subr.mxu0 0.0
      %568 = vmatpush1.xpose.msra.mxu0 0.0
      %569 = vmatprep.subr.mxu0 0.0
      %570 = vmatpush1.xpose.msra.mxu0 0.0
      %571 = vmatprep.subr.mxu0 0.0
      %572 = vmatpush1.xpose.msra.mxu0 0.0
      %573 = vmatprep.subr.mxu0 0.0
      %574 = vmatpush1.xpose.msra.mxu0 0.0
      %575 = vmatprep.subr.mxu0 0.0
      %576 = vmatpush1.xpose.msra.mxu0 0.0
      %577 = vmatprep.subr.mxu0 0.0
      %578 = vmatpush1.xpose.msra.mxu0 0.0
      %579 = vmatprep.mubr.f32.mxu0 0.0
      %580 = vmatmul.mubr.f32.gmra.mrb[0].mxu0 %v489
      %v581 = vpop.f32.mrb[0].mxu0
      %v582 = vadd.f32 0.0, %v581
      %v583 = vpop.f32.mrb[0].mxu0
      %584 = vmatprep.mubr.f32.mxu0 0.0
      %585 = vmatmul.mubr.f32.gmra.mrb[0].mxu0 %v492
      %v586 = vpop.f32.mrb[0].mxu0
      %v587 = vadd.f32 0.0, %v586
      %v588 = vpop.f32.mrb[0].mxu0
      %589 = vmatprep.mubr.f32.mxu0 0.0
      %590 = vmatmul.mubr.f32.gmra.mrb[0].mxu0 %v495
      %v591 = vpop.f32.mrb[0].mxu0
      %v592 = vadd.f32 0.0, %v591
      %v593 = vpop.f32.mrb[0].mxu0
      %594 = vmatprep.mubr.f32.mxu0 0.0
      %595 = vmatmul.mubr.f32.gmra.mrb[0].mxu0 %v498
      %v596 = vpop.f32.mrb[0].mxu0
      %v597 = vadd.f32 0.0, %v596
      %v598 = vpop.f32.mrb[0].mxu0
      %599 = vmatprep.mubr.f32.mxu0 0.0
      %600 = vmatmul.mubr.f32.gmra.mrb[0].mxu0 %v501
      %v601 = vpop.f32.mrb[0].mxu0
      %v602 = vadd.f32 0.0, %v601
      %v603 = vpop.f32.mrb[0].mxu0
      %604 = vmatprep.mubr.f32.mxu0 0.0
      %605 = vmatmul.mubr.f32.gmra.mrb[0].mxu0 %v504
      %v606 = vpop.f32.mrb[0].mxu0
      %v607 = vadd.f32 0.0, %v606
      %v608 = vpop.f32.mrb[0].mxu0
      %609 = vmatprep.mubr.f32.mxu0 0.0
      %610 = vmatmul.mubr.f32.gmra.mrb[0].mxu0 %v507
      %v611 = vpop.f32.mrb[0].mxu0
      %v612 = vadd.f32 0.0, %v611
      %v613 = vpop.f32.mrb[0].mxu0
      %614 = vmatprep.mubr.f32.mxu0 0.0
      %615 = vmatmul.mubr.f32.gmra.mrb[0].mxu0 %v510
      %v616 = vpop.f32.mrb[0].mxu0
      %v617 = vadd.f32 0.0, %v616
      %v618 = vpop.f32.mrb[0].mxu0
      %619 = vdwg.mxu0
      %v620 = vand.u32 2147483647, %v582
      %v621 = vand.u32 2147483647, %v587
      %v622 = vand.u32 2147483647, %v592
      %v623 = vand.u32 2147483647, %v597
      %v624 = vand.u32 2147483647, %v602
      %v625 = vand.u32 2147483647, %v607
      %v626 = vand.u32 2147483647, %v612
      %v627 = vand.u32 2147483647, %v617
      %vm628 = vcmp.gt.f32.partialorder %v620, 1e-09
      %vm629 = vcmp.gt.f32.partialorder %v621, 1e-09
      %vm630 = vcmp.gt.f32.partialorder %v622, 1e-09
      %vm631 = vcmp.gt.f32.partialorder %v623, 1e-09
      %vm632 = vcmp.gt.f32.partialorder %v624, 1e-09
      %vm633 = vcmp.gt.f32.partialorder %v625, 1e-09
      %vm634 = vcmp.gt.f32.partialorder %v626, 1e-09
      %vm635 = vcmp.gt.f32.partialorder %v627, 1e-09
      %v636 = vsel %vm628, 1, 0
      %v637 = vsel %vm629, 1, 0
      %v638 = vsel %vm630, 1, 0
      %v639 = vsel %vm631, 1, 0
      %v640 = vsel %vm632, 1, 0
      %v641 = vsel %vm633, 1, 0
      %v642 = vsel %vm634, 1, 0
      %v643 = vsel %vm635, 1, 0
      %v644 = vcvt.s32.f32 %v636
      %v645 = vcvt.s32.f32 %v637
      %v646 = vcvt.s32.f32 %v638
      %v647 = vcvt.s32.f32 %v639
      %v648 = vcvt.s32.f32 %v640
      %v649 = vcvt.s32.f32 %v641
      %v650 = vcvt.s32.f32 %v642
      %v651 = vcvt.s32.f32 %v643
      %vm652 = vcmask 15360
      %v653 = vsel %vm652, %v644, 0.0
      %v654 = vsel %vm652, %v645, 0.0
      %v655 = vadd.f32 %v653, %v654
      %v656 = vsel %vm652, %v646, 0.0
      %v657 = vadd.f32 %v655, %v656
      %v658 = vsel %vm652, %v647, 0.0
      %v659 = vadd.f32 %v657, %v658
      %v660 = vsel %vm652, %v648, 0.0
      %v661 = vadd.f32 %v659, %v660
      %v662 = vsel %vm652, %v649, 0.0
      %v663 = vadd.f32 %v661, %v662
      %v664 = vsel %vm652, %v650, 0.0
      %v665 = vadd.f32 %v663, %v664
      %v666 = vsel %vm652, %v651, 0.0
      %v667 = vadd.f32 %v665, %v666
      %668 = vadd.xlane.f32.xlu0 %v667
      %v669 = vpop.xlane.xlu0 %668
      %v670 = vrot.slane %v669, 4
      %v671 = vadd.f32 %v669, %v670
      %v672 = vrot.slane %v671, 2
      %v673 = vadd.f32 %v671, %v672
      %v674 = vrot.slane %v673, 1
      %v675 = vadd.f32 %v673, %v674
      %s676 = vtos %v675
      %s677 = sadd.f32 %s676, 0.0
      %v678 = vrot.slane %v582, 7
      %v679 = vrot.slane %v587, 7
      %v680 = vrot.slane %v592, 7
      %v681 = vrot.slane %v597, 7
      %v682 = vrot.slane %v602, 7
      %v683 = vrot.slane %v607, 7
      %v684 = vrot.slane %v612, 7
      %v685 = vrot.slane %v617, 7
      %vm686 = vcmp.lt.s32.totalorder %v326, 1
      %v687 = vsel %vm686, %v684, %v685
      %v688 = vsel %vm686, %v683, %v684
      %v689 = vsel %vm686, %v682, %v683
      %v690 = vsel %vm686, %v681, %v682
      %v691 = vsel %vm686, %v680, %v681
      %v692 = vsel %vm686, %v679, %v680
      %v693 = vsel %vm686, %v678, %v679
      %v694 = vsel %vm686, %v685, %v678
      %696 = vset.pattern.permute.xlu0 0
      %697 = vperm.xlu0 %696, %v334
      %v698 = vpop.permute.xlu0 %697
      %701 = vset.pattern.permute.xlu0 0
      %702 = vperm.xlu0 %701, %v335
      %v703 = vpop.permute.xlu0 %702
      %706 = vset.pattern.permute.xlu0 0
      %707 = vperm.xlu0 %706, %v336
      %v708 = vpop.permute.xlu0 %707
      %711 = vset.pattern.permute.xlu0 0
      %712 = vperm.xlu0 %711, %v337
      %v713 = vpop.permute.xlu0 %712
      %716 = vset.pattern.permute.xlu0 0
      %717 = vperm.xlu0 %716, %v338
      %v718 = vpop.permute.xlu0 %717
      %721 = vset.pattern.permute.xlu0 0
      %722 = vperm.xlu0 %721, %v339
      %v723 = vpop.permute.xlu0 %722
      %726 = vset.pattern.permute.xlu0 0
      %727 = vperm.xlu0 %726, %v340
      %v728 = vpop.permute.xlu0 %727
      %731 = vset.pattern.permute.xlu0 0
      %732 = vperm.xlu0 %731, %v341
      %v733 = vpop.permute.xlu0 %732
      %v735 = vmul.f32 %v687, %v698
      %v736 = vmul.f32 %v694, %v703
      %v737 = vmul.f32 %v693, %v708
      %v738 = vmul.f32 %v692, %v713
      %v739 = vmul.f32 %v691, %v718
      %v740 = vmul.f32 %v690, %v723
      %v741 = vmul.f32 %v689, %v728
      %v742 = vmul.f32 %v688, %v733
      %743 = vst.msk [vmem:[#allocation2] sm:$0xff] %vm652, %v735
      %744 = vst.msk [vmem:[#allocation2 + $0x8] sm:$0xff] %vm652, %v736
      %745 = vst.msk [vmem:[#allocation2 + $0x10] sm:$0xff] %vm652, %v737
      %746 = vst.msk [vmem:[#allocation2 + $0x18] sm:$0xff] %vm652, %v738
      %747 = vst.msk [vmem:[#allocation2 + $0x20] sm:$0xff] %vm652, %v739
      %748 = vst.msk [vmem:[#allocation2 + $0x28] sm:$0xff] %vm652, %v740
      %749 = vst.msk [vmem:[#allocation2 + $0x30] sm:$0xff] %vm652, %v741
      %750 = vst.msk [vmem:[#allocation2 + $0x38] sm:$0xff] %vm652, %v742
      %751 = vset.pattern.permute.xlu0 1
      %752 = vperm.xlu0 %751, %v334
      %v753 = vpop.permute.xlu0 %752
      %755 = vset.pattern.permute.xlu0 1
      %756 = vperm.xlu0 %755, %v335
      %v757 = vpop.permute.xlu0 %756
      %759 = vset.pattern.permute.xlu0 1
      %760 = vperm.xlu0 %759, %v336
      %v761 = vpop.permute.xlu0 %760
      %763 = vset.pattern.permute.xlu0 1
      %764 = vperm.xlu0 %763, %v337
      %v765 = vpop.permute.xlu0 %764
      %767 = vset.pattern.permute.xlu0 1
      %768 = vperm.xlu0 %767, %v338
      %v769 = vpop.permute.xlu0 %768
      %771 = vset.pattern.permute.xlu0 1
      %772 = vperm.xlu0 %771, %v339
      %v773 = vpop.permute.xlu0 %772
      %775 = vset.pattern.permute.xlu0 1
      %776 = vperm.xlu0 %775, %v340
      %v777 = vpop.permute.xlu0 %776
      %779 = vset.pattern.permute.xlu0 1
      %780 = vperm.xlu0 %779, %v341
      %v781 = vpop.permute.xlu0 %780
      %v783 = vmul.f32 %v617, %v753
      %v784 = vmul.f32 %v582, %v757
      %v785 = vmul.f32 %v587, %v761
      %v786 = vmul.f32 %v592, %v765
      %v787 = vmul.f32 %v597, %v769
      %v788 = vmul.f32 %v602, %v773
      %v789 = vmul.f32 %v607, %v777
      %v790 = vmul.f32 %v612, %v781
      %799 = vrot.lane.b32.xlu0 %v783, 2
      %v800 = vpop.permute.xlu0 %799
      %801 = vrot.lane.b32.xlu0 %v784, 2
      %v802 = vpop.permute.xlu0 %801
      %803 = vrot.lane.b32.xlu0 %v785, 2
      %v804 = vpop.permute.xlu0 %803
      %805 = vrot.lane.b32.xlu0 %v786, 2
      %v806 = vpop.permute.xlu0 %805
      %807 = vrot.lane.b32.xlu0 %v787, 2
      %v808 = vpop.permute.xlu0 %807
      %809 = vrot.lane.b32.xlu0 %v788, 2
      %v810 = vpop.permute.xlu0 %809
      %811 = vrot.lane.b32.xlu0 %v789, 2
      %v812 = vpop.permute.xlu0 %811
      %813 = vrot.lane.b32.xlu0 %v790, 2
      %v814 = vpop.permute.xlu0 %813
      %vm823 = vcmask 31760
      %824 = vst.msk [vmem:[#allocation2] sm:$0xff] %vm823, %v800
      %825 = vst.msk [vmem:[#allocation2 + $0x8] sm:$0xff] %vm823, %v802
      %826 = vst.msk [vmem:[#allocation2 + $0x10] sm:$0xff] %vm823, %v804
      %827 = vst.msk [vmem:[#allocation2 + $0x18] sm:$0xff] %vm823, %v806
      %828 = vst.msk [vmem:[#allocation2 + $0x20] sm:$0xff] %vm823, %v808
      %829 = vst.msk [vmem:[#allocation2 + $0x28] sm:$0xff] %vm823, %v810
      %830 = vst.msk [vmem:[#allocation2 + $0x30] sm:$0xff] %vm823, %v812
      %831 = vst.msk [vmem:[#allocation2 + $0x38] sm:$0xff] %vm823, %v814
      %v832 = vrot.slane %v582, 1
      %v833 = vrot.slane %v587, 1
      %v834 = vrot.slane %v592, 1
      %v835 = vrot.slane %v597, 1
      %v836 = vrot.slane %v602, 1
      %v837 = vrot.slane %v607, 1
      %v838 = vrot.slane %v612, 1
      %v839 = vrot.slane %v617, 1
      %vm840 = vcmp.lt.s32.totalorder %v326, 7
      %v841 = vsel %vm840, %v838, %v839
      %v842 = vsel %vm840, %v837, %v838
      %v843 = vsel %vm840, %v836, %v837
      %v844 = vsel %vm840, %v835, %v836
      %v845 = vsel %vm840, %v834, %v835
      %v846 = vsel %vm840, %v833, %v834
      %v847 = vsel %vm840, %v832, %v833
      %v848 = vsel %vm840, %v839, %v832
      %849 = vset.pattern.permute.xlu0 2
      %850 = vperm.xlu0 %849, %v334
      %v851 = vpop.permute.xlu0 %850
      %853 = vset.pattern.permute.xlu0 2
      %854 = vperm.xlu0 %853, %v335
      %v855 = vpop.permute.xlu0 %854
      %857 = vset.pattern.permute.xlu0 2
      %858 = vperm.xlu0 %857, %v336
      %v859 = vpop.permute.xlu0 %858
      %861 = vset.pattern.permute.xlu0 2
      %862 = vperm.xlu0 %861, %v337
      %v863 = vpop.permute.xlu0 %862
      %865 = vset.pattern.permute.xlu0 2
      %866 = vperm.xlu0 %865, %v338
      %v867 = vpop.permute.xlu0 %866
      %869 = vset.pattern.permute.xlu0 2
      %870 = vperm.xlu0 %869, %v339
      %v871 = vpop.permute.xlu0 %870
      %873 = vset.pattern.permute.xlu0 2
      %874 = vperm.xlu0 %873, %v340
      %v875 = vpop.permute.xlu0 %874
      %877 = vset.pattern.permute.xlu0 2
      %878 = vperm.xlu0 %877, %v341
      %v879 = vpop.permute.xlu0 %878
      %v881 = vmul.f32 %v848, %v851
      %v882 = vmul.f32 %v847, %v855
      %v883 = vmul.f32 %v846, %v859
      %v884 = vmul.f32 %v845, %v863
      %v885 = vmul.f32 %v844, %v867
      %v886 = vmul.f32 %v843, %v871
      %v887 = vmul.f32 %v842, %v875
      %v888 = vmul.f32 %v841, %v879
      %897 = vrot.lane.b32.xlu0 %v881, 4
      %v898 = vpop.permute.xlu0 %897
      %899 = vrot.lane.b32.xlu0 %v882, 4
      %v900 = vpop.permute.xlu0 %899
      %901 = vrot.lane.b32.xlu0 %v883, 4
      %v902 = vpop.permute.xlu0 %901
      %903 = vrot.lane.b32.xlu0 %v884, 4
      %v904 = vpop.permute.xlu0 %903
      %905 = vrot.lane.b32.xlu0 %v885, 4
      %v906 = vpop.permute.xlu0 %905
      %907 = vrot.lane.b32.xlu0 %v886, 4
      %v908 = vpop.permute.xlu0 %907
      %909 = vrot.lane.b32.xlu0 %v887, 4
      %v910 = vpop.permute.xlu0 %909
      %911 = vrot.lane.b32.xlu0 %v888, 4
      %v912 = vpop.permute.xlu0 %911
      %vm921 = vcmask 48160
      %922 = vst.msk [vmem:[#allocation2] sm:$0xff] %vm921, %v898
      %923 = vst.msk [vmem:[#allocation2 + $0x8] sm:$0xff] %vm921, %v900
      %924 = vst.msk [vmem:[#allocation2 + $0x10] sm:$0xff] %vm921, %v902
      %925 = vst.msk [vmem:[#allocation2 + $0x18] sm:$0xff] %vm921, %v904
      %926 = vst.msk [vmem:[#allocation2 + $0x20] sm:$0xff] %vm921, %v906
      %927 = vst.msk [vmem:[#allocation2 + $0x28] sm:$0xff] %vm921, %v908
      %928 = vst.msk [vmem:[#allocation2 + $0x30] sm:$0xff] %vm921, %v910
      %929 = vst.msk [vmem:[#allocation2 + $0x38] sm:$0xff] %vm921, %v912
      %930 = vset.pattern.permute.xlu0 3
      %931 = vperm.xlu0 %930, %v334
      %v932 = vpop.permute.xlu0 %931
      %934 = vset.pattern.permute.xlu0 3
      %935 = vperm.xlu0 %934, %v335
      %v936 = vpop.permute.xlu0 %935
      %938 = vset.pattern.permute.xlu0 3
      %939 = vperm.xlu0 %938, %v336
      %v940 = vpop.permute.xlu0 %939
      %942 = vset.pattern.permute.xlu0 3
      %943 = vperm.xlu0 %942, %v337
      %v944 = vpop.permute.xlu0 %943
      %946 = vset.pattern.permute.xlu0 3
      %947 = vperm.xlu0 %946, %v338
      %v948 = vpop.permute.xlu0 %947
      %950 = vset.pattern.permute.xlu0 3
      %951 = vperm.xlu0 %950, %v339
      %v952 = vpop.permute.xlu0 %951
      %954 = vset.pattern.permute.xlu0 3
      %955 = vperm.xlu0 %954, %v340
      %v956 = vpop.permute.xlu0 %955
      %958 = vset.pattern.permute.xlu0 3
      %959 = vperm.xlu0 %958, %v341
      %v960 = vpop.permute.xlu0 %959
      %v962 = vmul.f32 %v694, %v932
      %v963 = vmul.f32 %v693, %v936
      %v964 = vmul.f32 %v692, %v940
      %v965 = vmul.f32 %v691, %v944
      %v966 = vmul.f32 %v690, %v948
      %v967 = vmul.f32 %v689, %v952
      %v968 = vmul.f32 %v688, %v956
      %v969 = vmul.f32 %v687, %v960
      %978 = vrot.lane.b32.xlu0 %v962, 6
      %v979 = vpop.permute.xlu0 %978
      %980 = vrot.lane.b32.xlu0 %v963, 6
      %v981 = vpop.permute.xlu0 %980
      %982 = vrot.lane.b32.xlu0 %v964, 6
      %v983 = vpop.permute.xlu0 %982
      %984 = vrot.lane.b32.xlu0 %v965, 6
      %v985 = vpop.permute.xlu0 %984
      %986 = vrot.lane.b32.xlu0 %v966, 6
      %v987 = vpop.permute.xlu0 %986
      %988 = vrot.lane.b32.xlu0 %v967, 6
      %v989 = vpop.permute.xlu0 %988
      %990 = vrot.lane.b32.xlu0 %v968, 6
      %v991 = vpop.permute.xlu0 %990
      %992 = vrot.lane.b32.xlu0 %v969, 6
      %v993 = vpop.permute.xlu0 %992
      %vm1002 = vcmask 64560
      %1003 = vst.msk [vmem:[#allocation2] sm:$0xff] %vm1002, %v979
      %1004 = vst.msk [vmem:[#allocation2 + $0x8] sm:$0xff] %vm1002, %v981
      %1005 = vst.msk [vmem:[#allocation2 + $0x10] sm:$0xff] %vm1002, %v983
      %1006 = vst.msk [vmem:[#allocation2 + $0x18] sm:$0xff] %vm1002, %v985
      %1007 = vst.msk [vmem:[#allocation2 + $0x20] sm:$0xff] %vm1002, %v987
      %1008 = vst.msk [vmem:[#allocation2 + $0x28] sm:$0xff] %vm1002, %v989
      %1009 = vst.msk [vmem:[#allocation2 + $0x30] sm:$0xff] %vm1002, %v991
      %1010 = vst.msk [vmem:[#allocation2 + $0x38] sm:$0xff] %vm1002, %v993
      %1011 = vset.pattern.permute.xlu0 4
      %1012 = vperm.xlu0 %1011, %v334
      %v1013 = vpop.permute.xlu0 %1012
      %1015 = vset.pattern.permute.xlu0 4
      %1016 = vperm.xlu0 %1015, %v335
      %v1017 = vpop.permute.xlu0 %1016
      %1019 = vset.pattern.permute.xlu0 4
      %1020 = vperm.xlu0 %1019, %v336
      %v1021 = vpop.permute.xlu0 %1020
      %1023 = vset.pattern.permute.xlu0 4
      %1024 = vperm.xlu0 %1023, %v337
      %v1025 = vpop.permute.xlu0 %1024
      %1027 = vset.pattern.permute.xlu0 4
      %1028 = vperm.xlu0 %1027, %v338
      %v1029 = vpop.permute.xlu0 %1028
      %1031 = vset.pattern.permute.xlu0 4
      %1032 = vperm.xlu0 %1031, %v339
      %v1033 = vpop.permute.xlu0 %1032
      %1035 = vset.pattern.permute.xlu0 4
      %1036 = vperm.xlu0 %1035, %v340
      %v1037 = vpop.permute.xlu0 %1036
      %1039 = vset.pattern.permute.xlu0 4
      %1040 = vperm.xlu0 %1039, %v341
      %v1041 = vpop.permute.xlu0 %1040
      %v1043 = vmul.f32 %v582, %v1013
      %v1044 = vmul.f32 %v587, %v1017
      %v1045 = vmul.f32 %v592, %v1021
      %v1046 = vmul.f32 %v597, %v1025
      %v1047 = vmul.f32 %v602, %v1029
      %v1048 = vmul.f32 %v607, %v1033
      %v1049 = vmul.f32 %v612, %v1037
      %v1050 = vmul.f32 %v617, %v1041
      %1059 = vrot.lane.b32.xlu0 %v1043, 8
      %v1060 = vpop.permute.xlu0 %1059
      %1061 = vrot.lane.b32.xlu0 %v1044, 8
      %v1062 = vpop.permute.xlu0 %1061
      %1063 = vrot.lane.b32.xlu0 %v1045, 8
      %v1064 = vpop.permute.xlu0 %1063
      %1065 = vrot.lane.b32.xlu0 %v1046, 8
      %v1066 = vpop.permute.xlu0 %1065
      %1067 = vrot.lane.b32.xlu0 %v1047, 8
      %v1068 = vpop.permute.xlu0 %1067
      %1069 = vrot.lane.b32.xlu0 %v1048, 8
      %v1070 = vpop.permute.xlu0 %1069
      %1071 = vrot.lane.b32.xlu0 %v1049, 8
      %v1072 = vpop.permute.xlu0 %1071
      %1073 = vrot.lane.b32.xlu0 %v1050, 8
      %v1074 = vpop.permute.xlu0 %1073
      %vm1083 = vcmask 80960
      %1084 = vst.msk [vmem:[#allocation2] sm:$0xff] %vm1083, %v1060
      %1085 = vst.msk [vmem:[#allocation2 + $0x8] sm:$0xff] %vm1083, %v1062
      %1086 = vst.msk [vmem:[#allocation2 + $0x10] sm:$0xff] %vm1083, %v1064
      %1087 = vst.msk [vmem:[#allocation2 + $0x18] sm:$0xff] %vm1083, %v1066
      %1088 = vst.msk [vmem:[#allocation2 + $0x20] sm:$0xff] %vm1083, %v1068
      %1089 = vst.msk [vmem:[#allocation2 + $0x28] sm:$0xff] %vm1083, %v1070
      %1090 = vst.msk [vmem:[#allocation2 + $0x30] sm:$0xff] %vm1083, %v1072
      %1091 = vst.msk [vmem:[#allocation2 + $0x38] sm:$0xff] %vm1083, %v1074
      %1092 = vset.pattern.permute.xlu0 5
      %1093 = vperm.xlu0 %1092, %v334
      %v1094 = vpop.permute.xlu0 %1093
      %1096 = vset.pattern.permute.xlu0 5
      %1097 = vperm.xlu0 %1096, %v335
      %v1098 = vpop.permute.xlu0 %1097
      %1100 = vset.pattern.permute.xlu0 5
      %1101 = vperm.xlu0 %1100, %v336
      %v1102 = vpop.permute.xlu0 %1101
      %1104 = vset.pattern.permute.xlu0 5
      %1105 = vperm.xlu0 %1104, %v337
      %v1106 = vpop.permute.xlu0 %1105
      %1108 = vset.pattern.permute.xlu0 5
      %1109 = vperm.xlu0 %1108, %v338
      %v1110 = vpop.permute.xlu0 %1109
      %1112 = vset.pattern.permute.xlu0 5
      %1113 = vperm.xlu0 %1112, %v339
      %v1114 = vpop.permute.xlu0 %1113
      %1116 = vset.pattern.permute.xlu0 5
      %1117 = vperm.xlu0 %1116, %v340
      %v1118 = vpop.permute.xlu0 %1117
      %1120 = vset.pattern.permute.xlu0 5
      %1121 = vperm.xlu0 %1120, %v341
      %v1122 = vpop.permute.xlu0 %1121
      %v1124 = vmul.f32 %v847, %v1094
      %v1125 = vmul.f32 %v846, %v1098
      %v1126 = vmul.f32 %v845, %v1102
      %v1127 = vmul.f32 %v844, %v1106
      %v1128 = vmul.f32 %v843, %v1110
      %v1129 = vmul.f32 %v842, %v1114
      %v1130 = vmul.f32 %v841, %v1118
      %v1131 = vmul.f32 %v848, %v1122
      %1140 = vrot.lane.b32.xlu0 %v1124, 10
      %v1141 = vpop.permute.xlu0 %1140
      %1142 = vrot.lane.b32.xlu0 %v1125, 10
      %v1143 = vpop.permute.xlu0 %1142
      %1144 = vrot.lane.b32.xlu0 %v1126, 10
      %v1145 = vpop.permute.xlu0 %1144
      %1146 = vrot.lane.b32.xlu0 %v1127, 10
      %v1147 = vpop.permute.xlu0 %1146
      %1148 = vrot.lane.b32.xlu0 %v1128, 10
      %v1149 = vpop.permute.xlu0 %1148
      %1150 = vrot.lane.b32.xlu0 %v1129, 10
      %v1151 = vpop.permute.xlu0 %1150
      %1152 = vrot.lane.b32.xlu0 %v1130, 10
      %v1153 = vpop.permute.xlu0 %1152
      %1154 = vrot.lane.b32.xlu0 %v1131, 10
      %v1155 = vpop.permute.xlu0 %1154
      %vm1164 = vcmask 97360
      %1165 = vst.msk [vmem:[#allocation2] sm:$0xff] %vm1164, %v1141
      %1166 = vst.msk [vmem:[#allocation2 + $0x8] sm:$0xff] %vm1164, %v1143
      %1167 = vst.msk [vmem:[#allocation2 + $0x10] sm:$0xff] %vm1164, %v1145
      %1168 = vst.msk [vmem:[#allocation2 + $0x18] sm:$0xff] %vm1164, %v1147
      %1169 = vst.msk [vmem:[#allocation2 + $0x20] sm:$0xff] %vm1164, %v1149
      %1170 = vst.msk [vmem:[#allocation2 + $0x28] sm:$0xff] %vm1164, %v1151
      %1171 = vst.msk [vmem:[#allocation2 + $0x30] sm:$0xff] %vm1164, %v1153
      %1172 = vst.msk [vmem:[#allocation2 + $0x38] sm:$0xff] %vm1164, %v1155
      %1173 = vset.pattern.permute.xlu0 6
      %1174 = vperm.xlu0 %1173, %v334
      %v1175 = vpop.permute.xlu0 %1174
      %1177 = vset.pattern.permute.xlu0 6
      %1178 = vperm.xlu0 %1177, %v335
      %v1179 = vpop.permute.xlu0 %1178
      %1181 = vset.pattern.permute.xlu0 6
      %1182 = vperm.xlu0 %1181, %v336
      %v1183 = vpop.permute.xlu0 %1182
      %1185 = vset.pattern.permute.xlu0 6
      %1186 = vperm.xlu0 %1185, %v337
      %v1187 = vpop.permute.xlu0 %1186
      %1189 = vset.pattern.permute.xlu0 6
      %1190 = vperm.xlu0 %1189, %v338
      %v1191 = vpop.permute.xlu0 %1190
      %1193 = vset.pattern.permute.xlu0 6
      %1194 = vperm.xlu0 %1193, %v339
      %v1195 = vpop.permute.xlu0 %1194
      %1197 = vset.pattern.permute.xlu0 6
      %1198 = vperm.xlu0 %1197, %v340
      %v1199 = vpop.permute.xlu0 %1198
      %1201 = vset.pattern.permute.xlu0 6
      %1202 = vperm.xlu0 %1201, %v341
      %v1203 = vpop.permute.xlu0 %1202
      %v1205 = vmul.f32 %v693, %v1175
      %v1206 = vmul.f32 %v692, %v1179
      %v1207 = vmul.f32 %v691, %v1183
      %v1208 = vmul.f32 %v690, %v1187
      %v1209 = vmul.f32 %v689, %v1191
      %v1210 = vmul.f32 %v688, %v1195
      %v1211 = vmul.f32 %v687, %v1199
      %v1212 = vmul.f32 %v694, %v1203
      %1221 = vrot.lane.b32.xlu0 %v1205, 12
      %v1222 = vpop.permute.xlu0 %1221
      %1223 = vrot.lane.b32.xlu0 %v1206, 12
      %v1224 = vpop.permute.xlu0 %1223
      %1225 = vrot.lane.b32.xlu0 %v1207, 12
      %v1226 = vpop.permute.xlu0 %1225
      %1227 = vrot.lane.b32.xlu0 %v1208, 12
      %v1228 = vpop.permute.xlu0 %1227
      %1229 = vrot.lane.b32.xlu0 %v1209, 12
      %v1230 = vpop.permute.xlu0 %1229
      %1231 = vrot.lane.b32.xlu0 %v1210, 12
      %v1232 = vpop.permute.xlu0 %1231
      %1233 = vrot.lane.b32.xlu0 %v1211, 12
      %v1234 = vpop.permute.xlu0 %1233
      %1235 = vrot.lane.b32.xlu0 %v1212, 12
      %v1236 = vpop.permute.xlu0 %1235
      %vm1245 = vcmask 113760
      %1246 = vst.msk [vmem:[#allocation2] sm:$0xff] %vm1245, %v1222
      %1247 = vst.msk [vmem:[#allocation2 + $0x8] sm:$0xff] %vm1245, %v1224
      %1248 = vst.msk [vmem:[#allocation2 + $0x10] sm:$0xff] %vm1245, %v1226
      %1249 = vst.msk [vmem:[#allocation2 + $0x18] sm:$0xff] %vm1245, %v1228
      %1250 = vst.msk [vmem:[#allocation2 + $0x20] sm:$0xff] %vm1245, %v1230
      %1251 = vst.msk [vmem:[#allocation2 + $0x28] sm:$0xff] %vm1245, %v1232
      %1252 = vst.msk [vmem:[#allocation2 + $0x30] sm:$0xff] %vm1245, %v1234
      %1253 = vst.msk [vmem:[#allocation2 + $0x38] sm:$0xff] %vm1245, %v1236
      %1254 = vset.pattern.permute.xlu0 7
      %1255 = vperm.xlu0 %1254, %v334
      %v1256 = vpop.permute.xlu0 %1255
      %1258 = vset.pattern.permute.xlu0 7
      %1259 = vperm.xlu0 %1258, %v335
      %v1260 = vpop.permute.xlu0 %1259
      %1262 = vset.pattern.permute.xlu0 7
      %1263 = vperm.xlu0 %1262, %v336
      %v1264 = vpop.permute.xlu0 %1263
      %1266 = vset.pattern.permute.xlu0 7
      %1267 = vperm.xlu0 %1266, %v337
      %v1268 = vpop.permute.xlu0 %1267
      %1270 = vset.pattern.permute.xlu0 7
      %1271 = vperm.xlu0 %1270, %v338
      %v1272 = vpop.permute.xlu0 %1271
      %1274 = vset.pattern.permute.xlu0 7
      %1275 = vperm.xlu0 %1274, %v339
      %v1276 = vpop.permute.xlu0 %1275
      %1278 = vset.pattern.permute.xlu0 7
      %1279 = vperm.xlu0 %1278, %v340
      %v1280 = vpop.permute.xlu0 %1279
      %1282 = vset.pattern.permute.xlu0 7
      %1283 = vperm.xlu0 %1282, %v341
      %v1284 = vpop.permute.xlu0 %1283
      %v1286 = vmul.f32 %v587, %v1256
      %v1287 = vmul.f32 %v592, %v1260
      %v1288 = vmul.f32 %v597, %v1264
      %v1289 = vmul.f32 %v602, %v1268
      %v1290 = vmul.f32 %v607, %v1272
      %v1291 = vmul.f32 %v612, %v1276
      %v1292 = vmul.f32 %v617, %v1280
      %v1293 = vmul.f32 %v582, %v1284
      %1302 = vrot.lane.b32.xlu0 %v1286, 14
      %v1303 = vpop.permute.xlu0 %1302
      %1304 = vrot.lane.b32.xlu0 %v1287, 14
      %v1305 = vpop.permute.xlu0 %1304
      %1306 = vrot.lane.b32.xlu0 %v1288, 14
      %v1307 = vpop.permute.xlu0 %1306
      %1308 = vrot.lane.b32.xlu0 %v1289, 14
      %v1309 = vpop.permute.xlu0 %1308
      %1310 = vrot.lane.b32.xlu0 %v1290, 14
      %v1311 = vpop.permute.xlu0 %1310
      %1312 = vrot.lane.b32.xlu0 %v1291, 14
      %v1313 = vpop.permute.xlu0 %1312
      %1314 = vrot.lane.b32.xlu0 %v1292, 14
      %v1315 = vpop.permute.xlu0 %1314
      %1316 = vrot.lane.b32.xlu0 %v1293, 14
      %v1317 = vpop.permute.xlu0 %1316
      %vm1326 = vcmask 130160
      %1327 = vst.msk [vmem:[#allocation2] sm:$0xff] %vm1326, %v1303
      %1328 = vst.msk [vmem:[#allocation2 + $0x8] sm:$0xff] %vm1326, %v1305
      %1329 = vst.msk [vmem:[#allocation2 + $0x10] sm:$0xff] %vm1326, %v1307
      %1330 = vst.msk [vmem:[#allocation2 + $0x18] sm:$0xff] %vm1326, %v1309
      %1331 = vst.msk [vmem:[#allocation2 + $0x20] sm:$0xff] %vm1326, %v1311
      %1332 = vst.msk [vmem:[#allocation2 + $0x28] sm:$0xff] %vm1326, %v1313
      %1333 = vst.msk [vmem:[#allocation2 + $0x30] sm:$0xff] %vm1326, %v1315
      %1334 = vst.msk [vmem:[#allocation2 + $0x38] sm:$0xff] %vm1326, %v1317
      %1335 = vset.pattern.permute.xlu0 8
      %1336 = vperm.xlu0 %1335, %v334
      %v1337 = vpop.permute.xlu0 %1336
      %1339 = vset.pattern.permute.xlu0 8
      %1340 = vperm.xlu0 %1339, %v335
      %v1341 = vpop.permute.xlu0 %1340
      %1343 = vset.pattern.permute.xlu0 8
      %1344 = vperm.xlu0 %1343, %v336
      %v1345 = vpop.permute.xlu0 %1344
      %1347 = vset.pattern.permute.xlu0 8
      %1348 = vperm.xlu0 %1347, %v337
      %v1349 = vpop.permute.xlu0 %1348
      %1351 = vset.pattern.permute.xlu0 8
      %1352 = vperm.xlu0 %1351, %v338
      %v1353 = vpop.permute.xlu0 %1352
      %1355 = vset.pattern.permute.xlu0 8
      %1356 = vperm.xlu0 %1355, %v339
      %v1357 = vpop.permute.xlu0 %1356
      %1359 = vset.pattern.permute.xlu0 8
      %1360 = vperm.xlu0 %1359, %v340
      %v1361 = vpop.permute.xlu0 %1360
      %1363 = vset.pattern.permute.xlu0 8
      %1364 = vperm.xlu0 %1363, %v341
      %v1365 = vpop.permute.xlu0 %1364
      %v1367 = vmul.f32 %v846, %v1337
      %v1368 = vmul.f32 %v845, %v1341
      %v1369 = vmul.f32 %v844, %v1345
      %v1370 = vmul.f32 %v843, %v1349
      %v1371 = vmul.f32 %v842, %v1353
      %v1372 = vmul.f32 %v841, %v1357
      %v1373 = vmul.f32 %v848, %v1361
      %v1374 = vmul.f32 %v847, %v1365
      %1383 = vrot.lane.b32.xlu0 %v1367, 16
      %v1384 = vpop.permute.xlu0 %1383
      %1385 = vrot.lane.b32.xlu0 %v1368, 16
      %v1386 = vpop.permute.xlu0 %1385
      %1387 = vrot.lane.b32.xlu0 %v1369, 16
      %v1388 = vpop.permute.xlu0 %1387
      %1389 = vrot.lane.b32.xlu0 %v1370, 16
      %v1390 = vpop.permute.xlu0 %1389
      %1391 = vrot.lane.b32.xlu0 %v1371, 16
      %v1392 = vpop.permute.xlu0 %1391
      %1393 = vrot.lane.b32.xlu0 %v1372, 16
      %v1394 = vpop.permute.xlu0 %1393
      %1395 = vrot.lane.b32.xlu0 %v1373, 16
      %v1396 = vpop.permute.xlu0 %1395
      %1397 = vrot.lane.b32.xlu0 %v1374, 16
      %v1398 = vpop.permute.xlu0 %1397
      %vm1407 = vcmask 146560
      %1408 = vst.msk [vmem:[#allocation2] sm:$0xff] %vm1407, %v1384
      %1409 = vst.msk [vmem:[#allocation2 + $0x8] sm:$0xff] %vm1407, %v1386
      %1410 = vst.msk [vmem:[#allocation2 + $0x10] sm:$0xff] %vm1407, %v1388
      %1411 = vst.msk [vmem:[#allocation2 + $0x18] sm:$0xff] %vm1407, %v1390
      %1412 = vst.msk [vmem:[#allocation2 + $0x20] sm:$0xff] %vm1407, %v1392
      %1413 = vst.msk [vmem:[#allocation2 + $0x28] sm:$0xff] %vm1407, %v1394
      %1414 = vst.msk [vmem:[#allocation2 + $0x30] sm:$0xff] %vm1407, %v1396
      %1415 = vst.msk [vmem:[#allocation2 + $0x38] sm:$0xff] %vm1407, %v1398
      %v1416 = vld [vmem:[#allocation2] sm:$0xff]
      %v1417 = vld [vmem:[#allocation2 + $0x8] sm:$0xff]
      %v1418 = vld [vmem:[#allocation2 + $0x10] sm:$0xff]
      %v1419 = vld [vmem:[#allocation2 + $0x18] sm:$0xff]
      %v1420 = vld [vmem:[#allocation2 + $0x20] sm:$0xff]
      %v1421 = vld [vmem:[#allocation2 + $0x28] sm:$0xff]
      %v1422 = vld [vmem:[#allocation2 + $0x30] sm:$0xff]
      %v1423 = vld [vmem:[#allocation2 + $0x38] sm:$0xff]
      %v1424 = vld [vmem:[%s3] sm:$0xff]
      %v1425 = vld [vmem:[%s3 + $0x8] sm:$0xff]
      %v1426 = vld [vmem:[%s3 + $0x10] sm:$0x3]
      %v1427 = vld [vmem:[%s4] sm:$0x1]
      %v1429 = vlaneseq
      %v1430 = vshrl.u32 %v1429, 7
      %v1431 = vsub.s32 0, %v1430
      %v1432 = vrot.slane %v1427, %v1431
      %vm1434 = vcmask 146432
      %v1436 = vsel %vm1434, %v1416, 0
      %v1439 = vsel %vm1434, %v1417, 0
      %v1442 = vsel %vm1434, %v1418, 0
      %v1445 = vsel %vm1434, %v1419, 0
      %v1448 = vsel %vm1434, %v1420, 0
      %v1451 = vsel %vm1434, %v1421, 0
      %v1454 = vsel %vm1434, %v1422, 0
      %v1457 = vsel %vm1434, %v1423, 0
      %vm1459 = vcmask 1041408
      %v1461 = vsel %vm1459, %v1426, 0
      %1463 = vmatprep.subr.mxu0 0.0
      %1464 = vmatpush1.msra.mxu0 %v1424
      %1465 = vmatprep.subr.mxu0 0.0
      %1466 = vmatpush1.msra.mxu0 %v1425
      %1467 = vmatprep.subr.mxu0 0.0
      %1468 = vmatpush1.msra.mxu0 %v1461
      %1469 = vmatprep.subr.mxu0 0.0
      %1470 = vmatpush1.msra.mxu0 0.0
      %1471 = vmatprep.subr.mxu0 0.0
      %1472 = vmatpush1.msra.mxu0 0.0
      %1473 = vmatprep.subr.mxu0 0.0
      %1474 = vmatpush1.msra.mxu0 0.0
      %1475 = vmatprep.subr.mxu0 0.0
      %1476 = vmatpush1.msra.mxu0 0.0
      %1477 = vmatprep.subr.mxu0 0.0
      %1478 = vmatpush1.msra.mxu0 0.0
      %1479 = vmatprep.subr.mxu0 0.0
      %1480 = vmatpush1.msra.mxu0 0.0
      %1481 = vmatprep.subr.mxu0 0.0
      %1482 = vmatpush1.msra.mxu0 0.0
      %1483 = vmatprep.subr.mxu0 0.0
      %1484 = vmatpush1.msra.mxu0 0.0
      %1485 = vmatprep.subr.mxu0 0.0
      %1486 = vmatpush1.msra.mxu0 0.0
      %1487 = vmatprep.subr.mxu0 0.0
      %1488 = vmatpush1.msra.mxu0 0.0
      %1489 = vmatprep.subr.mxu0 0.0
      %1490 = vmatpush1.msra.mxu0 0.0
      %1491 = vmatprep.subr.mxu0 0.0
      %1492 = vmatpush1.msra.mxu0 0.0
      %1493 = vmatprep.subr.mxu0 0.0
      %1494 = vmatpush1.msra.mxu0 0.0
      %1495 = vmatprep.subr.mxu0 0.0
      %1496 = vmatpush1.msra.mxu0 0.0
      %1497 = vmatprep.subr.mxu0 0.0
      %1498 = vmatpush1.msra.mxu0 0.0
      %1499 = vmatprep.subr.mxu0 0.0
      %1500 = vmatpush1.msra.mxu0 0.0
      %1501 = vmatprep.subr.mxu0 0.0
      %1502 = vmatpush1.msra.mxu0 0.0
      %1503 = vmatprep.subr.mxu0 0.0
      %1504 = vmatpush1.msra.mxu0 0.0
      %1505 = vmatprep.subr.mxu0 0.0
      %1506 = vmatpush1.msra.mxu0 0.0
      %1507 = vmatprep.subr.mxu0 0.0
      %1508 = vmatpush1.msra.mxu0 0.0
      %1509 = vmatprep.subr.mxu0 0.0
      %1510 = vmatpush1.msra.mxu0 0.0
      %1511 = vmatprep.subr.mxu0 0.0
      %1512 = vmatpush1.msra.mxu0 0.0
      %1513 = vmatprep.subr.mxu0 0.0
      %1514 = vmatpush1.msra.mxu0 0.0
      %1515 = vmatprep.subr.mxu0 0.0
      %1516 = vmatpush1.msra.mxu0 0.0
      %1517 = vmatprep.subr.mxu0 0.0
      %1518 = vmatpush1.msra.mxu0 0.0
      %1519 = vmatprep.subr.mxu0 0.0
      %1520 = vmatpush1.msra.mxu0 0.0
      %1521 = vmatprep.subr.mxu0 0.0
      %1522 = vmatpush1.msra.mxu0 0.0
      %1523 = vmatprep.subr.mxu0 0.0
      %1524 = vmatpush1.msra.mxu0 0.0
      %1525 = vmatprep.subr.mxu0 0.0
      %1526 = vmatpush1.msra.mxu0 0.0
      %1527 = vmatprep.mubr.f32.mxu0 0.0
      %1528 = vmatmul.mubr.f32.gmra.mrb[0].mxu0 %v1436
      %v1529 = vpop.f32.mrb[0].mxu0
      %v1530 = vadd.f32 %v1432, %v1529
      %v1531 = vpop.f32.mrb[0].mxu0
      %1532 = vmatprep.mubr.f32.mxu0 0.0
      %1533 = vmatmul.mubr.f32.gmra.mrb[0].mxu0 %v1439
      %v1534 = vpop.f32.mrb[0].mxu0
      %v1535 = vadd.f32 %v1432, %v1534
      %v1536 = vpop.f32.mrb[0].mxu0
      %1537 = vmatprep.mubr.f32.mxu0 0.0
      %1538 = vmatmul.mubr.f32.gmra.mrb[0].mxu0 %v1442
      %v1539 = vpop.f32.mrb[0].mxu0
      %v1540 = vadd.f32 %v1432, %v1539
      %v1541 = vpop.f32.mrb[0].mxu0
      %1542 = vmatprep.mubr.f32.mxu0 0.0
      %1543 = vmatmul.mubr.f32.gmra.mrb[0].mxu0 %v1445
      %v1544 = vpop.f32.mrb[0].mxu0
      %v1545 = vadd.f32 %v1432, %v1544
      %v1546 = vpop.f32.mrb[0].mxu0
      %1547 = vmatprep.mubr.f32.mxu0 0.0
      %1548 = vmatmul.mubr.f32.gmra.mrb[0].mxu0 %v1448
      %v1549 = vpop.f32.mrb[0].mxu0
      %v1550 = vadd.f32 %v1432, %v1549
      %v1551 = vpop.f32.mrb[0].mxu0
      %1552 = vmatprep.mubr.f32.mxu0 0.0
      %1553 = vmatmul.mubr.f32.gmra.mrb[0].mxu0 %v1451
      %v1554 = vpop.f32.mrb[0].mxu0
      %v1555 = vadd.f32 %v1432, %v1554
      %v1556 = vpop.f32.mrb[0].mxu0
      %1557 = vmatprep.mubr.f32.mxu0 0.0
      %1558 = vmatmul.mubr.f32.gmra.mrb[0].mxu0 %v1454
      %v1559 = vpop.f32.mrb[0].mxu0
      %v1560 = vadd.f32 %v1432, %v1559
      %v1561 = vpop.f32.mrb[0].mxu0
      %1562 = vmatprep.mubr.f32.mxu0 0.0
      %1563 = vmatmul.mubr.f32.gmra.mrb[0].mxu0 %v1457
      %v1564 = vpop.f32.mrb[0].mxu0
      %v1565 = vadd.f32 %v1432, %v1564
      %v1566 = vpop.f32.mrb[0].mxu0
      %1567 = vdwg.mxu0
      %1568 = vxpose.xlu0.b32.start [1/16] %v1530, 128
      %1569 = vxpose.xlu0.b32.cont [2/16] %v1535, 128
      %1570 = vxpose.xlu0.b32.cont [3/16] %v1540, 128
      %1571 = vxpose.xlu0.b32.cont [4/16] %v1545, 128
      %1572 = vxpose.xlu0.b32.cont [5/16] %v1550, 128
      %1573 = vxpose.xlu0.b32.cont [6/16] %v1555, 128
      %1574 = vxpose.xlu0.b32.cont [7/16] %v1560, 128
      %1575 = vxpose.xlu0.b32.cont [8/16] %v1565, 128
      %1576 = vxpose.xlu0.b32.cont [9/16] 0.0, 128
      %1577 = vxpose.xlu0.b32.cont [10/16] 0.0, 128
      %1578 = vxpose.xlu0.b32.cont [11/16] 0.0, 128
      %1579 = vxpose.xlu0.b32.cont [12/16] 0.0, 128
      %1580 = vxpose.xlu0.b32.cont [13/16] 0.0, 128
      %1581 = vxpose.xlu0.b32.cont [14/16] 0.0, 128
      %1582 = vxpose.xlu0.b32.cont [15/16] 0.0, 128
      %1583 = vxpose.xlu0.b32.end [16/16] 0.0, 128
      %v1584 = vpop.trf.xlu0
      %v1585 = vpop.trf.xlu0
      %v1586 = vpop.trf.xlu0
      %v1587 = vpop.trf.xlu0
      %v1588 = vpop.trf.xlu0
      %v1589 = vpop.trf.xlu0
      %v1590 = vpop.trf.xlu0
      %v1591 = vpop.trf.xlu0
      %v1592 = vpop.trf.xlu0
      %v1593 = vpop.trf.xlu0
      %v1594 = vpop.trf.xlu0
      %v1595 = vpop.trf.xlu0
      %v1596 = vpop.trf.xlu0
      %v1597 = vpop.trf.xlu0
      %v1598 = vpop.trf.xlu0
      %v1599 = vpop.trf.xlu0
      %vm1600 = vcmask 523264
      %v1602 = vsel %vm1600, %v1584, 0
      %1604 = vmatprep.subr.mxu0 0.0
      %1605 = vmatpush1.msra.mxu0 %v478
      %1606 = vmatprep.subr.mxu0 0.0
      %1607 = vmatpush1.msra.mxu0 %v479
      %1608 = vmatprep.subr.mxu0 0.0
      %1609 = vmatpush1.msra.mxu0 %v480
      %1610 = vmatprep.subr.mxu0 0.0
      %1611 = vmatpush1.msra.mxu0 %v481
      %1612 = vmatprep.subr.mxu0 0.0
      %1613 = vmatpush1.msra.mxu0 %v482
      %1614 = vmatprep.subr.mxu0 0.0
      %1615 = vmatpush1.msra.mxu0 %v483
      %1616 = vmatprep.subr.mxu0 0.0
      %1617 = vmatpush1.msra.mxu0 %v484
      %1618 = vmatprep.subr.mxu0 0.0
      %1619 = vmatpush1.msra.mxu0 %v485
      %1620 = vmatprep.subr.mxu0 0.0
      %1621 = vmatpush1.msra.mxu0 0.0
      %1622 = vmatprep.subr.mxu0 0.0
      %1623 = vmatpush1.msra.mxu0 0.0
      %1624 = vmatprep.subr.mxu0 0.0
      %1625 = vmatpush1.msra.mxu0 0.0
      %1626 = vmatprep.subr.mxu0 0.0
      %1627 = vmatpush1.msra.mxu0 0.0
      %1628 = vmatprep.subr.mxu0 0.0
      %1629 = vmatpush1.msra.mxu0 0.0
      %1630 = vmatprep.subr.mxu0 0.0
      %1631 = vmatpush1.msra.mxu0 0.0
      %1632 = vmatprep.subr.mxu0 0.0
      %1633 = vmatpush1.msra.mxu0 0.0
      %1634 = vmatprep.subr.mxu0 0.0
      %1635 = vmatpush1.msra.mxu0 0.0
      %1636 = vmatprep.subr.mxu0 0.0
      %1637 = vmatpush1.msra.mxu0 0.0
      %1638 = vmatprep.subr.mxu0 0.0
      %1639 = vmatpush1.msra.mxu0 0.0
      %1640 = vmatprep.subr.mxu0 0.0
      %1641 = vmatpush1.msra.mxu0 0.0
      %1642 = vmatprep.subr.mxu0 0.0
      %1643 = vmatpush1.msra.mxu0 0.0
      %1644 = vmatprep.subr.mxu0 0.0
      %1645 = vmatpush1.msra.mxu0 0.0
      %1646 = vmatprep.subr.mxu0 0.0
      %1647 = vmatpush1.msra.mxu0 0.0
      %1648 = vmatprep.subr.mxu0 0.0
      %1649 = vmatpush1.msra.mxu0 0.0
      %1650 = vmatprep.subr.mxu0 0.0
      %1651 = vmatpush1.msra.mxu0 0.0
      %1652 = vmatprep.subr.mxu0 0.0
      %1653 = vmatpush1.msra.mxu0 0.0
      %1654 = vmatprep.subr.mxu0 0.0
      %1655 = vmatpush1.msra.mxu0 0.0
      %1656 = vmatprep.subr.mxu0 0.0
      %1657 = vmatpush1.msra.mxu0 0.0
      %1658 = vmatprep.subr.mxu0 0.0
      %1659 = vmatpush1.msra.mxu0 0.0
      %1660 = vmatprep.subr.mxu0 0.0
      %1661 = vmatpush1.msra.mxu0 0.0
      %1662 = vmatprep.subr.mxu0 0.0
      %1663 = vmatpush1.msra.mxu0 0.0
      %1664 = vmatprep.subr.mxu0 0.0
      %1665 = vmatpush1.msra.mxu0 0.0
      %1666 = vmatprep.subr.mxu0 0.0
      %1667 = vmatpush1.msra.mxu0 0.0
      %1668 = vmatprep.mubr.f32.mxu0 0.0
      %1669 = vmatmul.mubr.f32.gmra.mrb[0].mxu0 %v1602
      %v1670 = vpop.f32.mrb[0].mxu0
      %v1671 = vadd.f32 0.0, %v1670
      %v1672 = vpop.f32.mrb[0].mxu0
      %1673 = vdwg.mxu0
      %vm1674 = vcmask 123904
      %1675 = vst.msk [vmem:[%s321] sm:$0x3] %vm1674, %v1671
      %s1676 = scalar_lea.vmem %s312, 2
      %v1677 = vld [vmem:[%s1676] sm:$0x3]
      %v1678 = vld [vmem:[%s316 + $0x1] sm:$0x1]
      %v1679 = vsub.f32 1.0, %v1677
      %v1680 = vlaneseq
      %v1681 = vshrl.u32 %v1680, 7
      %v1682 = vsub.s32 0, %v1681
      %v1683 = vrot.slane %v1678, %v1682
      %vm1684 = vcmp.eq.s32.totalorder %v326, %v1683
      %vm1685 = vcmp.eq.s32.totalorder %v327, %v1683
      %vm1686 = vcmp.eq.s32.totalorder %v328, %v1683
      %vm1687 = vcmp.eq.s32.totalorder %v329, %v1683
      %vm1688 = vcmp.eq.s32.totalorder %v330, %v1683
      %vm1689 = vcmp.eq.s32.totalorder %v331, %v1683
      %vm1690 = vcmp.eq.s32.totalorder %v332, %v1683
      %vm1691 = vcmp.eq.s32.totalorder %v333, %v1683
      %v1693 = vrot.slane %v1679, 1
      %v1695 = vmul.f32 %v1679, %v1693
      %v1696 = vlaneseq
      %v1697 = vshrl.u32 %v1696, 7
      %v1698 = vsub.s32 0, %v1697
      %v1699 = vrot.slane %v1695, %v1698
      %v1700 = vsel %vm1684, %v1699, 0.0
      %v1701 = vsel %vm1685, %v1699, 0.0
      %v1702 = vsel %vm1686, %v1699, 0.0
      %v1703 = vsel %vm1687, %v1699, 0.0
      %v1704 = vsel %vm1688, %v1699, 0.0
      %v1705 = vsel %vm1689, %v1699, 0.0
      %v1706 = vsel %vm1690, %v1699, 0.0
      %v1707 = vsel %vm1691, %v1699, 0.0
      %v1708 = vadd.f32 %v1700, 0.0
      %v1709 = vadd.f32 %v1701, 0.0
      %v1710 = vadd.f32 %v1702, 0.0
      %v1711 = vadd.f32 %v1703, 0.0
      %v1712 = vadd.f32 %v1704, 0.0
      %v1713 = vadd.f32 %v1705, 0.0
      %v1714 = vadd.f32 %v1706, 0.0
      %v1715 = vadd.f32 %v1707, 0.0
      %v1716 = vadd.s32 %v1678, 1
      %v1717 = vlaneseq
      %v1718 = vshrl.u32 %v1717, 7
      %v1719 = vsub.s32 0, %v1718
      %v1720 = vrot.slane %v1716, %v1719
      %vm1721 = vcmp.eq.s32.totalorder %v326, %v1720
      %vm1722 = vcmp.eq.s32.totalorder %v327, %v1720
      %vm1723 = vcmp.eq.s32.totalorder %v328, %v1720
      %vm1724 = vcmp.eq.s32.totalorder %v329, %v1720
      %vm1725 = vcmp.eq.s32.totalorder %v330, %v1720
      %vm1726 = vcmp.eq.s32.totalorder %v331, %v1720
      %vm1727 = vcmp.eq.s32.totalorder %v332, %v1720
      %vm1728 = vcmp.eq.s32.totalorder %v333, %v1720
      %v1730 = vrot.slane %v1677, 1
      %v1732 = vmul.f32 %v1679, %v1730
      %v1733 = vlaneseq
      %v1734 = vshrl.u32 %v1733, 7
      %v1735 = vsub.s32 0, %v1734
      %v1736 = vrot.slane %v1732, %v1735
      %v1737 = vsel %vm1721, %v1736, 0.0
      %v1738 = vsel %vm1722, %v1736, 0.0
      %v1739 = vsel %vm1723, %v1736, 0.0
      %v1740 = vsel %vm1724, %v1736, 0.0
      %v1741 = vsel %vm1725, %v1736, 0.0
      %v1742 = vsel %vm1726, %v1736, 0.0
      %v1743 = vsel %vm1727, %v1736, 0.0
      %v1744 = vsel %vm1728, %v1736, 0.0
      %v1745 = vadd.f32 %v1708, %v1737
      %v1746 = vadd.f32 %v1709, %v1738
      %v1747 = vadd.f32 %v1710, %v1739
      %v1748 = vadd.f32 %v1711, %v1740
      %v1749 = vadd.f32 %v1712, %v1741
      %v1750 = vadd.f32 %v1713, %v1742
      %v1751 = vadd.f32 %v1714, %v1743
      %v1752 = vadd.f32 %v1715, %v1744
      %v1753 = vadd.s32 %v1678, 8
      %v1754 = vlaneseq
      %v1755 = vshrl.u32 %v1754, 7
      %v1756 = vsub.s32 0, %v1755
      %v1757 = vrot.slane %v1753, %v1756
      %vm1758 = vcmp.eq.s32.totalorder %v326, %v1757
      %vm1759 = vcmp.eq.s32.totalorder %v327, %v1757
      %vm1760 = vcmp.eq.s32.totalorder %v328, %v1757
      %vm1761 = vcmp.eq.s32.totalorder %v329, %v1757
      %vm1762 = vcmp.eq.s32.totalorder %v330, %v1757
      %vm1763 = vcmp.eq.s32.totalorder %v331, %v1757
      %vm1764 = vcmp.eq.s32.totalorder %v332, %v1757
      %vm1765 = vcmp.eq.s32.totalorder %v333, %v1757
      %v1766 = vmul.f32 %v1677, %v1693
      %v1767 = vlaneseq
      %v1768 = vshrl.u32 %v1767, 7
      %v1769 = vsub.s32 0, %v1768
      %v1770 = vrot.slane %v1766, %v1769
      %v1771 = vsel %vm1758, %v1770, 0.0
      %v1772 = vsel %vm1759, %v1770, 0.0
      %v1773 = vsel %vm1760, %v1770, 0.0
      %v1774 = vsel %vm1761, %v1770, 0.0
      %v1775 = vsel %vm1762, %v1770, 0.0
      %v1776 = vsel %vm1763, %v1770, 0.0
      %v1777 = vsel %vm1764, %v1770, 0.0
      %v1778 = vsel %vm1765, %v1770, 0.0
      %v1779 = vadd.f32 %v1745, %v1771
      %v1780 = vadd.f32 %v1746, %v1772
      %v1781 = vadd.f32 %v1747, %v1773
      %v1782 = vadd.f32 %v1748, %v1774
      %v1783 = vadd.f32 %v1749, %v1775
      %v1784 = vadd.f32 %v1750, %v1776
      %v1785 = vadd.f32 %v1751, %v1777
      %v1786 = vadd.f32 %v1752, %v1778
      %v1787 = vadd.s32 %v1678, 9
      %v1788 = vlaneseq
      %v1789 = vshrl.u32 %v1788, 7
      %v1790 = vsub.s32 0, %v1789
      %v1791 = vrot.slane %v1787, %v1790
      %vm1792 = vcmp.eq.s32.totalorder %v326, %v1791
      %vm1793 = vcmp.eq.s32.totalorder %v327, %v1791
      %vm1794 = vcmp.eq.s32.totalorder %v328, %v1791
      %vm1795 = vcmp.eq.s32.totalorder %v329, %v1791
      %vm1796 = vcmp.eq.s32.totalorder %v330, %v1791
      %vm1797 = vcmp.eq.s32.totalorder %v331, %v1791
      %vm1798 = vcmp.eq.s32.totalorder %v332, %v1791
      %vm1799 = vcmp.eq.s32.totalorder %v333, %v1791
      %v1800 = vmul.f32 %v1677, %v1730
      %v1801 = vlaneseq
      %v1802 = vshrl.u32 %v1801, 7
      %v1803 = vsub.s32 0, %v1802
      %v1804 = vrot.slane %v1800, %v1803
      %v1805 = vsel %vm1792, %v1804, 0.0
      %v1806 = vsel %vm1793, %v1804, 0.0
      %v1807 = vsel %vm1794, %v1804, 0.0
      %v1808 = vsel %vm1795, %v1804, 0.0
      %v1809 = vsel %vm1796, %v1804, 0.0
      %v1810 = vsel %vm1797, %v1804, 0.0
      %v1811 = vsel %vm1798, %v1804, 0.0
      %v1812 = vsel %vm1799, %v1804, 0.0
      %v1813 = vadd.f32 %v1779, %v1805
      %v1814 = vadd.f32 %v1780, %v1806
      %v1815 = vadd.f32 %v1781, %v1807
      %v1816 = vadd.f32 %v1782, %v1808
      %v1817 = vadd.f32 %v1783, %v1809
      %v1818 = vadd.f32 %v1784, %v1810
      %v1819 = vadd.f32 %v1785, %v1811
      %v1820 = vadd.f32 %v1786, %v1812
      %s1821 = scalar_lea.vmem %s307, 2
      %v1822 = vld [vmem:[%s1821] sm:$0x3]
      %v1824 = vsel %vm487, %v1813, 0
      %v1827 = vsel %vm487, %v1814, 0
      %v1830 = vsel %vm487, %v1815, 0
      %v1833 = vsel %vm487, %v1816, 0
      %v1836 = vsel %vm487, %v1817, 0
      %v1839 = vsel %vm487, %v1818, 0
      %v1842 = vsel %vm487, %v1819, 0
      %v1845 = vsel %vm487, %v1820, 0
      %v1848 = vsel %vm487, %v1822, 0
      %1850 = vmatprep.subr.mxu0 0.0
      %1851 = vmatpush1.xpose.msra.mxu0 %v1848
      %1852 = vmatprep.subr.mxu0 0.0
      %1853 = vmatpush1.xpose.msra.mxu0 0.0
      %1854 = vmatprep.subr.mxu0 0.0
      %1855 = vmatpush1.xpose.msra.mxu0 0.0
      %1856 = vmatprep.subr.mxu0 0.0
      %1857 = vmatpush1.xpose.msra.mxu0 0.0
      %1858 = vmatprep.subr.mxu0 0.0
      %1859 = vmatpush1.xpose.msra.mxu0 0.0
      %1860 = vmatprep.subr.mxu0 0.0
      %1861 = vmatpush1.xpose.msra.mxu0 0.0
      %1862 = vmatprep.subr.mxu0 0.0
      %1863 = vmatpush1.xpose.msra.mxu0 0.0
      %1864 = vmatprep.subr.mxu0 0.0
      %1865 = vmatpush1.xpose.msra.mxu0 0.0
      %1866 = vmatprep.subr.mxu0 0.0
      %1867 = vmatpush1.xpose.msra.mxu0 0.0
      %1868 = vmatprep.subr.mxu0 0.0
      %1869 = vmatpush1.xpose.msra.mxu0 0.0
      %1870 = vmatprep.subr.mxu0 0.0
      %1871 = vmatpush1.xpose.msra.mxu0 0.0
      %1872 = vmatprep.subr.mxu0 0.0
      %1873 = vmatpush1.xpose.msra.mxu0 0.0
      %1874 = vmatprep.subr.mxu0 0.0
      %1875 = vmatpush1.xpose.msra.mxu0 0.0
      %1876 = vmatprep.subr.mxu0 0.0
      %1877 = vmatpush1.xpose.msra.mxu0 0.0
      %1878 = vmatprep.subr.mxu0 0.0
      %1879 = vmatpush1.xpose.msra.mxu0 0.0
      %1880 = vmatprep.subr.mxu0 0.0
      %1881 = vmatpush1.xpose.msra.mxu0 0.0
      %1882 = vmatprep.subr.mxu0 0.0
      %1883 = vmatpush1.xpose.msra.mxu0 0.0
      %1884 = vmatprep.subr.mxu0 0.0
      %1885 = vmatpush1.xpose.msra.mxu0 0.0
      %1886 = vmatprep.subr.mxu0 0.0
      %1887 = vmatpush1.xpose.msra.mxu0 0.0
      %1888 = vmatprep.subr.mxu0 0.0
      %1889 = vmatpush1.xpose.msra.mxu0 0.0
      %1890 = vmatprep.subr.mxu0 0.0
      %1891 = vmatpush1.xpose.msra.mxu0 0.0
      %1892 = vmatprep.subr.mxu0 0.0
      %1893 = vmatpush1.xpose.msra.mxu0 0.0
      %1894 = vmatprep.subr.mxu0 0.0
      %1895 = vmatpush1.xpose.msra.mxu0 0.0
      %1896 = vmatprep.subr.mxu0 0.0
      %1897 = vmatpush1.xpose.msra.mxu0 0.0
      %1898 = vmatprep.subr.mxu0 0.0
      %1899 = vmatpush1.xpose.msra.mxu0 0.0
      %1900 = vmatprep.subr.mxu0 0.0
      %1901 = vmatpush1.xpose.msra.mxu0 0.0
      %1902 = vmatprep.subr.mxu0 0.0
      %1903 = vmatpush1.xpose.msra.mxu0 0.0
      %1904 = vmatprep.subr.mxu0 0.0
      %1905 = vmatpush1.xpose.msra.mxu0 0.0
      %1906 = vmatprep.subr.mxu0 0.0
      %1907 = vmatpush1.xpose.msra.mxu0 0.0
      %1908 = vmatprep.subr.mxu0 0.0
      %1909 = vmatpush1.xpose.msra.mxu0 0.0
      %1910 = vmatprep.subr.mxu0 0.0
      %1911 = vmatpush1.xpose.msra.mxu0 0.0
      %1912 = vmatprep.subr.mxu0 0.0
      %1913 = vmatpush1.xpose.msra.mxu0 0.0
      %1914 = vmatprep.mubr.f32.mxu0 0.0
      %1915 = vmatmul.mubr.f32.gmra.mrb[0].mxu0 %v1824
      %v1916 = vpop.f32.mrb[0].mxu0
      %v1917 = vadd.f32 0.0, %v1916
      %v1918 = vpop.f32.mrb[0].mxu0
      %1919 = vmatprep.mubr.f32.mxu0 0.0
      %1920 = vmatmul.mubr.f32.gmra.mrb[0].mxu0 %v1827
      %v1921 = vpop.f32.mrb[0].mxu0
      %v1922 = vadd.f32 0.0, %v1921
      %v1923 = vpop.f32.mrb[0].mxu0
      %1924 = vmatprep.mubr.f32.mxu0 0.0
      %1925 = vmatmul.mubr.f32.gmra.mrb[0].mxu0 %v1830
      %v1926 = vpop.f32.mrb[0].mxu0
      %v1927 = vadd.f32 0.0, %v1926
      %v1928 = vpop.f32.mrb[0].mxu0
      %1929 = vmatprep.mubr.f32.mxu0 0.0
      %1930 = vmatmul.mubr.f32.gmra.mrb[0].mxu0 %v1833
      %v1931 = vpop.f32.mrb[0].mxu0
      %v1932 = vadd.f32 0.0, %v1931
      %v1933 = vpop.f32.mrb[0].mxu0
      %1934 = vmatprep.mubr.f32.mxu0 0.0
      %1935 = vmatmul.mubr.f32.gmra.mrb[0].mxu0 %v1836
      %v1936 = vpop.f32.mrb[0].mxu0
      %v1937 = vadd.f32 0.0, %v1936
      %v1938 = vpop.f32.mrb[0].mxu0
      %1939 = vmatprep.mubr.f32.mxu0 0.0
      %1940 = vmatmul.mubr.f32.gmra.mrb[0].mxu0 %v1839
      %v1941 = vpop.f32.mrb[0].mxu0
      %v1942 = vadd.f32 0.0, %v1941
      %v1943 = vpop.f32.mrb[0].mxu0
      %1944 = vmatprep.mubr.f32.mxu0 0.0
      %1945 = vmatmul.mubr.f32.gmra.mrb[0].mxu0 %v1842
      %v1946 = vpop.f32.mrb[0].mxu0
      %v1947 = vadd.f32 0.0, %v1946
      %v1948 = vpop.f32.mrb[0].mxu0
      %1949 = vmatprep.mubr.f32.mxu0 0.0
      %1950 = vmatmul.mubr.f32.gmra.mrb[0].mxu0 %v1845
      %v1951 = vpop.f32.mrb[0].mxu0
      %v1952 = vadd.f32 0.0, %v1951
      %v1953 = vpop.f32.mrb[0].mxu0
      %1954 = vdwg.mxu0
      %v1955 = vand.u32 2147483647, %v1917
      %v1956 = vand.u32 2147483647, %v1922
      %v1957 = vand.u32 2147483647, %v1927
      %v1958 = vand.u32 2147483647, %v1932
      %v1959 = vand.u32 2147483647, %v1937
      %v1960 = vand.u32 2147483647, %v1942
      %v1961 = vand.u32 2147483647, %v1947
      %v1962 = vand.u32 2147483647, %v1952
      %vm1963 = vcmp.gt.f32.partialorder %v1955, 1e-09
      %vm1964 = vcmp.gt.f32.partialorder %v1956, 1e-09
      %vm1965 = vcmp.gt.f32.partialorder %v1957, 1e-09
      %vm1966 = vcmp.gt.f32.partialorder %v1958, 1e-09
      %vm1967 = vcmp.gt.f32.partialorder %v1959, 1e-09
      %vm1968 = vcmp.gt.f32.partialorder %v1960, 1e-09
      %vm1969 = vcmp.gt.f32.partialorder %v1961, 1e-09
      %vm1970 = vcmp.gt.f32.partialorder %v1962, 1e-09
      %v1971 = vsel %vm1963, 1, 0
      %v1972 = vsel %vm1964, 1, 0
      %v1973 = vsel %vm1965, 1, 0
      %v1974 = vsel %vm1966, 1, 0
      %v1975 = vsel %vm1967, 1, 0
      %v1976 = vsel %vm1968, 1, 0
      %v1977 = vsel %vm1969, 1, 0
      %v1978 = vsel %vm1970, 1, 0
      %v1979 = vcvt.s32.f32 %v1971
      %v1980 = vcvt.s32.f32 %v1972
      %v1981 = vcvt.s32.f32 %v1973
      %v1982 = vcvt.s32.f32 %v1974
      %v1983 = vcvt.s32.f32 %v1975
      %v1984 = vcvt.s32.f32 %v1976
      %v1985 = vcvt.s32.f32 %v1977
      %v1986 = vcvt.s32.f32 %v1978
      %v1987 = vsel %vm652, %v1979, 0.0
      %v1988 = vsel %vm652, %v1980, 0.0
      %v1989 = vadd.f32 %v1987, %v1988
      %v1990 = vsel %vm652, %v1981, 0.0
      %v1991 = vadd.f32 %v1989, %v1990
      %v1992 = vsel %vm652, %v1982, 0.0
      %v1993 = vadd.f32 %v1991, %v1992
      %v1994 = vsel %vm652, %v1983, 0.0
      %v1995 = vadd.f32 %v1993, %v1994
      %v1996 = vsel %vm652, %v1984, 0.0
      %v1997 = vadd.f32 %v1995, %v1996
      %v1998 = vsel %vm652, %v1985, 0.0
      %v1999 = vadd.f32 %v1997, %v1998
      %v2000 = vsel %vm652, %v1986, 0.0
      %v2001 = vadd.f32 %v1999, %v2000
      %2002 = vadd.xlane.f32.xlu0 %v2001
      %v2003 = vpop.xlane.xlu0 %2002
      %v2004 = vrot.slane %v2003, 4
      %v2005 = vadd.f32 %v2003, %v2004
      %v2006 = vrot.slane %v2005, 2
      %v2007 = vadd.f32 %v2005, %v2006
      %v2008 = vrot.slane %v2007, 1
      %v2009 = vadd.f32 %v2007, %v2008
      %s2010 = vtos %v2009
      %s2011 = sadd.f32 %s677, %s2010
      %v2012 = vrot.slane %v1917, 7
      %v2013 = vrot.slane %v1922, 7
      %v2014 = vrot.slane %v1927, 7
      %v2015 = vrot.slane %v1932, 7
      %v2016 = vrot.slane %v1937, 7
      %v2017 = vrot.slane %v1942, 7
      %v2018 = vrot.slane %v1947, 7
      %v2019 = vrot.slane %v1952, 7
      %v2020 = vsel %vm686, %v2018, %v2019
      %v2021 = vsel %vm686, %v2017, %v2018
      %v2022 = vsel %vm686, %v2016, %v2017
      %v2023 = vsel %vm686, %v2015, %v2016
      %v2024 = vsel %vm686, %v2014, %v2015
      %v2025 = vsel %vm686, %v2013, %v2014
      %v2026 = vsel %vm686, %v2012, %v2013
      %v2027 = vsel %vm686, %v2019, %v2012
      %v2028 = vmul.f32 %v2020, %v698
      %v2029 = vmul.f32 %v2027, %v703
      %v2030 = vmul.f32 %v2026, %v708
      %v2031 = vmul.f32 %v2025, %v713
      %v2032 = vmul.f32 %v2024, %v718
      %v2033 = vmul.f32 %v2023, %v723
      %v2034 = vmul.f32 %v2022, %v728
      %v2035 = vmul.f32 %v2021, %v733
      %2036 = vst.msk [vmem:[#allocation2] sm:$0xff] %vm652, %v2028
      %2037 = vst.msk [vmem:[#allocation2 + $0x8] sm:$0xff] %vm652, %v2029
      %2038 = vst.msk [vmem:[#allocation2 + $0x10] sm:$0xff] %vm652, %v2030
      %2039 = vst.msk [vmem:[#allocation2 + $0x18] sm:$0xff] %vm652, %v2031
      %2040 = vst.msk [vmem:[#allocation2 + $0x20] sm:$0xff] %vm652, %v2032
      %2041 = vst.msk [vmem:[#allocation2 + $0x28] sm:$0xff] %vm652, %v2033
      %2042 = vst.msk [vmem:[#allocation2 + $0x30] sm:$0xff] %vm652, %v2034
      %2043 = vst.msk [vmem:[#allocation2 + $0x38] sm:$0xff] %vm652, %v2035
      %v2044 = vmul.f32 %v1952, %v753
      %v2045 = vmul.f32 %v1917, %v757
      %v2046 = vmul.f32 %v1922, %v761
      %v2047 = vmul.f32 %v1927, %v765
      %v2048 = vmul.f32 %v1932, %v769
      %v2049 = vmul.f32 %v1937, %v773
      %v2050 = vmul.f32 %v1942, %v777
      %v2051 = vmul.f32 %v1947, %v781
      %2060 = vrot.lane.b32.xlu0 %v2044, 2
      %v2061 = vpop.permute.xlu0 %2060
      %2062 = vrot.lane.b32.xlu0 %v2045, 2
      %v2063 = vpop.permute.xlu0 %2062
      %2064 = vrot.lane.b32.xlu0 %v2046, 2
      %v2065 = vpop.permute.xlu0 %2064
      %2066 = vrot.lane.b32.xlu0 %v2047, 2
      %v2067 = vpop.permute.xlu0 %2066
      %2068 = vrot.lane.b32.xlu0 %v2048, 2
      %v2069 = vpop.permute.xlu0 %2068
      %2070 = vrot.lane.b32.xlu0 %v2049, 2
      %v2071 = vpop.permute.xlu0 %2070
      %2072 = vrot.lane.b32.xlu0 %v2050, 2
      %v2073 = vpop.permute.xlu0 %2072
      %2074 = vrot.lane.b32.xlu0 %v2051, 2
      %v2075 = vpop.permute.xlu0 %2074
      %2084 = vst.msk [vmem:[#allocation2] sm:$0xff] %vm823, %v2061
      %2085 = vst.msk [vmem:[#allocation2 + $0x8] sm:$0xff] %vm823, %v2063
      %2086 = vst.msk [vmem:[#allocation2 + $0x10] sm:$0xff] %vm823, %v2065
      %2087 = vst.msk [vmem:[#allocation2 + $0x18] sm:$0xff] %vm823, %v2067
      %2088 = vst.msk [vmem:[#allocation2 + $0x20] sm:$0xff] %vm823, %v2069
      %2089 = vst.msk [vmem:[#allocation2 + $0x28] sm:$0xff] %vm823, %v2071
      %2090 = vst.msk [vmem:[#allocation2 + $0x30] sm:$0xff] %vm823, %v2073
      %2091 = vst.msk [vmem:[#allocation2 + $0x38] sm:$0xff] %vm823, %v2075
      %v2092 = vrot.slane %v1917, 1
      %v2093 = vrot.slane %v1922, 1
      %v2094 = vrot.slane %v1927, 1
      %v2095 = vrot.slane %v1932, 1
      %v2096 = vrot.slane %v1937, 1
      %v2097 = vrot.slane %v1942, 1
      %v2098 = vrot.slane %v1947, 1
      %v2099 = vrot.slane %v1952, 1
      %v2100 = vsel %vm840, %v2098, %v2099
      %v2101 = vsel %vm840, %v2097, %v2098
      %v2102 = vsel %vm840, %v2096, %v2097
      %v2103 = vsel %vm840, %v2095, %v2096
      %v2104 = vsel %vm840, %v2094, %v2095
      %v2105 = vsel %vm840, %v2093, %v2094
      %v2106 = vsel %vm840, %v2092, %v2093
      %v2107 = vsel %vm840, %v2099, %v2092
      %v2108 = vmul.f32 %v2107, %v851
      %v2109 = vmul.f32 %v2106, %v855
      %v2110 = vmul.f32 %v2105, %v859
      %v2111 = vmul.f32 %v2104, %v863
      %v2112 = vmul.f32 %v2103, %v867
      %v2113 = vmul.f32 %v2102, %v871
      %v2114 = vmul.f32 %v2101, %v875
      %v2115 = vmul.f32 %v2100, %v879
      %2124 = vrot.lane.b32.xlu0 %v2108, 4
      %v2125 = vpop.permute.xlu0 %2124
      %2126 = vrot.lane.b32.xlu0 %v2109, 4
      %v2127 = vpop.permute.xlu0 %2126
      %2128 = vrot.lane.b32.xlu0 %v2110, 4
      %v2129 = vpop.permute.xlu0 %2128
      %2130 = vrot.lane.b32.xlu0 %v2111, 4
      %v2131 = vpop.permute.xlu0 %2130
      %2132 = vrot.lane.b32.xlu0 %v2112, 4
      %v2133 = vpop.permute.xlu0 %2132
      %2134 = vrot.lane.b32.xlu0 %v2113, 4
      %v2135 = vpop.permute.xlu0 %2134
      %2136 = vrot.lane.b32.xlu0 %v2114, 4
      %v2137 = vpop.permute.xlu0 %2136
      %2138 = vrot.lane.b32.xlu0 %v2115, 4
      %v2139 = vpop.permute.xlu0 %2138
      %2148 = vst.msk [vmem:[#allocation2] sm:$0xff] %vm921, %v2125
      %2149 = vst.msk [vmem:[#allocation2 + $0x8] sm:$0xff] %vm921, %v2127
      %2150 = vst.msk [vmem:[#allocation2 + $0x10] sm:$0xff] %vm921, %v2129
      %2151 = vst.msk [vmem:[#allocation2 + $0x18] sm:$0xff] %vm921, %v2131
      %2152 = vst.msk [vmem:[#allocation2 + $0x20] sm:$0xff] %vm921, %v2133
      %2153 = vst.msk [vmem:[#allocation2 + $0x28] sm:$0xff] %vm921, %v2135
      %2154 = vst.msk [vmem:[#allocation2 + $0x30] sm:$0xff] %vm921, %v2137
      %2155 = vst.msk [vmem:[#allocation2 + $0x38] sm:$0xff] %vm921, %v2139
      %v2156 = vmul.f32 %v2027, %v932
      %v2157 = vmul.f32 %v2026, %v936
      %v2158 = vmul.f32 %v2025, %v940
      %v2159 = vmul.f32 %v2024, %v944
      %v2160 = vmul.f32 %v2023, %v948
      %v2161 = vmul.f32 %v2022, %v952
      %v2162 = vmul.f32 %v2021, %v956
      %v2163 = vmul.f32 %v2020, %v960
      %2172 = vrot.lane.b32.xlu0 %v2156, 6
      %v2173 = vpop.permute.xlu0 %2172
      %2174 = vrot.lane.b32.xlu0 %v2157, 6
      %v2175 = vpop.permute.xlu0 %2174
      %2176 = vrot.lane.b32.xlu0 %v2158, 6
      %v2177 = vpop.permute.xlu0 %2176
      %2178 = vrot.lane.b32.xlu0 %v2159, 6
      %v2179 = vpop.permute.xlu0 %2178
      %2180 = vrot.lane.b32.xlu0 %v2160, 6
      %v2181 = vpop.permute.xlu0 %2180
      %2182 = vrot.lane.b32.xlu0 %v2161, 6
      %v2183 = vpop.permute.xlu0 %2182
      %2184 = vrot.lane.b32.xlu0 %v2162, 6
      %v2185 = vpop.permute.xlu0 %2184
      %2186 = vrot.lane.b32.xlu0 %v2163, 6
      %v2187 = vpop.permute.xlu0 %2186
      %2196 = vst.msk [vmem:[#allocation2] sm:$0xff] %vm1002, %v2173
      %2197 = vst.msk [vmem:[#allocation2 + $0x8] sm:$0xff] %vm1002, %v2175
      %2198 = vst.msk [vmem:[#allocation2 + $0x10] sm:$0xff] %vm1002, %v2177
      %2199 = vst.msk [vmem:[#allocation2 + $0x18] sm:$0xff] %vm1002, %v2179
      %2200 = vst.msk [vmem:[#allocation2 + $0x20] sm:$0xff] %vm1002, %v2181
      %2201 = vst.msk [vmem:[#allocation2 + $0x28] sm:$0xff] %vm1002, %v2183
      %2202 = vst.msk [vmem:[#allocation2 + $0x30] sm:$0xff] %vm1002, %v2185
      %2203 = vst.msk [vmem:[#allocation2 + $0x38] sm:$0xff] %vm1002, %v2187
      %v2204 = vmul.f32 %v1917, %v1013
      %v2205 = vmul.f32 %v1922, %v1017
      %v2206 = vmul.f32 %v1927, %v1021
      %v2207 = vmul.f32 %v1932, %v1025
      %v2208 = vmul.f32 %v1937, %v1029
      %v2209 = vmul.f32 %v1942, %v1033
      %v2210 = vmul.f32 %v1947, %v1037
      %v2211 = vmul.f32 %v1952, %v1041
      %2220 = vrot.lane.b32.xlu0 %v2204, 8
      %v2221 = vpop.permute.xlu0 %2220
      %2222 = vrot.lane.b32.xlu0 %v2205, 8
      %v2223 = vpop.permute.xlu0 %2222
      %2224 = vrot.lane.b32.xlu0 %v2206, 8
      %v2225 = vpop.permute.xlu0 %2224
      %2226 = vrot.lane.b32.xlu0 %v2207, 8
      %v2227 = vpop.permute.xlu0 %2226
      %2228 = vrot.lane.b32.xlu0 %v2208, 8
      %v2229 = vpop.permute.xlu0 %2228
      %2230 = vrot.lane.b32.xlu0 %v2209, 8
      %v2231 = vpop.permute.xlu0 %2230
      %2232 = vrot.lane.b32.xlu0 %v2210, 8
      %v2233 = vpop.permute.xlu0 %2232
      %2234 = vrot.lane.b32.xlu0 %v2211, 8
      %v2235 = vpop.permute.xlu0 %2234
      %2244 = vst.msk [vmem:[#allocation2] sm:$0xff] %vm1083, %v2221
      %2245 = vst.msk [vmem:[#allocation2 + $0x8] sm:$0xff] %vm1083, %v2223
      %2246 = vst.msk [vmem:[#allocation2 + $0x10] sm:$0xff] %vm1083, %v2225
      %2247 = vst.msk [vmem:[#allocation2 + $0x18] sm:$0xff] %vm1083, %v2227
      %2248 = vst.msk [vmem:[#allocation2 + $0x20] sm:$0xff] %vm1083, %v2229
      %2249 = vst.msk [vmem:[#allocation2 + $0x28] sm:$0xff] %vm1083, %v2231
      %2250 = vst.msk [vmem:[#allocation2 + $0x30] sm:$0xff] %vm1083, %v2233
      %2251 = vst.msk [vmem:[#allocation2 + $0x38] sm:$0xff] %vm1083, %v2235
      %v2252 = vmul.f32 %v2106, %v1094
      %v2253 = vmul.f32 %v2105, %v1098
      %v2254 = vmul.f32 %v2104, %v1102
      %v2255 = vmul.f32 %v2103, %v1106
      %v2256 = vmul.f32 %v2102, %v1110
      %v2257 = vmul.f32 %v2101, %v1114
      %v2258 = vmul.f32 %v2100, %v1118
      %v2259 = vmul.f32 %v2107, %v1122
      %2268 = vrot.lane.b32.xlu0 %v2252, 10
      %v2269 = vpop.permute.xlu0 %2268
      %2270 = vrot.lane.b32.xlu0 %v2253, 10
      %v2271 = vpop.permute.xlu0 %2270
      %2272 = vrot.lane.b32.xlu0 %v2254, 10
      %v2273 = vpop.permute.xlu0 %2272
      %2274 = vrot.lane.b32.xlu0 %v2255, 10
      %v2275 = vpop.permute.xlu0 %2274
      %2276 = vrot.lane.b32.xlu0 %v2256, 10
      %v2277 = vpop.permute.xlu0 %2276
      %2278 = vrot.lane.b32.xlu0 %v2257, 10
      %v2279 = vpop.permute.xlu0 %2278
      %2280 = vrot.lane.b32.xlu0 %v2258, 10
      %v2281 = vpop.permute.xlu0 %2280
      %2282 = vrot.lane.b32.xlu0 %v2259, 10
      %v2283 = vpop.permute.xlu0 %2282
      %2292 = vst.msk [vmem:[#allocation2] sm:$0xff] %vm1164, %v2269
      %2293 = vst.msk [vmem:[#allocation2 + $0x8] sm:$0xff] %vm1164, %v2271
      %2294 = vst.msk [vmem:[#allocation2 + $0x10] sm:$0xff] %vm1164, %v2273
      %2295 = vst.msk [vmem:[#allocation2 + $0x18] sm:$0xff] %vm1164, %v2275
      %2296 = vst.msk [vmem:[#allocation2 + $0x20] sm:$0xff] %vm1164, %v2277
      %2297 = vst.msk [vmem:[#allocation2 + $0x28] sm:$0xff] %vm1164, %v2279
      %2298 = vst.msk [vmem:[#allocation2 + $0x30] sm:$0xff] %vm1164, %v2281
      %2299 = vst.msk [vmem:[#allocation2 + $0x38] sm:$0xff] %vm1164, %v2283
      %v2300 = vmul.f32 %v2026, %v1175
      %v2301 = vmul.f32 %v2025, %v1179
      %v2302 = vmul.f32 %v2024, %v1183
      %v2303 = vmul.f32 %v2023, %v1187
      %v2304 = vmul.f32 %v2022, %v1191
      %v2305 = vmul.f32 %v2021, %v1195
      %v2306 = vmul.f32 %v2020, %v1199
      %v2307 = vmul.f32 %v2027, %v1203
      %2316 = vrot.lane.b32.xlu0 %v2300, 12
      %v2317 = vpop.permute.xlu0 %2316
      %2318 = vrot.lane.b32.xlu0 %v2301, 12
      %v2319 = vpop.permute.xlu0 %2318
      %2320 = vrot.lane.b32.xlu0 %v2302, 12
      %v2321 = vpop.permute.xlu0 %2320
      %2322 = vrot.lane.b32.xlu0 %v2303, 12
      %v2323 = vpop.permute.xlu0 %2322
      %2324 = vrot.lane.b32.xlu0 %v2304, 12
      %v2325 = vpop.permute.xlu0 %2324
      %2326 = vrot.lane.b32.xlu0 %v2305, 12
      %v2327 = vpop.permute.xlu0 %2326
      %2328 = vrot.lane.b32.xlu0 %v2306, 12
      %v2329 = vpop.permute.xlu0 %2328
      %2330 = vrot.lane.b32.xlu0 %v2307, 12
      %v2331 = vpop.permute.xlu0 %2330
      %2340 = vst.msk [vmem:[#allocation2] sm:$0xff] %vm1245, %v2317
      %2341 = vst.msk [vmem:[#allocation2 + $0x8] sm:$0xff] %vm1245, %v2319
      %2342 = vst.msk [vmem:[#allocation2 + $0x10] sm:$0xff] %vm1245, %v2321
      %2343 = vst.msk [vmem:[#allocation2 + $0x18] sm:$0xff] %vm1245, %v2323
      %2344 = vst.msk [vmem:[#allocation2 + $0x20] sm:$0xff] %vm1245, %v2325
      %2345 = vst.msk [vmem:[#allocation2 + $0x28] sm:$0xff] %vm1245, %v2327
      %2346 = vst.msk [vmem:[#allocation2 + $0x30] sm:$0xff] %vm1245, %v2329
      %2347 = vst.msk [vmem:[#allocation2 + $0x38] sm:$0xff] %vm1245, %v2331
      %v2348 = vmul.f32 %v1922, %v1256
      %v2349 = vmul.f32 %v1927, %v1260
      %v2350 = vmul.f32 %v1932, %v1264
      %v2351 = vmul.f32 %v1937, %v1268
      %v2352 = vmul.f32 %v1942, %v1272
      %v2353 = vmul.f32 %v1947, %v1276
      %v2354 = vmul.f32 %v1952, %v1280
      %v2355 = vmul.f32 %v1917, %v1284
      %2364 = vrot.lane.b32.xlu0 %v2348, 14
      %v2365 = vpop.permute.xlu0 %2364
      %2366 = vrot.lane.b32.xlu0 %v2349, 14
      %v2367 = vpop.permute.xlu0 %2366
      %2368 = vrot.lane.b32.xlu0 %v2350, 14
      %v2369 = vpop.permute.xlu0 %2368
      %2370 = vrot.lane.b32.xlu0 %v2351, 14
      %v2371 = vpop.permute.xlu0 %2370
      %2372 = vrot.lane.b32.xlu0 %v2352, 14
      %v2373 = vpop.permute.xlu0 %2372
      %2374 = vrot.lane.b32.xlu0 %v2353, 14
      %v2375 = vpop.permute.xlu0 %2374
      %2376 = vrot.lane.b32.xlu0 %v2354, 14
      %v2377 = vpop.permute.xlu0 %2376
      %2378 = vrot.lane.b32.xlu0 %v2355, 14
      %v2379 = vpop.permute.xlu0 %2378
      %2388 = vst.msk [vmem:[#allocation2] sm:$0xff] %vm1326, %v2365
      %2389 = vst.msk [vmem:[#allocation2 + $0x8] sm:$0xff] %vm1326, %v2367
      %2390 = vst.msk [vmem:[#allocation2 + $0x10] sm:$0xff] %vm1326, %v2369
      %2391 = vst.msk [vmem:[#allocation2 + $0x18] sm:$0xff] %vm1326, %v2371
      %2392 = vst.msk [vmem:[#allocation2 + $0x20] sm:$0xff] %vm1326, %v2373
      %2393 = vst.msk [vmem:[#allocation2 + $0x28] sm:$0xff] %vm1326, %v2375
      %2394 = vst.msk [vmem:[#allocation2 + $0x30] sm:$0xff] %vm1326, %v2377
      %2395 = vst.msk [vmem:[#allocation2 + $0x38] sm:$0xff] %vm1326, %v2379
      %v2396 = vmul.f32 %v2105, %v1337
      %v2397 = vmul.f32 %v2104, %v1341
      %v2398 = vmul.f32 %v2103, %v1345
      %v2399 = vmul.f32 %v2102, %v1349
      %v2400 = vmul.f32 %v2101, %v1353
      %v2401 = vmul.f32 %v2100, %v1357
      %v2402 = vmul.f32 %v2107, %v1361
      %v2403 = vmul.f32 %v2106, %v1365
      %2412 = vrot.lane.b32.xlu0 %v2396, 16
      %v2413 = vpop.permute.xlu0 %2412
      %2414 = vrot.lane.b32.xlu0 %v2397, 16
      %v2415 = vpop.permute.xlu0 %2414
      %2416 = vrot.lane.b32.xlu0 %v2398, 16
      %v2417 = vpop.permute.xlu0 %2416
      %2418 = vrot.lane.b32.xlu0 %v2399, 16
      %v2419 = vpop.permute.xlu0 %2418
      %2420 = vrot.lane.b32.xlu0 %v2400, 16
      %v2421 = vpop.permute.xlu0 %2420
      %2422 = vrot.lane.b32.xlu0 %v2401, 16
      %v2423 = vpop.permute.xlu0 %2422
      %2424 = vrot.lane.b32.xlu0 %v2402, 16
      %v2425 = vpop.permute.xlu0 %2424
      %2426 = vrot.lane.b32.xlu0 %v2403, 16
      %v2427 = vpop.permute.xlu0 %2426
      %2436 = vst.msk [vmem:[#allocation2] sm:$0xff] %vm1407, %v2413
      %2437 = vst.msk [vmem:[#allocation2 + $0x8] sm:$0xff] %vm1407, %v2415
      %2438 = vst.msk [vmem:[#allocation2 + $0x10] sm:$0xff] %vm1407, %v2417
      %2439 = vst.msk [vmem:[#allocation2 + $0x18] sm:$0xff] %vm1407, %v2419
      %2440 = vst.msk [vmem:[#allocation2 + $0x20] sm:$0xff] %vm1407, %v2421
      %2441 = vst.msk [vmem:[#allocation2 + $0x28] sm:$0xff] %vm1407, %v2423
      %2442 = vst.msk [vmem:[#allocation2 + $0x30] sm:$0xff] %vm1407, %v2425
      %2443 = vst.msk [vmem:[#allocation2 + $0x38] sm:$0xff] %vm1407, %v2427
      %v2444 = vld [vmem:[#allocation2] sm:$0xff]
      %v2445 = vld [vmem:[#allocation2 + $0x8] sm:$0xff]
      %v2446 = vld [vmem:[#allocation2 + $0x10] sm:$0xff]
      %v2447 = vld [vmem:[#allocation2 + $0x18] sm:$0xff]
      %v2448 = vld [vmem:[#allocation2 + $0x20] sm:$0xff]
      %v2449 = vld [vmem:[#allocation2 + $0x28] sm:$0xff]
      %v2450 = vld [vmem:[#allocation2 + $0x30] sm:$0xff]
      %v2451 = vld [vmem:[#allocation2 + $0x38] sm:$0xff]
      %s2452 = scalar_lea.vmem %s3, 24
      %v2453 = vld [vmem:[%s2452] sm:$0xff]
      %v2454 = vld [vmem:[%s2452 + $0x8] sm:$0xff]
      %v2455 = vld [vmem:[%s2452 + $0x10] sm:$0x3]
      %s2456 = scalar_lea.vmem %s4, 1
      %v2457 = vld [vmem:[%s2456] sm:$0x1]
      %v2459 = vlaneseq
      %v2460 = vshrl.u32 %v2459, 7
      %v2461 = vsub.s32 0, %v2460
      %v2462 = vrot.slane %v2457, %v2461
      %v2465 = vsel %vm1434, %v2444, 0
      %v2468 = vsel %vm1434, %v2445, 0
      %v2471 = vsel %vm1434, %v2446, 0
      %v2474 = vsel %vm1434, %v2447, 0
      %v2477 = vsel %vm1434, %v2448, 0
      %v2480 = vsel %vm1434, %v2449, 0
      %v2483 = vsel %vm1434, %v2450, 0
      %v2486 = vsel %vm1434, %v2451, 0
      %v2489 = vsel %vm1459, %v2455, 0
      %2491 = vmatprep.subr.mxu0 0.0
      %2492 = vmatpush1.msra.mxu0 %v2453
      %2493 = vmatprep.subr.mxu0 0.0
      %2494 = vmatpush1.msra.mxu0 %v2454
      %2495 = vmatprep.subr.mxu0 0.0
      %2496 = vmatpush1.msra.mxu0 %v2489
      %2497 = vmatprep.subr.mxu0 0.0
      %2498 = vmatpush1.msra.mxu0 0.0
      %2499 = vmatprep.subr.mxu0 0.0
      %2500 = vmatpush1.msra.mxu0 0.0
      %2501 = vmatprep.subr.mxu0 0.0
      %2502 = vmatpush1.msra.mxu0 0.0
      %2503 = vmatprep.subr.mxu0 0.0
      %2504 = vmatpush1.msra.mxu0 0.0
      %2505 = vmatprep.subr.mxu0 0.0
      %2506 = vmatpush1.msra.mxu0 0.0
      %2507 = vmatprep.subr.mxu0 0.0
      %2508 = vmatpush1.msra.mxu0 0.0
      %2509 = vmatprep.subr.mxu0 0.0
      %2510 = vmatpush1.msra.mxu0 0.0
      %2511 = vmatprep.subr.mxu0 0.0
      %2512 = vmatpush1.msra.mxu0 0.0
      %2513 = vmatprep.subr.mxu0 0.0
      %2514 = vmatpush1.msra.mxu0 0.0
      %2515 = vmatprep.subr.mxu0 0.0
      %2516 = vmatpush1.msra.mxu0 0.0
      %2517 = vmatprep.subr.mxu0 0.0
      %2518 = vmatpush1.msra.mxu0 0.0
      %2519 = vmatprep.subr.mxu0 0.0
      %2520 = vmatpush1.msra.mxu0 0.0
      %2521 = vmatprep.subr.mxu0 0.0
      %2522 = vmatpush1.msra.mxu0 0.0
      %2523 = vmatprep.subr.mxu0 0.0
      %2524 = vmatpush1.msra.mxu0 0.0
      %2525 = vmatprep.subr.mxu0 0.0
      %2526 = vmatpush1.msra.mxu0 0.0
      %2527 = vmatprep.subr.mxu0 0.0
      %2528 = vmatpush1.msra.mxu0 0.0
      %2529 = vmatprep.subr.mxu0 0.0
      %2530 = vmatpush1.msra.mxu0 0.0
      %2531 = vmatprep.subr.mxu0 0.0
      %2532 = vmatpush1.msra.mxu0 0.0
      %2533 = vmatprep.subr.mxu0 0.0
      %2534 = vmatpush1.msra.mxu0 0.0
      %2535 = vmatprep.subr.mxu0 0.0
      %2536 = vmatpush1.msra.mxu0 0.0
      %2537 = vmatprep.subr.mxu0 0.0
      %2538 = vmatpush1.msra.mxu0 0.0
      %2539 = vmatprep.subr.mxu0 0.0
      %2540 = vmatpush1.msra.mxu0 0.0
      %2541 = vmatprep.subr.mxu0 0.0
      %2542 = vmatpush1.msra.mxu0 0.0
      %2543 = vmatprep.subr.mxu0 0.0
      %2544 = vmatpush1.msra.mxu0 0.0
      %2545 = vmatprep.subr.mxu0 0.0
      %2546 = vmatpush1.msra.mxu0 0.0
      %2547 = vmatprep.subr.mxu0 0.0
      %2548 = vmatpush1.msra.mxu0 0.0
      %2549 = vmatprep.subr.mxu0 0.0
      %2550 = vmatpush1.msra.mxu0 0.0
      %2551 = vmatprep.subr.mxu0 0.0
      %2552 = vmatpush1.msra.mxu0 0.0
      %2553 = vmatprep.subr.mxu0 0.0
      %2554 = vmatpush1.msra.mxu0 0.0
      %2555 = vmatprep.mubr.f32.mxu0 0.0
      %2556 = vmatmul.mubr.f32.gmra.mrb[0].mxu0 %v2465
      %v2557 = vpop.f32.mrb[0].mxu0
      %v2558 = vadd.f32 %v2462, %v2557
      %v2559 = vpop.f32.mrb[0].mxu0
      %2560 = vmatprep.mubr.f32.mxu0 0.0
      %2561 = vmatmul.mubr.f32.gmra.mrb[0].mxu0 %v2468
      %v2562 = vpop.f32.mrb[0].mxu0
      %v2563 = vadd.f32 %v2462, %v2562
      %v2564 = vpop.f32.mrb[0].mxu0
      %2565 = vmatprep.mubr.f32.mxu0 0.0
      %2566 = vmatmul.mubr.f32.gmra.mrb[0].mxu0 %v2471
      %v2567 = vpop.f32.mrb[0].mxu0
      %v2568 = vadd.f32 %v2462, %v2567
      %v2569 = vpop.f32.mrb[0].mxu0
      %2570 = vmatprep.mubr.f32.mxu0 0.0
      %2571 = vmatmul.mubr.f32.gmra.mrb[0].mxu0 %v2474
      %v2572 = vpop.f32.mrb[0].mxu0
      %v2573 = vadd.f32 %v2462, %v2572
      %v2574 = vpop.f32.mrb[0].mxu0
      %2575 = vmatprep.mubr.f32.mxu0 0.0
      %2576 = vmatmul.mubr.f32.gmra.mrb[0].mxu0 %v2477
      %v2577 = vpop.f32.mrb[0].mxu0
      %v2578 = vadd.f32 %v2462, %v2577
      %v2579 = vpop.f32.mrb[0].mxu0
      %2580 = vmatprep.mubr.f32.mxu0 0.0
      %2581 = vmatmul.mubr.f32.gmra.mrb[0].mxu0 %v2480
      %v2582 = vpop.f32.mrb[0].mxu0
      %v2583 = vadd.f32 %v2462, %v2582
      %v2584 = vpop.f32.mrb[0].mxu0
      %2585 = vmatprep.mubr.f32.mxu0 0.0
      %2586 = vmatmul.mubr.f32.gmra.mrb[0].mxu0 %v2483
      %v2587 = vpop.f32.mrb[0].mxu0
      %v2588 = vadd.f32 %v2462, %v2587
      %v2589 = vpop.f32.mrb[0].mxu0
      %2590 = vmatprep.mubr.f32.mxu0 0.0
      %2591 = vmatmul.mubr.f32.gmra.mrb[0].mxu0 %v2486
      %v2592 = vpop.f32.mrb[0].mxu0
      %v2593 = vadd.f32 %v2462, %v2592
      %v2594 = vpop.f32.mrb[0].mxu0
      %2595 = vdwg.mxu0
      %2596 = vxpose.xlu0.b32.start [1/16] %v2558, 128
      %2597 = vxpose.xlu0.b32.cont [2/16] %v2563, 128
      %2598 = vxpose.xlu0.b32.cont [3/16] %v2568, 128
      %2599 = vxpose.xlu0.b32.cont [4/16] %v2573, 128
      %2600 = vxpose.xlu0.b32.cont [5/16] %v2578, 128
      %2601 = vxpose.xlu0.b32.cont [6/16] %v2583, 128
      %2602 = vxpose.xlu0.b32.cont [7/16] %v2588, 128
      %2603 = vxpose.xlu0.b32.cont [8/16] %v2593, 128
      %2604 = vxpose.xlu0.b32.cont [9/16] 0.0, 128
      %2605 = vxpose.xlu0.b32.cont [10/16] 0.0, 128
      %2606 = vxpose.xlu0.b32.cont [11/16] 0.0, 128
      %2607 = vxpose.xlu0.b32.cont [12/16] 0.0, 128
      %2608 = vxpose.xlu0.b32.cont [13/16] 0.0, 128
      %2609 = vxpose.xlu0.b32.cont [14/16] 0.0, 128
      %2610 = vxpose.xlu0.b32.cont [15/16] 0.0, 128
      %2611 = vxpose.xlu0.b32.end [16/16] 0.0, 128
      %v2612 = vpop.trf.xlu0
      %v2613 = vpop.trf.xlu0
      %v2614 = vpop.trf.xlu0
      %v2615 = vpop.trf.xlu0
      %v2616 = vpop.trf.xlu0
      %v2617 = vpop.trf.xlu0
      %v2618 = vpop.trf.xlu0
      %v2619 = vpop.trf.xlu0
      %v2620 = vpop.trf.xlu0
      %v2621 = vpop.trf.xlu0
      %v2622 = vpop.trf.xlu0
      %v2623 = vpop.trf.xlu0
      %v2624 = vpop.trf.xlu0
      %v2625 = vpop.trf.xlu0
      %v2626 = vpop.trf.xlu0
      %v2627 = vpop.trf.xlu0
      %v2629 = vsel %vm1600, %v2612, 0
      %2631 = vmatprep.subr.mxu0 0.0
      %2632 = vmatpush1.msra.mxu0 %v1813
      %2633 = vmatprep.subr.mxu0 0.0
      %2634 = vmatpush1.msra.mxu0 %v1814
      %2635 = vmatprep.subr.mxu0 0.0
      %2636 = vmatpush1.msra.mxu0 %v1815
      %2637 = vmatprep.subr.mxu0 0.0
      %2638 = vmatpush1.msra.mxu0 %v1816
      %2639 = vmatprep.subr.mxu0 0.0
      %2640 = vmatpush1.msra.mxu0 %v1817
      %2641 = vmatprep.subr.mxu0 0.0
      %2642 = vmatpush1.msra.mxu0 %v1818
      %2643 = vmatprep.subr.mxu0 0.0
      %2644 = vmatpush1.msra.mxu0 %v1819
      %2645 = vmatprep.subr.mxu0 0.0
      %2646 = vmatpush1.msra.mxu0 %v1820
      %2647 = vmatprep.subr.mxu0 0.0
      %2648 = vmatpush1.msra.mxu0 0.0
      %2649 = vmatprep.subr.mxu0 0.0
      %2650 = vmatpush1.msra.mxu0 0.0
      %2651 = vmatprep.subr.mxu0 0.0
      %2652 = vmatpush1.msra.mxu0 0.0
      %2653 = vmatprep.subr.mxu0 0.0
      %2654 = vmatpush1.msra.mxu0 0.0
      %2655 = vmatprep.subr.mxu0 0.0
      %2656 = vmatpush1.msra.mxu0 0.0
      %2657 = vmatprep.subr.mxu0 0.0
      %2658 = vmatpush1.msra.mxu0 0.0
      %2659 = vmatprep.subr.mxu0 0.0
      %2660 = vmatpush1.msra.mxu0 0.0
      %2661 = vmatprep.subr.mxu0 0.0
      %2662 = vmatpush1.msra.mxu0 0.0
      %2663 = vmatprep.subr.mxu0 0.0
      %2664 = vmatpush1.msra.mxu0 0.0
      %2665 = vmatprep.subr.mxu0 0.0
      %2666 = vmatpush1.msra.mxu0 0.0
      %2667 = vmatprep.subr.mxu0 0.0
      %2668 = vmatpush1.msra.mxu0 0.0
      %2669 = vmatprep.subr.mxu0 0.0
      %2670 = vmatpush1.msra.mxu0 0.0
      %2671 = vmatprep.subr.mxu0 0.0
      %2672 = vmatpush1.msra.mxu0 0.0
      %2673 = vmatprep.subr.mxu0 0.0
      %2674 = vmatpush1.msra.mxu0 0.0
      %2675 = vmatprep.subr.mxu0 0.0
      %2676 = vmatpush1.msra.mxu0 0.0
      %2677 = vmatprep.subr.mxu0 0.0
      %2678 = vmatpush1.msra.mxu0 0.0
      %2679 = vmatprep.subr.mxu0 0.0
      %2680 = vmatpush1.msra.mxu0 0.0
      %2681 = vmatprep.subr.mxu0 0.0
      %2682 = vmatpush1.msra.mxu0 0.0
      %2683 = vmatprep.subr.mxu0 0.0
      %2684 = vmatpush1.msra.mxu0 0.0
      %2685 = vmatprep.subr.mxu0 0.0
      %2686 = vmatpush1.msra.mxu0 0.0
      %2687 = vmatprep.subr.mxu0 0.0
      %2688 = vmatpush1.msra.mxu0 0.0
      %2689 = vmatprep.subr.mxu0 0.0
      %2690 = vmatpush1.msra.mxu0 0.0
      %2691 = vmatprep.subr.mxu0 0.0
      %2692 = vmatpush1.msra.mxu0 0.0
      %2693 = vmatprep.subr.mxu0 0.0
      %2694 = vmatpush1.msra.mxu0 0.0
      %2695 = vmatprep.mubr.f32.mxu0 0.0
      %2696 = vmatmul.mubr.f32.gmra.mrb[0].mxu0 %v2629
      %v2697 = vpop.f32.mrb[0].mxu0
      %v2698 = vadd.f32 0.0, %v2697
      %v2699 = vpop.f32.mrb[0].mxu0
      %2700 = vdwg.mxu0
      %s2701 = scalar_lea.vmem %s321, 2
      %2702 = vst.msk [vmem:[%s2701] sm:$0x3] %vm1674, %v2698
      %v2703 = vstv %s2011
      %v2704 = vadd.f32 %v2703, 0.0
      %vm2705 = vcmask 0
      %2706 = vst.msk [vmem:[%s324] sm:$0x1] %vm2705, %v2704
      %p2707 = scmp.lt.s32.totalorder %s19, 1
      %s2708 = scalar_select %p2707, %s19, 1
      %s2709 = smul.addr %s2708, 2
      %s2710 = smul.addr %s2709, 2
      %s2711 = scalar_lea.vmem %s6, %s2710
      %p2712 = scmp.lt.s32.totalorder %s19, 1
      %s2713 = scalar_select %p2712, %s19, 1
      %s2714 = scalar_lea.vmem %s7, %s2713
      // Predicated region
      $region45: #{_lambda_.11} parent=43 // pred_check
        %p2715 = pneg %p178
      $region46: #{_lambda_.11} parent=43 // pred_check_branch
        %2717 = sbr.rel (%p2715) target = $region48
      $region47: #{_lambda_.11} parent=43 // pred_region
        _
      $region48: #{_lambda_.11} parent=43 // pred_fallthru
        _
      // Predicated region
      $region49: #{_lambda_.11} parent=43 // pred_check
        %p2718 = pneg %p204
      $region50: #{_lambda_.11} parent=43 // pred_check_branch
        %2720 = sbr.rel (%p2718) target = $region52
      $region51: #{_lambda_.11} parent=43 // pred_region
        _
      $region52: #{_lambda_.11} parent=43 // pred_fallthru
        _
    $region44: #{_lambda_.11} parent=5 // pred_fallthru
      _
    %p2721 = scmp.le.s32.totalorder 2, %s14
    // Predicated region
    $region53: #{_lambda_.11} parent=5 // pred_check
      %p2722 = pneg %p2721
    $region54: #{_lambda_.11} parent=5 // pred_check_branch
      %2724 = sbr.rel (%p2722) target = $region56
    $region55: #{_lambda_.11} parent=5 // pred_region
      %s2725 = ssub.s32 %s14, 2
      // Predicated region
      $region57: #{_lambda_.11} parent=55 // pred_check
        %p2726 = pneg %p184
      $region58: #{_lambda_.11} parent=55 // pred_check_branch
        %2728 = sbr.rel (%p2726) target = $region60
      $region59: #{_lambda_.11} parent=55 // pred_region
        %p2729 = scmp.lt.s32.totalorder %s20, 1
        %s2730 = scalar_select %p2729, %s20, 1
        %s2731 = smul.addr %s2730, 2
        %s2732 = smul.addr %s2731, 2
        %s2733 = scalar_lea.vmem %s6, %s2732
      $region60: #{_lambda_.11} parent=55 // pred_fallthru
        _
      // Predicated region
      $region61: #{_lambda_.11} parent=55 // pred_check
        %p2734 = pneg %p210
      $region62: #{_lambda_.11} parent=55 // pred_check_branch
        %2736 = sbr.rel (%p2734) target = $region64
      $region63: #{_lambda_.11} parent=55 // pred_region
        %p2737 = scmp.lt.s32.totalorder %s20, 1
        %s2738 = scalar_select %p2737, %s20, 1
        %s2739 = scalar_lea.vmem %s7, %s2738
      $region64: #{_lambda_.11} parent=55 // pred_fallthru
        _
    $region56: #{_lambda_.11} parent=5 // pred_fallthru
      _
  $region6: #{_lambda_.11} parent=0 // loop_footer
    %s18 = sadd.s32 1, %s14
  $region7: #{_lambda_.11} parent=0 // loop_footer_branch
    %13 = sbr.rel target = $region3
  $region8: #{_lambda_.11} parent=0 // loop_exit
    _

</llo_original>
